<compile_context>
chip_gen: v6e
topology: v6e:2x2x1
jax: 0.10.0
libtpu: 0.0.40
codegen_flags: <defaults>
</compile_context>

<pallas_src>
import functools

import jax
import jax.numpy as jnp
from jax.experimental import pallas as pl
from jax.experimental.pallas import tpu as pltpu

EPS = 1e-5


# --------------------------- fused matmul kernel -----------------------------

def _matmul_kernel(*refs, n_parts, has_bias, out_act, want_stats):
    """y = out_act( sum_p dot(a_p, w_p) [+ bias] ); optional per-step BN stats.

    refs = [a_0, w_0, ..., a_{P-1}, w_{P-1}, (bias,), y, (sum, sumsq)]
    A operands and weights are bf16; accumulation / epilogue math is f32.
    """
    acc = None
    for p in range(n_parts):
        part = jnp.dot(refs[2 * p][...], refs[2 * p + 1][...],
                       preferred_element_type=jnp.float32)
        acc = part if acc is None else acc + part
    idx = 2 * n_parts
    if has_bias:
        acc = acc + refs[idx][...]
        idx += 1
    if out_act == "tanh":
        acc = jnp.tanh(acc)
    y_ref = refs[idx]
    yb = acc.astype(y_ref.dtype)
    y_ref[...] = yb
    if want_stats:
        # Per-grid-step partial statistics of the stored (rounded) activation,
        # written to this step's own (1, 1, C) block -> grid stays "parallel";
        # the tiny (grid, 1, C) arrays are reduced in JAX.
        yf = yb.astype(jnp.float32)
        s1 = jnp.sum(yf, axis=0, keepdims=True)
        s2 = jnp.sum(yf * yf, axis=0, keepdims=True)
        refs[idx + 1][...] = s1.reshape(1, 1, s1.shape[-1])
        refs[idx + 2][...] = s2.reshape(1, 1, s2.shape[-1])


# --------------------------- VMEM / tile sizing -------------------------------

@functools.lru_cache(maxsize=None)
def _vmem_limit_bytes():
    # per-generation scoped-VMEM budget: ~40 MiB on v7x (64 MiB physical),
    # ~80 MiB on v5e/v6e (128 MiB physical).  Conservative default if the
    # hardware query is unavailable.
    try:
        cap = getattr(pltpu.get_tpu_info(), "vmem_capacity_bytes", None)
        if cap:
            return int(min(0.625 * cap, 96 * 1024 * 1024))
    except Exception:
        pass
    return 40 * 1024 * 1024


def _choose_tm(m, k_list, nc, out_itemsize, vmem_limit):
    """Largest row tile whose double-buffered A/out tiles plus resident
    (double-buffered) bf16 weights fit the VMEM budget, then shrunk to give
    >=4 grid steps (>=2 per v7x TensorCore) while keeping >=256-row tiles."""
    weights = 2 * sum(k * nc * 2 for k in k_list)             # bf16, 2 buffers
    per_row = 2 * (2 * sum(k_list) + nc * out_itemsize) + 4 * nc  # A+out bufs + f32 acc
    budget = max(int(0.7 * vmem_limit) - weights, 2 * 1024 * 1024)
    tm = m
    for cand in (4096, 2048, 1024, 512, 256, 128, 64, 32, 16, 8):
        if cand <= m and m % cand == 0 and cand * per_row <= budget:
            tm = cand
            break
    while m // tm < 4 and tm >= 512 and tm % 16 == 0:
        tm //= 2
    return tm


def _fused_matmul(a_list, w_list, bias, *, out_act, want_stats, out_dtype):
    m = a_list[0].shape[0]
    nc = w_list[0].shape[1]
    k_list = [a.shape[1] for a in a_list]
    vmem_limit = _vmem_limit_bytes()
    tm = _choose_tm(m, k_list, nc, jnp.dtype(out_dtype).itemsize, vmem_limit)
    grid = (m // tm,)

    in_specs, args = [], []
    for a, w in zip(a_list, w_list):
        k = a.shape[1]
        in_specs += [pl.BlockSpec((tm, k), lambda i: (i, 0)),
                     pl.BlockSpec((k, nc), lambda i: (0, 0))]
        args += [a, w]
    has_bias = bias is not None
    if has_bias:
        in_specs.append(pl.BlockSpec((1, nc), lambda i: (0, 0)))
        args.append(bias.reshape(1, nc).astype(jnp.float32))

    if want_stats:
        g = grid[0]
        out_shape = (jax.ShapeDtypeStruct((m, nc), out_dtype),
                     jax.ShapeDtypeStruct((g, 1, nc), jnp.float32),
                     jax.ShapeDtypeStruct((g, 1, nc), jnp.float32))
        out_specs = (pl.BlockSpec((tm, nc), lambda i: (i, 0)),
                     pl.BlockSpec((1, 1, nc), lambda i: (i, 0, 0)),
                     pl.BlockSpec((1, 1, nc), lambda i: (i, 0, 0)))
    else:
        out_shape = jax.ShapeDtypeStruct((m, nc), out_dtype)
        out_specs = pl.BlockSpec((tm, nc), lambda i: (i, 0))

    kern = functools.partial(_matmul_kernel, n_parts=len(a_list),
                             has_bias=has_bias, out_act=out_act,
                             want_stats=want_stats)
    res = pl.pallas_call(
        kern,
        out_shape=out_shape,
        grid=grid,
        in_specs=in_specs,
        out_specs=out_specs,
        compiler_params=pltpu.CompilerParams(
            dimension_semantics=("parallel",),        # no resident stats blocks
            vmem_limit_bytes=vmem_limit),
    )(*args)
    return res if want_stats else (res,)


# --------------------------- JAX glue (layout plumbing) -----------------------

def _apply_affine_act(flat, shape, scale, shift, act):
    """Producer's deferred BatchNorm affine + this consumer's pre-activation,
    applied per-channel on the UN-expanded activation (k*k cheaper than doing
    it on im2col patches); XLA fuses it into the pad + patch gather below."""
    n, h, w, c = shape
    if scale is None and act == "none":
        return flat.reshape(n, h, w, c)
    x = flat.astype(jnp.float32)
    if scale is not None:
        x = x * scale + shift
    if act == "leaky":
        x = jnp.where(x > 0, x, 0.2 * x)
    elif act == "relu":
        x = jnp.maximum(x, 0.0)
    return x.astype(jnp.bfloat16).reshape(n, h, w, c)


def _pad_nhwc(x, pad):
    return jnp.pad(x, ((0, 0), (pad, pad), (pad, pad), (0, 0)))


def _im2col_nhwc(xp, k, stride):
    n, hp, wp, c = xp.shape
    ho = (hp - k) // stride + 1
    wo = (wp - k) // stride + 1
    taps = []
    for kh in range(k):
        for kw in range(k):
            taps.append(xp[:, kh:kh + stride * (ho - 1) + 1:stride,
                            kw:kw + stride * (wo - 1) + 1:stride, :])
    patches = jnp.stack(taps, axis=3)                     # (n, ho, wo, k*k, c)
    return patches.reshape(n * ho * wo, k * k * c), ho, wo


def _bn_scale_shift(ssum, ssq, count, gamma, beta):
    # TODO(synk): single-pass variance; a two-pass/Welford reduction would
    # track the f32 reference slightly more closely for large |mean|/std.
    mean = ssum / count
    var = jnp.maximum(ssq / count - mean * mean, 0.0)
    scale = gamma / jnp.sqrt(var + EPS)
    shift = beta - mean * scale
    return scale, shift


def conv_down_block(parts, w, *, pre_act, bn):
    """Fused Conv2d(k=4, s=2, p=1, bias=False); the producer's deferred BN
    affine and the LeakyReLU pre-activation are applied per-channel in the
    patch producer.  Optionally emits per-step BN statistics of its output."""
    cout = w.shape[0]
    n, h, ww, _ = parts[0][1]
    a_list, w_list = [], []
    off = 0
    for flat, shape, scale, shift in parts:
        c = shape[3]
        x = _apply_affine_act(flat, shape, scale, shift, pre_act)
        patches, _, _ = _im2col_nhwc(_pad_nhwc(x, 1), 4, 2)   # (rows, 16*C) bf16
        a_list.append(patches)
        wm = jnp.transpose(w[:, off:off + c, :, :], (2, 3, 1, 0))
        w_list.append(wm.reshape(16 * c, cout).astype(jnp.bfloat16))
        off += c
    outs = _fused_matmul(a_list, w_list, None, out_act="none",
                         want_stats=bn is not None, out_dtype=jnp.bfloat16)
    ho, wo = h // 2, ww // 2
    m = n * ho * wo
    if bn is not None:
        y, ssum, ssq = outs
        scale_o, shift_o = _bn_scale_shift(ssum.sum(axis=(0, 1)),
                                           ssq.sum(axis=(0, 1)), m,
                                           bn["gamma"], bn["beta"])
    else:
        y = outs[0]
        scale_o = shift_o = None
    return y, (n, ho, wo, cout), scale_o, shift_o


# ConvT(k=4,s=2,p=1) sub-pixel weight map: (output-parity a, offset d) -> tap kh
_KH_MAP = {(0, -1): 3, (0, 0): 1, (1, 0): 2, (1, 1): 0}


def _convt_w3(w):
    """(Cin, Cout, 4, 4) ConvTranspose2d weight -> (9*Cin, 4*Cout) matrix for
    the stride-1, 3x3-patch, sub-pixel formulation of ConvT(k=4, s=2, p=1)."""
    cin, cout = w.shape[0], w.shape[1]
    w3 = jnp.zeros((9 * cin, 4 * cout), jnp.float32)
    for dh in (-1, 0, 1):
        for dw in (-1, 0, 1):
            tap = (dh + 1) * 3 + (dw + 1)
            for a in (0, 1):
                for b in (0, 1):
                    kh = _KH_MAP.get((a, dh))
                    kw = _KH_MAP.get((b, dw))
                    if kh is None or kw is None:
                        continue
                    w3 = w3.at[tap * cin:(tap + 1) * cin,
                               (a * 2 + b) * cout:(a * 2 + b + 1) * cout
                               ].set(w[:, :, kh, kw])
    return w3.astype(jnp.bfloat16)


def conv_up_block(parts, w, *, bias=None, out_act="none", bn=None,
                  out_dtype=jnp.bfloat16):
    """Fused ConvTranspose2d(k=4, s=2, p=1) on the *virtual* channel concat of
    `parts` (K-split matmul; concat never hits HBM).  Producer BN affines and
    the ReLU pre-activation are applied per-channel in the patch producer."""
    cout = w.shape[1]
    n, h, ww, _ = parts[0][1]
    a_list, w_list = [], []
    off = 0
    for flat, shape, scale, shift in parts:
        c = shape[3]
        x = _apply_affine_act(flat, shape, scale, shift, "relu")
        patches, _, _ = _im2col_nhwc(_pad_nhwc(x, 1), 3, 1)   # (rows, 9*C) bf16
        a_list.append(patches)
        w_list.append(_convt_w3(w[off:off + c]))
        off += c
    b4 = None if bias is None else jnp.tile(bias, 4)
    outs = _fused_matmul(a_list, w_list, b4, out_act=out_act,
                         want_stats=bn is not None, out_dtype=out_dtype)
    m = n * h * ww
    if bn is not None:
        y4, ssum, ssq = outs
        scale_o, shift_o = _bn_scale_shift(
            ssum.sum(axis=(0, 1)).reshape(4, cout).sum(0),
            ssq.sum(axis=(0, 1)).reshape(4, cout).sum(0),
            4 * m, bn["gamma"], bn["beta"])
    else:
        y4 = outs[0]
        scale_o = shift_o = None
    # pixel shuffle: (rows, 4*Cout) -> (n*2h*2w, Cout); col = (a*2+b)*Cout + c
    # TODO(synk): fold this parity relayout into the consumer's patch gather.
    y = y4.reshape(n, h, ww, 2, 2, cout).transpose(0, 1, 3, 2, 4, 5)
    y = y.reshape(n * 2 * h * 2 * ww, cout)
    return y, (n, 2 * h, 2 * ww, cout), scale_o, shift_o


# --------------------------- U-Net parameters & forward -----------------------

def init_unet_params(key, input_nc, output_nc, nf, num_downs):
    kit = iter(jax.random.split(key, 8 * num_downs + 8))

    def conv_w(cout, cin):
        return 0.02 * jax.random.normal(next(kit), (cout, cin, 4, 4), jnp.float32)

    def convt_w(cin, cout):
        return 0.02 * jax.random.normal(next(kit), (cin, cout, 4, 4), jnp.float32)

    def bn_p(c):
        return {"gamma": 1.0 + 0.02 * jax.random.normal(next(kit), (c,), jnp.float32),
                "beta": jnp.zeros((c,), jnp.float32)}

    def block(outer_nc, inner_nc, input_nc=None, sub=None,
              outermost=False, innermost=False):
        if input_nc is None:
            input_nc = outer_nc
        p = {"outermost": outermost, "innermost": innermost, "sub": sub}
        p["down_w"] = conv_w(inner_nc, input_nc)               # Conv2d, bias=False
        if outermost:
            p["up_w"] = convt_w(inner_nc * 2, outer_nc)        # ConvT, bias=True
            p["up_b"] = 0.02 * jax.random.normal(next(kit), (outer_nc,), jnp.float32)
        elif innermost:
            p["up_w"] = convt_w(inner_nc, outer_nc)            # ConvT, bias=False
            p["up_bn"] = bn_p(outer_nc)
        else:
            p["down_bn"] = bn_p(inner_nc)
            p["up_w"] = convt_w(inner_nc * 2, outer_nc)        # ConvT, bias=False
            p["up_bn"] = bn_p(outer_nc)
        return p

    b = block(nf * 8, nf * 8, innermost=True)
    for _ in range(num_downs - 5):
        b = block(nf * 8, nf * 8, sub=b)                       # use_dropout=False
    b = block(nf * 4, nf * 8, sub=b)
    b = block(nf * 2, nf * 4, sub=b)
    b = block(nf, nf * 2, sub=b)
    b = block(output_nc, nf, input_nc=input_nc, sub=b, outermost=True)
    return b


def block_forward(p, x_parts):
    # x_parts: list of (flat2d, (N,H,W,C), deferred_bn_scale, deferred_bn_shift)
    if p["outermost"]:
        d = conv_down_block(x_parts, p["down_w"], pre_act="none", bn=None)
        sub = block_forward(p["sub"], [d])
        return conv_up_block(sub, p["up_w"], bias=p["up_b"], out_act="tanh",
                             bn=None, out_dtype=jnp.float32)
    elif p["innermost"]:
        d = conv_down_block(x_parts, p["down_w"], pre_act="leaky", bn=None)
        u = conv_up_block([d], p["up_w"], bn=p["up_bn"])
        return x_parts + [u]                                   # virtual skip concat
    else:
        d = conv_down_block(x_parts, p["down_w"], pre_act="leaky",
                            bn=p["down_bn"])
        sub = block_forward(p["sub"], [d])
        u = conv_up_block(sub, p["up_w"], bn=p["up_bn"])
        return x_parts + [u]                                   # virtual skip concat


def unet_forward(params, x_nchw):
    x = jnp.transpose(x_nchw, (0, 2, 3, 1)).astype(jnp.bfloat16)
    n, h, w, c = x.shape
    part = (x.reshape(n * h * w, c), (n, h, w, c), None, None)
    y2d, (n, ho, wo, co), _, _ = block_forward(params, [part])
    return jnp.transpose(y2d.reshape(n, ho, wo, co), (0, 3, 1, 2))


# --------------------------- main ---------------------------------------------

if __name__ == "__main__":
    key = jax.random.PRNGKey(0)
    pkey, xkey = jax.random.split(key)

    # 5 nested UnetSkipConnectionBlocks (outermost / middle / innermost)
    # => 5 stride-2 downsamplings, so spatial size = 2**5 = 32.
    input_nc, output_nc, nf, num_downs = 3, 3, 8, 5
    size = 2 ** num_downs
    params = init_unet_params(pkey, input_nc, output_nc, nf, num_downs)

    x = jax.random.normal(xkey, (2, input_nc, size, size), jnp.float32)

    fwd = jax.jit(lambda inp: unet_forward(params, inp))
    y = fwd(x)
    jax.block_until_ready(y)

    assert y.shape == (2, output_nc, size, size), y.shape
    assert bool(jnp.isfinite(y).all())
    print("KERNEL_OK")
</pallas_src>

<mosaic_0001>
module attributes {stable_mosaic.version = 11 : i64} {
  func.func @_matmul_kernel(%arg0: i32, %arg1: memref<256x48xbf16, #tpu.memory_space<vmem>>, %arg2: memref<48x8xbf16, #tpu.memory_space<vmem>>, %arg3: memref<256x8xbf16, #tpu.memory_space<vmem>>) attributes {dimension_semantics = [#tpu.dimension_semantics<parallel>], iteration_bounds = array<i64: 2>, scalar_prefetch = 0 : i64, scratch_operands = 0 : i64, tpu.core_type = #tpu.core_type<tc>, window_params = [{transform_indices = @transform_0, window_bounds = array<i64: 256, 48>}, {pipeline_mode = #tpu.pipeline_mode<synchronous>, transform_indices = @transform_1, window_bounds = array<i64: 48, 8>}, {transform_indices = @transform_2, window_bounds = array<i64: 256, 8>}]} {
    %c0 = arith.constant 0 : index
    %c0_0 = arith.constant 0 : index
    %0 = vector.load %arg1[%c0, %c0_0] : memref<256x48xbf16, #tpu.memory_space<vmem>>, vector<256x48xbf16>
    %c0_1 = arith.constant 0 : index
    %c0_2 = arith.constant 0 : index
    %1 = vector.load %arg2[%c0_1, %c0_2] : memref<48x8xbf16, #tpu.memory_space<vmem>>, vector<48x8xbf16>
    %cst = arith.constant dense<0.000000e+00> : vector<256x8xf32>
    %2 = tpu.matmul %0, %1, %cst {dimension_numbers = #tpu.dot_dimension_numbers<[1], [0], [0], [1], [0, 0, 1, 1], [], []>} : vector<256x48xbf16>, vector<48x8xbf16>, vector<256x8xf32> -> vector<256x8xf32>
    %3 = arith.truncf %2 : vector<256x8xf32> to vector<256x8xbf16>
    %c0_3 = arith.constant 0 : index
    %c0_4 = arith.constant 0 : index
    %4 = vector.load %arg3[%c0_3, %c0_4] : memref<256x8xbf16, #tpu.memory_space<vmem>>, vector<256x8xbf16>
    tpu.vector_store %arg3[%c0_3, %c0_4], %3 {strides = array<i32>} : memref<256x8xbf16, #tpu.memory_space<vmem>>, vector<256x8xbf16>,
    return
  }
  func.func @transform_0(%arg0: i32) -> (i32, i32) {
    %c0_i32 = arith.constant 0 : i32
    %c0_i32_0 = arith.constant 0 : i32
    return %arg0, %c0_i32 : i32, i32
  }
  func.func @transform_1(%arg0: i32) -> (i32, i32) {
    %c0_i32 = arith.constant 0 : i32
    %c0_i32_0 = arith.constant 0 : i32
    %c0_i32_1 = arith.constant 0 : i32
    return %c0_i32, %c0_i32_0 : i32, i32
  }
  func.func @transform_2(%arg0: i32) -> (i32, i32) {
    %c0_i32 = arith.constant 0 : i32
    %c0_i32_0 = arith.constant 0 : i32
    return %arg0, %c0_i32 : i32, i32
  }
}

module attributes {stable_mosaic.version = 11 : i64} {
  func.func @_matmul_kernel(%arg0: i32, %arg1: memref<128x128xbf16, #tpu.memory_space<vmem>>, %arg2: memref<128x16xbf16, #tpu.memory_space<vmem>>, %arg3: memref<128x16xbf16, #tpu.memory_space<vmem>>, %arg4: memref<1x1x16xf32, #tpu.memory_space<vmem>>, %arg5: memref<1x1x16xf32, #tpu.memory_space<vmem>>) attributes {dimension_semantics = [#tpu.dimension_semantics<parallel>], iteration_bounds = array<i64: 1>, scalar_prefetch = 0 : i64, scratch_operands = 0 : i64, tpu.core_type = #tpu.core_type<tc>, window_params = [{transform_indices = @transform_0, window_bounds = array<i64: 128, 128>}, {pipeline_mode = #tpu.pipeline_mode<synchronous>, transform_indices = @transform_1, window_bounds = array<i64: 128, 16>}, {transform_indices = @transform_2, window_bounds = array<i64: 128, 16>}, {transform_indices = @transform_3, window_bounds = array<i64: 1, 1, 16>}, {transform_indices = @transform_4, window_bounds = array<i64: 1, 1, 16>}]} {
    %c0 = arith.constant 0 : index
    %c0_0 = arith.constant 0 : index
    %0 = vector.load %arg1[%c0, %c0_0] : memref<128x128xbf16, #tpu.memory_space<vmem>>, vector<128x128xbf16>
    %c0_1 = arith.constant 0 : index
    %c0_2 = arith.constant 0 : index
    %1 = vector.load %arg2[%c0_1, %c0_2] : memref<128x16xbf16, #tpu.memory_space<vmem>>, vector<128x16xbf16>
    %cst = arith.constant dense<0.000000e+00> : vector<128x16xf32>
    %2 = tpu.matmul %0, %1, %cst {dimension_numbers = #tpu.dot_dimension_numbers<[1], [0], [0], [1], [0, 0, 1, 1], [], []>} : vector<128x128xbf16>, vector<128x16xbf16>, vector<128x16xf32> -> vector<128x16xf32>
    %3 = arith.truncf %2 : vector<128x16xf32> to vector<128x16xbf16>
    %c0_3 = arith.constant 0 : index
    %c0_4 = arith.constant 0 : index
    %4 = vector.load %arg3[%c0_3, %c0_4] : memref<128x16xbf16, #tpu.memory_space<vmem>>, vector<128x16xbf16>
    tpu.vector_store %arg3[%c0_3, %c0_4], %3 {strides = array<i32>} : memref<128x16xbf16, #tpu.memory_space<vmem>>, vector<128x16xbf16>,
    %5 = arith.extf %3 : vector<128x16xbf16> to vector<128x16xf32>
    %cst_5 = arith.constant dense<0.000000e+00> : vector<16xf32>
    %6 = vector.multi_reduction <add>, %5, %cst_5 [0] : vector<128x16xf32> to vector<16xf32>
    %7 = vector.shape_cast %6 : vector<16xf32> to vector<1x16xf32>
    %8 = arith.mulf %5, %5 : vector<128x16xf32>
    %cst_6 = arith.constant dense<0.000000e+00> : vector<16xf32>
    %9 = vector.multi_reduction <add>, %8, %cst_6 [0] : vector<128x16xf32> to vector<16xf32>
    %10 = vector.shape_cast %9 : vector<16xf32> to vector<1x16xf32>
    %11 = vector.shape_cast %7 : vector<1x16xf32> to vector<1x1x16xf32>
    %c0_7 = arith.constant 0 : index
    %c0_8 = arith.constant 0 : index
    %c0_9 = arith.constant 0 : index
    %12 = vector.load %arg4[%c0_7, %c0_8, %c0_9] : memref<1x1x16xf32, #tpu.memory_space<vmem>>, vector<1x1x16xf32>
    tpu.vector_store %arg4[%c0_7, %c0_8, %c0_9], %11 {strides = array<i32>} : memref<1x1x16xf32, #tpu.memory_space<vmem>>, vector<1x1x16xf32>,
    %13 = vector.shape_cast %10 : vector<1x16xf32> to vector<1x1x16xf32>
    %c0_10 = arith.constant 0 : index
    %c0_11 = arith.constant 0 : index
    %c0_12 = arith.constant 0 : index
    %14 = vector.load %arg5[%c0_10, %c0_11, %c0_12] : memref<1x1x16xf32, #tpu.memory_space<vmem>>, vector<1x1x16xf32>
    tpu.vector_store %arg5[%c0_10, %c0_11, %c0_12], %13 {strides = array<i32>} : memref<1x1x16xf32, #tpu.memory_space<vmem>>, vector<1x1x16xf32>,
    return
  }
  func.func @transform_0(%arg0: i32) -> (i32, i32) {
    %c0_i32 = arith.constant 0 : i32
    %c0_i32_0 = arith.constant 0 : i32
    return %arg0, %c0_i32 : i32, i32
  }
  func.func @transform_1(%arg0: i32) -> (i32, i32) {
    %c0_i32 = arith.constant 0 : i32
    %c0_i32_0 = arith.constant 0 : i32
    %c0_i32_1 = arith.constant 0 : i32
    return %c0_i32, %c0_i32_0 : i32, i32
  }
  func.func @transform_2(%arg0: i32) -> (i32, i32) {
    %c0_i32 = arith.constant 0 : i32
    %c0_i32_0 = arith.constant 0 : i32
    return %arg0, %c0_i32 : i32, i32
  }
  func.func @transform_3(%arg0: i32) -> (i32, i32, i32) {
    %c0_i32 = arith.constant 0 : i32
    %c0_i32_0 = arith.constant 0 : i32
    %c0_i32_1 = arith.constant 0 : i32
    return %arg0, %c0_i32, %c0_i32_0 : i32, i32, i32
  }
  func.func @transform_4(%arg0: i32) -> (i32, i32, i32) {
    %c0_i32 = arith.constant 0 : i32
    %c0_i32_0 = arith.constant 0 : i32
    %c0_i32_1 = arith.constant 0 : i32
    return %arg0, %c0_i32, %c0_i32_0 : i32, i32, i32
  }
}

module attributes {stable_mosaic.version = 11 : i64} {
  func.func @_matmul_kernel(%arg0: i32, %arg1: memref<32x256xbf16, #tpu.memory_space<vmem>>, %arg2: memref<256x32xbf16, #tpu.memory_space<vmem>>, %arg3: memref<32x32xbf16, #tpu.memory_space<vmem>>, %arg4: memref<1x1x32xf32, #tpu.memory_space<vmem>>, %arg5: memref<1x1x32xf32, #tpu.memory_space<vmem>>) attributes {dimension_semantics = [#tpu.dimension_semantics<parallel>], iteration_bounds = array<i64: 1>, scalar_prefetch = 0 : i64, scratch_operands = 0 : i64, tpu.core_type = #tpu.core_type<tc>, window_params = [{transform_indices = @transform_0, window_bounds = array<i64: 32, 256>}, {pipeline_mode = #tpu.pipeline_mode<synchronous>, transform_indices = @transform_1, window_bounds = array<i64: 256, 32>}, {transform_indices = @transform_2, window_bounds = array<i64: 32, 32>}, {transform_indices = @transform_3, window_bounds = array<i64: 1, 1, 32>}, {transform_indices = @transform_4, window_bounds = array<i64: 1, 1, 32>}]} {
    %c0 = arith.constant 0 : index
    %c0_0 = arith.constant 0 : index
    %0 = vector.load %arg1[%c0, %c0_0] : memref<32x256xbf16, #tpu.memory_space<vmem>>, vector<32x256xbf16>
    %c0_1 = arith.constant 0 : index
    %c0_2 = arith.constant 0 : index
    %1 = vector.load %arg2[%c0_1, %c0_2] : memref<256x32xbf16, #tpu.memory_space<vmem>>, vector<256x32xbf16>
    %cst = arith.constant dense<0.000000e+00> : vector<32x32xf32>
    %2 = tpu.matmul %0, %1, %cst {dimension_numbers = #tpu.dot_dimension_numbers<[1], [0], [0], [1], [0, 0, 1, 1], [], []>} : vector<32x256xbf16>, vector<256x32xbf16>, vector<32x32xf32> -> vector<32x32xf32>
    %3 = arith.truncf %2 : vector<32x32xf32> to vector<32x32xbf16>
    %c0_3 = arith.constant 0 : index
    %c0_4 = arith.constant 0 : index
    %4 = vector.load %arg3[%c0_3, %c0_4] : memref<32x32xbf16, #tpu.memory_space<vmem>>, vector<32x32xbf16>
    tpu.vector_store %arg3[%c0_3, %c0_4], %3 {strides = array<i32>} : memref<32x32xbf16, #tpu.memory_space<vmem>>, vector<32x32xbf16>,
    %5 = arith.extf %3 : vector<32x32xbf16> to vector<32x32xf32>
    %cst_5 = arith.constant dense<0.000000e+00> : vector<32xf32>
    %6 = vector.multi_reduction <add>, %5, %cst_5 [0] : vector<32x32xf32> to vector<32xf32>
    %7 = vector.shape_cast %6 : vector<32xf32> to vector<1x32xf32>
    %8 = arith.mulf %5, %5 : vector<32x32xf32>
    %cst_6 = arith.constant dense<0.000000e+00> : vector<32xf32>
    %9 = vector.multi_reduction <add>, %8, %cst_6 [0] : vector<32x32xf32> to vector<32xf32>
    %10 = vector.shape_cast %9 : vector<32xf32> to vector<1x32xf32>
    %11 = vector.shape_cast %7 : vector<1x32xf32> to vector<1x1x32xf32>
    %c0_7 = arith.constant 0 : index
    %c0_8 = arith.constant 0 : index
    %c0_9 = arith.constant 0 : index
    %12 = vector.load %arg4[%c0_7, %c0_8, %c0_9] : memref<1x1x32xf32, #tpu.memory_space<vmem>>, vector<1x1x32xf32>
    tpu.vector_store %arg4[%c0_7, %c0_8, %c0_9], %11 {strides = array<i32>} : memref<1x1x32xf32, #tpu.memory_space<vmem>>, vector<1x1x32xf32>,
    %13 = vector.shape_cast %10 : vector<1x32xf32> to vector<1x1x32xf32>
    %c0_10 = arith.constant 0 : index
    %c0_11 = arith.constant 0 : index
    %c0_12 = arith.constant 0 : index
    %14 = vector.load %arg5[%c0_10, %c0_11, %c0_12] : memref<1x1x32xf32, #tpu.memory_space<vmem>>, vector<1x1x32xf32>
    tpu.vector_store %arg5[%c0_10, %c0_11, %c0_12], %13 {strides = array<i32>} : memref<1x1x32xf32, #tpu.memory_space<vmem>>, vector<1x1x32xf32>,
    return
  }
  func.func @transform_0(%arg0: i32) -> (i32, i32) {
    %c0_i32 = arith.constant 0 : i32
    %c0_i32_0 = arith.constant 0 : i32
    return %arg0, %c0_i32 : i32, i32
  }
  func.func @transform_1(%arg0: i32) -> (i32, i32) {
    %c0_i32 = arith.constant 0 : i32
    %c0_i32_0 = arith.constant 0 : i32
    %c0_i32_1 = arith.constant 0 : i32
    return %c0_i32, %c0_i32_0 : i32, i32
  }
  func.func @transform_2(%arg0: i32) -> (i32, i32) {
    %c0_i32 = arith.constant 0 : i32
    %c0_i32_0 = arith.constant 0 : i32
    return %arg0, %c0_i32 : i32, i32
  }
  func.func @transform_3(%arg0: i32) -> (i32, i32, i32) {
    %c0_i32 = arith.constant 0 : i32
    %c0_i32_0 = arith.constant 0 : i32
    %c0_i32_1 = arith.constant 0 : i32
    return %arg0, %c0_i32, %c0_i32_0 : i32, i32, i32
  }
  func.func @transform_4(%arg0: i32) -> (i32, i32, i32) {
    %c0_i32 = arith.constant 0 : i32
    %c0_i32_0 = arith.constant 0 : i32
    %c0_i32_1 = arith.constant 0 : i32
    return %arg0, %c0_i32, %c0_i32_0 : i32, i32, i32
  }
}

module attributes {stable_mosaic.version = 11 : i64} {
  func.func @_matmul_kernel(%arg0: i32, %arg1: memref<8x512xbf16, #tpu.memory_space<vmem>>, %arg2: memref<512x64xbf16, #tpu.memory_space<vmem>>, %arg3: memref<8x64xbf16, #tpu.memory_space<vmem>>, %arg4: memref<1x1x64xf32, #tpu.memory_space<vmem>>, %arg5: memref<1x1x64xf32, #tpu.memory_space<vmem>>) attributes {dimension_semantics = [#tpu.dimension_semantics<parallel>], iteration_bounds = array<i64: 1>, scalar_prefetch = 0 : i64, scratch_operands = 0 : i64, tpu.core_type = #tpu.core_type<tc>, window_params = [{transform_indices = @transform_0, window_bounds = array<i64: 8, 512>}, {pipeline_mode = #tpu.pipeline_mode<synchronous>, transform_indices = @transform_1, window_bounds = array<i64: 512, 64>}, {transform_indices = @transform_2, window_bounds = array<i64: 8, 64>}, {transform_indices = @transform_3, window_bounds = array<i64: 1, 1, 64>}, {transform_indices = @transform_4, window_bounds = array<i64: 1, 1, 64>}]} {
    %c0 = arith.constant 0 : index
    %c0_0 = arith.constant 0 : index
    %0 = vector.load %arg1[%c0, %c0_0] : memref<8x512xbf16, #tpu.memory_space<vmem>>, vector<8x512xbf16>
    %c0_1 = arith.constant 0 : index
    %c0_2 = arith.constant 0 : index
    %1 = vector.load %arg2[%c0_1, %c0_2] : memref<512x64xbf16, #tpu.memory_space<vmem>>, vector<512x64xbf16>
    %cst = arith.constant dense<0.000000e+00> : vector<8x64xf32>
    %2 = tpu.matmul %0, %1, %cst {dimension_numbers = #tpu.dot_dimension_numbers<[1], [0], [0], [1], [0, 0, 1, 1], [], []>} : vector<8x512xbf16>, vector<512x64xbf16>, vector<8x64xf32> -> vector<8x64xf32>
    %3 = arith.truncf %2 : vector<8x64xf32> to vector<8x64xbf16>
    %c0_3 = arith.constant 0 : index
    %c0_4 = arith.constant 0 : index
    %4 = vector.load %arg3[%c0_3, %c0_4] : memref<8x64xbf16, #tpu.memory_space<vmem>>, vector<8x64xbf16>
    tpu.vector_store %arg3[%c0_3, %c0_4], %3 {strides = array<i32>} : memref<8x64xbf16, #tpu.memory_space<vmem>>, vector<8x64xbf16>,
    %5 = arith.extf %3 : vector<8x64xbf16> to vector<8x64xf32>
    %cst_5 = arith.constant dense<0.000000e+00> : vector<64xf32>
    %6 = vector.multi_reduction <add>, %5, %cst_5 [0] : vector<8x64xf32> to vector<64xf32>
    %7 = vector.shape_cast %6 : vector<64xf32> to vector<1x64xf32>
    %8 = arith.mulf %5, %5 : vector<8x64xf32>
    %cst_6 = arith.constant dense<0.000000e+00> : vector<64xf32>
    %9 = vector.multi_reduction <add>, %8, %cst_6 [0] : vector<8x64xf32> to vector<64xf32>
    %10 = vector.shape_cast %9 : vector<64xf32> to vector<1x64xf32>
    %11 = vector.shape_cast %7 : vector<1x64xf32> to vector<1x1x64xf32>
    %c0_7 = arith.constant 0 : index
    %c0_8 = arith.constant 0 : index
    %c0_9 = arith.constant 0 : index
    %12 = vector.load %arg4[%c0_7, %c0_8, %c0_9] : memref<1x1x64xf32, #tpu.memory_space<vmem>>, vector<1x1x64xf32>
    tpu.vector_store %arg4[%c0_7, %c0_8, %c0_9], %11 {strides = array<i32>} : memref<1x1x64xf32, #tpu.memory_space<vmem>>, vector<1x1x64xf32>,
    %13 = vector.shape_cast %10 : vector<1x64xf32> to vector<1x1x64xf32>
    %c0_10 = arith.constant 0 : index
    %c0_11 = arith.constant 0 : index
    %c0_12 = arith.constant 0 : index
    %14 = vector.load %arg5[%c0_10, %c0_11, %c0_12] : memref<1x1x64xf32, #tpu.memory_space<vmem>>, vector<1x1x64xf32>
    tpu.vector_store %arg5[%c0_10, %c0_11, %c0_12], %13 {strides = array<i32>} : memref<1x1x64xf32, #tpu.memory_space<vmem>>, vector<1x1x64xf32>,
    return
  }
  func.func @transform_0(%arg0: i32) -> (i32, i32) {
    %c0_i32 = arith.constant 0 : i32
    %c0_i32_0 = arith.constant 0 : i32
    return %arg0, %c0_i32 : i32, i32
  }
  func.func @transform_1(%arg0: i32) -> (i32, i32) {
    %c0_i32 = arith.constant 0 : i32
    %c0_i32_0 = arith.constant 0 : i32
    %c0_i32_1 = arith.constant 0 : i32
    return %c0_i32, %c0_i32_0 : i32, i32
  }
  func.func @transform_2(%arg0: i32) -> (i32, i32) {
    %c0_i32 = arith.constant 0 : i32
    %c0_i32_0 = arith.constant 0 : i32
    return %arg0, %c0_i32 : i32, i32
  }
  func.func @transform_3(%arg0: i32) -> (i32, i32, i32) {
    %c0_i32 = arith.constant 0 : i32
    %c0_i32_0 = arith.constant 0 : i32
    %c0_i32_1 = arith.constant 0 : i32
    return %arg0, %c0_i32, %c0_i32_0 : i32, i32, i32
  }
  func.func @transform_4(%arg0: i32) -> (i32, i32, i32) {
    %c0_i32 = arith.constant 0 : i32
    %c0_i32_0 = arith.constant 0 : i32
    %c0_i32_1 = arith.constant 0 : i32
    return %arg0, %c0_i32, %c0_i32_0 : i32, i32, i32
  }
}

module attributes {stable_mosaic.version = 11 : i64} {
  func.func @_matmul_kernel(%arg0: i32, %arg1: memref<8x576xbf16, #tpu.memory_space<vmem>>, %arg2: memref<576x128xbf16, #tpu.memory_space<vmem>>, %arg3: memref<8x576xbf16, #tpu.memory_space<vmem>>, %arg4: memref<576x128xbf16, #tpu.memory_space<vmem>>, %arg5: memref<8x128xbf16, #tpu.memory_space<vmem>>, %arg6: memref<1x1x128xf32, #tpu.memory_space<vmem>>, %arg7: memref<1x1x128xf32, #tpu.memory_space<vmem>>) attributes {dimension_semantics = [#tpu.dimension_semantics<parallel>], iteration_bounds = array<i64: 1>, scalar_prefetch = 0 : i64, scratch_operands = 0 : i64, tpu.core_type = #tpu.core_type<tc>, window_params = [{transform_indices = @transform_0, window_bounds = array<i64: 8, 576>}, {pipeline_mode = #tpu.pipeline_mode<synchronous>, transform_indices = @transform_1, window_bounds = array<i64: 576, 128>}, {transform_indices = @transform_2, window_bounds = array<i64: 8, 576>}, {pipeline_mode = #tpu.pipeline_mode<synchronous>, transform_indices = @transform_3, window_bounds = array<i64: 576, 128>}, {transform_indices = @transform_4, window_bounds = array<i64: 8, 128>}, {transform_indices = @transform_5, window_bounds = array<i64: 1, 1, 128>}, {transform_indices = @transform_6, window_bounds = array<i64: 1, 1, 128>}]} {
    %c0 = arith.constant 0 : index
    %c0_0 = arith.constant 0 : index
    %0 = vector.load %arg1[%c0, %c0_0] : memref<8x576xbf16, #tpu.memory_space<vmem>>, vector<8x576xbf16>
    %c0_1 = arith.constant 0 : index
    %c0_2 = arith.constant 0 : index
    %1 = vector.load %arg2[%c0_1, %c0_2] : memref<576x128xbf16, #tpu.memory_space<vmem>>, vector<576x128xbf16>
    %cst = arith.constant dense<0.000000e+00> : vector<8x128xf32>
    %2 = tpu.matmul %0, %1, %cst {dimension_numbers = #tpu.dot_dimension_numbers<[1], [0], [0], [1], [0, 0, 1, 1], [], []>} : vector<8x576xbf16>, vector<576x128xbf16>, vector<8x128xf32> -> vector<8x128xf32>
    %c0_3 = arith.constant 0 : index
    %c0_4 = arith.constant 0 : index
    %3 = vector.load %arg3[%c0_3, %c0_4] : memref<8x576xbf16, #tpu.memory_space<vmem>>, vector<8x576xbf16>
    %c0_5 = arith.constant 0 : index
    %c0_6 = arith.constant 0 : index
    %4 = vector.load %arg4[%c0_5, %c0_6] : memref<576x128xbf16, #tpu.memory_space<vmem>>, vector<576x128xbf16>
    %cst_7 = arith.constant dense<0.000000e+00> : vector<8x128xf32>
    %5 = tpu.matmul %3, %4, %cst_7 {dimension_numbers = #tpu.dot_dimension_numbers<[1], [0], [0], [1], [0, 0, 1, 1], [], []>} : vector<8x576xbf16>, vector<576x128xbf16>, vector<8x128xf32> -> vector<8x128xf32>
    %6 = arith.addf %2, %5 : vector<8x128xf32>
    %7 = arith.truncf %6 : vector<8x128xf32> to vector<8x128xbf16>
    %c0_8 = arith.constant 0 : index
    %c0_9 = arith.constant 0 : index
    %8 = vector.load %arg5[%c0_8, %c0_9] : memref<8x128xbf16, #tpu.memory_space<vmem>>, vector<8x128xbf16>
    tpu.vector_store %arg5[%c0_8, %c0_9], %7 {strides = array<i32>} : memref<8x128xbf16, #tpu.memory_space<vmem>>, vector<8x128xbf16>,
    %9 = arith.extf %7 : vector<8x128xbf16> to vector<8x128xf32>
    %cst_10 = arith.constant dense<0.000000e+00> : vector<128xf32>
    %10 = vector.multi_reduction <add>, %9, %cst_10 [0] : vector<8x128xf32> to vector<128xf32>
    %11 = vector.shape_cast %10 : vector<128xf32> to vector<1x128xf32>
    %12 = arith.mulf %9, %9 : vector<8x128xf32>
    %cst_11 = arith.constant dense<0.000000e+00> : vector<128xf32>
    %13 = vector.multi_reduction <add>, %12, %cst_11 [0] : vector<8x128xf32> to vector<128xf32>
    %14 = vector.shape_cast %13 : vector<128xf32> to vector<1x128xf32>
    %15 = vector.shape_cast %11 : vector<1x128xf32> to vector<1x1x128xf32>
    %c0_12 = arith.constant 0 : index
    %c0_13 = arith.constant 0 : index
    %c0_14 = arith.constant 0 : index
    %16 = vector.load %arg6[%c0_12, %c0_13, %c0_14] : memref<1x1x128xf32, #tpu.memory_space<vmem>>, vector<1x1x128xf32>
    tpu.vector_store %arg6[%c0_12, %c0_13, %c0_14], %15 {strides = array<i32>} : memref<1x1x128xf32, #tpu.memory_space<vmem>>, vector<1x1x128xf32>,
    %17 = vector.shape_cast %14 : vector<1x128xf32> to vector<1x1x128xf32>
    %c0_15 = arith.constant 0 : index
    %c0_16 = arith.constant 0 : index
    %c0_17 = arith.constant 0 : index
    %18 = vector.load %arg7[%c0_15, %c0_16, %c0_17] : memref<1x1x128xf32, #tpu.memory_space<vmem>>, vector<1x1x128xf32>
    tpu.vector_store %arg7[%c0_15, %c0_16, %c0_17], %17 {strides = array<i32>} : memref<1x1x128xf32, #tpu.memory_space<vmem>>, vector<1x1x128xf32>,
    return
  }
  func.func @transform_0(%arg0: i32) -> (i32, i32) {
    %c0_i32 = arith.constant 0 : i32
    %c0_i32_0 = arith.constant 0 : i32
    return %arg0, %c0_i32 : i32, i32
  }
  func.func @transform_1(%arg0: i32) -> (i32, i32) {
    %c0_i32 = arith.constant 0 : i32
    %c0_i32_0 = arith.constant 0 : i32
    %c0_i32_1 = arith.constant 0 : i32
    return %c0_i32, %c0_i32_0 : i32, i32
  }
  func.func @transform_2(%arg0: i32) -> (i32, i32) {
    %c0_i32 = arith.constant 0 : i32
    %c0_i32_0 = arith.constant 0 : i32
    return %arg0, %c0_i32 : i32, i32
  }
  func.func @transform_3(%arg0: i32) -> (i32, i32) {
    %c0_i32 = arith.constant 0 : i32
    %c0_i32_0 = arith.constant 0 : i32
    %c0_i32_1 = arith.constant 0 : i32
    return %c0_i32, %c0_i32_0 : i32, i32
  }
  func.func @transform_4(%arg0: i32) -> (i32, i32) {
    %c0_i32 = arith.constant 0 : i32
    %c0_i32_0 = arith.constant 0 : i32
    return %arg0, %c0_i32 : i32, i32
  }
  func.func @transform_5(%arg0: i32) -> (i32, i32, i32) {
    %c0_i32 = arith.constant 0 : i32
    %c0_i32_0 = arith.constant 0 : i32
    %c0_i32_1 = arith.constant 0 : i32
    return %arg0, %c0_i32, %c0_i32_0 : i32, i32, i32
  }
  func.func @transform_6(%arg0: i32) -> (i32, i32, i32) {
    %c0_i32 = arith.constant 0 : i32
    %c0_i32_0 = arith.constant 0 : i32
    %c0_i32_1 = arith.constant 0 : i32
    return %arg0, %c0_i32, %c0_i32_0 : i32, i32, i32
  }
}

module attributes {stable_mosaic.version = 11 : i64} {
  func.func @_matmul_kernel(%arg0: i32, %arg1: memref<2x1024xbf16, #tpu.memory_space<vmem>>, %arg2: memref<1024x64xbf16, #tpu.memory_space<vmem>>, %arg3: memref<2x64xbf16, #tpu.memory_space<vmem>>) attributes {dimension_semantics = [#tpu.dimension_semantics<parallel>], iteration_bounds = array<i64: 1>, scalar_prefetch = 0 : i64, scratch_operands = 0 : i64, tpu.core_type = #tpu.core_type<tc>, window_params = [{transform_indices = @transform_0, window_bounds = array<i64: 2, 1024>}, {pipeline_mode = #tpu.pipeline_mode<synchronous>, transform_indices = @transform_1, window_bounds = array<i64: 1024, 64>}, {transform_indices = @transform_2, window_bounds = array<i64: 2, 64>}]} {
    %c0 = arith.constant 0 : index
    %c0_0 = arith.constant 0 : index
    %0 = vector.load %arg1[%c0, %c0_0] : memref<2x1024xbf16, #tpu.memory_space<vmem>>, vector<2x1024xbf16>
    %c0_1 = arith.constant 0 : index
    %c0_2 = arith.constant 0 : index
    %1 = vector.load %arg2[%c0_1, %c0_2] : memref<1024x64xbf16, #tpu.memory_space<vmem>>, vector<1024x64xbf16>
    %cst = arith.constant dense<0.000000e+00> : vector<2x64xf32>
    %2 = tpu.matmul %0, %1, %cst {dimension_numbers = #tpu.dot_dimension_numbers<[1], [0], [0], [1], [0, 0, 1, 1], [], []>} : vector<2x1024xbf16>, vector<1024x64xbf16>, vector<2x64xf32> -> vector<2x64xf32>
    %3 = arith.truncf %2 : vector<2x64xf32> to vector<2x64xbf16>
    %c0_3 = arith.constant 0 : index
    %c0_4 = arith.constant 0 : index
    %4 = vector.load %arg3[%c0_3, %c0_4] : memref<2x64xbf16, #tpu.memory_space<vmem>>, vector<2x64xbf16>
    tpu.vector_store %arg3[%c0_3, %c0_4], %3 {strides = array<i32>} : memref<2x64xbf16, #tpu.memory_space<vmem>>, vector<2x64xbf16>,
    return
  }
  func.func @transform_0(%arg0: i32) -> (i32, i32) {
    %c0_i32 = arith.constant 0 : i32
    %c0_i32_0 = arith.constant 0 : i32
    return %arg0, %c0_i32 : i32, i32
  }
  func.func @transform_1(%arg0: i32) -> (i32, i32) {
    %c0_i32 = arith.constant 0 : i32
    %c0_i32_0 = arith.constant 0 : i32
    %c0_i32_1 = arith.constant 0 : i32
    return %c0_i32, %c0_i32_0 : i32, i32
  }
  func.func @transform_2(%arg0: i32) -> (i32, i32) {
    %c0_i32 = arith.constant 0 : i32
    %c0_i32_0 = arith.constant 0 : i32
    return %arg0, %c0_i32 : i32, i32
  }
}

module attributes {stable_mosaic.version = 11 : i64} {
  func.func @_matmul_kernel(%arg0: i32, %arg1: memref<2x576xbf16, #tpu.memory_space<vmem>>, %arg2: memref<576x256xbf16, #tpu.memory_space<vmem>>, %arg3: memref<2x256xbf16, #tpu.memory_space<vmem>>, %arg4: memref<1x1x256xf32, #tpu.memory_space<vmem>>, %arg5: memref<1x1x256xf32, #tpu.memory_space<vmem>>) attributes {dimension_semantics = [#tpu.dimension_semantics<parallel>], iteration_bounds = array<i64: 1>, scalar_prefetch = 0 : i64, scratch_operands = 0 : i64, tpu.core_type = #tpu.core_type<tc>, window_params = [{transform_indices = @transform_0, window_bounds = array<i64: 2, 576>}, {pipeline_mode = #tpu.pipeline_mode<synchronous>, transform_indices = @transform_1, window_bounds = array<i64: 576, 256>}, {transform_indices = @transform_2, window_bounds = array<i64: 2, 256>}, {transform_indices = @transform_3, window_bounds = array<i64: 1, 1, 256>}, {transform_indices = @transform_4, window_bounds = array<i64: 1, 1, 256>}]} {
    %c0 = arith.constant 0 : index
    %c0_0 = arith.constant 0 : index
    %0 = vector.load %arg1[%c0, %c0_0] : memref<2x576xbf16, #tpu.memory_space<vmem>>, vector<2x576xbf16>
    %c0_1 = arith.constant 0 : index
    %c0_2 = arith.constant 0 : index
    %1 = vector.load %arg2[%c0_1, %c0_2] : memref<576x256xbf16, #tpu.memory_space<vmem>>, vector<576x256xbf16>
    %cst = arith.constant dense<0.000000e+00> : vector<2x256xf32>
    %2 = tpu.matmul %0, %1, %cst {dimension_numbers = #tpu.dot_dimension_numbers<[1], [0], [0], [1], [0, 0, 1, 1], [], []>} : vector<2x576xbf16>, vector<576x256xbf16>, vector<2x256xf32> -> vector<2x256xf32>
    %3 = arith.truncf %2 : vector<2x256xf32> to vector<2x256xbf16>
    %c0_3 = arith.constant 0 : index
    %c0_4 = arith.constant 0 : index
    %4 = vector.load %arg3[%c0_3, %c0_4] : memref<2x256xbf16, #tpu.memory_space<vmem>>, vector<2x256xbf16>
    tpu.vector_store %arg3[%c0_3, %c0_4], %3 {strides = array<i32>} : memref<2x256xbf16, #tpu.memory_space<vmem>>, vector<2x256xbf16>,
    %5 = arith.extf %3 : vector<2x256xbf16> to vector<2x256xf32>
    %cst_5 = arith.constant dense<0.000000e+00> : vector<256xf32>
    %6 = vector.multi_reduction <add>, %5, %cst_5 [0] : vector<2x256xf32> to vector<256xf32>
    %7 = vector.shape_cast %6 : vector<256xf32> to vector<1x256xf32>
    %8 = arith.mulf %5, %5 : vector<2x256xf32>
    %cst_6 = arith.constant dense<0.000000e+00> : vector<256xf32>
    %9 = vector.multi_reduction <add>, %8, %cst_6 [0] : vector<2x256xf32> to vector<256xf32>
    %10 = vector.shape_cast %9 : vector<256xf32> to vector<1x256xf32>
    %11 = vector.shape_cast %7 : vector<1x256xf32> to vector<1x1x256xf32>
    %c0_7 = arith.constant 0 : index
    %c0_8 = arith.constant 0 : index
    %c0_9 = arith.constant 0 : index
    %12 = vector.load %arg4[%c0_7, %c0_8, %c0_9] : memref<1x1x256xf32, #tpu.memory_space<vmem>>, vector<1x1x256xf32>
    tpu.vector_store %arg4[%c0_7, %c0_8, %c0_9], %11 {strides = array<i32>} : memref<1x1x256xf32, #tpu.memory_space<vmem>>, vector<1x1x256xf32>,
    %13 = vector.shape_cast %10 : vector<1x256xf32> to vector<1x1x256xf32>
    %c0_10 = arith.constant 0 : index
    %c0_11 = arith.constant 0 : index
    %c0_12 = arith.constant 0 : index
    %14 = vector.load %arg5[%c0_10, %c0_11, %c0_12] : memref<1x1x256xf32, #tpu.memory_space<vmem>>, vector<1x1x256xf32>
    tpu.vector_store %arg5[%c0_10, %c0_11, %c0_12], %13 {strides = array<i32>} : memref<1x1x256xf32, #tpu.memory_space<vmem>>, vector<1x1x256xf32>,
    return
  }
  func.func @transform_0(%arg0: i32) -> (i32, i32) {
    %c0_i32 = arith.constant 0 : i32
    %c0_i32_0 = arith.constant 0 : i32
    return %arg0, %c0_i32 : i32, i32
  }
  func.func @transform_1(%arg0: i32) -> (i32, i32) {
    %c0_i32 = arith.constant 0 : i32
    %c0_i32_0 = arith.constant 0 : i32
    %c0_i32_1 = arith.constant 0 : i32
    return %c0_i32, %c0_i32_0 : i32, i32
  }
  func.func @transform_2(%arg0: i32) -> (i32, i32) {
    %c0_i32 = arith.constant 0 : i32
    %c0_i32_0 = arith.constant 0 : i32
    return %arg0, %c0_i32 : i32, i32
  }
  func.func @transform_3(%arg0: i32) -> (i32, i32, i32) {
    %c0_i32 = arith.constant 0 : i32
    %c0_i32_0 = arith.constant 0 : i32
    %c0_i32_1 = arith.constant 0 : i32
    return %arg0, %c0_i32, %c0_i32_0 : i32, i32, i32
  }
  func.func @transform_4(%arg0: i32) -> (i32, i32, i32) {
    %c0_i32 = arith.constant 0 : i32
    %c0_i32_0 = arith.constant 0 : i32
    %c0_i32_1 = arith.constant 0 : i32
    return %arg0, %c0_i32, %c0_i32_0 : i32, i32, i32
  }
}

module attributes {stable_mosaic.version = 11 : i64} {
  func.func @_matmul_kernel(%arg0: i32, %arg1: memref<32x288xbf16, #tpu.memory_space<vmem>>, %arg2: memref<288x64xbf16, #tpu.memory_space<vmem>>, %arg3: memref<32x288xbf16, #tpu.memory_space<vmem>>, %arg4: memref<288x64xbf16, #tpu.memory_space<vmem>>, %arg5: memref<32x64xbf16, #tpu.memory_space<vmem>>, %arg6: memref<1x1x64xf32, #tpu.memory_space<vmem>>, %arg7: memref<1x1x64xf32, #tpu.memory_space<vmem>>) attributes {dimension_semantics = [#tpu.dimension_semantics<parallel>], iteration_bounds = array<i64: 1>, scalar_prefetch = 0 : i64, scratch_operands = 0 : i64, tpu.core_type = #tpu.core_type<tc>, window_params = [{transform_indices = @transform_0, window_bounds = array<i64: 32, 288>}, {pipeline_mode = #tpu.pipeline_mode<synchronous>, transform_indices = @transform_1, window_bounds = array<i64: 288, 64>}, {transform_indices = @transform_2, window_bounds = array<i64: 32, 288>}, {pipeline_mode = #tpu.pipeline_mode<synchronous>, transform_indices = @transform_3, window_bounds = array<i64: 288, 64>}, {transform_indices = @transform_4, window_bounds = array<i64: 32, 64>}, {transform_indices = @transform_5, window_bounds = array<i64: 1, 1, 64>}, {transform_indices = @transform_6, window_bounds = array<i64: 1, 1, 64>}]} {
    %c0 = arith.constant 0 : index
    %c0_0 = arith.constant 0 : index
    %0 = vector.load %arg1[%c0, %c0_0] : memref<32x288xbf16, #tpu.memory_space<vmem>>, vector<32x288xbf16>
    %c0_1 = arith.constant 0 : index
    %c0_2 = arith.constant 0 : index
    %1 = vector.load %arg2[%c0_1, %c0_2] : memref<288x64xbf16, #tpu.memory_space<vmem>>, vector<288x64xbf16>
    %cst = arith.constant dense<0.000000e+00> : vector<32x64xf32>
    %2 = tpu.matmul %0, %1, %cst {dimension_numbers = #tpu.dot_dimension_numbers<[1], [0], [0], [1], [0, 0, 1, 1], [], []>} : vector<32x288xbf16>, vector<288x64xbf16>, vector<32x64xf32> -> vector<32x64xf32>
    %c0_3 = arith.constant 0 : index
    %c0_4 = arith.constant 0 : index
    %3 = vector.load %arg3[%c0_3, %c0_4] : memref<32x288xbf16, #tpu.memory_space<vmem>>, vector<32x288xbf16>
    %c0_5 = arith.constant 0 : index
    %c0_6 = arith.constant 0 : index
    %4 = vector.load %arg4[%c0_5, %c0_6] : memref<288x64xbf16, #tpu.memory_space<vmem>>, vector<288x64xbf16>
    %cst_7 = arith.constant dense<0.000000e+00> : vector<32x64xf32>
    %5 = tpu.matmul %3, %4, %cst_7 {dimension_numbers = #tpu.dot_dimension_numbers<[1], [0], [0], [1], [0, 0, 1, 1], [], []>} : vector<32x288xbf16>, vector<288x64xbf16>, vector<32x64xf32> -> vector<32x64xf32>
    %6 = arith.addf %2, %5 : vector<32x64xf32>
    %7 = arith.truncf %6 : vector<32x64xf32> to vector<32x64xbf16>
    %c0_8 = arith.constant 0 : index
    %c0_9 = arith.constant 0 : index
    %8 = vector.load %arg5[%c0_8, %c0_9] : memref<32x64xbf16, #tpu.memory_space<vmem>>, vector<32x64xbf16>
    tpu.vector_store %arg5[%c0_8, %c0_9], %7 {strides = array<i32>} : memref<32x64xbf16, #tpu.memory_space<vmem>>, vector<32x64xbf16>,
    %9 = arith.extf %7 : vector<32x64xbf16> to vector<32x64xf32>
    %cst_10 = arith.constant dense<0.000000e+00> : vector<64xf32>
    %10 = vector.multi_reduction <add>, %9, %cst_10 [0] : vector<32x64xf32> to vector<64xf32>
    %11 = vector.shape_cast %10 : vector<64xf32> to vector<1x64xf32>
    %12 = arith.mulf %9, %9 : vector<32x64xf32>
    %cst_11 = arith.constant dense<0.000000e+00> : vector<64xf32>
    %13 = vector.multi_reduction <add>, %12, %cst_11 [0] : vector<32x64xf32> to vector<64xf32>
    %14 = vector.shape_cast %13 : vector<64xf32> to vector<1x64xf32>
    %15 = vector.shape_cast %11 : vector<1x64xf32> to vector<1x1x64xf32>
    %c0_12 = arith.constant 0 : index
    %c0_13 = arith.constant 0 : index
    %c0_14 = arith.constant 0 : index
    %16 = vector.load %arg6[%c0_12, %c0_13, %c0_14] : memref<1x1x64xf32, #tpu.memory_space<vmem>>, vector<1x1x64xf32>
    tpu.vector_store %arg6[%c0_12, %c0_13, %c0_14], %15 {strides = array<i32>} : memref<1x1x64xf32, #tpu.memory_space<vmem>>, vector<1x1x64xf32>,
    %17 = vector.shape_cast %14 : vector<1x64xf32> to vector<1x1x64xf32>
    %c0_15 = arith.constant 0 : index
    %c0_16 = arith.constant 0 : index
    %c0_17 = arith.constant 0 : index
    %18 = vector.load %arg7[%c0_15, %c0_16, %c0_17] : memref<1x1x64xf32, #tpu.memory_space<vmem>>, vector<1x1x64xf32>
    tpu.vector_store %arg7[%c0_15, %c0_16, %c0_17], %17 {strides = array<i32>} : memref<1x1x64xf32, #tpu.memory_space<vmem>>, vector<1x1x64xf32>,
    return
  }
  func.func @transform_0(%arg0: i32) -> (i32, i32) {
    %c0_i32 = arith.constant 0 : i32
    %c0_i32_0 = arith.constant 0 : i32
    return %arg0, %c0_i32 : i32, i32
  }
  func.func @transform_1(%arg0: i32) -> (i32, i32) {
    %c0_i32 = arith.constant 0 : i32
    %c0_i32_0 = arith.constant 0 : i32
    %c0_i32_1 = arith.constant 0 : i32
    return %c0_i32, %c0_i32_0 : i32, i32
  }
  func.func @transform_2(%arg0: i32) -> (i32, i32) {
    %c0_i32 = arith.constant 0 : i32
    %c0_i32_0 = arith.constant 0 : i32
    return %arg0, %c0_i32 : i32, i32
  }
  func.func @transform_3(%arg0: i32) -> (i32, i32) {
    %c0_i32 = arith.constant 0 : i32
    %c0_i32_0 = arith.constant 0 : i32
    %c0_i32_1 = arith.constant 0 : i32
    return %c0_i32, %c0_i32_0 : i32, i32
  }
  func.func @transform_4(%arg0: i32) -> (i32, i32) {
    %c0_i32 = arith.constant 0 : i32
    %c0_i32_0 = arith.constant 0 : i32
    return %arg0, %c0_i32 : i32, i32
  }
  func.func @transform_5(%arg0: i32) -> (i32, i32, i32) {
    %c0_i32 = arith.constant 0 : i32
    %c0_i32_0 = arith.constant 0 : i32
    %c0_i32_1 = arith.constant 0 : i32
    return %arg0, %c0_i32, %c0_i32_0 : i32, i32, i32
  }
  func.func @transform_6(%arg0: i32) -> (i32, i32, i32) {
    %c0_i32 = arith.constant 0 : i32
    %c0_i32_0 = arith.constant 0 : i32
    %c0_i32_1 = arith.constant 0 : i32
    return %arg0, %c0_i32, %c0_i32_0 : i32, i32, i32
  }
}

module attributes {stable_mosaic.version = 11 : i64} {
  func.func @_matmul_kernel(%arg0: i32, %arg1: memref<128x144xbf16, #tpu.memory_space<vmem>>, %arg2: memref<144x32xbf16, #tpu.memory_space<vmem>>, %arg3: memref<128x144xbf16, #tpu.memory_space<vmem>>, %arg4: memref<144x32xbf16, #tpu.memory_space<vmem>>, %arg5: memref<128x32xbf16, #tpu.memory_space<vmem>>, %arg6: memref<1x1x32xf32, #tpu.memory_space<vmem>>, %arg7: memref<1x1x32xf32, #tpu.memory_space<vmem>>) attributes {dimension_semantics = [#tpu.dimension_semantics<parallel>], iteration_bounds = array<i64: 1>, scalar_prefetch = 0 : i64, scratch_operands = 0 : i64, tpu.core_type = #tpu.core_type<tc>, window_params = [{transform_indices = @transform_0, window_bounds = array<i64: 128, 144>}, {pipeline_mode = #tpu.pipeline_mode<synchronous>, transform_indices = @transform_1, window_bounds = array<i64: 144, 32>}, {transform_indices = @transform_2, window_bounds = array<i64: 128, 144>}, {pipeline_mode = #tpu.pipeline_mode<synchronous>, transform_indices = @transform_3, window_bounds = array<i64: 144, 32>}, {transform_indices = @transform_4, window_bounds = array<i64: 128, 32>}, {transform_indices = @transform_5, window_bounds = array<i64: 1, 1, 32>}, {transform_indices = @transform_6, window_bounds = array<i64: 1, 1, 32>}]} {
    %c0 = arith.constant 0 : index
    %c0_0 = arith.constant 0 : index
    %0 = vector.load %arg1[%c0, %c0_0] : memref<128x144xbf16, #tpu.memory_space<vmem>>, vector<128x144xbf16>
    %c0_1 = arith.constant 0 : index
    %c0_2 = arith.constant 0 : index
    %1 = vector.load %arg2[%c0_1, %c0_2] : memref<144x32xbf16, #tpu.memory_space<vmem>>, vector<144x32xbf16>
    %cst = arith.constant dense<0.000000e+00> : vector<128x32xf32>
    %2 = tpu.matmul %0, %1, %cst {dimension_numbers = #tpu.dot_dimension_numbers<[1], [0], [0], [1], [0, 0, 1, 1], [], []>} : vector<128x144xbf16>, vector<144x32xbf16>, vector<128x32xf32> -> vector<128x32xf32>
    %c0_3 = arith.constant 0 : index
    %c0_4 = arith.constant 0 : index
    %3 = vector.load %arg3[%c0_3, %c0_4] : memref<128x144xbf16, #tpu.memory_space<vmem>>, vector<128x144xbf16>
    %c0_5 = arith.constant 0 : index
    %c0_6 = arith.constant 0 : index
    %4 = vector.load %arg4[%c0_5, %c0_6] : memref<144x32xbf16, #tpu.memory_space<vmem>>, vector<144x32xbf16>
    %cst_7 = arith.constant dense<0.000000e+00> : vector<128x32xf32>
    %5 = tpu.matmul %3, %4, %cst_7 {dimension_numbers = #tpu.dot_dimension_numbers<[1], [0], [0], [1], [0, 0, 1, 1], [], []>} : vector<128x144xbf16>, vector<144x32xbf16>, vector<128x32xf32> -> vector<128x32xf32>
    %6 = arith.addf %2, %5 : vector<128x32xf32>
    %7 = arith.truncf %6 : vector<128x32xf32> to vector<128x32xbf16>
    %c0_8 = arith.constant 0 : index
    %c0_9 = arith.constant 0 : index
    %8 = vector.load %arg5[%c0_8, %c0_9] : memref<128x32xbf16, #tpu.memory_space<vmem>>, vector<128x32xbf16>
    tpu.vector_store %arg5[%c0_8, %c0_9], %7 {strides = array<i32>} : memref<128x32xbf16, #tpu.memory_space<vmem>>, vector<128x32xbf16>,
    %9 = arith.extf %7 : vector<128x32xbf16> to vector<128x32xf32>
    %cst_10 = arith.constant dense<0.000000e+00> : vector<32xf32>
    %10 = vector.multi_reduction <add>, %9, %cst_10 [0] : vector<128x32xf32> to vector<32xf32>
    %11 = vector.shape_cast %10 : vector<32xf32> to vector<1x32xf32>
    %12 = arith.mulf %9, %9 : vector<128x32xf32>
    %cst_11 = arith.constant dense<0.000000e+00> : vector<32xf32>
    %13 = vector.multi_reduction <add>, %12, %cst_11 [0] : vector<128x32xf32> to vector<32xf32>
    %14 = vector.shape_cast %13 : vector<32xf32> to vector<1x32xf32>
    %15 = vector.shape_cast %11 : vector<1x32xf32> to vector<1x1x32xf32>
    %c0_12 = arith.constant 0 : index
    %c0_13 = arith.constant 0 : index
    %c0_14 = arith.constant 0 : index
    %16 = vector.load %arg6[%c0_12, %c0_13, %c0_14] : memref<1x1x32xf32, #tpu.memory_space<vmem>>, vector<1x1x32xf32>
    tpu.vector_store %arg6[%c0_12, %c0_13, %c0_14], %15 {strides = array<i32>} : memref<1x1x32xf32, #tpu.memory_space<vmem>>, vector<1x1x32xf32>,
    %17 = vector.shape_cast %14 : vector<1x32xf32> to vector<1x1x32xf32>
    %c0_15 = arith.constant 0 : index
    %c0_16 = arith.constant 0 : index
    %c0_17 = arith.constant 0 : index
    %18 = vector.load %arg7[%c0_15, %c0_16, %c0_17] : memref<1x1x32xf32, #tpu.memory_space<vmem>>, vector<1x1x32xf32>
    tpu.vector_store %arg7[%c0_15, %c0_16, %c0_17], %17 {strides = array<i32>} : memref<1x1x32xf32, #tpu.memory_space<vmem>>, vector<1x1x32xf32>,
    return
  }
  func.func @transform_0(%arg0: i32) -> (i32, i32) {
    %c0_i32 = arith.constant 0 : i32
    %c0_i32_0 = arith.constant 0 : i32
    return %arg0, %c0_i32 : i32, i32
  }
  func.func @transform_1(%arg0: i32) -> (i32, i32) {
    %c0_i32 = arith.constant 0 : i32
    %c0_i32_0 = arith.constant 0 : i32
    %c0_i32_1 = arith.constant 0 : i32
    return %c0_i32, %c0_i32_0 : i32, i32
  }
  func.func @transform_2(%arg0: i32) -> (i32, i32) {
    %c0_i32 = arith.constant 0 : i32
    %c0_i32_0 = arith.constant 0 : i32
    return %arg0, %c0_i32 : i32, i32
  }
  func.func @transform_3(%arg0: i32) -> (i32, i32) {
    %c0_i32 = arith.constant 0 : i32
    %c0_i32_0 = arith.constant 0 : i32
    %c0_i32_1 = arith.constant 0 : i32
    return %c0_i32, %c0_i32_0 : i32, i32
  }
  func.func @transform_4(%arg0: i32) -> (i32, i32) {
    %c0_i32 = arith.constant 0 : i32
    %c0_i32_0 = arith.constant 0 : i32
    return %arg0, %c0_i32 : i32, i32
  }
  func.func @transform_5(%arg0: i32) -> (i32, i32, i32) {
    %c0_i32 = arith.constant 0 : i32
    %c0_i32_0 = arith.constant 0 : i32
    %c0_i32_1 = arith.constant 0 : i32
    return %arg0, %c0_i32, %c0_i32_0 : i32, i32, i32
  }
  func.func @transform_6(%arg0: i32) -> (i32, i32, i32) {
    %c0_i32 = arith.constant 0 : i32
    %c0_i32_0 = arith.constant 0 : i32
    %c0_i32_1 = arith.constant 0 : i32
    return %arg0, %c0_i32, %c0_i32_0 : i32, i32, i32
  }
}

module attributes {stable_mosaic.version = 11 : i64} {
  func.func @_matmul_kernel(%arg0: i32, %arg1: memref<256x72xbf16, #tpu.memory_space<vmem>>, %arg2: memref<72x12xbf16, #tpu.memory_space<vmem>>, %arg3: memref<256x72xbf16, #tpu.memory_space<vmem>>, %arg4: memref<72x12xbf16, #tpu.memory_space<vmem>>, %arg5: memref<1x12xf32, #tpu.memory_space<vmem>>, %arg6: memref<256x12xf32, #tpu.memory_space<vmem>>) attributes {dimension_semantics = [#tpu.dimension_semantics<parallel>], iteration_bounds = array<i64: 2>, scalar_prefetch = 0 : i64, scratch_operands = 0 : i64, tpu.core_type = #tpu.core_type<tc>, window_params = [{transform_indices = @transform_0, window_bounds = array<i64: 256, 72>}, {pipeline_mode = #tpu.pipeline_mode<synchronous>, transform_indices = @transform_1, window_bounds = array<i64: 72, 12>}, {transform_indices = @transform_2, window_bounds = array<i64: 256, 72>}, {pipeline_mode = #tpu.pipeline_mode<synchronous>, transform_indices = @transform_3, window_bounds = array<i64: 72, 12>}, {pipeline_mode = #tpu.pipeline_mode<synchronous>, transform_indices = @transform_4, window_bounds = array<i64: 1, 12>}, {transform_indices = @transform_5, window_bounds = array<i64: 256, 12>}]} {
    %c0 = arith.constant 0 : index
    %c0_0 = arith.constant 0 : index
    %0 = vector.load %arg1[%c0, %c0_0] : memref<256x72xbf16, #tpu.memory_space<vmem>>, vector<256x72xbf16>
    %c0_1 = arith.constant 0 : index
    %c0_2 = arith.constant 0 : index
    %1 = vector.load %arg2[%c0_1, %c0_2] : memref<72x12xbf16, #tpu.memory_space<vmem>>, vector<72x12xbf16>
    %cst = arith.constant dense<0.000000e+00> : vector<256x12xf32>
    %2 = tpu.matmul %0, %1, %cst {dimension_numbers = #tpu.dot_dimension_numbers<[1], [0], [0], [1], [0, 0, 1, 1], [], []>} : vector<256x72xbf16>, vector<72x12xbf16>, vector<256x12xf32> -> vector<256x12xf32>
    %c0_3 = arith.constant 0 : index
    %c0_4 = arith.constant 0 : index
    %3 = vector.load %arg3[%c0_3, %c0_4] : memref<256x72xbf16, #tpu.memory_space<vmem>>, vector<256x72xbf16>
    %c0_5 = arith.constant 0 : index
    %c0_6 = arith.constant 0 : index
    %4 = vector.load %arg4[%c0_5, %c0_6] : memref<72x12xbf16, #tpu.memory_space<vmem>>, vector<72x12xbf16>
    %cst_7 = arith.constant dense<0.000000e+00> : vector<256x12xf32>
    %5 = tpu.matmul %3, %4, %cst_7 {dimension_numbers = #tpu.dot_dimension_numbers<[1], [0], [0], [1], [0, 0, 1, 1], [], []>} : vector<256x72xbf16>, vector<72x12xbf16>, vector<256x12xf32> -> vector<256x12xf32>
    %6 = arith.addf %2, %5 : vector<256x12xf32>
    %c0_8 = arith.constant 0 : index
    %c0_9 = arith.constant 0 : index
    %7 = vector.load %arg5[%c0_8, %c0_9] : memref<1x12xf32, #tpu.memory_space<vmem>>, vector<1x12xf32>
    %8 = vector.broadcast %7 : vector<1x12xf32> to vector<256x12xf32>
    %9 = arith.addf %6, %8 : vector<256x12xf32>
    %10 = math.tanh %9 : vector<256x12xf32>
    %c0_10 = arith.constant 0 : index
    %c0_11 = arith.constant 0 : index
    %11 = vector.load %arg6[%c0_10, %c0_11] : memref<256x12xf32, #tpu.memory_space<vmem>>, vector<256x12xf32>
    tpu.vector_store %arg6[%c0_10, %c0_11], %10 {strides = array<i32>} : memref<256x12xf32, #tpu.memory_space<vmem>>, vector<256x12xf32>,
    return
  }
  func.func @transform_0(%arg0: i32) -> (i32, i32) {
    %c0_i32 = arith.constant 0 : i32
    %c0_i32_0 = arith.constant 0 : i32
    return %arg0, %c0_i32 : i32, i32
  }
  func.func @transform_1(%arg0: i32) -> (i32, i32) {
    %c0_i32 = arith.constant 0 : i32
    %c0_i32_0 = arith.constant 0 : i32
    %c0_i32_1 = arith.constant 0 : i32
    return %c0_i32, %c0_i32_0 : i32, i32
  }
  func.func @transform_2(%arg0: i32) -> (i32, i32) {
    %c0_i32 = arith.constant 0 : i32
    %c0_i32_0 = arith.constant 0 : i32
    return %arg0, %c0_i32 : i32, i32
  }
  func.func @transform_3(%arg0: i32) -> (i32, i32) {
    %c0_i32 = arith.constant 0 : i32
    %c0_i32_0 = arith.constant 0 : i32
    %c0_i32_1 = arith.constant 0 : i32
    return %c0_i32, %c0_i32_0 : i32, i32
  }
  func.func @transform_4(%arg0: i32) -> (i32, i32) {
    %c0_i32 = arith.constant 0 : i32
    %c0_i32_0 = arith.constant 0 : i32
    %c0_i32_1 = arith.constant 0 : i32
    return %c0_i32, %c0_i32_0 : i32, i32
  }
  func.func @transform_5(%arg0: i32) -> (i32, i32) {
    %c0_i32 = arith.constant 0 : i32
    %c0_i32_0 = arith.constant 0 : i32
    return %arg0, %c0_i32 : i32, i32
  }
}

</mosaic_0001>

<llo_original>
// kernel: _lambda_.10
$region0: #{_lambda_.10}
  #allocation0 [shape = 'u32[]', space=smem, size = 0x4, offset = 0x4, fixed_abs, tag = 'smem constant byte address 0x4 - core index']
  #allocation1 [shape = 'u32[144,128]{1,0:T(1,128)}', space=vmem, size = 0x12000, scoped, tag = 'internal scratch']
  %s0 = inlined_call_operand.vmem [shape: bf16[512,48], index: 0, kind: input, shape index: {}]
  %s1 = inlined_call_operand.vmem [shape: bf16[48,8], index: 1, kind: input, shape index: {}]
  %s2 = inlined_call_operand.vmem [shape: bf16[512,8], index: 2, kind: output, shape index: {}]
  %s3 = sld [smem:[#allocation0]]
  $region41: #{_lambda_.10} parent=0
    _
  %s5 = ssub.s32 1, %s3
  %s6 = scalar_select 0, %s5, %s3
  loop: start=0, step=1, limit=4
  $region2: #{_lambda_.10} parent=0 // loop_pre_header
    _
  $region3: #{_lambda_.10} parent=0 // loop_header
    %s8 = sphi 0, %s12
    %p9 = scmp.ge.s32.totalorder %s8, 4
    %s18 = sphi 0, %s20
    %s21 = sphi 0, %s18
    %s22 = sphi 0, %s21
    %s38 = sphi 0, %s22
    %s42 = sphi 0, %s42
    %s44 = sphi 0, %s42
    %s45 = sphi 0, %s44
    %s59 = sphi 0, %s45
    %s65 = sphi 0, %s67
    %s68 = sphi 0, %s65
    %s69 = sphi 0, %s68
    %s85 = sphi 0, %s69
  $region4: #{_lambda_.10} parent=0 // loop_header_branch
    %11 = sbr.rel (%p9) target = $region8
  $region5: #{_lambda_.10} parent=0 // loop_body
    %s13 = ssub.s32 %s8, 1
    %s14 = ssub.s32 %s8, 2
    %s15 = sadd.s32 %s8, 1
    %s16 = ssub.s32 %s8, %s15
    %p17 = scmp.eq.s32.totalorder %s16, 0
    %s19 = sadd.s32 %s18, 1
    %s20 = scalar_select %p17, %s18, %s19
    %p23 = pneg %p17
    %p24 = scmp.eq.s32.totalorder %s8, 1
    %p25 = por %p23, %p24
    %p26 = scmp.ne.s32.totalorder %s18, %s21
    %p27 = scmp.eq.s32.totalorder %s8, 0
    %p28 = por %p26, %p27
    %p29 = scmp.ne.s32.totalorder %s18, %s21
    %p30 = scmp.eq.s32.totalorder %s13, 1
    %p31 = por %p29, %p30
    %p32 = scmp.ne.s32.totalorder %s21, %s22
    %p33 = scmp.eq.s32.totalorder %s13, 0
    %p34 = por %p32, %p33
    %p35 = scmp.ne.s32.totalorder %s21, %s22
    %p36 = scmp.eq.s32.totalorder %s14, 1
    %p37 = por %p35, %p36
    %p39 = scmp.ne.s32.totalorder %s22, %s38
    %p40 = scmp.eq.s32.totalorder %s14, 0
    %p41 = por %p39, %p40
    %s43 = sadd.s32 %s42, 1
    %p46 = scmp.eq.s32.totalorder %s8, 1
    %p47 = scmp.ne.s32.totalorder %s42, %s44
    %p48 = scmp.eq.s32.totalorder %s8, 0
    %p49 = por %p47, %p48
    %p50 = scmp.ne.s32.totalorder %s42, %s44
    %p51 = scmp.eq.s32.totalorder %s13, 1
    %p52 = por %p50, %p51
    %p53 = scmp.ne.s32.totalorder %s44, %s45
    %p54 = scmp.eq.s32.totalorder %s13, 0
    %p55 = por %p53, %p54
    %p56 = scmp.ne.s32.totalorder %s44, %s45
    %p57 = scmp.eq.s32.totalorder %s14, 1
    %p58 = por %p56, %p57
    %p60 = scmp.ne.s32.totalorder %s45, %s59
    %p61 = scmp.eq.s32.totalorder %s14, 0
    %p62 = por %p60, %p61
    %s63 = ssub.s32 %s8, %s15
    %p64 = scmp.eq.s32.totalorder %s63, 0
    %s66 = sadd.s32 %s65, 1
    %s67 = scalar_select %p64, %s65, %s66
    %p70 = pneg %p64
    %p71 = scmp.eq.s32.totalorder %s8, 1
    %p72 = por %p70, %p71
    %p73 = scmp.ne.s32.totalorder %s65, %s68
    %p74 = scmp.eq.s32.totalorder %s8, 0
    %p75 = por %p73, %p74
    %p76 = scmp.ne.s32.totalorder %s65, %s68
    %p77 = scmp.eq.s32.totalorder %s13, 1
    %p78 = por %p76, %p77
    %p79 = scmp.ne.s32.totalorder %s68, %s69
    %p80 = scmp.eq.s32.totalorder %s13, 0
    %p81 = por %p79, %p80
    %p82 = scmp.ne.s32.totalorder %s68, %s69
    %p83 = scmp.eq.s32.totalorder %s14, 1
    %p84 = por %p82, %p83
    %p86 = scmp.ne.s32.totalorder %s69, %s85
    %p87 = scmp.eq.s32.totalorder %s14, 0
    %p88 = por %p86, %p87
    %p89 = scmp.le.s32.totalorder 1, %s8
    %p90 = scmp.lt.s32.totalorder %s8, 3
    %p91 = pnand %p89, %p90
    %p92 = pneg %p91
    // Predicated region
    $region9: #{_lambda_.10} parent=5 // pred_check
      _
    $region10: #{_lambda_.10} parent=5 // pred_check_branch
      %94 = sbr.rel (%p91) target = $region12
    $region11: #{_lambda_.10} parent=5 // pred_region
      %s95 = ssub.s32 %s8, 1
      // Predicated region
      $region13: #{_lambda_.10} parent=11 // pred_check
        %p96 = pneg %p55
      $region14: #{_lambda_.10} parent=11 // pred_check_branch
        %98 = sbr.rel (%p96) target = $region16
      $region15: #{_lambda_.10} parent=11 // pred_region
        _
      $region16: #{_lambda_.10} parent=11 // pred_fallthru
        _
    $region12: #{_lambda_.10} parent=5 // pred_fallthru
      _
    %p99 = scmp.lt.s32.totalorder %s8, 2
    // Predicated region
    $region17: #{_lambda_.10} parent=5 // pred_check
      %p100 = pneg %p99
    $region18: #{_lambda_.10} parent=5 // pred_check_branch
      %102 = sbr.rel (%p100) target = $region20
    $region19: #{_lambda_.10} parent=5 // pred_region
      // Predicated region
      $region21: #{_lambda_.10} parent=19 // pred_check
        %p103 = pneg %p28
      $region22: #{_lambda_.10} parent=19 // pred_check_branch
        %105 = sbr.rel (%p103) target = $region24
      $region23: #{_lambda_.10} parent=19 // pred_region
        %s106 = smul.u32 32, %s8
        %p107 = scmp.lt.s32.totalorder %s106, 63
        %s108 = scalar_select %p107, %s106, 63
        %s109 = smul.addr %s108, 4
        %s110 = scalar_lea.vmem %s0, %s109
        %s111 = smul.u32 32, %s8
      $region24: #{_lambda_.10} parent=19 // pred_fallthru
        _
    $region20: #{_lambda_.10} parent=5 // pred_fallthru
      _
    %p112 = scmp.le.s32.totalorder 1, %s8
    %p113 = scmp.lt.s32.totalorder %s8, 3
    %p114 = pnand %p112, %p113
    %p115 = pneg %p114
    // Predicated region
    $region25: #{_lambda_.10} parent=5 // pred_check
      _
    $region26: #{_lambda_.10} parent=5 // pred_check_branch
      %117 = sbr.rel (%p114) target = $region28
    $region27: #{_lambda_.10} parent=5 // pred_region
      %s118 = ssub.s32 %s8, 1
      %s119 = smul.u32 32, %s13
      %p120 = scmp.lt.s32.totalorder %s119, 63
      %s121 = scalar_select %p120, %s119, 63
      %s122 = smul.addr %s121, 4
      %s123 = scalar_lea.vmem %s0, %s122
      %p124 = pneg %p34
      %p125 = pneg %p31
      %p126 = pneg %p55
      %p127 = pneg %p52
      %p128 = pneg %p81
      %p129 = pneg %p78
      %s130 = smul.u32 32, %s13
      %p131 = scmp.lt.s32.totalorder %s130, 63
      %s132 = scalar_select %p131, %s130, 63
      %s133 = smul.addr %s132, 4
      %s134 = scalar_lea.vmem %s2, %s133
      %s135 = smul.u32 32, %s13
      %p136 = scmp.lt.s32.totalorder %s135, 63
      %s137 = scalar_select %p136, %s135, 63
      %s138 = smul.addr %s137, 4
      %s139 = scalar_lea.vmem %s0, %s138
      %s140 = smul.u32 32, %s13
      %s141 = smul.u32 32, %s13
      %p142 = scmp.lt.s32.totalorder %s141, 63
      %s143 = scalar_select %p142, %s141, 63
      %s144 = smul.addr %s143, 4
      %s145 = scalar_lea.vmem %s2, %s144
      %s146 = smul.u32 32, %s13
      %v148 = vld [vmem:[%s139] sm:$0xf]
      %v149 = vld [vmem:[%s139 + $0x4] sm:$0xf]
      %v150 = vld [vmem:[%s139 + $0x8] sm:$0xf]
      %v151 = vld [vmem:[%s139 + $0xc] sm:$0xf]
      %v152 = vld [vmem:[%s139 + $0x10] sm:$0xf]
      %v153 = vld [vmem:[%s139 + $0x14] sm:$0xf]
      %v154 = vld [vmem:[%s139 + $0x18] sm:$0xf]
      %v155 = vld [vmem:[%s139 + $0x1c] sm:$0xf]
      %v156 = vld [vmem:[%s139 + $0x20] sm:$0xf]
      %v157 = vld [vmem:[%s139 + $0x24] sm:$0xf]
      %v158 = vld [vmem:[%s139 + $0x28] sm:$0xf]
      %v159 = vld [vmem:[%s139 + $0x2c] sm:$0xf]
      %v160 = vld [vmem:[%s139 + $0x30] sm:$0xf]
      %v161 = vld [vmem:[%s139 + $0x34] sm:$0xf]
      %v162 = vld [vmem:[%s139 + $0x38] sm:$0xf]
      %v163 = vld [vmem:[%s139 + $0x3c] sm:$0xf]
      %v164 = vld [vmem:[%s139 + $0x40] sm:$0xf]
      %v165 = vld [vmem:[%s139 + $0x44] sm:$0xf]
      %v166 = vld [vmem:[%s139 + $0x48] sm:$0xf]
      %v167 = vld [vmem:[%s139 + $0x4c] sm:$0xf]
      %v168 = vld [vmem:[%s139 + $0x50] sm:$0xf]
      %v169 = vld [vmem:[%s139 + $0x54] sm:$0xf]
      %v170 = vld [vmem:[%s139 + $0x58] sm:$0xf]
      %v171 = vld [vmem:[%s139 + $0x5c] sm:$0xf]
      %v172 = vld [vmem:[%s139 + $0x60] sm:$0xf]
      %v173 = vld [vmem:[%s139 + $0x64] sm:$0xf]
      %v174 = vld [vmem:[%s139 + $0x68] sm:$0xf]
      %v175 = vld [vmem:[%s139 + $0x6c] sm:$0xf]
      %v176 = vld [vmem:[%s139 + $0x70] sm:$0xf]
      %v177 = vld [vmem:[%s139 + $0x74] sm:$0xf]
      %v178 = vld [vmem:[%s139 + $0x78] sm:$0xf]
      %v179 = vld [vmem:[%s139 + $0x7c] sm:$0xf]
      %v180 = vld [vmem:[%s1] sm:$0xf]
      %v181 = vld [vmem:[%s1 + $0x4] sm:$0xf]
      %v182 = vld [vmem:[%s1 + $0x8] sm:$0xf]
      %v183 = vld [vmem:[%s1 + $0xc] sm:$0xf]
      %v184 = vld [vmem:[%s1 + $0x10] sm:$0xf]
      %v185 = vld [vmem:[%s1 + $0x14] sm:$0xf]
      %v218 = vunpack.c.l.b16 %v148
      %v219 = vunpack.c.l.b16 %v149
      %v220 = vunpack.c.l.b16 %v150
      %v221 = vunpack.c.l.b16 %v151
      %v222 = vunpack.c.l.b16 %v152
      %v223 = vunpack.c.l.b16 %v153
      %v224 = vunpack.c.l.b16 %v154
      %v225 = vunpack.c.l.b16 %v155
      %v226 = vunpack.c.l.b16 %v156
      %v227 = vunpack.c.l.b16 %v157
      %v228 = vunpack.c.l.b16 %v158
      %v229 = vunpack.c.l.b16 %v159
      %v230 = vunpack.c.l.b16 %v160
      %v231 = vunpack.c.l.b16 %v161
      %v232 = vunpack.c.l.b16 %v162
      %v233 = vunpack.c.l.b16 %v163
      %v234 = vunpack.c.l.b16 %v164
      %v235 = vunpack.c.l.b16 %v165
      %v236 = vunpack.c.l.b16 %v166
      %v237 = vunpack.c.l.b16 %v167
      %v238 = vunpack.c.l.b16 %v168
      %v239 = vunpack.c.l.b16 %v169
      %v240 = vunpack.c.l.b16 %v170
      %v241 = vunpack.c.l.b16 %v171
      %v242 = vunpack.c.l.b16 %v172
      %v243 = vunpack.c.l.b16 %v173
      %v244 = vunpack.c.l.b16 %v174
      %v245 = vunpack.c.l.b16 %v175
      %v246 = vunpack.c.l.b16 %v176
      %v247 = vunpack.c.l.b16 %v177
      %v248 = vunpack.c.l.b16 %v178
      %v249 = vunpack.c.l.b16 %v179
      %v250 = vpack.c.b16 %v219, %v218
      %v251 = vpack.c.b16 %v221, %v220
      %v252 = vpack.c.b16 %v223, %v222
      %v253 = vpack.c.b16 %v225, %v224
      %v254 = vpack.c.b16 %v227, %v226
      %v255 = vpack.c.b16 %v229, %v228
      %v256 = vpack.c.b16 %v231, %v230
      %v257 = vpack.c.b16 %v233, %v232
      %v258 = vpack.c.b16 %v235, %v234
      %v259 = vpack.c.b16 %v237, %v236
      %v260 = vpack.c.b16 %v239, %v238
      %v261 = vpack.c.b16 %v241, %v240
      %v262 = vpack.c.b16 %v243, %v242
      %v263 = vpack.c.b16 %v245, %v244
      %v264 = vpack.c.b16 %v247, %v246
      %v265 = vpack.c.b16 %v249, %v248
      %v272 = vunpack.c.l.b16 %v180
      %v273 = vunpack.c.l.b16 %v181
      %v274 = vunpack.c.l.b16 %v182
      %v275 = vunpack.c.l.b16 %v183
      %v276 = vunpack.c.l.b16 %v184
      %v277 = vunpack.c.l.b16 %v185
      %v278 = vpack.c.b16 %v273, %v272
      %v279 = vpack.c.b16 %v275, %v274
      %v280 = vpack.c.b16 %v277, %v276
      %vm284 = vcmask 392192
      %v286 = vsel %vm284, %v250, 0
      %v289 = vsel %vm284, %v251, 0
      %v292 = vsel %vm284, %v252, 0
      %v295 = vsel %vm284, %v253, 0
      %v298 = vsel %vm284, %v254, 0
      %v301 = vsel %vm284, %v255, 0
      %v304 = vsel %vm284, %v256, 0
      %v307 = vsel %vm284, %v257, 0
      %v310 = vsel %vm284, %v258, 0
      %v313 = vsel %vm284, %v259, 0
      %v316 = vsel %vm284, %v260, 0
      %v319 = vsel %vm284, %v261, 0
      %v322 = vsel %vm284, %v262, 0
      %v325 = vsel %vm284, %v263, 0
      %v328 = vsel %vm284, %v264, 0
      %v331 = vsel %vm284, %v265, 0
      %333 = vmatprep.subr.bf16.mxu0 0
      %334 = vmatpush1.bf16.msra.mxu0 0
      %335 = vmatprep.subr.bf16.mxu0 0
      %336 = vmatpush1.bf16.msra.mxu0 0
      %337 = vmatprep.subr.bf16.mxu0 0
      %338 = vmatpush1.bf16.msra.mxu0 0
      %339 = vmatprep.subr.bf16.mxu0 0
      %340 = vmatpush1.bf16.msra.mxu0 0
      %341 = vmatprep.subr.bf16.mxu0 0
      %342 = vmatpush1.bf16.msra.mxu0 0
      %343 = vmatprep.subr.bf16.mxu0 0
      %344 = vmatpush1.bf16.msra.mxu0 %v280
      %345 = vmatprep.subr.bf16.mxu0 0
      %346 = vmatpush1.bf16.msra.mxu0 %v279
      %347 = vmatprep.subr.bf16.mxu0 0
      %348 = vmatpush1.bf16.msra.mxu0 %v278
      %349 = vmatprep.subr.bf16.mxu0 0
      %350 = vmatpush2.bf16.msra.mxu0 0
      %351 = vmatprep.subr.bf16.mxu0 0
      %352 = vmatpush2.bf16.msra.mxu0 0
      %353 = vmatprep.subr.bf16.mxu0 0
      %354 = vmatpush2.bf16.msra.mxu0 0
      %355 = vmatprep.subr.bf16.mxu0 0
      %356 = vmatpush2.bf16.msra.mxu0 0
      %357 = vmatprep.subr.bf16.mxu0 0
      %358 = vmatpush2.bf16.msra.mxu0 0
      %359 = vmatprep.subr.bf16.mxu0 0
      %360 = vmatpush2.bf16.msra.mxu0 0
      %361 = vmatprep.subr.bf16.mxu0 0
      %362 = vmatpush2.bf16.msra.mxu0 0
      %363 = vmatprep.subr.bf16.mxu0 0
      %364 = vmatpush2.bf16.msra.mxu0 0
      %365 = vmatprep.mubr.bf16.mxu0 0
      %366 = vmatmul.mubr.bf16.gmra.mxu0 %v286
      %v367 = vpop.f32.mrf.mxu0
      %v368 = vadd.f32 0.0, %v367
      %v369 = vpop.f32.mrf.mxu0
      %v370 = vpop.f32.mrf.mxu0
      %v371 = vadd.f32 0.0, %v370
      %v372 = vpop.f32.mrf.mxu0
      %373 = vmatprep.mubr.bf16.mxu0 0
      %374 = vmatmul.mubr.bf16.gmra.mxu0 %v289
      %v375 = vpop.f32.mrf.mxu0
      %v376 = vadd.f32 0.0, %v375
      %v377 = vpop.f32.mrf.mxu0
      %v378 = vpop.f32.mrf.mxu0
      %v379 = vadd.f32 0.0, %v378
      %v380 = vpop.f32.mrf.mxu0
      %381 = vmatprep.mubr.bf16.mxu0 0
      %382 = vmatmul.mubr.bf16.gmra.mxu0 %v292
      %v383 = vpop.f32.mrf.mxu0
      %v384 = vadd.f32 0.0, %v383
      %v385 = vpop.f32.mrf.mxu0
      %v386 = vpop.f32.mrf.mxu0
      %v387 = vadd.f32 0.0, %v386
      %v388 = vpop.f32.mrf.mxu0
      %389 = vmatprep.mubr.bf16.mxu0 0
      %390 = vmatmul.mubr.bf16.gmra.mxu0 %v295
      %v391 = vpop.f32.mrf.mxu0
      %v392 = vadd.f32 0.0, %v391
      %v393 = vpop.f32.mrf.mxu0
      %v394 = vpop.f32.mrf.mxu0
      %v395 = vadd.f32 0.0, %v394
      %v396 = vpop.f32.mrf.mxu0
      %397 = vmatprep.mubr.bf16.mxu0 0
      %398 = vmatmul.mubr.bf16.gmra.mxu0 %v298
      %v399 = vpop.f32.mrf.mxu0
      %v400 = vadd.f32 0.0, %v399
      %v401 = vpop.f32.mrf.mxu0
      %v402 = vpop.f32.mrf.mxu0
      %v403 = vadd.f32 0.0, %v402
      %v404 = vpop.f32.mrf.mxu0
      %405 = vmatprep.mubr.bf16.mxu0 0
      %406 = vmatmul.mubr.bf16.gmra.mxu0 %v301
      %v407 = vpop.f32.mrf.mxu0
      %v408 = vadd.f32 0.0, %v407
      %v409 = vpop.f32.mrf.mxu0
      %v410 = vpop.f32.mrf.mxu0
      %v411 = vadd.f32 0.0, %v410
      %v412 = vpop.f32.mrf.mxu0
      %413 = vmatprep.mubr.bf16.mxu0 0
      %414 = vmatmul.mubr.bf16.gmra.mxu0 %v304
      %v415 = vpop.f32.mrf.mxu0
      %v416 = vadd.f32 0.0, %v415
      %v417 = vpop.f32.mrf.mxu0
      %v418 = vpop.f32.mrf.mxu0
      %v419 = vadd.f32 0.0, %v418
      %v420 = vpop.f32.mrf.mxu0
      %421 = vmatprep.mubr.bf16.mxu0 0
      %422 = vmatmul.mubr.bf16.gmra.mxu0 %v307
      %v423 = vpop.f32.mrf.mxu0
      %v424 = vadd.f32 0.0, %v423
      %v425 = vpop.f32.mrf.mxu0
      %v426 = vpop.f32.mrf.mxu0
      %v427 = vadd.f32 0.0, %v426
      %v428 = vpop.f32.mrf.mxu0
      %429 = vmatprep.mubr.bf16.mxu0 0
      %430 = vmatmul.mubr.bf16.gmra.mxu0 %v310
      %v431 = vpop.f32.mrf.mxu0
      %v432 = vadd.f32 0.0, %v431
      %v433 = vpop.f32.mrf.mxu0
      %v434 = vpop.f32.mrf.mxu0
      %v435 = vadd.f32 0.0, %v434
      %v436 = vpop.f32.mrf.mxu0
      %437 = vmatprep.mubr.bf16.mxu0 0
      %438 = vmatmul.mubr.bf16.gmra.mxu0 %v313
      %v439 = vpop.f32.mrf.mxu0
      %v440 = vadd.f32 0.0, %v439
      %v441 = vpop.f32.mrf.mxu0
      %v442 = vpop.f32.mrf.mxu0
      %v443 = vadd.f32 0.0, %v442
      %v444 = vpop.f32.mrf.mxu0
      %445 = vmatprep.mubr.bf16.mxu0 0
      %446 = vmatmul.mubr.bf16.gmra.mxu0 %v316
      %v447 = vpop.f32.mrf.mxu0
      %v448 = vadd.f32 0.0, %v447
      %v449 = vpop.f32.mrf.mxu0
      %v450 = vpop.f32.mrf.mxu0
      %v451 = vadd.f32 0.0, %v450
      %v452 = vpop.f32.mrf.mxu0
      %453 = vmatprep.mubr.bf16.mxu0 0
      %454 = vmatmul.mubr.bf16.gmra.mxu0 %v319
      %v455 = vpop.f32.mrf.mxu0
      %v456 = vadd.f32 0.0, %v455
      %v457 = vpop.f32.mrf.mxu0
      %v458 = vpop.f32.mrf.mxu0
      %v459 = vadd.f32 0.0, %v458
      %v460 = vpop.f32.mrf.mxu0
      %461 = vmatprep.mubr.bf16.mxu0 0
      %462 = vmatmul.mubr.bf16.gmra.mxu0 %v322
      %v463 = vpop.f32.mrf.mxu0
      %v464 = vadd.f32 0.0, %v463
      %v465 = vpop.f32.mrf.mxu0
      %v466 = vpop.f32.mrf.mxu0
      %v467 = vadd.f32 0.0, %v466
      %v468 = vpop.f32.mrf.mxu0
      %469 = vmatprep.mubr.bf16.mxu0 0
      %470 = vmatmul.mubr.bf16.gmra.mxu0 %v325
      %v471 = vpop.f32.mrf.mxu0
      %v472 = vadd.f32 0.0, %v471
      %v473 = vpop.f32.mrf.mxu0
      %v474 = vpop.f32.mrf.mxu0
      %v475 = vadd.f32 0.0, %v474
      %v476 = vpop.f32.mrf.mxu0
      %477 = vmatprep.mubr.bf16.mxu0 0
      %478 = vmatmul.mubr.bf16.gmra.mxu0 %v328
      %v479 = vpop.f32.mrf.mxu0
      %v480 = vadd.f32 0.0, %v479
      %v481 = vpop.f32.mrf.mxu0
      %v482 = vpop.f32.mrf.mxu0
      %v483 = vadd.f32 0.0, %v482
      %v484 = vpop.f32.mrf.mxu0
      %485 = vmatprep.mubr.bf16.mxu0 0
      %486 = vmatmul.mubr.bf16.gmra.mxu0 %v331
      %v487 = vpop.f32.mrf.mxu0
      %v488 = vadd.f32 0.0, %v487
      %v489 = vpop.f32.mrf.mxu0
      %v490 = vpop.f32.mrf.mxu0
      %v491 = vadd.f32 0.0, %v490
      %v492 = vpop.f32.mrf.mxu0
      %493 = vdwg.mxu0
      %v494 = vpack.c.bf16 %v371, %v368
      %v495 = vpack.c.bf16 %v379, %v376
      %v496 = vpack.c.bf16 %v387, %v384
      %v497 = vpack.c.bf16 %v395, %v392
      %v498 = vpack.c.bf16 %v403, %v400
      %v499 = vpack.c.bf16 %v411, %v408
      %v500 = vpack.c.bf16 %v419, %v416
      %v501 = vpack.c.bf16 %v427, %v424
      %v502 = vpack.c.bf16 %v435, %v432
      %v503 = vpack.c.bf16 %v443, %v440
      %v504 = vpack.c.bf16 %v451, %v448
      %v505 = vpack.c.bf16 %v459, %v456
      %v506 = vpack.c.bf16 %v467, %v464
      %v507 = vpack.c.bf16 %v475, %v472
      %v508 = vpack.c.bf16 %v483, %v480
      %v509 = vpack.c.bf16 %v491, %v488
      %v526 = vunpack.c.l.b16 %v494
      %v527 = vunpack.c.h.b16 %v494
      %v528 = vunpack.c.l.b16 %v495
      %v529 = vunpack.c.h.b16 %v495
      %v530 = vunpack.c.l.b16 %v496
      %v531 = vunpack.c.h.b16 %v496
      %v532 = vunpack.c.l.b16 %v497
      %v533 = vunpack.c.h.b16 %v497
      %v534 = vunpack.c.l.b16 %v498
      %v535 = vunpack.c.h.b16 %v498
      %v536 = vunpack.c.l.b16 %v499
      %v537 = vunpack.c.h.b16 %v499
      %v538 = vunpack.c.l.b16 %v500
      %v539 = vunpack.c.h.b16 %v500
      %v540 = vunpack.c.l.b16 %v501
      %v541 = vunpack.c.h.b16 %v501
      %v542 = vunpack.c.l.b16 %v502
      %v543 = vunpack.c.h.b16 %v502
      %v544 = vunpack.c.l.b16 %v503
      %v545 = vunpack.c.h.b16 %v503
      %v546 = vunpack.c.l.b16 %v504
      %v547 = vunpack.c.h.b16 %v504
      %v548 = vunpack.c.l.b16 %v505
      %v549 = vunpack.c.h.b16 %v505
      %v550 = vunpack.c.l.b16 %v506
      %v551 = vunpack.c.h.b16 %v506
      %v552 = vunpack.c.l.b16 %v507
      %v553 = vunpack.c.h.b16 %v507
      %v554 = vunpack.c.l.b16 %v508
      %v555 = vunpack.c.h.b16 %v508
      %v556 = vunpack.c.l.b16 %v509
      %v557 = vunpack.c.h.b16 %v509
      %v558 = vpack.c.b16 %v526, %v526
      %v559 = vpack.c.b16 %v527, %v527
      %v560 = vpack.c.b16 %v528, %v528
      %v561 = vpack.c.b16 %v529, %v529
      %v562 = vpack.c.b16 %v530, %v530
      %v563 = vpack.c.b16 %v531, %v531
      %v564 = vpack.c.b16 %v532, %v532
      %v565 = vpack.c.b16 %v533, %v533
      %v566 = vpack.c.b16 %v534, %v534
      %v567 = vpack.c.b16 %v535, %v535
      %v568 = vpack.c.b16 %v536, %v536
      %v569 = vpack.c.b16 %v537, %v537
      %v570 = vpack.c.b16 %v538, %v538
      %v571 = vpack.c.b16 %v539, %v539
      %v572 = vpack.c.b16 %v540, %v540
      %v573 = vpack.c.b16 %v541, %v541
      %v574 = vpack.c.b16 %v542, %v542
      %v575 = vpack.c.b16 %v543, %v543
      %v576 = vpack.c.b16 %v544, %v544
      %v577 = vpack.c.b16 %v545, %v545
      %v578 = vpack.c.b16 %v546, %v546
      %v579 = vpack.c.b16 %v547, %v547
      %v580 = vpack.c.b16 %v548, %v548
      %v581 = vpack.c.b16 %v549, %v549
      %v582 = vpack.c.b16 %v550, %v550
      %v583 = vpack.c.b16 %v551, %v551
      %v584 = vpack.c.b16 %v552, %v552
      %v585 = vpack.c.b16 %v553, %v553
      %v586 = vpack.c.b16 %v554, %v554
      %v587 = vpack.c.b16 %v555, %v555
      %v588 = vpack.c.b16 %v556, %v556
      %v589 = vpack.c.b16 %v557, %v557
      %vm622 = vcmask 60416
      %623 = vst.msk [vmem:[%s145] sm:$0xf] %vm622, %v558
      %624 = vst.msk [vmem:[%s145 + $0x4] sm:$0xf] %vm622, %v559
      %625 = vst.msk [vmem:[%s145 + $0x8] sm:$0xf] %vm622, %v560
      %626 = vst.msk [vmem:[%s145 + $0xc] sm:$0xf] %vm622, %v561
      %627 = vst.msk [vmem:[%s145 + $0x10] sm:$0xf] %vm622, %v562
      %628 = vst.msk [vmem:[%s145 + $0x14] sm:$0xf] %vm622, %v563
      %629 = vst.msk [vmem:[%s145 + $0x18] sm:$0xf] %vm622, %v564
      %630 = vst.msk [vmem:[%s145 + $0x1c] sm:$0xf] %vm622, %v565
      %631 = vst.msk [vmem:[%s145 + $0x20] sm:$0xf] %vm622, %v566
      %632 = vst.msk [vmem:[%s145 + $0x24] sm:$0xf] %vm622, %v567
      %633 = vst.msk [vmem:[%s145 + $0x28] sm:$0xf] %vm622, %v568
      %634 = vst.msk [vmem:[%s145 + $0x2c] sm:$0xf] %vm622, %v569
      %635 = vst.msk [vmem:[%s145 + $0x30] sm:$0xf] %vm622, %v570
      %636 = vst.msk [vmem:[%s145 + $0x34] sm:$0xf] %vm622, %v571
      %637 = vst.msk [vmem:[%s145 + $0x38] sm:$0xf] %vm622, %v572
      %638 = vst.msk [vmem:[%s145 + $0x3c] sm:$0xf] %vm622, %v573
      %639 = vst.msk [vmem:[%s145 + $0x40] sm:$0xf] %vm622, %v574
      %640 = vst.msk [vmem:[%s145 + $0x44] sm:$0xf] %vm622, %v575
      %641 = vst.msk [vmem:[%s145 + $0x48] sm:$0xf] %vm622, %v576
      %642 = vst.msk [vmem:[%s145 + $0x4c] sm:$0xf] %vm622, %v577
      %643 = vst.msk [vmem:[%s145 + $0x50] sm:$0xf] %vm622, %v578
      %644 = vst.msk [vmem:[%s145 + $0x54] sm:$0xf] %vm622, %v579
      %645 = vst.msk [vmem:[%s145 + $0x58] sm:$0xf] %vm622, %v580
      %646 = vst.msk [vmem:[%s145 + $0x5c] sm:$0xf] %vm622, %v581
      %647 = vst.msk [vmem:[%s145 + $0x60] sm:$0xf] %vm622, %v582
      %648 = vst.msk [vmem:[%s145 + $0x64] sm:$0xf] %vm622, %v583
      %649 = vst.msk [vmem:[%s145 + $0x68] sm:$0xf] %vm622, %v584
      %650 = vst.msk [vmem:[%s145 + $0x6c] sm:$0xf] %vm622, %v585
      %651 = vst.msk [vmem:[%s145 + $0x70] sm:$0xf] %vm622, %v586
      %652 = vst.msk [vmem:[%s145 + $0x74] sm:$0xf] %vm622, %v587
      %653 = vst.msk [vmem:[%s145 + $0x78] sm:$0xf] %vm622, %v588
      %654 = vst.msk [vmem:[%s145 + $0x7c] sm:$0xf] %vm622, %v589
      %s655 = smul.u32 32, %s13
      %p656 = scmp.lt.s32.totalorder %s655, 63
      %s657 = scalar_select %p656, %s655, 63
      %s658 = smul.addr %s657, 4
      %s659 = scalar_lea.vmem %s2, %s658
      // Predicated region
      $region29: #{_lambda_.10} parent=27 // pred_check
        %p660 = pneg %p78
      $region30: #{_lambda_.10} parent=27 // pred_check_branch
        %662 = sbr.rel (%p660) target = $region32
      $region31: #{_lambda_.10} parent=27 // pred_region
        %s663 = smul.u32 32, %s13
      $region32: #{_lambda_.10} parent=27 // pred_fallthru
        _
    $region28: #{_lambda_.10} parent=5 // pred_fallthru
      _
    %p664 = scmp.le.s32.totalorder 2, %s8
    // Predicated region
    $region33: #{_lambda_.10} parent=5 // pred_check
      %p665 = pneg %p664
    $region34: #{_lambda_.10} parent=5 // pred_check_branch
      %667 = sbr.rel (%p665) target = $region36
    $region35: #{_lambda_.10} parent=5 // pred_region
      %s668 = ssub.s32 %s8, 2
      // Predicated region
      $region37: #{_lambda_.10} parent=35 // pred_check
        %p669 = pneg %p84
      $region38: #{_lambda_.10} parent=35 // pred_check_branch
        %671 = sbr.rel (%p669) target = $region40
      $region39: #{_lambda_.10} parent=35 // pred_region
        %s672 = smul.u32 32, %s14
        %p673 = scmp.lt.s32.totalorder %s672, 63
        %s674 = scalar_select %p673, %s672, 63
        %s675 = smul.addr %s674, 4
        %s676 = scalar_lea.vmem %s2, %s675
      $region40: #{_lambda_.10} parent=35 // pred_fallthru
        _
    $region36: #{_lambda_.10} parent=5 // pred_fallthru
      _
  $region6: #{_lambda_.10} parent=0 // loop_footer
    %s12 = sadd.s32 1, %s8
  $region7: #{_lambda_.10} parent=0 // loop_footer_branch
    %7 = sbr.rel target = $region3
  $region8: #{_lambda_.10} parent=0 // loop_exit
    _

// kernel: _lambda_.11
$region0: #{_lambda_.11}
  #allocation0 [shape = 'u32[]', space=smem, size = 0x4, offset = 0x4, fixed_abs, tag = 'smem constant byte address 0x4 - core index']
  #allocation1 [shape = 'u32[144,128]{1,0:T(1,128)}', space=vmem, size = 0x12000, scoped, tag = 'internal scratch']
  %s0 = inlined_call_operand.vmem [shape: bf16[128,128], index: 0, kind: input, shape index: {}]
  %s1 = inlined_call_operand.vmem [shape: bf16[128,16], index: 1, kind: input, shape index: {}]
  %s2 = inlined_call_operand.vmem [shape: bf16[128,16], index: 2, kind: output, shape index: {0}]
  %s3 = inlined_call_operand.vmem [shape: f32[1,1,16], index: 3, kind: output, shape index: {1}]
  %s4 = inlined_call_operand.vmem [shape: f32[1,1,16], index: 4, kind: output, shape index: {2}]
  %5 = xla_tuple %s2, %s3, %s4
  %s6 = sld [smem:[#allocation0]]
  $region34: #{_lambda_.11} parent=0
    _
  %s8 = ssub.s32 1, %s6
  %s9 = scalar_select 0, %s8, %s6
  // Predicated region
  $region2: #{_lambda_.11} parent=0 // pred_check
    _
  $region3: #{_lambda_.11} parent=0 // pred_check_branch
    %11 = sbr.rel (0) target = $region5
  $region4: #{_lambda_.11} parent=0 // pred_region
    _
  $region5: #{_lambda_.11} parent=0 // pred_fallthru
    _
  // Predicated region
  $region6: #{_lambda_.11} parent=0 // pred_check
    _
  $region7: #{_lambda_.11} parent=0 // pred_check_branch
    %13 = sbr.rel (0) target = $region9
  $region8: #{_lambda_.11} parent=0 // pred_region
    _
  $region9: #{_lambda_.11} parent=0 // pred_fallthru
    _
  %v15 = vld [vmem:[%s0] sm:$0xf]
  %v16 = vld [vmem:[%s0 + $0x4] sm:$0xf]
  %v17 = vld [vmem:[%s0 + $0x8] sm:$0xf]
  %v18 = vld [vmem:[%s0 + $0xc] sm:$0xf]
  %v19 = vld [vmem:[%s0 + $0x10] sm:$0xf]
  %v20 = vld [vmem:[%s0 + $0x14] sm:$0xf]
  %v21 = vld [vmem:[%s0 + $0x18] sm:$0xf]
  %v22 = vld [vmem:[%s0 + $0x1c] sm:$0xf]
  %v23 = vld [vmem:[%s0 + $0x20] sm:$0xf]
  %v24 = vld [vmem:[%s0 + $0x24] sm:$0xf]
  %v25 = vld [vmem:[%s0 + $0x28] sm:$0xf]
  %v26 = vld [vmem:[%s0 + $0x2c] sm:$0xf]
  %v27 = vld [vmem:[%s0 + $0x30] sm:$0xf]
  %v28 = vld [vmem:[%s0 + $0x34] sm:$0xf]
  %v29 = vld [vmem:[%s0 + $0x38] sm:$0xf]
  %v30 = vld [vmem:[%s0 + $0x3c] sm:$0xf]
  %v31 = vld [vmem:[%s1] sm:$0xf]
  %v32 = vld [vmem:[%s1 + $0x4] sm:$0xf]
  %v33 = vld [vmem:[%s1 + $0x8] sm:$0xf]
  %v34 = vld [vmem:[%s1 + $0xc] sm:$0xf]
  %v35 = vld [vmem:[%s1 + $0x10] sm:$0xf]
  %v36 = vld [vmem:[%s1 + $0x14] sm:$0xf]
  %v37 = vld [vmem:[%s1 + $0x18] sm:$0xf]
  %v38 = vld [vmem:[%s1 + $0x1c] sm:$0xf]
  %v39 = vld [vmem:[%s1 + $0x20] sm:$0xf]
  %v40 = vld [vmem:[%s1 + $0x24] sm:$0xf]
  %v41 = vld [vmem:[%s1 + $0x28] sm:$0xf]
  %v42 = vld [vmem:[%s1 + $0x2c] sm:$0xf]
  %v43 = vld [vmem:[%s1 + $0x30] sm:$0xf]
  %v44 = vld [vmem:[%s1 + $0x34] sm:$0xf]
  %v45 = vld [vmem:[%s1 + $0x38] sm:$0xf]
  %v46 = vld [vmem:[%s1 + $0x3c] sm:$0xf]
  %v63 = vunpack.c.l.b16 %v15
  %v64 = vunpack.c.l.b16 %v16
  %v65 = vunpack.c.l.b16 %v17
  %v66 = vunpack.c.l.b16 %v18
  %v67 = vunpack.c.l.b16 %v19
  %v68 = vunpack.c.l.b16 %v20
  %v69 = vunpack.c.l.b16 %v21
  %v70 = vunpack.c.l.b16 %v22
  %v71 = vunpack.c.l.b16 %v23
  %v72 = vunpack.c.l.b16 %v24
  %v73 = vunpack.c.l.b16 %v25
  %v74 = vunpack.c.l.b16 %v26
  %v75 = vunpack.c.l.b16 %v27
  %v76 = vunpack.c.l.b16 %v28
  %v77 = vunpack.c.l.b16 %v29
  %v78 = vunpack.c.l.b16 %v30
  %v79 = vpack.c.b16 %v64, %v63
  %v80 = vpack.c.b16 %v66, %v65
  %v81 = vpack.c.b16 %v68, %v67
  %v82 = vpack.c.b16 %v70, %v69
  %v83 = vpack.c.b16 %v72, %v71
  %v84 = vpack.c.b16 %v74, %v73
  %v85 = vpack.c.b16 %v76, %v75
  %v86 = vpack.c.b16 %v78, %v77
  %v111 = vunpack.c.l.b16 %v31
  %v112 = vunpack.c.l.b16 %v32
  %v113 = vunpack.c.l.b16 %v33
  %v114 = vunpack.c.l.b16 %v34
  %v115 = vunpack.c.l.b16 %v35
  %v116 = vunpack.c.l.b16 %v36
  %v117 = vunpack.c.l.b16 %v37
  %v118 = vunpack.c.l.b16 %v38
  %v119 = vunpack.c.l.b16 %v39
  %v120 = vunpack.c.l.b16 %v40
  %v121 = vunpack.c.l.b16 %v41
  %v122 = vunpack.c.l.b16 %v42
  %v123 = vunpack.c.l.b16 %v43
  %v124 = vunpack.c.l.b16 %v44
  %v125 = vunpack.c.l.b16 %v45
  %v126 = vunpack.c.l.b16 %v46
  %v127 = vpack.c.b16 %v112, %v111
  %v128 = vpack.c.b16 %v114, %v113
  %v129 = vpack.c.b16 %v116, %v115
  %v130 = vpack.c.b16 %v118, %v117
  %v131 = vpack.c.b16 %v120, %v119
  %v132 = vpack.c.b16 %v122, %v121
  %v133 = vpack.c.b16 %v124, %v123
  %v134 = vpack.c.b16 %v126, %v125
  %143 = vmatprep.subr.bf16.mxu0 0
  %144 = vmatpush1.bf16.msra.mxu0 %v134
  %145 = vmatprep.subr.bf16.mxu0 0
  %146 = vmatpush1.bf16.msra.mxu0 %v133
  %147 = vmatprep.subr.bf16.mxu0 0
  %148 = vmatpush1.bf16.msra.mxu0 %v132
  %149 = vmatprep.subr.bf16.mxu0 0
  %150 = vmatpush1.bf16.msra.mxu0 %v131
  %151 = vmatprep.subr.bf16.mxu0 0
  %152 = vmatpush1.bf16.msra.mxu0 %v130
  %153 = vmatprep.subr.bf16.mxu0 0
  %154 = vmatpush1.bf16.msra.mxu0 %v129
  %155 = vmatprep.subr.bf16.mxu0 0
  %156 = vmatpush1.bf16.msra.mxu0 %v128
  %157 = vmatprep.subr.bf16.mxu0 0
  %158 = vmatpush1.bf16.msra.mxu0 %v127
  %159 = vmatprep.subr.bf16.mxu0 0
  %160 = vmatpush2.bf16.msra.mxu0 0
  %161 = vmatprep.subr.bf16.mxu0 0
  %162 = vmatpush2.bf16.msra.mxu0 0
  %163 = vmatprep.subr.bf16.mxu0 0
  %164 = vmatpush2.bf16.msra.mxu0 0
  %165 = vmatprep.subr.bf16.mxu0 0
  %166 = vmatpush2.bf16.msra.mxu0 0
  %167 = vmatprep.subr.bf16.mxu0 0
  %168 = vmatpush2.bf16.msra.mxu0 0
  %169 = vmatprep.subr.bf16.mxu0 0
  %170 = vmatpush2.bf16.msra.mxu0 0
  %171 = vmatprep.subr.bf16.mxu0 0
  %172 = vmatpush2.bf16.msra.mxu0 0
  %173 = vmatprep.subr.bf16.mxu0 0
  %174 = vmatpush2.bf16.msra.mxu0 0
  %175 = vmatprep.mubr.bf16.mxu0 0
  %176 = vmatmul.mubr.bf16.gmra.mxu0 %v79
  %v177 = vpop.f32.mrf.mxu0
  %v178 = vadd.f32 0.0, %v177
  %v179 = vpop.f32.mrf.mxu0
  %v180 = vpop.f32.mrf.mxu0
  %v181 = vadd.f32 0.0, %v180
  %v182 = vpop.f32.mrf.mxu0
  %183 = vmatprep.mubr.bf16.mxu0 0
  %184 = vmatmul.mubr.bf16.gmra.mxu0 %v80
  %v185 = vpop.f32.mrf.mxu0
  %v186 = vadd.f32 0.0, %v185
  %v187 = vpop.f32.mrf.mxu0
  %v188 = vpop.f32.mrf.mxu0
  %v189 = vadd.f32 0.0, %v188
  %v190 = vpop.f32.mrf.mxu0
  %191 = vmatprep.mubr.bf16.mxu0 0
  %192 = vmatmul.mubr.bf16.gmra.mxu0 %v81
  %v193 = vpop.f32.mrf.mxu0
  %v194 = vadd.f32 0.0, %v193
  %v195 = vpop.f32.mrf.mxu0
  %v196 = vpop.f32.mrf.mxu0
  %v197 = vadd.f32 0.0, %v196
  %v198 = vpop.f32.mrf.mxu0
  %199 = vmatprep.mubr.bf16.mxu0 0
  %200 = vmatmul.mubr.bf16.gmra.mxu0 %v82
  %v201 = vpop.f32.mrf.mxu0
  %v202 = vadd.f32 0.0, %v201
  %v203 = vpop.f32.mrf.mxu0
  %v204 = vpop.f32.mrf.mxu0
  %v205 = vadd.f32 0.0, %v204
  %v206 = vpop.f32.mrf.mxu0
  %207 = vmatprep.mubr.bf16.mxu0 0
  %208 = vmatmul.mubr.bf16.gmra.mxu0 %v83
  %v209 = vpop.f32.mrf.mxu0
  %v210 = vadd.f32 0.0, %v209
  %v211 = vpop.f32.mrf.mxu0
  %v212 = vpop.f32.mrf.mxu0
  %v213 = vadd.f32 0.0, %v212
  %v214 = vpop.f32.mrf.mxu0
  %215 = vmatprep.mubr.bf16.mxu0 0
  %216 = vmatmul.mubr.bf16.gmra.mxu0 %v84
  %v217 = vpop.f32.mrf.mxu0
  %v218 = vadd.f32 0.0, %v217
  %v219 = vpop.f32.mrf.mxu0
  %v220 = vpop.f32.mrf.mxu0
  %v221 = vadd.f32 0.0, %v220
  %v222 = vpop.f32.mrf.mxu0
  %223 = vmatprep.mubr.bf16.mxu0 0
  %224 = vmatmul.mubr.bf16.gmra.mxu0 %v85
  %v225 = vpop.f32.mrf.mxu0
  %v226 = vadd.f32 0.0, %v225
  %v227 = vpop.f32.mrf.mxu0
  %v228 = vpop.f32.mrf.mxu0
  %v229 = vadd.f32 0.0, %v228
  %v230 = vpop.f32.mrf.mxu0
  %231 = vmatprep.mubr.bf16.mxu0 0
  %232 = vmatmul.mubr.bf16.gmra.mxu0 %v86
  %v233 = vpop.f32.mrf.mxu0
  %v234 = vadd.f32 0.0, %v233
  %v235 = vpop.f32.mrf.mxu0
  %v236 = vpop.f32.mrf.mxu0
  %v237 = vadd.f32 0.0, %v236
  %v238 = vpop.f32.mrf.mxu0
  %239 = vdwg.mxu0
  %v240 = vpack.c.bf16 %v181, %v178
  %v241 = vpack.c.bf16 %v189, %v186
  %v242 = vpack.c.bf16 %v197, %v194
  %v243 = vpack.c.bf16 %v205, %v202
  %v244 = vpack.c.bf16 %v213, %v210
  %v245 = vpack.c.bf16 %v221, %v218
  %v246 = vpack.c.bf16 %v229, %v226
  %v247 = vpack.c.bf16 %v237, %v234
  %v256 = vunpack.c.l.b16 %v240
  %v257 = vunpack.c.h.b16 %v240
  %v258 = vunpack.c.l.b16 %v241
  %v259 = vunpack.c.h.b16 %v241
  %v260 = vunpack.c.l.b16 %v242
  %v261 = vunpack.c.h.b16 %v242
  %v262 = vunpack.c.l.b16 %v243
  %v263 = vunpack.c.h.b16 %v243
  %v264 = vunpack.c.l.b16 %v244
  %v265 = vunpack.c.h.b16 %v244
  %v266 = vunpack.c.l.b16 %v245
  %v267 = vunpack.c.h.b16 %v245
  %v268 = vunpack.c.l.b16 %v246
  %v269 = vunpack.c.h.b16 %v246
  %v270 = vunpack.c.l.b16 %v247
  %v271 = vunpack.c.h.b16 %v247
  %v272 = vpack.c.b16 %v256, %v256
  %v273 = vpack.c.b16 %v257, %v257
  %v274 = vpack.c.b16 %v258, %v258
  %v275 = vpack.c.b16 %v259, %v259
  %v276 = vpack.c.b16 %v260, %v260
  %v277 = vpack.c.b16 %v261, %v261
  %v278 = vpack.c.b16 %v262, %v262
  %v279 = vpack.c.b16 %v263, %v263
  %v280 = vpack.c.b16 %v264, %v264
  %v281 = vpack.c.b16 %v265, %v265
  %v282 = vpack.c.b16 %v266, %v266
  %v283 = vpack.c.b16 %v267, %v267
  %v284 = vpack.c.b16 %v268, %v268
  %v285 = vpack.c.b16 %v269, %v269
  %v286 = vpack.c.b16 %v270, %v270
  %v287 = vpack.c.b16 %v271, %v271
  %vm304 = vcmask 125952
  %305 = vst.msk [vmem:[%s2] sm:$0xf] %vm304, %v272
  %306 = vst.msk [vmem:[%s2 + $0x4] sm:$0xf] %vm304, %v273
  %307 = vst.msk [vmem:[%s2 + $0x8] sm:$0xf] %vm304, %v274
  %308 = vst.msk [vmem:[%s2 + $0xc] sm:$0xf] %vm304, %v275
  %309 = vst.msk [vmem:[%s2 + $0x10] sm:$0xf] %vm304, %v276
  %310 = vst.msk [vmem:[%s2 + $0x14] sm:$0xf] %vm304, %v277
  %311 = vst.msk [vmem:[%s2 + $0x18] sm:$0xf] %vm304, %v278
  %312 = vst.msk [vmem:[%s2 + $0x1c] sm:$0xf] %vm304, %v279
  %313 = vst.msk [vmem:[%s2 + $0x20] sm:$0xf] %vm304, %v280
  %314 = vst.msk [vmem:[%s2 + $0x24] sm:$0xf] %vm304, %v281
  %315 = vst.msk [vmem:[%s2 + $0x28] sm:$0xf] %vm304, %v282
  %316 = vst.msk [vmem:[%s2 + $0x2c] sm:$0xf] %vm304, %v283
  %317 = vst.msk [vmem:[%s2 + $0x30] sm:$0xf] %vm304, %v284
  %318 = vst.msk [vmem:[%s2 + $0x34] sm:$0xf] %vm304, %v285
  %319 = vst.msk [vmem:[%s2 + $0x38] sm:$0xf] %vm304, %v286
  %320 = vst.msk [vmem:[%s2 + $0x3c] sm:$0xf] %vm304, %v287
  %v321 = vunpack.c.l.bf16 %v240
  %v322 = vunpack.c.h.bf16 %v240
  %v323 = vunpack.c.l.bf16 %v241
  %v324 = vunpack.c.h.bf16 %v241
  %v325 = vunpack.c.l.bf16 %v242
  %v326 = vunpack.c.h.bf16 %v242
  %v327 = vunpack.c.l.bf16 %v243
  %v328 = vunpack.c.h.bf16 %v243
  %v329 = vunpack.c.l.bf16 %v244
  %v330 = vunpack.c.h.bf16 %v244
  %v331 = vunpack.c.l.bf16 %v245
  %v332 = vunpack.c.h.bf16 %v245
  %v333 = vunpack.c.l.bf16 %v246
  %v334 = vunpack.c.h.bf16 %v246
  %v335 = vunpack.c.l.bf16 %v247
  %v336 = vunpack.c.h.bf16 %v247
  %vm337 = vcmask 130048
  %v338 = vsel %vm337, %v321, 0.0
  %v339 = vsel %vm337, %v322, 0.0
  %v340 = vadd.f32 %v338, %v339
  %v341 = vsel %vm337, %v323, 0.0
  %v342 = vadd.f32 %v340, %v341
  %v343 = vsel %vm337, %v324, 0.0
  %v344 = vadd.f32 %v342, %v343
  %v345 = vsel %vm337, %v325, 0.0
  %v346 = vadd.f32 %v344, %v345
  %v347 = vsel %vm337, %v326, 0.0
  %v348 = vadd.f32 %v346, %v347
  %v349 = vsel %vm337, %v327, 0.0
  %v350 = vadd.f32 %v348, %v349
  %v351 = vsel %vm337, %v328, 0.0
  %v352 = vadd.f32 %v350, %v351
  %v353 = vsel %vm337, %v329, 0.0
  %v354 = vadd.f32 %v352, %v353
  %v355 = vsel %vm337, %v330, 0.0
  %v356 = vadd.f32 %v354, %v355
  %v357 = vsel %vm337, %v331, 0.0
  %v358 = vadd.f32 %v356, %v357
  %v359 = vsel %vm337, %v332, 0.0
  %v360 = vadd.f32 %v358, %v359
  %v361 = vsel %vm337, %v333, 0.0
  %v362 = vadd.f32 %v360, %v361
  %v363 = vsel %vm337, %v334, 0.0
  %v364 = vadd.f32 %v362, %v363
  %v365 = vsel %vm337, %v335, 0.0
  %v366 = vadd.f32 %v364, %v365
  %v367 = vsel %vm337, %v336, 0.0
  %v368 = vadd.f32 %v366, %v367
  %v369 = vrot.slane %v368, 4
  %v370 = vadd.f32 %v368, %v369
  %v371 = vrot.slane %v370, 2
  %v372 = vadd.f32 %v370, %v371
  %v373 = vrot.slane %v372, 1
  %v374 = vadd.f32 %v372, %v373
  %v375 = vmul.f32 %v321, %v321
  %v376 = vmul.f32 %v322, %v322
  %v377 = vmul.f32 %v323, %v323
  %v378 = vmul.f32 %v324, %v324
  %v379 = vmul.f32 %v325, %v325
  %v380 = vmul.f32 %v326, %v326
  %v381 = vmul.f32 %v327, %v327
  %v382 = vmul.f32 %v328, %v328
  %v383 = vmul.f32 %v329, %v329
  %v384 = vmul.f32 %v330, %v330
  %v385 = vmul.f32 %v331, %v331
  %v386 = vmul.f32 %v332, %v332
  %v387 = vmul.f32 %v333, %v333
  %v388 = vmul.f32 %v334, %v334
  %v389 = vmul.f32 %v335, %v335
  %v390 = vmul.f32 %v336, %v336
  %v391 = vsel %vm337, %v375, 0.0
  %v392 = vsel %vm337, %v376, 0.0
  %v393 = vadd.f32 %v391, %v392
  %v394 = vsel %vm337, %v377, 0.0
  %v395 = vadd.f32 %v393, %v394
  %v396 = vsel %vm337, %v378, 0.0
  %v397 = vadd.f32 %v395, %v396
  %v398 = vsel %vm337, %v379, 0.0
  %v399 = vadd.f32 %v397, %v398
  %v400 = vsel %vm337, %v380, 0.0
  %v401 = vadd.f32 %v399, %v400
  %v402 = vsel %vm337, %v381, 0.0
  %v403 = vadd.f32 %v401, %v402
  %v404 = vsel %vm337, %v382, 0.0
  %v405 = vadd.f32 %v403, %v404
  %v406 = vsel %vm337, %v383, 0.0
  %v407 = vadd.f32 %v405, %v406
  %v408 = vsel %vm337, %v384, 0.0
  %v409 = vadd.f32 %v407, %v408
  %v410 = vsel %vm337, %v385, 0.0
  %v411 = vadd.f32 %v409, %v410
  %v412 = vsel %vm337, %v386, 0.0
  %v413 = vadd.f32 %v411, %v412
  %v414 = vsel %vm337, %v387, 0.0
  %v415 = vadd.f32 %v413, %v414
  %v416 = vsel %vm337, %v388, 0.0
  %v417 = vadd.f32 %v415, %v416
  %v418 = vsel %vm337, %v389, 0.0
  %v419 = vadd.f32 %v417, %v418
  %v420 = vsel %vm337, %v390, 0.0
  %v421 = vadd.f32 %v419, %v420
  %v422 = vrot.slane %v421, 4
  %v423 = vadd.f32 %v421, %v422
  %v424 = vrot.slane %v423, 2
  %v425 = vadd.f32 %v423, %v424
  %v426 = vrot.slane %v425, 1
  %v427 = vadd.f32 %v425, %v426
  %vm428 = vcmask 122880
  %429 = vst.msk [vmem:[%s3] sm:$0x1] %vm428, %v374
  %430 = vst.msk [vmem:[%s4] sm:$0x1] %vm428, %v427
  // Predicated region
  $region10: #{_lambda_.11} parent=0 // pred_check
    _
  $region11: #{_lambda_.11} parent=0 // pred_check_branch
    %432 = sbr.rel (0) target = $region13
  $region12: #{_lambda_.11} parent=0 // pred_region
    _
  $region13: #{_lambda_.11} parent=0 // pred_fallthru
    _
  // Predicated region
  $region14: #{_lambda_.11} parent=0 // pred_check
    _
  $region15: #{_lambda_.11} parent=0 // pred_check_branch
    %434 = sbr.rel (0) target = $region17
  $region16: #{_lambda_.11} parent=0 // pred_region
    _
  $region17: #{_lambda_.11} parent=0 // pred_fallthru
    _
  // Predicated region
  $region18: #{_lambda_.11} parent=0 // pred_check
    _
  $region19: #{_lambda_.11} parent=0 // pred_check_branch
    %436 = sbr.rel (0) target = $region21
  $region20: #{_lambda_.11} parent=0 // pred_region
    _
  $region21: #{_lambda_.11} parent=0 // pred_fallthru
    _
  // Predicated region
  $region22: #{_lambda_.11} parent=0 // pred_check
    _
  $region23: #{_lambda_.11} parent=0 // pred_check_branch
    %438 = sbr.rel (0) target = $region25
  $region24: #{_lambda_.11} parent=0 // pred_region
    _
  $region25: #{_lambda_.11} parent=0 // pred_fallthru
    _
  // Predicated region
  $region26: #{_lambda_.11} parent=0 // pred_check
    _
  $region27: #{_lambda_.11} parent=0 // pred_check_branch
    %440 = sbr.rel (0) target = $region29
  $region28: #{_lambda_.11} parent=0 // pred_region
    _
  $region29: #{_lambda_.11} parent=0 // pred_fallthru
    _
  // Predicated region
  $region30: #{_lambda_.11} parent=0 // pred_check
    _
  $region31: #{_lambda_.11} parent=0 // pred_check_branch
    %442 = sbr.rel (0) target = $region33
  $region32: #{_lambda_.11} parent=0 // pred_region
    _
  $region33: #{_lambda_.11} parent=0 // pred_fallthru
    _

// kernel: _lambda_.12
$region0: #{_lambda_.12}
  #allocation0 [shape = 'u32[]', space=smem, size = 0x4, offset = 0x4, fixed_abs, tag = 'smem constant byte address 0x4 - core index']
  #allocation1 [shape = 'u32[144,128]{1,0:T(1,128)}', space=vmem, size = 0x12000, scoped, tag = 'internal scratch']
  %s0 = inlined_call_operand.vmem [shape: bf16[32,256], index: 0, kind: input, shape index: {}]
  %s1 = inlined_call_operand.vmem [shape: bf16[256,32], index: 1, kind: input, shape index: {}]
  %s2 = inlined_call_operand.vmem [shape: bf16[32,32], index: 2, kind: output, shape index: {0}]
  %s3 = inlined_call_operand.vmem [shape: f32[1,1,32], index: 3, kind: output, shape index: {1}]
  %s4 = inlined_call_operand.vmem [shape: f32[1,1,32], index: 4, kind: output, shape index: {2}]
  %5 = xla_tuple %s2, %s3, %s4
  %s6 = sld [smem:[#allocation0]]
  $region34: #{_lambda_.12} parent=0
    _
  %s8 = ssub.s32 1, %s6
  %s9 = scalar_select 0, %s8, %s6
  // Predicated region
  $region2: #{_lambda_.12} parent=0 // pred_check
    _
  $region3: #{_lambda_.12} parent=0 // pred_check_branch
    %11 = sbr.rel (0) target = $region5
  $region4: #{_lambda_.12} parent=0 // pred_region
    _
  $region5: #{_lambda_.12} parent=0 // pred_fallthru
    _
  // Predicated region
  $region6: #{_lambda_.12} parent=0 // pred_check
    _
  $region7: #{_lambda_.12} parent=0 // pred_check_branch
    %13 = sbr.rel (0) target = $region9
  $region8: #{_lambda_.12} parent=0 // pred_region
    _
  $region9: #{_lambda_.12} parent=0 // pred_fallthru
    _
  %v15 = vld [vmem:[%s0] sm:$0xff]
  %v16 = vld [vmem:[%s0 + $0x8] sm:$0xff]
  %v17 = vld [vmem:[%s0 + $0x10] sm:$0xff]
  %v18 = vld [vmem:[%s0 + $0x18] sm:$0xff]
  %v19 = vld [vmem:[%s1] sm:$0xf]
  %v20 = vld [vmem:[%s1 + $0x4] sm:$0xf]
  %v21 = vld [vmem:[%s1 + $0x8] sm:$0xf]
  %v22 = vld [vmem:[%s1 + $0xc] sm:$0xf]
  %v23 = vld [vmem:[%s1 + $0x10] sm:$0xf]
  %v24 = vld [vmem:[%s1 + $0x14] sm:$0xf]
  %v25 = vld [vmem:[%s1 + $0x18] sm:$0xf]
  %v26 = vld [vmem:[%s1 + $0x1c] sm:$0xf]
  %v27 = vld [vmem:[%s1 + $0x20] sm:$0xf]
  %v28 = vld [vmem:[%s1 + $0x24] sm:$0xf]
  %v29 = vld [vmem:[%s1 + $0x28] sm:$0xf]
  %v30 = vld [vmem:[%s1 + $0x2c] sm:$0xf]
  %v31 = vld [vmem:[%s1 + $0x30] sm:$0xf]
  %v32 = vld [vmem:[%s1 + $0x34] sm:$0xf]
  %v33 = vld [vmem:[%s1 + $0x38] sm:$0xf]
  %v34 = vld [vmem:[%s1 + $0x3c] sm:$0xf]
  %v35 = vld [vmem:[%s1 + $0x40] sm:$0xf]
  %v36 = vld [vmem:[%s1 + $0x44] sm:$0xf]
  %v37 = vld [vmem:[%s1 + $0x48] sm:$0xf]
  %v38 = vld [vmem:[%s1 + $0x4c] sm:$0xf]
  %v39 = vld [vmem:[%s1 + $0x50] sm:$0xf]
  %v40 = vld [vmem:[%s1 + $0x54] sm:$0xf]
  %v41 = vld [vmem:[%s1 + $0x58] sm:$0xf]
  %v42 = vld [vmem:[%s1 + $0x5c] sm:$0xf]
  %v43 = vld [vmem:[%s1 + $0x60] sm:$0xf]
  %v44 = vld [vmem:[%s1 + $0x64] sm:$0xf]
  %v45 = vld [vmem:[%s1 + $0x68] sm:$0xf]
  %v46 = vld [vmem:[%s1 + $0x6c] sm:$0xf]
  %v47 = vld [vmem:[%s1 + $0x70] sm:$0xf]
  %v48 = vld [vmem:[%s1 + $0x74] sm:$0xf]
  %v49 = vld [vmem:[%s1 + $0x78] sm:$0xf]
  %v50 = vld [vmem:[%s1 + $0x7c] sm:$0xf]
  %v55 = vunpack.c.l.b16 %v15
  %v56 = vunpack.c.h.b16 %v15
  %v57 = vunpack.c.l.b16 %v16
  %v58 = vunpack.c.h.b16 %v16
  %v59 = vunpack.c.l.b16 %v17
  %v60 = vunpack.c.h.b16 %v17
  %v61 = vunpack.c.l.b16 %v18
  %v62 = vunpack.c.h.b16 %v18
  %v63 = vpack.c.b16 %v57, %v55
  %v64 = vpack.c.b16 %v58, %v56
  %v65 = vpack.c.b16 %v61, %v59
  %v66 = vpack.c.b16 %v62, %v60
  %v103 = vunpack.c.l.b16 %v19
  %v104 = vunpack.c.l.b16 %v20
  %v105 = vunpack.c.l.b16 %v21
  %v106 = vunpack.c.l.b16 %v22
  %v107 = vunpack.c.l.b16 %v23
  %v108 = vunpack.c.l.b16 %v24
  %v109 = vunpack.c.l.b16 %v25
  %v110 = vunpack.c.l.b16 %v26
  %v111 = vunpack.c.l.b16 %v27
  %v112 = vunpack.c.l.b16 %v28
  %v113 = vunpack.c.l.b16 %v29
  %v114 = vunpack.c.l.b16 %v30
  %v115 = vunpack.c.l.b16 %v31
  %v116 = vunpack.c.l.b16 %v32
  %v117 = vunpack.c.l.b16 %v33
  %v118 = vunpack.c.l.b16 %v34
  %v119 = vunpack.c.l.b16 %v35
  %v120 = vunpack.c.l.b16 %v36
  %v121 = vunpack.c.l.b16 %v37
  %v122 = vunpack.c.l.b16 %v38
  %v123 = vunpack.c.l.b16 %v39
  %v124 = vunpack.c.l.b16 %v40
  %v125 = vunpack.c.l.b16 %v41
  %v126 = vunpack.c.l.b16 %v42
  %v127 = vunpack.c.l.b16 %v43
  %v128 = vunpack.c.l.b16 %v44
  %v129 = vunpack.c.l.b16 %v45
  %v130 = vunpack.c.l.b16 %v46
  %v131 = vunpack.c.l.b16 %v47
  %v132 = vunpack.c.l.b16 %v48
  %v133 = vunpack.c.l.b16 %v49
  %v134 = vunpack.c.l.b16 %v50
  %v135 = vpack.c.b16 %v104, %v103
  %v136 = vpack.c.b16 %v106, %v105
  %v137 = vpack.c.b16 %v108, %v107
  %v138 = vpack.c.b16 %v110, %v109
  %v139 = vpack.c.b16 %v112, %v111
  %v140 = vpack.c.b16 %v114, %v113
  %v141 = vpack.c.b16 %v116, %v115
  %v142 = vpack.c.b16 %v118, %v117
  %v143 = vpack.c.b16 %v120, %v119
  %v144 = vpack.c.b16 %v122, %v121
  %v145 = vpack.c.b16 %v124, %v123
  %v146 = vpack.c.b16 %v126, %v125
  %v147 = vpack.c.b16 %v128, %v127
  %v148 = vpack.c.b16 %v130, %v129
  %v149 = vpack.c.b16 %v132, %v131
  %v150 = vpack.c.b16 %v134, %v133
  %167 = vmatprep.subr.bf16.mxu0 0
  %168 = vmatpush1.bf16.msra.mxu0 %v142
  %169 = vmatprep.subr.bf16.mxu0 0
  %170 = vmatpush1.bf16.msra.mxu0 %v141
  %171 = vmatprep.subr.bf16.mxu0 0
  %172 = vmatpush1.bf16.msra.mxu0 %v140
  %173 = vmatprep.subr.bf16.mxu0 0
  %174 = vmatpush1.bf16.msra.mxu0 %v139
  %175 = vmatprep.subr.bf16.mxu0 0
  %176 = vmatpush1.bf16.msra.mxu0 %v138
  %177 = vmatprep.subr.bf16.mxu0 0
  %178 = vmatpush1.bf16.msra.mxu0 %v137
  %179 = vmatprep.subr.bf16.mxu0 0
  %180 = vmatpush1.bf16.msra.mxu0 %v136
  %181 = vmatprep.subr.bf16.mxu0 0
  %182 = vmatpush1.bf16.msra.mxu0 %v135
  %183 = vmatprep.subr.bf16.mxu0 0
  %184 = vmatpush2.bf16.msra.mxu0 %v150
  %185 = vmatprep.subr.bf16.mxu0 0
  %186 = vmatpush2.bf16.msra.mxu0 %v149
  %187 = vmatprep.subr.bf16.mxu0 0
  %188 = vmatpush2.bf16.msra.mxu0 %v148
  %189 = vmatprep.subr.bf16.mxu0 0
  %190 = vmatpush2.bf16.msra.mxu0 %v147
  %191 = vmatprep.subr.bf16.mxu0 0
  %192 = vmatpush2.bf16.msra.mxu0 %v146
  %193 = vmatprep.subr.bf16.mxu0 0
  %194 = vmatpush2.bf16.msra.mxu0 %v145
  %195 = vmatprep.subr.bf16.mxu0 0
  %196 = vmatpush2.bf16.msra.mxu0 %v144
  %197 = vmatprep.subr.bf16.mxu0 0
  %198 = vmatpush2.bf16.msra.mxu0 %v143
  %199 = vmatprep.mubr.bf16.mxu0 %v64
  %200 = vmatmul.mubr.bf16.gmra.mxu0 %v63
  %v201 = vpop.f32.mrf.mxu0
  %v202 = vadd.f32 0.0, %v201
  %v203 = vpop.f32.mrf.mxu0
  %v204 = vpop.f32.mrf.mxu0
  %v205 = vadd.f32 0.0, %v204
  %v206 = vpop.f32.mrf.mxu0
  %207 = vmatprep.mubr.bf16.mxu0 %v66
  %208 = vmatmul.mubr.bf16.gmra.mxu0 %v65
  %v209 = vpop.f32.mrf.mxu0
  %v210 = vadd.f32 0.0, %v209
  %v211 = vpop.f32.mrf.mxu0
  %v212 = vpop.f32.mrf.mxu0
  %v213 = vadd.f32 0.0, %v212
  %v214 = vpop.f32.mrf.mxu0
  %215 = vdwg.mxu0
  %v216 = vpack.c.bf16 %v205, %v202
  %v217 = vpack.c.bf16 %v213, %v210
  %v220 = vunpack.c.l.b16 %v216
  %v221 = vunpack.c.h.b16 %v216
  %v222 = vunpack.c.l.b16 %v217
  %v223 = vunpack.c.h.b16 %v217
  %v224 = vpack.c.b16 %v220, %v220
  %v225 = vpack.c.b16 %v221, %v221
  %v226 = vpack.c.b16 %v222, %v222
  %v227 = vpack.c.b16 %v223, %v223
  %vm232 = vcmask 257024
  %233 = vst.msk [vmem:[%s2] sm:$0xf] %vm232, %v224
  %234 = vst.msk [vmem:[%s2 + $0x4] sm:$0xf] %vm232, %v225
  %235 = vst.msk [vmem:[%s2 + $0x8] sm:$0xf] %vm232, %v226
  %236 = vst.msk [vmem:[%s2 + $0xc] sm:$0xf] %vm232, %v227
  %v237 = vunpack.c.l.bf16 %v216
  %v238 = vunpack.c.h.bf16 %v216
  %v239 = vunpack.c.l.bf16 %v217
  %v240 = vunpack.c.h.bf16 %v217
  %vm241 = vcmask 261120
  %v242 = vsel %vm241, %v237, 0.0
  %v243 = vsel %vm241, %v238, 0.0
  %v244 = vadd.f32 %v242, %v243
  %v245 = vsel %vm241, %v239, 0.0
  %v246 = vadd.f32 %v244, %v245
  %v247 = vsel %vm241, %v240, 0.0
  %v248 = vadd.f32 %v246, %v247
  %v249 = vrot.slane %v248, 4
  %v250 = vadd.f32 %v248, %v249
  %v251 = vrot.slane %v250, 2
  %v252 = vadd.f32 %v250, %v251
  %v253 = vrot.slane %v252, 1
  %v254 = vadd.f32 %v252, %v253
  %v255 = vmul.f32 %v237, %v237
  %v256 = vmul.f32 %v238, %v238
  %v257 = vmul.f32 %v239, %v239
  %v258 = vmul.f32 %v240, %v240
  %v259 = vsel %vm241, %v255, 0.0
  %v260 = vsel %vm241, %v256, 0.0
  %v261 = vadd.f32 %v259, %v260
  %v262 = vsel %vm241, %v257, 0.0
  %v263 = vadd.f32 %v261, %v262
  %v264 = vsel %vm241, %v258, 0.0
  %v265 = vadd.f32 %v263, %v264
  %v266 = vrot.slane %v265, 4
  %v267 = vadd.f32 %v265, %v266
  %v268 = vrot.slane %v267, 2
  %v269 = vadd.f32 %v267, %v268
  %v270 = vrot.slane %v269, 1
  %v271 = vadd.f32 %v269, %v270
  %vm272 = vcmask 253952
  %273 = vst.msk [vmem:[%s3] sm:$0x1] %vm272, %v254
  %274 = vst.msk [vmem:[%s4] sm:$0x1] %vm272, %v271
  // Predicated region
  $region10: #{_lambda_.12} parent=0 // pred_check
    _
  $region11: #{_lambda_.12} parent=0 // pred_check_branch
    %276 = sbr.rel (0) target = $region13
  $region12: #{_lambda_.12} parent=0 // pred_region
    _
  $region13: #{_lambda_.12} parent=0 // pred_fallthru
    _
  // Predicated region
  $region14: #{_lambda_.12} parent=0 // pred_check
    _
  $region15: #{_lambda_.12} parent=0 // pred_check_branch
    %278 = sbr.rel (0) target = $region17
  $region16: #{_lambda_.12} parent=0 // pred_region
    _
  $region17: #{_lambda_.12} parent=0 // pred_fallthru
    _
  // Predicated region
  $region18: #{_lambda_.12} parent=0 // pred_check
    _
  $region19: #{_lambda_.12} parent=0 // pred_check_branch
    %280 = sbr.rel (0) target = $region21
  $region20: #{_lambda_.12} parent=0 // pred_region
    _
  $region21: #{_lambda_.12} parent=0 // pred_fallthru
    _
  // Predicated region
  $region22: #{_lambda_.12} parent=0 // pred_check
    _
  $region23: #{_lambda_.12} parent=0 // pred_check_branch
    %282 = sbr.rel (0) target = $region25
  $region24: #{_lambda_.12} parent=0 // pred_region
    _
  $region25: #{_lambda_.12} parent=0 // pred_fallthru
    _
  // Predicated region
  $region26: #{_lambda_.12} parent=0 // pred_check
    _
  $region27: #{_lambda_.12} parent=0 // pred_check_branch
    %284 = sbr.rel (0) target = $region29
  $region28: #{_lambda_.12} parent=0 // pred_region
    _
  $region29: #{_lambda_.12} parent=0 // pred_fallthru
    _
  // Predicated region
  $region30: #{_lambda_.12} parent=0 // pred_check
    _
  $region31: #{_lambda_.12} parent=0 // pred_check_branch
    %286 = sbr.rel (0) target = $region33
  $region32: #{_lambda_.12} parent=0 // pred_region
    _
  $region33: #{_lambda_.12} parent=0 // pred_fallthru
    _

// kernel: _lambda_.13
$region0: #{_lambda_.13}
  #allocation0 [shape = 'u32[]', space=smem, size = 0x4, offset = 0x4, fixed_abs, tag = 'smem constant byte address 0x4 - core index']
  #allocation1 [shape = 'u32[144,128]{1,0:T(1,128)}', space=vmem, size = 0x12000, scoped, tag = 'internal scratch']
  %s0 = inlined_call_operand.vmem [shape: bf16[8,512], index: 0, kind: input, shape index: {}]
  %s1 = inlined_call_operand.vmem [shape: bf16[512,64], index: 1, kind: input, shape index: {}]
  %s2 = inlined_call_operand.vmem [shape: bf16[8,64], index: 2, kind: output, shape index: {0}]
  %s3 = inlined_call_operand.vmem [shape: f32[1,1,64], index: 3, kind: output, shape index: {1}]
  %s4 = inlined_call_operand.vmem [shape: f32[1,1,64], index: 4, kind: output, shape index: {2}]
  %5 = xla_tuple %s2, %s3, %s4
  %s6 = sld [smem:[#allocation0]]
  $region34: #{_lambda_.13} parent=0
    _
  %s8 = ssub.s32 1, %s6
  %s9 = scalar_select 0, %s8, %s6
  // Predicated region
  $region2: #{_lambda_.13} parent=0 // pred_check
    _
  $region3: #{_lambda_.13} parent=0 // pred_check_branch
    %11 = sbr.rel (0) target = $region5
  $region4: #{_lambda_.13} parent=0 // pred_region
    _
  $region5: #{_lambda_.13} parent=0 // pred_fallthru
    _
  // Predicated region
  $region6: #{_lambda_.13} parent=0 // pred_check
    _
  $region7: #{_lambda_.13} parent=0 // pred_check_branch
    %13 = sbr.rel (0) target = $region9
  $region8: #{_lambda_.13} parent=0 // pred_region
    _
  $region9: #{_lambda_.13} parent=0 // pred_fallthru
    _
  %v15 = vld [vmem:[%s0] sm:$0xff]
  %v16 = vld [vmem:[%s0 + $0x8] sm:$0xff]
  %v17 = vld [vmem:[%s1] sm:$0xf]
  %v18 = vld [vmem:[%s1 + $0x4] sm:$0xf]
  %v19 = vld [vmem:[%s1 + $0x8] sm:$0xf]
  %v20 = vld [vmem:[%s1 + $0xc] sm:$0xf]
  %v21 = vld [vmem:[%s1 + $0x10] sm:$0xf]
  %v22 = vld [vmem:[%s1 + $0x14] sm:$0xf]
  %v23 = vld [vmem:[%s1 + $0x18] sm:$0xf]
  %v24 = vld [vmem:[%s1 + $0x1c] sm:$0xf]
  %v25 = vld [vmem:[%s1 + $0x20] sm:$0xf]
  %v26 = vld [vmem:[%s1 + $0x24] sm:$0xf]
  %v27 = vld [vmem:[%s1 + $0x28] sm:$0xf]
  %v28 = vld [vmem:[%s1 + $0x2c] sm:$0xf]
  %v29 = vld [vmem:[%s1 + $0x30] sm:$0xf]
  %v30 = vld [vmem:[%s1 + $0x34] sm:$0xf]
  %v31 = vld [vmem:[%s1 + $0x38] sm:$0xf]
  %v32 = vld [vmem:[%s1 + $0x3c] sm:$0xf]
  %v33 = vld [vmem:[%s1 + $0x40] sm:$0xf]
  %v34 = vld [vmem:[%s1 + $0x44] sm:$0xf]
  %v35 = vld [vmem:[%s1 + $0x48] sm:$0xf]
  %v36 = vld [vmem:[%s1 + $0x4c] sm:$0xf]
  %v37 = vld [vmem:[%s1 + $0x50] sm:$0xf]
  %v38 = vld [vmem:[%s1 + $0x54] sm:$0xf]
  %v39 = vld [vmem:[%s1 + $0x58] sm:$0xf]
  %v40 = vld [vmem:[%s1 + $0x5c] sm:$0xf]
  %v41 = vld [vmem:[%s1 + $0x60] sm:$0xf]
  %v42 = vld [vmem:[%s1 + $0x64] sm:$0xf]
  %v43 = vld [vmem:[%s1 + $0x68] sm:$0xf]
  %v44 = vld [vmem:[%s1 + $0x6c] sm:$0xf]
  %v45 = vld [vmem:[%s1 + $0x70] sm:$0xf]
  %v46 = vld [vmem:[%s1 + $0x74] sm:$0xf]
  %v47 = vld [vmem:[%s1 + $0x78] sm:$0xf]
  %v48 = vld [vmem:[%s1 + $0x7c] sm:$0xf]
  %v49 = vld [vmem:[%s1 + $0x80] sm:$0xf]
  %v50 = vld [vmem:[%s1 + $0x84] sm:$0xf]
  %v51 = vld [vmem:[%s1 + $0x88] sm:$0xf]
  %v52 = vld [vmem:[%s1 + $0x8c] sm:$0xf]
  %v53 = vld [vmem:[%s1 + $0x90] sm:$0xf]
  %v54 = vld [vmem:[%s1 + $0x94] sm:$0xf]
  %v55 = vld [vmem:[%s1 + $0x98] sm:$0xf]
  %v56 = vld [vmem:[%s1 + $0x9c] sm:$0xf]
  %v57 = vld [vmem:[%s1 + $0xa0] sm:$0xf]
  %v58 = vld [vmem:[%s1 + $0xa4] sm:$0xf]
  %v59 = vld [vmem:[%s1 + $0xa8] sm:$0xf]
  %v60 = vld [vmem:[%s1 + $0xac] sm:$0xf]
  %v61 = vld [vmem:[%s1 + $0xb0] sm:$0xf]
  %v62 = vld [vmem:[%s1 + $0xb4] sm:$0xf]
  %v63 = vld [vmem:[%s1 + $0xb8] sm:$0xf]
  %v64 = vld [vmem:[%s1 + $0xbc] sm:$0xf]
  %v65 = vld [vmem:[%s1 + $0xc0] sm:$0xf]
  %v66 = vld [vmem:[%s1 + $0xc4] sm:$0xf]
  %v67 = vld [vmem:[%s1 + $0xc8] sm:$0xf]
  %v68 = vld [vmem:[%s1 + $0xcc] sm:$0xf]
  %v69 = vld [vmem:[%s1 + $0xd0] sm:$0xf]
  %v70 = vld [vmem:[%s1 + $0xd4] sm:$0xf]
  %v71 = vld [vmem:[%s1 + $0xd8] sm:$0xf]
  %v72 = vld [vmem:[%s1 + $0xdc] sm:$0xf]
  %v73 = vld [vmem:[%s1 + $0xe0] sm:$0xf]
  %v74 = vld [vmem:[%s1 + $0xe4] sm:$0xf]
  %v75 = vld [vmem:[%s1 + $0xe8] sm:$0xf]
  %v76 = vld [vmem:[%s1 + $0xec] sm:$0xf]
  %v77 = vld [vmem:[%s1 + $0xf0] sm:$0xf]
  %v78 = vld [vmem:[%s1 + $0xf4] sm:$0xf]
  %v79 = vld [vmem:[%s1 + $0xf8] sm:$0xf]
  %v80 = vld [vmem:[%s1 + $0xfc] sm:$0xf]
  %v83 = vunpack.c.l.b16 %v15
  %v84 = vunpack.c.h.b16 %v15
  %v85 = vunpack.c.l.b16 %v16
  %v86 = vunpack.c.h.b16 %v16
  %v87 = vpack.c.b16 %v83, %v83
  %v88 = vpack.c.b16 %v84, %v84
  %v89 = vpack.c.b16 %v85, %v85
  %v90 = vpack.c.b16 %v86, %v86
  %v159 = vunpack.c.l.b16 %v17
  %v160 = vunpack.c.l.b16 %v18
  %v161 = vunpack.c.l.b16 %v19
  %v162 = vunpack.c.l.b16 %v20
  %v163 = vunpack.c.l.b16 %v21
  %v164 = vunpack.c.l.b16 %v22
  %v165 = vunpack.c.l.b16 %v23
  %v166 = vunpack.c.l.b16 %v24
  %v167 = vunpack.c.l.b16 %v25
  %v168 = vunpack.c.l.b16 %v26
  %v169 = vunpack.c.l.b16 %v27
  %v170 = vunpack.c.l.b16 %v28
  %v171 = vunpack.c.l.b16 %v29
  %v172 = vunpack.c.l.b16 %v30
  %v173 = vunpack.c.l.b16 %v31
  %v174 = vunpack.c.l.b16 %v32
  %v175 = vunpack.c.l.b16 %v33
  %v176 = vunpack.c.l.b16 %v34
  %v177 = vunpack.c.l.b16 %v35
  %v178 = vunpack.c.l.b16 %v36
  %v179 = vunpack.c.l.b16 %v37
  %v180 = vunpack.c.l.b16 %v38
  %v181 = vunpack.c.l.b16 %v39
  %v182 = vunpack.c.l.b16 %v40
  %v183 = vunpack.c.l.b16 %v41
  %v184 = vunpack.c.l.b16 %v42
  %v185 = vunpack.c.l.b16 %v43
  %v186 = vunpack.c.l.b16 %v44
  %v187 = vunpack.c.l.b16 %v45
  %v188 = vunpack.c.l.b16 %v46
  %v189 = vunpack.c.l.b16 %v47
  %v190 = vunpack.c.l.b16 %v48
  %v191 = vunpack.c.l.b16 %v49
  %v192 = vunpack.c.l.b16 %v50
  %v193 = vunpack.c.l.b16 %v51
  %v194 = vunpack.c.l.b16 %v52
  %v195 = vunpack.c.l.b16 %v53
  %v196 = vunpack.c.l.b16 %v54
  %v197 = vunpack.c.l.b16 %v55
  %v198 = vunpack.c.l.b16 %v56
  %v199 = vunpack.c.l.b16 %v57
  %v200 = vunpack.c.l.b16 %v58
  %v201 = vunpack.c.l.b16 %v59
  %v202 = vunpack.c.l.b16 %v60
  %v203 = vunpack.c.l.b16 %v61
  %v204 = vunpack.c.l.b16 %v62
  %v205 = vunpack.c.l.b16 %v63
  %v206 = vunpack.c.l.b16 %v64
  %v207 = vunpack.c.l.b16 %v65
  %v208 = vunpack.c.l.b16 %v66
  %v209 = vunpack.c.l.b16 %v67
  %v210 = vunpack.c.l.b16 %v68
  %v211 = vunpack.c.l.b16 %v69
  %v212 = vunpack.c.l.b16 %v70
  %v213 = vunpack.c.l.b16 %v71
  %v214 = vunpack.c.l.b16 %v72
  %v215 = vunpack.c.l.b16 %v73
  %v216 = vunpack.c.l.b16 %v74
  %v217 = vunpack.c.l.b16 %v75
  %v218 = vunpack.c.l.b16 %v76
  %v219 = vunpack.c.l.b16 %v77
  %v220 = vunpack.c.l.b16 %v78
  %v221 = vunpack.c.l.b16 %v79
  %v222 = vunpack.c.l.b16 %v80
  %v223 = vpack.c.b16 %v160, %v159
  %v224 = vpack.c.b16 %v162, %v161
  %v225 = vpack.c.b16 %v164, %v163
  %v226 = vpack.c.b16 %v166, %v165
  %v227 = vpack.c.b16 %v168, %v167
  %v228 = vpack.c.b16 %v170, %v169
  %v229 = vpack.c.b16 %v172, %v171
  %v230 = vpack.c.b16 %v174, %v173
  %v231 = vpack.c.b16 %v176, %v175
  %v232 = vpack.c.b16 %v178, %v177
  %v233 = vpack.c.b16 %v180, %v179
  %v234 = vpack.c.b16 %v182, %v181
  %v235 = vpack.c.b16 %v184, %v183
  %v236 = vpack.c.b16 %v186, %v185
  %v237 = vpack.c.b16 %v188, %v187
  %v238 = vpack.c.b16 %v190, %v189
  %v239 = vpack.c.b16 %v192, %v191
  %v240 = vpack.c.b16 %v194, %v193
  %v241 = vpack.c.b16 %v196, %v195
  %v242 = vpack.c.b16 %v198, %v197
  %v243 = vpack.c.b16 %v200, %v199
  %v244 = vpack.c.b16 %v202, %v201
  %v245 = vpack.c.b16 %v204, %v203
  %v246 = vpack.c.b16 %v206, %v205
  %v247 = vpack.c.b16 %v208, %v207
  %v248 = vpack.c.b16 %v210, %v209
  %v249 = vpack.c.b16 %v212, %v211
  %v250 = vpack.c.b16 %v214, %v213
  %v251 = vpack.c.b16 %v216, %v215
  %v252 = vpack.c.b16 %v218, %v217
  %v253 = vpack.c.b16 %v220, %v219
  %v254 = vpack.c.b16 %v222, %v221
  %287 = vmatprep.subr.bf16.mxu0 0
  %288 = vmatpush1.bf16.msra.mxu0 %v230
  %289 = vmatprep.subr.bf16.mxu0 0
  %290 = vmatpush1.bf16.msra.mxu0 %v229
  %291 = vmatprep.subr.bf16.mxu0 0
  %292 = vmatpush1.bf16.msra.mxu0 %v228
  %293 = vmatprep.subr.bf16.mxu0 0
  %294 = vmatpush1.bf16.msra.mxu0 %v227
  %295 = vmatprep.subr.bf16.mxu0 0
  %296 = vmatpush1.bf16.msra.mxu0 %v226
  %297 = vmatprep.subr.bf16.mxu0 0
  %298 = vmatpush1.bf16.msra.mxu0 %v225
  %299 = vmatprep.subr.bf16.mxu0 0
  %300 = vmatpush1.bf16.msra.mxu0 %v224
  %301 = vmatprep.subr.bf16.mxu0 0
  %302 = vmatpush1.bf16.msra.mxu0 %v223
  %303 = vmatprep.subr.bf16.mxu0 0
  %304 = vmatpush2.bf16.msra.mxu0 %v238
  %305 = vmatprep.subr.bf16.mxu0 0
  %306 = vmatpush2.bf16.msra.mxu0 %v237
  %307 = vmatprep.subr.bf16.mxu0 0
  %308 = vmatpush2.bf16.msra.mxu0 %v236
  %309 = vmatprep.subr.bf16.mxu0 0
  %310 = vmatpush2.bf16.msra.mxu0 %v235
  %311 = vmatprep.subr.bf16.mxu0 0
  %312 = vmatpush2.bf16.msra.mxu0 %v234
  %313 = vmatprep.subr.bf16.mxu0 0
  %314 = vmatpush2.bf16.msra.mxu0 %v233
  %315 = vmatprep.subr.bf16.mxu0 0
  %316 = vmatpush2.bf16.msra.mxu0 %v232
  %317 = vmatprep.subr.bf16.mxu0 0
  %318 = vmatpush2.bf16.msra.mxu0 %v231
  %319 = vmatprep.mubr.bf16.mxu0 %v88
  %320 = vmatmul.mubr.bf16.gmra.mxu0 %v87
  %v321 = vpop.f32.mrf.mxu0
  %v322 = vadd.f32 0.0, %v321
  %v323 = vpop.f32.mrf.mxu0
  %v324 = vpop.f32.mrf.mxu0
  %v325 = vpop.f32.mrf.mxu0
  %326 = vdwg.mxu0
  %327 = vmatprep.subr.bf16.mxu0 0
  %328 = vmatpush1.bf16.msra.mxu0 %v246
  %329 = vmatprep.subr.bf16.mxu0 0
  %330 = vmatpush1.bf16.msra.mxu0 %v245
  %331 = vmatprep.subr.bf16.mxu0 0
  %332 = vmatpush1.bf16.msra.mxu0 %v244
  %333 = vmatprep.subr.bf16.mxu0 0
  %334 = vmatpush1.bf16.msra.mxu0 %v243
  %335 = vmatprep.subr.bf16.mxu0 0
  %336 = vmatpush1.bf16.msra.mxu0 %v242
  %337 = vmatprep.subr.bf16.mxu0 0
  %338 = vmatpush1.bf16.msra.mxu0 %v241
  %339 = vmatprep.subr.bf16.mxu0 0
  %340 = vmatpush1.bf16.msra.mxu0 %v240
  %341 = vmatprep.subr.bf16.mxu0 0
  %342 = vmatpush1.bf16.msra.mxu0 %v239
  %343 = vmatprep.subr.bf16.mxu0 0
  %344 = vmatpush2.bf16.msra.mxu0 %v254
  %345 = vmatprep.subr.bf16.mxu0 0
  %346 = vmatpush2.bf16.msra.mxu0 %v253
  %347 = vmatprep.subr.bf16.mxu0 0
  %348 = vmatpush2.bf16.msra.mxu0 %v252
  %349 = vmatprep.subr.bf16.mxu0 0
  %350 = vmatpush2.bf16.msra.mxu0 %v251
  %351 = vmatprep.subr.bf16.mxu0 0
  %352 = vmatpush2.bf16.msra.mxu0 %v250
  %353 = vmatprep.subr.bf16.mxu0 0
  %354 = vmatpush2.bf16.msra.mxu0 %v249
  %355 = vmatprep.subr.bf16.mxu0 0
  %356 = vmatpush2.bf16.msra.mxu0 %v248
  %357 = vmatprep.subr.bf16.mxu0 0
  %358 = vmatpush2.bf16.msra.mxu0 %v247
  %359 = vmatprep.mubr.bf16.mxu0 %v90
  %360 = vmatmul.mubr.bf16.gmra.mxu0 %v89
  %v361 = vpop.f32.mrf.mxu0
  %v362 = vadd.f32 %v322, %v361
  %v363 = vpop.f32.mrf.mxu0
  %v364 = vpop.f32.mrf.mxu0
  %v365 = vpop.f32.mrf.mxu0
  %366 = vdwg.mxu0
  %v367 = vpack.c.bf16 %v362, %v362
  %vm368 = vcmask 519168
  %369 = vst.msk [vmem:[%s2] sm:$0xf] %vm368, %v367
  %v370 = vunpack.c.l.bf16 %v367
  %vm371 = vcmask 523264
  %v372 = vsel %vm371, %v370, 0.0
  %v373 = vrot.slane %v372, 4
  %v374 = vadd.f32 %v372, %v373
  %v375 = vrot.slane %v374, 2
  %v376 = vadd.f32 %v374, %v375
  %v377 = vrot.slane %v376, 1
  %v378 = vadd.f32 %v376, %v377
  %v379 = vmul.f32 %v370, %v370
  %v380 = vsel %vm371, %v379, 0.0
  %v381 = vrot.slane %v380, 4
  %v382 = vadd.f32 %v380, %v381
  %v383 = vrot.slane %v382, 2
  %v384 = vadd.f32 %v382, %v383
  %v385 = vrot.slane %v384, 1
  %v386 = vadd.f32 %v384, %v385
  %vm387 = vcmask 516096
  %388 = vst.msk [vmem:[%s3] sm:$0x1] %vm387, %v378
  %389 = vst.msk [vmem:[%s4] sm:$0x1] %vm387, %v386
  // Predicated region
  $region10: #{_lambda_.13} parent=0 // pred_check
    _
  $region11: #{_lambda_.13} parent=0 // pred_check_branch
    %391 = sbr.rel (0) target = $region13
  $region12: #{_lambda_.13} parent=0 // pred_region
    _
  $region13: #{_lambda_.13} parent=0 // pred_fallthru
    _
  // Predicated region
  $region14: #{_lambda_.13} parent=0 // pred_check
    _
  $region15: #{_lambda_.13} parent=0 // pred_check_branch
    %393 = sbr.rel (0) target = $region17
  $region16: #{_lambda_.13} parent=0 // pred_region
    _
  $region17: #{_lambda_.13} parent=0 // pred_fallthru
    _
  // Predicated region
  $region18: #{_lambda_.13} parent=0 // pred_check
    _
  $region19: #{_lambda_.13} parent=0 // pred_check_branch
    %395 = sbr.rel (0) target = $region21
  $region20: #{_lambda_.13} parent=0 // pred_region
    _
  $region21: #{_lambda_.13} parent=0 // pred_fallthru
    _
  // Predicated region
  $region22: #{_lambda_.13} parent=0 // pred_check
    _
  $region23: #{_lambda_.13} parent=0 // pred_check_branch
    %397 = sbr.rel (0) target = $region25
  $region24: #{_lambda_.13} parent=0 // pred_region
    _
  $region25: #{_lambda_.13} parent=0 // pred_fallthru
    _
  // Predicated region
  $region26: #{_lambda_.13} parent=0 // pred_check
    _
  $region27: #{_lambda_.13} parent=0 // pred_check_branch
    %399 = sbr.rel (0) target = $region29
  $region28: #{_lambda_.13} parent=0 // pred_region
    _
  $region29: #{_lambda_.13} parent=0 // pred_fallthru
    _
  // Predicated region
  $region30: #{_lambda_.13} parent=0 // pred_check
    _
  $region31: #{_lambda_.13} parent=0 // pred_check_branch
    %401 = sbr.rel (0) target = $region33
  $region32: #{_lambda_.13} parent=0 // pred_region
    _
  $region33: #{_lambda_.13} parent=0 // pred_fallthru
    _

// kernel: _lambda_.15
$region0: #{_lambda_.15}
  #allocation0 [shape = 'u32[]', space=smem, size = 0x4, offset = 0x4, fixed_abs, tag = 'smem constant byte address 0x4 - core index']
  #allocation1 [shape = 'u32[144,128]{1,0:T(1,128)}', space=vmem, size = 0x12000, scoped, tag = 'internal scratch']
  %s0 = inlined_call_operand.vmem [shape: bf16[2,576], index: 0, kind: input, shape index: {}]
  %s1 = inlined_call_operand.vmem [shape: bf16[576,256], index: 1, kind: input, shape index: {}]
  %s2 = inlined_call_operand.vmem [shape: bf16[2,256], index: 2, kind: output, shape index: {0}]
  %s3 = inlined_call_operand.vmem [shape: f32[1,1,256], index: 3, kind: output, shape index: {1}]
  %s4 = inlined_call_operand.vmem [shape: f32[1,1,256], index: 4, kind: output, shape index: {2}]
  %5 = xla_tuple %s2, %s3, %s4
  %s6 = sld [smem:[#allocation0]]
  $region34: #{_lambda_.15} parent=0
    _
  %s8 = ssub.s32 1, %s6
  %s9 = scalar_select 0, %s8, %s6
  // Predicated region
  $region2: #{_lambda_.15} parent=0 // pred_check
    _
  $region3: #{_lambda_.15} parent=0 // pred_check_branch
    %11 = sbr.rel (0) target = $region5
  $region4: #{_lambda_.15} parent=0 // pred_region
    _
  $region5: #{_lambda_.15} parent=0 // pred_fallthru
    _
  // Predicated region
  $region6: #{_lambda_.15} parent=0 // pred_check
    _
  $region7: #{_lambda_.15} parent=0 // pred_check_branch
    %13 = sbr.rel (0) target = $region9
  $region8: #{_lambda_.15} parent=0 // pred_region
    _
  $region9: #{_lambda_.15} parent=0 // pred_fallthru
    _
  %v15 = vld [vmem:[%s0] sm:$0x1f]
  %v16 = vld [vmem:[%s1] sm:$0xff]
  %v17 = vld [vmem:[%s1 + $0x8] sm:$0xff]
  %v18 = vld [vmem:[%s1 + $0x10] sm:$0xff]
  %v19 = vld [vmem:[%s1 + $0x18] sm:$0xff]
  %v20 = vld [vmem:[%s1 + $0x20] sm:$0xff]
  %v21 = vld [vmem:[%s1 + $0x28] sm:$0xff]
  %v22 = vld [vmem:[%s1 + $0x30] sm:$0xff]
  %v23 = vld [vmem:[%s1 + $0x38] sm:$0xff]
  %v24 = vld [vmem:[%s1 + $0x40] sm:$0xff]
  %v25 = vld [vmem:[%s1 + $0x48] sm:$0xff]
  %v26 = vld [vmem:[%s1 + $0x50] sm:$0xff]
  %v27 = vld [vmem:[%s1 + $0x58] sm:$0xff]
  %v28 = vld [vmem:[%s1 + $0x60] sm:$0xff]
  %v29 = vld [vmem:[%s1 + $0x68] sm:$0xff]
  %v30 = vld [vmem:[%s1 + $0x70] sm:$0xff]
  %v31 = vld [vmem:[%s1 + $0x78] sm:$0xff]
  %v32 = vld [vmem:[%s1 + $0x80] sm:$0xff]
  %v33 = vld [vmem:[%s1 + $0x88] sm:$0xff]
  %v34 = vld [vmem:[%s1 + $0x90] sm:$0xff]
  %v35 = vld [vmem:[%s1 + $0x98] sm:$0xff]
  %v36 = vld [vmem:[%s1 + $0xa0] sm:$0xff]
  %v37 = vld [vmem:[%s1 + $0xa8] sm:$0xff]
  %v38 = vld [vmem:[%s1 + $0xb0] sm:$0xff]
  %v39 = vld [vmem:[%s1 + $0xb8] sm:$0xff]
  %v40 = vld [vmem:[%s1 + $0xc0] sm:$0xff]
  %v41 = vld [vmem:[%s1 + $0xc8] sm:$0xff]
  %v42 = vld [vmem:[%s1 + $0xd0] sm:$0xff]
  %v43 = vld [vmem:[%s1 + $0xd8] sm:$0xff]
  %v44 = vld [vmem:[%s1 + $0xe0] sm:$0xff]
  %v45 = vld [vmem:[%s1 + $0xe8] sm:$0xff]
  %v46 = vld [vmem:[%s1 + $0xf0] sm:$0xff]
  %v47 = vld [vmem:[%s1 + $0xf8] sm:$0xff]
  %v48 = vld [vmem:[%s1 + $0x100] sm:$0xff]
  %v49 = vld [vmem:[%s1 + $0x108] sm:$0xff]
  %v50 = vld [vmem:[%s1 + $0x110] sm:$0xff]
  %v51 = vld [vmem:[%s1 + $0x118] sm:$0xff]
  %v52 = vld [vmem:[%s1 + $0x120] sm:$0xff]
  %v53 = vld [vmem:[%s1 + $0x128] sm:$0xff]
  %v54 = vld [vmem:[%s1 + $0x130] sm:$0xff]
  %v55 = vld [vmem:[%s1 + $0x138] sm:$0xff]
  %v56 = vld [vmem:[%s1 + $0x140] sm:$0xff]
  %v57 = vld [vmem:[%s1 + $0x148] sm:$0xff]
  %v58 = vld [vmem:[%s1 + $0x150] sm:$0xff]
  %v59 = vld [vmem:[%s1 + $0x158] sm:$0xff]
  %v60 = vld [vmem:[%s1 + $0x160] sm:$0xff]
  %v61 = vld [vmem:[%s1 + $0x168] sm:$0xff]
  %v62 = vld [vmem:[%s1 + $0x170] sm:$0xff]
  %v63 = vld [vmem:[%s1 + $0x178] sm:$0xff]
  %v64 = vld [vmem:[%s1 + $0x180] sm:$0xff]
  %v65 = vld [vmem:[%s1 + $0x188] sm:$0xff]
  %v66 = vld [vmem:[%s1 + $0x190] sm:$0xff]
  %v67 = vld [vmem:[%s1 + $0x198] sm:$0xff]
  %v68 = vld [vmem:[%s1 + $0x1a0] sm:$0xff]
  %v69 = vld [vmem:[%s1 + $0x1a8] sm:$0xff]
  %v70 = vld [vmem:[%s1 + $0x1b0] sm:$0xff]
  %v71 = vld [vmem:[%s1 + $0x1b8] sm:$0xff]
  %v72 = vld [vmem:[%s1 + $0x1c0] sm:$0xff]
  %v73 = vld [vmem:[%s1 + $0x1c8] sm:$0xff]
  %v74 = vld [vmem:[%s1 + $0x1d0] sm:$0xff]
  %v75 = vld [vmem:[%s1 + $0x1d8] sm:$0xff]
  %v76 = vld [vmem:[%s1 + $0x1e0] sm:$0xff]
  %v77 = vld [vmem:[%s1 + $0x1e8] sm:$0xff]
  %v78 = vld [vmem:[%s1 + $0x1f0] sm:$0xff]
  %v79 = vld [vmem:[%s1 + $0x1f8] sm:$0xff]
  %v80 = vld [vmem:[%s1 + $0x200] sm:$0xff]
  %v81 = vld [vmem:[%s1 + $0x208] sm:$0xff]
  %v82 = vld [vmem:[%s1 + $0x210] sm:$0xff]
  %v83 = vld [vmem:[%s1 + $0x218] sm:$0xff]
  %v84 = vld [vmem:[%s1 + $0x220] sm:$0xff]
  %v85 = vld [vmem:[%s1 + $0x228] sm:$0xff]
  %v86 = vld [vmem:[%s1 + $0x230] sm:$0xff]
  %v87 = vld [vmem:[%s1 + $0x238] sm:$0xff]
  %v89 = vcombine.high %v15, %v15
  %v91 = vunpack.c.l.s4 1966171168
  %v92 = vunpack.c.0.s8 %v91
  %v93 = vlaneseq
  %v94 = vshrl.u32 %v93, 7
  %v95 = vsub.s32 %v92, %v94
  %v96 = vrot.slane %v15, %v95
  %v98 = vunpack.c.l.s4 1966171168
  %v99 = vunpack.c.0.s8 %v98
  %v100 = vlaneseq
  %v101 = vshrl.u32 %v100, 7
  %v102 = vsub.s32 %v99, %v101
  %v103 = vrot.slane %v89, %v102
  %v104 = vcombine.high %v96, %v96
  %v106 = vunpack.c.l.s4 1966171168
  %v107 = vunpack.c.0.s8 %v106
  %v108 = vlaneseq
  %v109 = vshrl.u32 %v108, 7
  %v110 = vsub.s32 %v107, %v109
  %v111 = vrot.slane %v96, %v110
  %v113 = vunpack.c.l.s4 1966171168
  %v114 = vunpack.c.0.s8 %v113
  %v115 = vlaneseq
  %v116 = vshrl.u32 %v115, 7
  %v117 = vsub.s32 %v114, %v116
  %v118 = vrot.slane %v103, %v117
  %v120 = vunpack.c.l.s4 1966171168
  %v121 = vunpack.c.0.s8 %v120
  %v122 = vlaneseq
  %v123 = vshrl.u32 %v122, 7
  %v124 = vsub.s32 %v121, %v123
  %v125 = vrot.slane %v104, %v124
  %v126 = vcombine.high %v111, %v111
  %v127 = vcombine.high %v125, %v125
  %v204 = vunpack.c.l.b16 %v16
  %v205 = vunpack.c.h.b16 %v16
  %v206 = vunpack.c.l.b16 %v17
  %v207 = vunpack.c.h.b16 %v17
  %v208 = vunpack.c.l.b16 %v18
  %v209 = vunpack.c.h.b16 %v18
  %v210 = vunpack.c.l.b16 %v19
  %v211 = vunpack.c.h.b16 %v19
  %v212 = vunpack.c.l.b16 %v20
  %v213 = vunpack.c.h.b16 %v20
  %v214 = vunpack.c.l.b16 %v21
  %v215 = vunpack.c.h.b16 %v21
  %v216 = vunpack.c.l.b16 %v22
  %v217 = vunpack.c.h.b16 %v22
  %v218 = vunpack.c.l.b16 %v23
  %v219 = vunpack.c.h.b16 %v23
  %v220 = vunpack.c.l.b16 %v24
  %v221 = vunpack.c.h.b16 %v24
  %v222 = vunpack.c.l.b16 %v25
  %v223 = vunpack.c.h.b16 %v25
  %v224 = vunpack.c.l.b16 %v26
  %v225 = vunpack.c.h.b16 %v26
  %v226 = vunpack.c.l.b16 %v27
  %v227 = vunpack.c.h.b16 %v27
  %v228 = vunpack.c.l.b16 %v28
  %v229 = vunpack.c.h.b16 %v28
  %v230 = vunpack.c.l.b16 %v29
  %v231 = vunpack.c.h.b16 %v29
  %v232 = vunpack.c.l.b16 %v30
  %v233 = vunpack.c.h.b16 %v30
  %v234 = vunpack.c.l.b16 %v31
  %v235 = vunpack.c.h.b16 %v31
  %v236 = vunpack.c.l.b16 %v32
  %v237 = vunpack.c.h.b16 %v32
  %v238 = vunpack.c.l.b16 %v33
  %v239 = vunpack.c.h.b16 %v33
  %v240 = vunpack.c.l.b16 %v34
  %v241 = vunpack.c.h.b16 %v34
  %v242 = vunpack.c.l.b16 %v35
  %v243 = vunpack.c.h.b16 %v35
  %v244 = vunpack.c.l.b16 %v36
  %v245 = vunpack.c.h.b16 %v36
  %v246 = vunpack.c.l.b16 %v37
  %v247 = vunpack.c.h.b16 %v37
  %v248 = vunpack.c.l.b16 %v38
  %v249 = vunpack.c.h.b16 %v38
  %v250 = vunpack.c.l.b16 %v39
  %v251 = vunpack.c.h.b16 %v39
  %v252 = vunpack.c.l.b16 %v40
  %v253 = vunpack.c.h.b16 %v40
  %v254 = vunpack.c.l.b16 %v41
  %v255 = vunpack.c.h.b16 %v41
  %v256 = vunpack.c.l.b16 %v42
  %v257 = vunpack.c.h.b16 %v42
  %v258 = vunpack.c.l.b16 %v43
  %v259 = vunpack.c.h.b16 %v43
  %v260 = vunpack.c.l.b16 %v44
  %v261 = vunpack.c.h.b16 %v44
  %v262 = vunpack.c.l.b16 %v45
  %v263 = vunpack.c.h.b16 %v45
  %v264 = vunpack.c.l.b16 %v46
  %v265 = vunpack.c.h.b16 %v46
  %v266 = vunpack.c.l.b16 %v47
  %v267 = vunpack.c.h.b16 %v47
  %v268 = vunpack.c.l.b16 %v48
  %v269 = vunpack.c.h.b16 %v48
  %v270 = vunpack.c.l.b16 %v49
  %v271 = vunpack.c.h.b16 %v49
  %v272 = vunpack.c.l.b16 %v50
  %v273 = vunpack.c.h.b16 %v50
  %v274 = vunpack.c.l.b16 %v51
  %v275 = vunpack.c.h.b16 %v51
  %v276 = vunpack.c.l.b16 %v52
  %v277 = vunpack.c.h.b16 %v52
  %v278 = vunpack.c.l.b16 %v53
  %v279 = vunpack.c.h.b16 %v53
  %v280 = vunpack.c.l.b16 %v54
  %v281 = vunpack.c.h.b16 %v54
  %v282 = vunpack.c.l.b16 %v55
  %v283 = vunpack.c.h.b16 %v55
  %v284 = vunpack.c.l.b16 %v56
  %v285 = vunpack.c.h.b16 %v56
  %v286 = vunpack.c.l.b16 %v57
  %v287 = vunpack.c.h.b16 %v57
  %v288 = vunpack.c.l.b16 %v58
  %v289 = vunpack.c.h.b16 %v58
  %v290 = vunpack.c.l.b16 %v59
  %v291 = vunpack.c.h.b16 %v59
  %v292 = vunpack.c.l.b16 %v60
  %v293 = vunpack.c.h.b16 %v60
  %v294 = vunpack.c.l.b16 %v61
  %v295 = vunpack.c.h.b16 %v61
  %v296 = vunpack.c.l.b16 %v62
  %v297 = vunpack.c.h.b16 %v62
  %v298 = vunpack.c.l.b16 %v63
  %v299 = vunpack.c.h.b16 %v63
  %v300 = vunpack.c.l.b16 %v64
  %v301 = vunpack.c.h.b16 %v64
  %v302 = vunpack.c.l.b16 %v65
  %v303 = vunpack.c.h.b16 %v65
  %v304 = vunpack.c.l.b16 %v66
  %v305 = vunpack.c.h.b16 %v66
  %v306 = vunpack.c.l.b16 %v67
  %v307 = vunpack.c.h.b16 %v67
  %v308 = vunpack.c.l.b16 %v68
  %v309 = vunpack.c.h.b16 %v68
  %v310 = vunpack.c.l.b16 %v69
  %v311 = vunpack.c.h.b16 %v69
  %v312 = vunpack.c.l.b16 %v70
  %v313 = vunpack.c.h.b16 %v70
  %v314 = vunpack.c.l.b16 %v71
  %v315 = vunpack.c.h.b16 %v71
  %v316 = vunpack.c.l.b16 %v72
  %v317 = vunpack.c.h.b16 %v72
  %v318 = vunpack.c.l.b16 %v73
  %v319 = vunpack.c.h.b16 %v73
  %v320 = vunpack.c.l.b16 %v74
  %v321 = vunpack.c.h.b16 %v74
  %v322 = vunpack.c.l.b16 %v75
  %v323 = vunpack.c.h.b16 %v75
  %v324 = vunpack.c.l.b16 %v76
  %v325 = vunpack.c.h.b16 %v76
  %v326 = vunpack.c.l.b16 %v77
  %v327 = vunpack.c.h.b16 %v77
  %v328 = vunpack.c.l.b16 %v78
  %v329 = vunpack.c.h.b16 %v78
  %v330 = vunpack.c.l.b16 %v79
  %v331 = vunpack.c.h.b16 %v79
  %v332 = vunpack.c.l.b16 %v80
  %v333 = vunpack.c.h.b16 %v80
  %v334 = vunpack.c.l.b16 %v81
  %v335 = vunpack.c.h.b16 %v81
  %v336 = vunpack.c.l.b16 %v82
  %v337 = vunpack.c.h.b16 %v82
  %v338 = vunpack.c.l.b16 %v83
  %v339 = vunpack.c.h.b16 %v83
  %v340 = vunpack.c.l.b16 %v84
  %v341 = vunpack.c.h.b16 %v84
  %v342 = vunpack.c.l.b16 %v85
  %v343 = vunpack.c.h.b16 %v85
  %v344 = vunpack.c.l.b16 %v86
  %v345 = vunpack.c.h.b16 %v86
  %v346 = vunpack.c.l.b16 %v87
  %v347 = vunpack.c.h.b16 %v87
  %v348 = vpack.c.b16 %v206, %v204
  %v349 = vpack.c.b16 %v207, %v205
  %v350 = vpack.c.b16 %v210, %v208
  %v351 = vpack.c.b16 %v211, %v209
  %v352 = vpack.c.b16 %v214, %v212
  %v353 = vpack.c.b16 %v215, %v213
  %v354 = vpack.c.b16 %v218, %v216
  %v355 = vpack.c.b16 %v219, %v217
  %v356 = vpack.c.b16 %v222, %v220
  %v357 = vpack.c.b16 %v223, %v221
  %v358 = vpack.c.b16 %v226, %v224
  %v359 = vpack.c.b16 %v227, %v225
  %v360 = vpack.c.b16 %v230, %v228
  %v361 = vpack.c.b16 %v231, %v229
  %v362 = vpack.c.b16 %v234, %v232
  %v363 = vpack.c.b16 %v235, %v233
  %v364 = vpack.c.b16 %v238, %v236
  %v365 = vpack.c.b16 %v239, %v237
  %v366 = vpack.c.b16 %v242, %v240
  %v367 = vpack.c.b16 %v243, %v241
  %v368 = vpack.c.b16 %v246, %v244
  %v369 = vpack.c.b16 %v247, %v245
  %v370 = vpack.c.b16 %v250, %v248
  %v371 = vpack.c.b16 %v251, %v249
  %v372 = vpack.c.b16 %v254, %v252
  %v373 = vpack.c.b16 %v255, %v253
  %v374 = vpack.c.b16 %v258, %v256
  %v375 = vpack.c.b16 %v259, %v257
  %v376 = vpack.c.b16 %v262, %v260
  %v377 = vpack.c.b16 %v263, %v261
  %v378 = vpack.c.b16 %v266, %v264
  %v379 = vpack.c.b16 %v267, %v265
  %v380 = vpack.c.b16 %v270, %v268
  %v381 = vpack.c.b16 %v271, %v269
  %v382 = vpack.c.b16 %v274, %v272
  %v383 = vpack.c.b16 %v275, %v273
  %v384 = vpack.c.b16 %v278, %v276
  %v385 = vpack.c.b16 %v279, %v277
  %v386 = vpack.c.b16 %v282, %v280
  %v387 = vpack.c.b16 %v283, %v281
  %v388 = vpack.c.b16 %v286, %v284
  %v389 = vpack.c.b16 %v287, %v285
  %v390 = vpack.c.b16 %v290, %v288
  %v391 = vpack.c.b16 %v291, %v289
  %v392 = vpack.c.b16 %v294, %v292
  %v393 = vpack.c.b16 %v295, %v293
  %v394 = vpack.c.b16 %v298, %v296
  %v395 = vpack.c.b16 %v299, %v297
  %v396 = vpack.c.b16 %v302, %v300
  %v397 = vpack.c.b16 %v303, %v301
  %v398 = vpack.c.b16 %v306, %v304
  %v399 = vpack.c.b16 %v307, %v305
  %v400 = vpack.c.b16 %v310, %v308
  %v401 = vpack.c.b16 %v311, %v309
  %v402 = vpack.c.b16 %v314, %v312
  %v403 = vpack.c.b16 %v315, %v313
  %v404 = vpack.c.b16 %v318, %v316
  %v405 = vpack.c.b16 %v319, %v317
  %v406 = vpack.c.b16 %v322, %v320
  %v407 = vpack.c.b16 %v323, %v321
  %v408 = vpack.c.b16 %v326, %v324
  %v409 = vpack.c.b16 %v327, %v325
  %v410 = vpack.c.b16 %v330, %v328
  %v411 = vpack.c.b16 %v331, %v329
  %v412 = vpack.c.b16 %v334, %v332
  %v413 = vpack.c.b16 %v335, %v333
  %v414 = vpack.c.b16 %v338, %v336
  %v415 = vpack.c.b16 %v339, %v337
  %v416 = vpack.c.b16 %v342, %v340
  %v417 = vpack.c.b16 %v343, %v341
  %v418 = vpack.c.b16 %v346, %v344
  %v419 = vpack.c.b16 %v347, %v345
  %vm492 = vcmask 523264
  %v494 = vsel %vm492, %v118, 0
  %496 = vmatprep.subr.bf16.mxu0 %v363
  %497 = vmatpush1.bf16.msra.mxu0 %v362
  %498 = vmatprep.subr.bf16.mxu0 %v361
  %499 = vmatpush1.bf16.msra.mxu0 %v360
  %500 = vmatprep.subr.bf16.mxu0 %v359
  %501 = vmatpush1.bf16.msra.mxu0 %v358
  %502 = vmatprep.subr.bf16.mxu0 %v357
  %503 = vmatpush1.bf16.msra.mxu0 %v356
  %504 = vmatprep.subr.bf16.mxu0 %v355
  %505 = vmatpush1.bf16.msra.mxu0 %v354
  %506 = vmatprep.subr.bf16.mxu0 %v353
  %507 = vmatpush1.bf16.msra.mxu0 %v352
  %508 = vmatprep.subr.bf16.mxu0 %v351
  %509 = vmatpush1.bf16.msra.mxu0 %v350
  %510 = vmatprep.subr.bf16.mxu0 %v349
  %511 = vmatpush1.bf16.msra.mxu0 %v348
  %512 = vmatprep.subr.bf16.mxu0 %v379
  %513 = vmatpush2.bf16.msra.mxu0 %v378
  %514 = vmatprep.subr.bf16.mxu0 %v377
  %515 = vmatpush2.bf16.msra.mxu0 %v376
  %516 = vmatprep.subr.bf16.mxu0 %v375
  %517 = vmatpush2.bf16.msra.mxu0 %v374
  %518 = vmatprep.subr.bf16.mxu0 %v373
  %519 = vmatpush2.bf16.msra.mxu0 %v372
  %520 = vmatprep.subr.bf16.mxu0 %v371
  %521 = vmatpush2.bf16.msra.mxu0 %v370
  %522 = vmatprep.subr.bf16.mxu0 %v369
  %523 = vmatpush2.bf16.msra.mxu0 %v368
  %524 = vmatprep.subr.bf16.mxu0 %v367
  %525 = vmatpush2.bf16.msra.mxu0 %v366
  %526 = vmatprep.subr.bf16.mxu0 %v365
  %527 = vmatpush2.bf16.msra.mxu0 %v364
  %528 = vmatprep.mubr.bf16.mxu0 %v125
  %529 = vmatmul.mubr.bf16.gmra.mxu0 %v111
  %v530 = vpop.f32.mrf.mxu0
  %v531 = vadd.f32 0.0, %v530
  %v532 = vpop.f32.mrf.mxu0
  %v533 = vadd.f32 0.0, %v532
  %v534 = vpop.f32.mrf.mxu0
  %v535 = vpop.f32.mrf.mxu0
  %536 = vdwg.mxu0
  %537 = vmatprep.subr.bf16.mxu0 %v395
  %538 = vmatpush1.bf16.msra.mxu0 %v394
  %539 = vmatprep.subr.bf16.mxu0 %v393
  %540 = vmatpush1.bf16.msra.mxu0 %v392
  %541 = vmatprep.subr.bf16.mxu0 %v391
  %542 = vmatpush1.bf16.msra.mxu0 %v390
  %543 = vmatprep.subr.bf16.mxu0 %v389
  %544 = vmatpush1.bf16.msra.mxu0 %v388
  %545 = vmatprep.subr.bf16.mxu0 %v387
  %546 = vmatpush1.bf16.msra.mxu0 %v386
  %547 = vmatprep.subr.bf16.mxu0 %v385
  %548 = vmatpush1.bf16.msra.mxu0 %v384
  %549 = vmatprep.subr.bf16.mxu0 %v383
  %550 = vmatpush1.bf16.msra.mxu0 %v382
  %551 = vmatprep.subr.bf16.mxu0 %v381
  %552 = vmatpush1.bf16.msra.mxu0 %v380
  %553 = vmatprep.subr.bf16.mxu0 %v411
  %554 = vmatpush2.bf16.msra.mxu0 %v410
  %555 = vmatprep.subr.bf16.mxu0 %v409
  %556 = vmatpush2.bf16.msra.mxu0 %v408
  %557 = vmatprep.subr.bf16.mxu0 %v407
  %558 = vmatpush2.bf16.msra.mxu0 %v406
  %559 = vmatprep.subr.bf16.mxu0 %v405
  %560 = vmatpush2.bf16.msra.mxu0 %v404
  %561 = vmatprep.subr.bf16.mxu0 %v403
  %562 = vmatpush2.bf16.msra.mxu0 %v402
  %563 = vmatprep.subr.bf16.mxu0 %v401
  %564 = vmatpush2.bf16.msra.mxu0 %v400
  %565 = vmatprep.subr.bf16.mxu0 %v399
  %566 = vmatpush2.bf16.msra.mxu0 %v398
  %567 = vmatprep.subr.bf16.mxu0 %v397
  %568 = vmatpush2.bf16.msra.mxu0 %v396
  %569 = vmatprep.mubr.bf16.mxu0 %v127
  %570 = vmatmul.mubr.bf16.gmra.mxu0 %v126
  %v571 = vpop.f32.mrf.mxu0
  %v572 = vadd.f32 %v531, %v571
  %v573 = vpop.f32.mrf.mxu0
  %v574 = vadd.f32 %v533, %v573
  %v575 = vpop.f32.mrf.mxu0
  %v576 = vpop.f32.mrf.mxu0
  %577 = vdwg.mxu0
  %578 = vmatprep.subr.bf16.mxu0 0
  %579 = vmatpush1.bf16.msra.mxu0 0
  %580 = vmatprep.subr.bf16.mxu0 0
  %581 = vmatpush1.bf16.msra.mxu0 0
  %582 = vmatprep.subr.bf16.mxu0 0
  %583 = vmatpush1.bf16.msra.mxu0 0
  %584 = vmatprep.subr.bf16.mxu0 0
  %585 = vmatpush1.bf16.msra.mxu0 0
  %586 = vmatprep.subr.bf16.mxu0 %v419
  %587 = vmatpush1.bf16.msra.mxu0 %v418
  %588 = vmatprep.subr.bf16.mxu0 %v417
  %589 = vmatpush1.bf16.msra.mxu0 %v416
  %590 = vmatprep.subr.bf16.mxu0 %v415
  %591 = vmatpush1.bf16.msra.mxu0 %v414
  %592 = vmatprep.subr.bf16.mxu0 %v413
  %593 = vmatpush1.bf16.msra.mxu0 %v412
  %594 = vmatprep.subr.bf16.mxu0 0
  %595 = vmatpush2.bf16.msra.mxu0 0
  %596 = vmatprep.subr.bf16.mxu0 0
  %597 = vmatpush2.bf16.msra.mxu0 0
  %598 = vmatprep.subr.bf16.mxu0 0
  %599 = vmatpush2.bf16.msra.mxu0 0
  %600 = vmatprep.subr.bf16.mxu0 0
  %601 = vmatpush2.bf16.msra.mxu0 0
  %602 = vmatprep.subr.bf16.mxu0 0
  %603 = vmatpush2.bf16.msra.mxu0 0
  %604 = vmatprep.subr.bf16.mxu0 0
  %605 = vmatpush2.bf16.msra.mxu0 0
  %606 = vmatprep.subr.bf16.mxu0 0
  %607 = vmatpush2.bf16.msra.mxu0 0
  %608 = vmatprep.subr.bf16.mxu0 0
  %609 = vmatpush2.bf16.msra.mxu0 0
  %610 = vmatprep.mubr.bf16.mxu0 0
  %611 = vmatmul.mubr.bf16.gmra.mxu0 %v494
  %v612 = vpop.f32.mrf.mxu0
  %v613 = vadd.f32 %v572, %v612
  %v614 = vpop.f32.mrf.mxu0
  %v615 = vadd.f32 %v574, %v614
  %v616 = vpop.f32.mrf.mxu0
  %v617 = vpop.f32.mrf.mxu0
  %618 = vdwg.mxu0
  %v619 = vpack.c.bf16 %v613, %v613
  %v620 = vpack.c.bf16 %v615, %v615
  %v623 = vcombine.low %v619, %v620
  %v625 = vunpack.c.l.s4 1966171168
  %v626 = vunpack.c.0.s8 %v625
  %v627 = vlaneseq
  %v628 = vshrl.u32 %v627, 7
  %v629 = vsub.s32 %v626, %v628
  %v630 = vrot.slane %v623, %v629
  %v632 = vunpack.c.l.s4 1966171168
  %v633 = vunpack.c.0.s8 %v632
  %v634 = vlaneseq
  %v635 = vshrl.u32 %v634, 7
  %v636 = vsub.s32 %v633, %v635
  %v637 = vrot.slane %v630, %v636
  %639 = vst [vmem:[%s2] sm:$0x3] %v637
  %v640 = vunpack.c.l.bf16 %v619
  %v641 = vunpack.c.l.bf16 %v620
  %vm642 = vcmask 1041408
  %v643 = vsel %vm642, %v640, 0.0
  %v644 = vrot.slane %v643, 4
  %v645 = vadd.f32 %v643, %v644
  %v646 = vrot.slane %v645, 2
  %v647 = vadd.f32 %v645, %v646
  %v648 = vrot.slane %v647, 1
  %v649 = vadd.f32 %v647, %v648
  %v650 = vsel %vm642, %v641, 0.0
  %v651 = vrot.slane %v650, 4
  %v652 = vadd.f32 %v650, %v651
  %v653 = vrot.slane %v652, 2
  %v654 = vadd.f32 %v652, %v653
  %v655 = vrot.slane %v654, 1
  %v656 = vadd.f32 %v654, %v655
  %v657 = vmul.f32 %v640, %v640
  %v658 = vmul.f32 %v641, %v641
  %v659 = vsel %vm642, %v657, 0.0
  %v660 = vrot.slane %v659, 4
  %v661 = vadd.f32 %v659, %v660
  %v662 = vrot.slane %v661, 2
  %v663 = vadd.f32 %v661, %v662
  %v664 = vrot.slane %v663, 1
  %v665 = vadd.f32 %v663, %v664
  %v666 = vsel %vm642, %v658, 0.0
  %v667 = vrot.slane %v666, 4
  %v668 = vadd.f32 %v666, %v667
  %v669 = vrot.slane %v668, 2
  %v670 = vadd.f32 %v668, %v669
  %v671 = vrot.slane %v670, 1
  %v672 = vadd.f32 %v670, %v671
  %v675 = vcombine.low %v649, %v656
  %v677 = vunpack.c.l.s4 1966171168
  %v678 = vunpack.c.0.s8 %v677
  %v679 = vlaneseq
  %v680 = vshrl.u32 %v679, 7
  %v681 = vsub.s32 %v678, %v680
  %v682 = vrot.slane %v675, %v681
  %v684 = vunpack.c.l.s4 1966171168
  %v685 = vunpack.c.0.s8 %v684
  %v686 = vlaneseq
  %v687 = vshrl.u32 %v686, 7
  %v688 = vsub.s32 %v685, %v687
  %v689 = vrot.slane %v682, %v688
  %v691 = vlaneseq
  %vm692 = vcmp.ge.s32.totalorder %v691, 0
  %vm693 = vcmp.lt.s32.totalorder %v691, 256
  %vm694 = vmand %vm692, %vm693
  %695 = vst.msk [vmem:[%s3] sm:$0x3] %vm694, %v689
  %v698 = vcombine.low %v665, %v672
  %v700 = vunpack.c.l.s4 1966171168
  %v701 = vunpack.c.0.s8 %v700
  %v702 = vlaneseq
  %v703 = vshrl.u32 %v702, 7
  %v704 = vsub.s32 %v701, %v703
  %v705 = vrot.slane %v698, %v704
  %v707 = vunpack.c.l.s4 1966171168
  %v708 = vunpack.c.0.s8 %v707
  %v709 = vlaneseq
  %v710 = vshrl.u32 %v709, 7
  %v711 = vsub.s32 %v708, %v710
  %v712 = vrot.slane %v705, %v711
  %714 = vst.msk [vmem:[%s4] sm:$0x3] %vm694, %v712
  // Predicated region
  $region10: #{_lambda_.15} parent=0 // pred_check
    _
  $region11: #{_lambda_.15} parent=0 // pred_check_branch
    %716 = sbr.rel (0) target = $region13
  $region12: #{_lambda_.15} parent=0 // pred_region
    _
  $region13: #{_lambda_.15} parent=0 // pred_fallthru
    _
  // Predicated region
  $region14: #{_lambda_.15} parent=0 // pred_check
    _
  $region15: #{_lambda_.15} parent=0 // pred_check_branch
    %718 = sbr.rel (0) target = $region17
  $region16: #{_lambda_.15} parent=0 // pred_region
    _
  $region17: #{_lambda_.15} parent=0 // pred_fallthru
    _
  // Predicated region
  $region18: #{_lambda_.15} parent=0 // pred_check
    _
  $region19: #{_lambda_.15} parent=0 // pred_check_branch
    %720 = sbr.rel (0) target = $region21
  $region20: #{_lambda_.15} parent=0 // pred_region
    _
  $region21: #{_lambda_.15} parent=0 // pred_fallthru
    _
  // Predicated region
  $region22: #{_lambda_.15} parent=0 // pred_check
    _
  $region23: #{_lambda_.15} parent=0 // pred_check_branch
    %722 = sbr.rel (0) target = $region25
  $region24: #{_lambda_.15} parent=0 // pred_region
    _
  $region25: #{_lambda_.15} parent=0 // pred_fallthru
    _
  // Predicated region
  $region26: #{_lambda_.15} parent=0 // pred_check
    _
  $region27: #{_lambda_.15} parent=0 // pred_check_branch
    %724 = sbr.rel (0) target = $region29
  $region28: #{_lambda_.15} parent=0 // pred_region
    _
  $region29: #{_lambda_.15} parent=0 // pred_fallthru
    _
  // Predicated region
  $region30: #{_lambda_.15} parent=0 // pred_check
    _
  $region31: #{_lambda_.15} parent=0 // pred_check_branch
    %726 = sbr.rel (0) target = $region33
  $region32: #{_lambda_.15} parent=0 // pred_region
    _
  $region33: #{_lambda_.15} parent=0 // pred_fallthru
    _

// kernel: _lambda_.14
$region0: #{_lambda_.14}
  #allocation0 [shape = 'u32[]', space=smem, size = 0x4, offset = 0x4, fixed_abs, tag = 'smem constant byte address 0x4 - core index']
  #allocation1 [shape = 'u32[144,128]{1,0:T(1,128)}', space=vmem, size = 0x12000, scoped, tag = 'internal scratch']
  %s0 = inlined_call_operand.vmem [shape: bf16[2,1024], index: 0, kind: input, shape index: {}]
  %s1 = inlined_call_operand.vmem [shape: bf16[1024,64], index: 1, kind: input, shape index: {}]
  %s2 = inlined_call_operand.vmem [shape: bf16[2,64], index: 2, kind: output, shape index: {}]
  %s3 = sld [smem:[#allocation0]]
  $region18: #{_lambda_.14} parent=0
    _
  %s5 = ssub.s32 1, %s3
  %s6 = scalar_select 0, %s5, %s3
  // Predicated region
  $region2: #{_lambda_.14} parent=0 // pred_check
    _
  $region3: #{_lambda_.14} parent=0 // pred_check_branch
    %8 = sbr.rel (0) target = $region5
  $region4: #{_lambda_.14} parent=0 // pred_region
    _
  $region5: #{_lambda_.14} parent=0 // pred_fallthru
    _
  // Predicated region
  $region6: #{_lambda_.14} parent=0 // pred_check
    _
  $region7: #{_lambda_.14} parent=0 // pred_check_branch
    %10 = sbr.rel (0) target = $region9
  $region8: #{_lambda_.14} parent=0 // pred_region
    _
  $region9: #{_lambda_.14} parent=0 // pred_fallthru
    _
  %v12 = vld [vmem:[%s0] sm:$0xff]
  %v13 = vld [vmem:[%s1] sm:$0xf]
  %v14 = vld [vmem:[%s1 + $0x4] sm:$0xf]
  %v15 = vld [vmem:[%s1 + $0x8] sm:$0xf]
  %v16 = vld [vmem:[%s1 + $0xc] sm:$0xf]
  %v17 = vld [vmem:[%s1 + $0x10] sm:$0xf]
  %v18 = vld [vmem:[%s1 + $0x14] sm:$0xf]
  %v19 = vld [vmem:[%s1 + $0x18] sm:$0xf]
  %v20 = vld [vmem:[%s1 + $0x1c] sm:$0xf]
  %v21 = vld [vmem:[%s1 + $0x20] sm:$0xf]
  %v22 = vld [vmem:[%s1 + $0x24] sm:$0xf]
  %v23 = vld [vmem:[%s1 + $0x28] sm:$0xf]
  %v24 = vld [vmem:[%s1 + $0x2c] sm:$0xf]
  %v25 = vld [vmem:[%s1 + $0x30] sm:$0xf]
  %v26 = vld [vmem:[%s1 + $0x34] sm:$0xf]
  %v27 = vld [vmem:[%s1 + $0x38] sm:$0xf]
  %v28 = vld [vmem:[%s1 + $0x3c] sm:$0xf]
  %v29 = vld [vmem:[%s1 + $0x40] sm:$0xf]
  %v30 = vld [vmem:[%s1 + $0x44] sm:$0xf]
  %v31 = vld [vmem:[%s1 + $0x48] sm:$0xf]
  %v32 = vld [vmem:[%s1 + $0x4c] sm:$0xf]
  %v33 = vld [vmem:[%s1 + $0x50] sm:$0xf]
  %v34 = vld [vmem:[%s1 + $0x54] sm:$0xf]
  %v35 = vld [vmem:[%s1 + $0x58] sm:$0xf]
  %v36 = vld [vmem:[%s1 + $0x5c] sm:$0xf]
  %v37 = vld [vmem:[%s1 + $0x60] sm:$0xf]
  %v38 = vld [vmem:[%s1 + $0x64] sm:$0xf]
  %v39 = vld [vmem:[%s1 + $0x68] sm:$0xf]
  %v40 = vld [vmem:[%s1 + $0x6c] sm:$0xf]
  %v41 = vld [vmem:[%s1 + $0x70] sm:$0xf]
  %v42 = vld [vmem:[%s1 + $0x74] sm:$0xf]
  %v43 = vld [vmem:[%s1 + $0x78] sm:$0xf]
  %v44 = vld [vmem:[%s1 + $0x7c] sm:$0xf]
  %v45 = vld [vmem:[%s1 + $0x80] sm:$0xf]
  %v46 = vld [vmem:[%s1 + $0x84] sm:$0xf]
  %v47 = vld [vmem:[%s1 + $0x88] sm:$0xf]
  %v48 = vld [vmem:[%s1 + $0x8c] sm:$0xf]
  %v49 = vld [vmem:[%s1 + $0x90] sm:$0xf]
  %v50 = vld [vmem:[%s1 + $0x94] sm:$0xf]
  %v51 = vld [vmem:[%s1 + $0x98] sm:$0xf]
  %v52 = vld [vmem:[%s1 + $0x9c] sm:$0xf]
  %v53 = vld [vmem:[%s1 + $0xa0] sm:$0xf]
  %v54 = vld [vmem:[%s1 + $0xa4] sm:$0xf]
  %v55 = vld [vmem:[%s1 + $0xa8] sm:$0xf]
  %v56 = vld [vmem:[%s1 + $0xac] sm:$0xf]
  %v57 = vld [vmem:[%s1 + $0xb0] sm:$0xf]
  %v58 = vld [vmem:[%s1 + $0xb4] sm:$0xf]
  %v59 = vld [vmem:[%s1 + $0xb8] sm:$0xf]
  %v60 = vld [vmem:[%s1 + $0xbc] sm:$0xf]
  %v61 = vld [vmem:[%s1 + $0xc0] sm:$0xf]
  %v62 = vld [vmem:[%s1 + $0xc4] sm:$0xf]
  %v63 = vld [vmem:[%s1 + $0xc8] sm:$0xf]
  %v64 = vld [vmem:[%s1 + $0xcc] sm:$0xf]
  %v65 = vld [vmem:[%s1 + $0xd0] sm:$0xf]
  %v66 = vld [vmem:[%s1 + $0xd4] sm:$0xf]
  %v67 = vld [vmem:[%s1 + $0xd8] sm:$0xf]
  %v68 = vld [vmem:[%s1 + $0xdc] sm:$0xf]
  %v69 = vld [vmem:[%s1 + $0xe0] sm:$0xf]
  %v70 = vld [vmem:[%s1 + $0xe4] sm:$0xf]
  %v71 = vld [vmem:[%s1 + $0xe8] sm:$0xf]
  %v72 = vld [vmem:[%s1 + $0xec] sm:$0xf]
  %v73 = vld [vmem:[%s1 + $0xf0] sm:$0xf]
  %v74 = vld [vmem:[%s1 + $0xf4] sm:$0xf]
  %v75 = vld [vmem:[%s1 + $0xf8] sm:$0xf]
  %v76 = vld [vmem:[%s1 + $0xfc] sm:$0xf]
  %v77 = vld [vmem:[%s1 + $0x100] sm:$0xf]
  %v78 = vld [vmem:[%s1 + $0x104] sm:$0xf]
  %v79 = vld [vmem:[%s1 + $0x108] sm:$0xf]
  %v80 = vld [vmem:[%s1 + $0x10c] sm:$0xf]
  %v81 = vld [vmem:[%s1 + $0x110] sm:$0xf]
  %v82 = vld [vmem:[%s1 + $0x114] sm:$0xf]
  %v83 = vld [vmem:[%s1 + $0x118] sm:$0xf]
  %v84 = vld [vmem:[%s1 + $0x11c] sm:$0xf]
  %v85 = vld [vmem:[%s1 + $0x120] sm:$0xf]
  %v86 = vld [vmem:[%s1 + $0x124] sm:$0xf]
  %v87 = vld [vmem:[%s1 + $0x128] sm:$0xf]
  %v88 = vld [vmem:[%s1 + $0x12c] sm:$0xf]
  %v89 = vld [vmem:[%s1 + $0x130] sm:$0xf]
  %v90 = vld [vmem:[%s1 + $0x134] sm:$0xf]
  %v91 = vld [vmem:[%s1 + $0x138] sm:$0xf]
  %v92 = vld [vmem:[%s1 + $0x13c] sm:$0xf]
  %v93 = vld [vmem:[%s1 + $0x140] sm:$0xf]
  %v94 = vld [vmem:[%s1 + $0x144] sm:$0xf]
  %v95 = vld [vmem:[%s1 + $0x148] sm:$0xf]
  %v96 = vld [vmem:[%s1 + $0x14c] sm:$0xf]
  %v97 = vld [vmem:[%s1 + $0x150] sm:$0xf]
  %v98 = vld [vmem:[%s1 + $0x154] sm:$0xf]
  %v99 = vld [vmem:[%s1 + $0x158] sm:$0xf]
  %v100 = vld [vmem:[%s1 + $0x15c] sm:$0xf]
  %v101 = vld [vmem:[%s1 + $0x160] sm:$0xf]
  %v102 = vld [vmem:[%s1 + $0x164] sm:$0xf]
  %v103 = vld [vmem:[%s1 + $0x168] sm:$0xf]
  %v104 = vld [vmem:[%s1 + $0x16c] sm:$0xf]
  %v105 = vld [vmem:[%s1 + $0x170] sm:$0xf]
  %v106 = vld [vmem:[%s1 + $0x174] sm:$0xf]
  %v107 = vld [vmem:[%s1 + $0x178] sm:$0xf]
  %v108 = vld [vmem:[%s1 + $0x17c] sm:$0xf]
  %v109 = vld [vmem:[%s1 + $0x180] sm:$0xf]
  %v110 = vld [vmem:[%s1 + $0x184] sm:$0xf]
  %v111 = vld [vmem:[%s1 + $0x188] sm:$0xf]
  %v112 = vld [vmem:[%s1 + $0x18c] sm:$0xf]
  %v113 = vld [vmem:[%s1 + $0x190] sm:$0xf]
  %v114 = vld [vmem:[%s1 + $0x194] sm:$0xf]
  %v115 = vld [vmem:[%s1 + $0x198] sm:$0xf]
  %v116 = vld [vmem:[%s1 + $0x19c] sm:$0xf]
  %v117 = vld [vmem:[%s1 + $0x1a0] sm:$0xf]
  %v118 = vld [vmem:[%s1 + $0x1a4] sm:$0xf]
  %v119 = vld [vmem:[%s1 + $0x1a8] sm:$0xf]
  %v120 = vld [vmem:[%s1 + $0x1ac] sm:$0xf]
  %v121 = vld [vmem:[%s1 + $0x1b0] sm:$0xf]
  %v122 = vld [vmem:[%s1 + $0x1b4] sm:$0xf]
  %v123 = vld [vmem:[%s1 + $0x1b8] sm:$0xf]
  %v124 = vld [vmem:[%s1 + $0x1bc] sm:$0xf]
  %v125 = vld [vmem:[%s1 + $0x1c0] sm:$0xf]
  %v126 = vld [vmem:[%s1 + $0x1c4] sm:$0xf]
  %v127 = vld [vmem:[%s1 + $0x1c8] sm:$0xf]
  %v128 = vld [vmem:[%s1 + $0x1cc] sm:$0xf]
  %v129 = vld [vmem:[%s1 + $0x1d0] sm:$0xf]
  %v130 = vld [vmem:[%s1 + $0x1d4] sm:$0xf]
  %v131 = vld [vmem:[%s1 + $0x1d8] sm:$0xf]
  %v132 = vld [vmem:[%s1 + $0x1dc] sm:$0xf]
  %v133 = vld [vmem:[%s1 + $0x1e0] sm:$0xf]
  %v134 = vld [vmem:[%s1 + $0x1e4] sm:$0xf]
  %v135 = vld [vmem:[%s1 + $0x1e8] sm:$0xf]
  %v136 = vld [vmem:[%s1 + $0x1ec] sm:$0xf]
  %v137 = vld [vmem:[%s1 + $0x1f0] sm:$0xf]
  %v138 = vld [vmem:[%s1 + $0x1f4] sm:$0xf]
  %v139 = vld [vmem:[%s1 + $0x1f8] sm:$0xf]
  %v140 = vld [vmem:[%s1 + $0x1fc] sm:$0xf]
  %v142 = vcombine.high %v12, %v12
  %v144 = vunpack.c.l.s4 1966171168
  %v145 = vunpack.c.0.s8 %v144
  %v146 = vlaneseq
  %v147 = vshrl.u32 %v146, 7
  %v148 = vsub.s32 %v145, %v147
  %v149 = vrot.slane %v12, %v148
  %v151 = vunpack.c.l.s4 1966171168
  %v152 = vunpack.c.0.s8 %v151
  %v153 = vlaneseq
  %v154 = vshrl.u32 %v153, 7
  %v155 = vsub.s32 %v152, %v154
  %v156 = vrot.slane %v142, %v155
  %v157 = vcombine.high %v149, %v149
  %v158 = vcombine.high %v156, %v156
  %v160 = vunpack.c.l.s4 1966171168
  %v161 = vunpack.c.0.s8 %v160
  %v162 = vlaneseq
  %v163 = vshrl.u32 %v162, 7
  %v164 = vsub.s32 %v161, %v163
  %v165 = vrot.slane %v149, %v164
  %v167 = vunpack.c.l.s4 1966171168
  %v168 = vunpack.c.0.s8 %v167
  %v169 = vlaneseq
  %v170 = vshrl.u32 %v169, 7
  %v171 = vsub.s32 %v168, %v170
  %v172 = vrot.slane %v156, %v171
  %v174 = vunpack.c.l.s4 1966171168
  %v175 = vunpack.c.0.s8 %v174
  %v176 = vlaneseq
  %v177 = vshrl.u32 %v176, 7
  %v178 = vsub.s32 %v175, %v177
  %v179 = vrot.slane %v157, %v178
  %v181 = vunpack.c.l.s4 1966171168
  %v182 = vunpack.c.0.s8 %v181
  %v183 = vlaneseq
  %v184 = vshrl.u32 %v183, 7
  %v185 = vsub.s32 %v182, %v184
  %v186 = vrot.slane %v158, %v185
  %v187 = vcombine.high %v165, %v165
  %v188 = vcombine.high %v172, %v172
  %v189 = vcombine.high %v179, %v179
  %v190 = vcombine.high %v186, %v186
  %v327 = vunpack.c.l.b16 %v13
  %v328 = vunpack.c.l.b16 %v14
  %v329 = vunpack.c.l.b16 %v15
  %v330 = vunpack.c.l.b16 %v16
  %v331 = vunpack.c.l.b16 %v17
  %v332 = vunpack.c.l.b16 %v18
  %v333 = vunpack.c.l.b16 %v19
  %v334 = vunpack.c.l.b16 %v20
  %v335 = vunpack.c.l.b16 %v21
  %v336 = vunpack.c.l.b16 %v22
  %v337 = vunpack.c.l.b16 %v23
  %v338 = vunpack.c.l.b16 %v24
  %v339 = vunpack.c.l.b16 %v25
  %v340 = vunpack.c.l.b16 %v26
  %v341 = vunpack.c.l.b16 %v27
  %v342 = vunpack.c.l.b16 %v28
  %v343 = vunpack.c.l.b16 %v29
  %v344 = vunpack.c.l.b16 %v30
  %v345 = vunpack.c.l.b16 %v31
  %v346 = vunpack.c.l.b16 %v32
  %v347 = vunpack.c.l.b16 %v33
  %v348 = vunpack.c.l.b16 %v34
  %v349 = vunpack.c.l.b16 %v35
  %v350 = vunpack.c.l.b16 %v36
  %v351 = vunpack.c.l.b16 %v37
  %v352 = vunpack.c.l.b16 %v38
  %v353 = vunpack.c.l.b16 %v39
  %v354 = vunpack.c.l.b16 %v40
  %v355 = vunpack.c.l.b16 %v41
  %v356 = vunpack.c.l.b16 %v42
  %v357 = vunpack.c.l.b16 %v43
  %v358 = vunpack.c.l.b16 %v44
  %v359 = vunpack.c.l.b16 %v45
  %v360 = vunpack.c.l.b16 %v46
  %v361 = vunpack.c.l.b16 %v47
  %v362 = vunpack.c.l.b16 %v48
  %v363 = vunpack.c.l.b16 %v49
  %v364 = vunpack.c.l.b16 %v50
  %v365 = vunpack.c.l.b16 %v51
  %v366 = vunpack.c.l.b16 %v52
  %v367 = vunpack.c.l.b16 %v53
  %v368 = vunpack.c.l.b16 %v54
  %v369 = vunpack.c.l.b16 %v55
  %v370 = vunpack.c.l.b16 %v56
  %v371 = vunpack.c.l.b16 %v57
  %v372 = vunpack.c.l.b16 %v58
  %v373 = vunpack.c.l.b16 %v59
  %v374 = vunpack.c.l.b16 %v60
  %v375 = vunpack.c.l.b16 %v61
  %v376 = vunpack.c.l.b16 %v62
  %v377 = vunpack.c.l.b16 %v63
  %v378 = vunpack.c.l.b16 %v64
  %v379 = vunpack.c.l.b16 %v65
  %v380 = vunpack.c.l.b16 %v66
  %v381 = vunpack.c.l.b16 %v67
  %v382 = vunpack.c.l.b16 %v68
  %v383 = vunpack.c.l.b16 %v69
  %v384 = vunpack.c.l.b16 %v70
  %v385 = vunpack.c.l.b16 %v71
  %v386 = vunpack.c.l.b16 %v72
  %v387 = vunpack.c.l.b16 %v73
  %v388 = vunpack.c.l.b16 %v74
  %v389 = vunpack.c.l.b16 %v75
  %v390 = vunpack.c.l.b16 %v76
  %v391 = vunpack.c.l.b16 %v77
  %v392 = vunpack.c.l.b16 %v78
  %v393 = vunpack.c.l.b16 %v79
  %v394 = vunpack.c.l.b16 %v80
  %v395 = vunpack.c.l.b16 %v81
  %v396 = vunpack.c.l.b16 %v82
  %v397 = vunpack.c.l.b16 %v83
  %v398 = vunpack.c.l.b16 %v84
  %v399 = vunpack.c.l.b16 %v85
  %v400 = vunpack.c.l.b16 %v86
  %v401 = vunpack.c.l.b16 %v87
  %v402 = vunpack.c.l.b16 %v88
  %v403 = vunpack.c.l.b16 %v89
  %v404 = vunpack.c.l.b16 %v90
  %v405 = vunpack.c.l.b16 %v91
  %v406 = vunpack.c.l.b16 %v92
  %v407 = vunpack.c.l.b16 %v93
  %v408 = vunpack.c.l.b16 %v94
  %v409 = vunpack.c.l.b16 %v95
  %v410 = vunpack.c.l.b16 %v96
  %v411 = vunpack.c.l.b16 %v97
  %v412 = vunpack.c.l.b16 %v98
  %v413 = vunpack.c.l.b16 %v99
  %v414 = vunpack.c.l.b16 %v100
  %v415 = vunpack.c.l.b16 %v101
  %v416 = vunpack.c.l.b16 %v102
  %v417 = vunpack.c.l.b16 %v103
  %v418 = vunpack.c.l.b16 %v104
  %v419 = vunpack.c.l.b16 %v105
  %v420 = vunpack.c.l.b16 %v106
  %v421 = vunpack.c.l.b16 %v107
  %v422 = vunpack.c.l.b16 %v108
  %v423 = vunpack.c.l.b16 %v109
  %v424 = vunpack.c.l.b16 %v110
  %v425 = vunpack.c.l.b16 %v111
  %v426 = vunpack.c.l.b16 %v112
  %v427 = vunpack.c.l.b16 %v113
  %v428 = vunpack.c.l.b16 %v114
  %v429 = vunpack.c.l.b16 %v115
  %v430 = vunpack.c.l.b16 %v116
  %v431 = vunpack.c.l.b16 %v117
  %v432 = vunpack.c.l.b16 %v118
  %v433 = vunpack.c.l.b16 %v119
  %v434 = vunpack.c.l.b16 %v120
  %v435 = vunpack.c.l.b16 %v121
  %v436 = vunpack.c.l.b16 %v122
  %v437 = vunpack.c.l.b16 %v123
  %v438 = vunpack.c.l.b16 %v124
  %v439 = vunpack.c.l.b16 %v125
  %v440 = vunpack.c.l.b16 %v126
  %v441 = vunpack.c.l.b16 %v127
  %v442 = vunpack.c.l.b16 %v128
  %v443 = vunpack.c.l.b16 %v129
  %v444 = vunpack.c.l.b16 %v130
  %v445 = vunpack.c.l.b16 %v131
  %v446 = vunpack.c.l.b16 %v132
  %v447 = vunpack.c.l.b16 %v133
  %v448 = vunpack.c.l.b16 %v134
  %v449 = vunpack.c.l.b16 %v135
  %v450 = vunpack.c.l.b16 %v136
  %v451 = vunpack.c.l.b16 %v137
  %v452 = vunpack.c.l.b16 %v138
  %v453 = vunpack.c.l.b16 %v139
  %v454 = vunpack.c.l.b16 %v140
  %v455 = vpack.c.b16 %v328, %v327
  %v456 = vpack.c.b16 %v330, %v329
  %v457 = vpack.c.b16 %v332, %v331
  %v458 = vpack.c.b16 %v334, %v333
  %v459 = vpack.c.b16 %v336, %v335
  %v460 = vpack.c.b16 %v338, %v337
  %v461 = vpack.c.b16 %v340, %v339
  %v462 = vpack.c.b16 %v342, %v341
  %v463 = vpack.c.b16 %v344, %v343
  %v464 = vpack.c.b16 %v346, %v345
  %v465 = vpack.c.b16 %v348, %v347
  %v466 = vpack.c.b16 %v350, %v349
  %v467 = vpack.c.b16 %v352, %v351
  %v468 = vpack.c.b16 %v354, %v353
  %v469 = vpack.c.b16 %v356, %v355
  %v470 = vpack.c.b16 %v358, %v357
  %v471 = vpack.c.b16 %v360, %v359
  %v472 = vpack.c.b16 %v362, %v361
  %v473 = vpack.c.b16 %v364, %v363
  %v474 = vpack.c.b16 %v366, %v365
  %v475 = vpack.c.b16 %v368, %v367
  %v476 = vpack.c.b16 %v370, %v369
  %v477 = vpack.c.b16 %v372, %v371
  %v478 = vpack.c.b16 %v374, %v373
  %v479 = vpack.c.b16 %v376, %v375
  %v480 = vpack.c.b16 %v378, %v377
  %v481 = vpack.c.b16 %v380, %v379
  %v482 = vpack.c.b16 %v382, %v381
  %v483 = vpack.c.b16 %v384, %v383
  %v484 = vpack.c.b16 %v386, %v385
  %v485 = vpack.c.b16 %v388, %v387
  %v486 = vpack.c.b16 %v390, %v389
  %v487 = vpack.c.b16 %v392, %v391
  %v488 = vpack.c.b16 %v394, %v393
  %v489 = vpack.c.b16 %v396, %v395
  %v490 = vpack.c.b16 %v398, %v397
  %v491 = vpack.c.b16 %v400, %v399
  %v492 = vpack.c.b16 %v402, %v401
  %v493 = vpack.c.b16 %v404, %v403
  %v494 = vpack.c.b16 %v406, %v405
  %v495 = vpack.c.b16 %v408, %v407
  %v496 = vpack.c.b16 %v410, %v409
  %v497 = vpack.c.b16 %v412, %v411
  %v498 = vpack.c.b16 %v414, %v413
  %v499 = vpack.c.b16 %v416, %v415
  %v500 = vpack.c.b16 %v418, %v417
  %v501 = vpack.c.b16 %v420, %v419
  %v502 = vpack.c.b16 %v422, %v421
  %v503 = vpack.c.b16 %v424, %v423
  %v504 = vpack.c.b16 %v426, %v425
  %v505 = vpack.c.b16 %v428, %v427
  %v506 = vpack.c.b16 %v430, %v429
  %v507 = vpack.c.b16 %v432, %v431
  %v508 = vpack.c.b16 %v434, %v433
  %v509 = vpack.c.b16 %v436, %v435
  %v510 = vpack.c.b16 %v438, %v437
  %v511 = vpack.c.b16 %v440, %v439
  %v512 = vpack.c.b16 %v442, %v441
  %v513 = vpack.c.b16 %v444, %v443
  %v514 = vpack.c.b16 %v446, %v445
  %v515 = vpack.c.b16 %v448, %v447
  %v516 = vpack.c.b16 %v450, %v449
  %v517 = vpack.c.b16 %v452, %v451
  %v518 = vpack.c.b16 %v454, %v453
  %583 = vmatprep.subr.bf16.mxu0 0
  %584 = vmatpush1.bf16.msra.mxu0 %v462
  %585 = vmatprep.subr.bf16.mxu0 0
  %586 = vmatpush1.bf16.msra.mxu0 %v461
  %587 = vmatprep.subr.bf16.mxu0 0
  %588 = vmatpush1.bf16.msra.mxu0 %v460
  %589 = vmatprep.subr.bf16.mxu0 0
  %590 = vmatpush1.bf16.msra.mxu0 %v459
  %591 = vmatprep.subr.bf16.mxu0 0
  %592 = vmatpush1.bf16.msra.mxu0 %v458
  %593 = vmatprep.subr.bf16.mxu0 0
  %594 = vmatpush1.bf16.msra.mxu0 %v457
  %595 = vmatprep.subr.bf16.mxu0 0
  %596 = vmatpush1.bf16.msra.mxu0 %v456
  %597 = vmatprep.subr.bf16.mxu0 0
  %598 = vmatpush1.bf16.msra.mxu0 %v455
  %599 = vmatprep.subr.bf16.mxu0 0
  %600 = vmatpush2.bf16.msra.mxu0 %v470
  %601 = vmatprep.subr.bf16.mxu0 0
  %602 = vmatpush2.bf16.msra.mxu0 %v469
  %603 = vmatprep.subr.bf16.mxu0 0
  %604 = vmatpush2.bf16.msra.mxu0 %v468
  %605 = vmatprep.subr.bf16.mxu0 0
  %606 = vmatpush2.bf16.msra.mxu0 %v467
  %607 = vmatprep.subr.bf16.mxu0 0
  %608 = vmatpush2.bf16.msra.mxu0 %v466
  %609 = vmatprep.subr.bf16.mxu0 0
  %610 = vmatpush2.bf16.msra.mxu0 %v465
  %611 = vmatprep.subr.bf16.mxu0 0
  %612 = vmatpush2.bf16.msra.mxu0 %v464
  %613 = vmatprep.subr.bf16.mxu0 0
  %614 = vmatpush2.bf16.msra.mxu0 %v463
  %615 = vmatprep.mubr.bf16.mxu0 %v179
  %616 = vmatmul.mubr.bf16.gmra.mxu0 %v165
  %v617 = vpop.f32.mrf.mxu0
  %v618 = vadd.f32 0.0, %v617
  %v619 = vpop.f32.mrf.mxu0
  %v620 = vpop.f32.mrf.mxu0
  %v621 = vpop.f32.mrf.mxu0
  %622 = vdwg.mxu0
  %623 = vmatprep.subr.bf16.mxu0 0
  %624 = vmatpush1.bf16.msra.mxu0 %v478
  %625 = vmatprep.subr.bf16.mxu0 0
  %626 = vmatpush1.bf16.msra.mxu0 %v477
  %627 = vmatprep.subr.bf16.mxu0 0
  %628 = vmatpush1.bf16.msra.mxu0 %v476
  %629 = vmatprep.subr.bf16.mxu0 0
  %630 = vmatpush1.bf16.msra.mxu0 %v475
  %631 = vmatprep.subr.bf16.mxu0 0
  %632 = vmatpush1.bf16.msra.mxu0 %v474
  %633 = vmatprep.subr.bf16.mxu0 0
  %634 = vmatpush1.bf16.msra.mxu0 %v473
  %635 = vmatprep.subr.bf16.mxu0 0
  %636 = vmatpush1.bf16.msra.mxu0 %v472
  %637 = vmatprep.subr.bf16.mxu0 0
  %638 = vmatpush1.bf16.msra.mxu0 %v471
  %639 = vmatprep.subr.bf16.mxu0 0
  %640 = vmatpush2.bf16.msra.mxu0 %v486
  %641 = vmatprep.subr.bf16.mxu0 0
  %642 = vmatpush2.bf16.msra.mxu0 %v485
  %643 = vmatprep.subr.bf16.mxu0 0
  %644 = vmatpush2.bf16.msra.mxu0 %v484
  %645 = vmatprep.subr.bf16.mxu0 0
  %646 = vmatpush2.bf16.msra.mxu0 %v483
  %647 = vmatprep.subr.bf16.mxu0 0
  %648 = vmatpush2.bf16.msra.mxu0 %v482
  %649 = vmatprep.subr.bf16.mxu0 0
  %650 = vmatpush2.bf16.msra.mxu0 %v481
  %651 = vmatprep.subr.bf16.mxu0 0
  %652 = vmatpush2.bf16.msra.mxu0 %v480
  %653 = vmatprep.subr.bf16.mxu0 0
  %654 = vmatpush2.bf16.msra.mxu0 %v479
  %655 = vmatprep.mubr.bf16.mxu0 %v189
  %656 = vmatmul.mubr.bf16.gmra.mxu0 %v187
  %v657 = vpop.f32.mrf.mxu0
  %v658 = vadd.f32 %v618, %v657
  %v659 = vpop.f32.mrf.mxu0
  %v660 = vpop.f32.mrf.mxu0
  %v661 = vpop.f32.mrf.mxu0
  %662 = vdwg.mxu0
  %663 = vmatprep.subr.bf16.mxu0 0
  %664 = vmatpush1.bf16.msra.mxu0 %v494
  %665 = vmatprep.subr.bf16.mxu0 0
  %666 = vmatpush1.bf16.msra.mxu0 %v493
  %667 = vmatprep.subr.bf16.mxu0 0
  %668 = vmatpush1.bf16.msra.mxu0 %v492
  %669 = vmatprep.subr.bf16.mxu0 0
  %670 = vmatpush1.bf16.msra.mxu0 %v491
  %671 = vmatprep.subr.bf16.mxu0 0
  %672 = vmatpush1.bf16.msra.mxu0 %v490
  %673 = vmatprep.subr.bf16.mxu0 0
  %674 = vmatpush1.bf16.msra.mxu0 %v489
  %675 = vmatprep.subr.bf16.mxu0 0
  %676 = vmatpush1.bf16.msra.mxu0 %v488
  %677 = vmatprep.subr.bf16.mxu0 0
  %678 = vmatpush1.bf16.msra.mxu0 %v487
  %679 = vmatprep.subr.bf16.mxu0 0
  %680 = vmatpush2.bf16.msra.mxu0 %v502
  %681 = vmatprep.subr.bf16.mxu0 0
  %682 = vmatpush2.bf16.msra.mxu0 %v501
  %683 = vmatprep.subr.bf16.mxu0 0
  %684 = vmatpush2.bf16.msra.mxu0 %v500
  %685 = vmatprep.subr.bf16.mxu0 0
  %686 = vmatpush2.bf16.msra.mxu0 %v499
  %687 = vmatprep.subr.bf16.mxu0 0
  %688 = vmatpush2.bf16.msra.mxu0 %v498
  %689 = vmatprep.subr.bf16.mxu0 0
  %690 = vmatpush2.bf16.msra.mxu0 %v497
  %691 = vmatprep.subr.bf16.mxu0 0
  %692 = vmatpush2.bf16.msra.mxu0 %v496
  %693 = vmatprep.subr.bf16.mxu0 0
  %694 = vmatpush2.bf16.msra.mxu0 %v495
  %695 = vmatprep.mubr.bf16.mxu0 %v186
  %696 = vmatmul.mubr.bf16.gmra.mxu0 %v172
  %v697 = vpop.f32.mrf.mxu0
  %v698 = vadd.f32 %v658, %v697
  %v699 = vpop.f32.mrf.mxu0
  %v700 = vpop.f32.mrf.mxu0
  %v701 = vpop.f32.mrf.mxu0
  %702 = vdwg.mxu0
  %703 = vmatprep.subr.bf16.mxu0 0
  %704 = vmatpush1.bf16.msra.mxu0 %v510
  %705 = vmatprep.subr.bf16.mxu0 0
  %706 = vmatpush1.bf16.msra.mxu0 %v509
  %707 = vmatprep.subr.bf16.mxu0 0
  %708 = vmatpush1.bf16.msra.mxu0 %v508
  %709 = vmatprep.subr.bf16.mxu0 0
  %710 = vmatpush1.bf16.msra.mxu0 %v507
  %711 = vmatprep.subr.bf16.mxu0 0
  %712 = vmatpush1.bf16.msra.mxu0 %v506
  %713 = vmatprep.subr.bf16.mxu0 0
  %714 = vmatpush1.bf16.msra.mxu0 %v505
  %715 = vmatprep.subr.bf16.mxu0 0
  %716 = vmatpush1.bf16.msra.mxu0 %v504
  %717 = vmatprep.subr.bf16.mxu0 0
  %718 = vmatpush1.bf16.msra.mxu0 %v503
  %719 = vmatprep.subr.bf16.mxu0 0
  %720 = vmatpush2.bf16.msra.mxu0 %v518
  %721 = vmatprep.subr.bf16.mxu0 0
  %722 = vmatpush2.bf16.msra.mxu0 %v517
  %723 = vmatprep.subr.bf16.mxu0 0
  %724 = vmatpush2.bf16.msra.mxu0 %v516
  %725 = vmatprep.subr.bf16.mxu0 0
  %726 = vmatpush2.bf16.msra.mxu0 %v515
  %727 = vmatprep.subr.bf16.mxu0 0
  %728 = vmatpush2.bf16.msra.mxu0 %v514
  %729 = vmatprep.subr.bf16.mxu0 0
  %730 = vmatpush2.bf16.msra.mxu0 %v513
  %731 = vmatprep.subr.bf16.mxu0 0
  %732 = vmatpush2.bf16.msra.mxu0 %v512
  %733 = vmatprep.subr.bf16.mxu0 0
  %734 = vmatpush2.bf16.msra.mxu0 %v511
  %735 = vmatprep.mubr.bf16.mxu0 %v190
  %736 = vmatmul.mubr.bf16.gmra.mxu0 %v188
  %v737 = vpop.f32.mrf.mxu0
  %v738 = vadd.f32 %v698, %v737
  %v739 = vpop.f32.mrf.mxu0
  %v740 = vpop.f32.mrf.mxu0
  %v741 = vpop.f32.mrf.mxu0
  %742 = vdwg.mxu0
  %v743 = vpack.c.bf16 %v738, %v738
  %vm744 = vcmask 516096
  %745 = vst.msk [vmem:[%s2] sm:$0x1] %vm744, %v743
  // Predicated region
  $region10: #{_lambda_.14} parent=0 // pred_check
    _
  $region11: #{_lambda_.14} parent=0 // pred_check_branch
    %747 = sbr.rel (0) target = $region13
  $region12: #{_lambda_.14} parent=0 // pred_region
    _
  $region13: #{_lambda_.14} parent=0 // pred_fallthru
    _
  // Predicated region
  $region14: #{_lambda_.14} parent=0 // pred_check
    _
  $region15: #{_lambda_.14} parent=0 // pred_check_branch
    %749 = sbr.rel (0) target = $region17
  $region16: #{_lambda_.14} parent=0 // pred_region
    _
  $region17: #{_lambda_.14} parent=0 // pred_fallthru
    _

// kernel: _lambda_.16
$region0: #{_lambda_.16}
  #allocation0 [shape = 'u32[]', space=smem, size = 0x4, offset = 0x4, fixed_abs, tag = 'smem constant byte address 0x4 - core index']
  #allocation1 [shape = 'u32[144,128]{1,0:T(1,128)}', space=vmem, size = 0x12000, scoped, tag = 'internal scratch']
  %s0 = inlined_call_operand.vmem [shape: bf16[8,576], index: 0, kind: input, shape index: {}]
  %s1 = inlined_call_operand.vmem [shape: bf16[576,128], index: 1, kind: input, shape index: {}]
  %s2 = inlined_call_operand.vmem [shape: bf16[8,576], index: 2, kind: input, shape index: {}]
  %s3 = inlined_call_operand.vmem [shape: bf16[576,128], index: 3, kind: input, shape index: {}]
  %s4 = inlined_call_operand.vmem [shape: bf16[8,128], index: 4, kind: output, shape index: {0}]
  %s5 = inlined_call_operand.vmem [shape: f32[1,1,128], index: 5, kind: output, shape index: {1}]
  %s6 = inlined_call_operand.vmem [shape: f32[1,1,128], index: 6, kind: output, shape index: {2}]
  %7 = xla_tuple %s4, %s5, %s6
  %s8 = sld [smem:[#allocation0]]
  $region42: #{_lambda_.16} parent=0
    _
  %s10 = ssub.s32 1, %s8
  %s11 = scalar_select 0, %s10, %s8
  // Predicated region
  $region2: #{_lambda_.16} parent=0 // pred_check
    _
  $region3: #{_lambda_.16} parent=0 // pred_check_branch
    %13 = sbr.rel (0) target = $region5
  $region4: #{_lambda_.16} parent=0 // pred_region
    _
  $region5: #{_lambda_.16} parent=0 // pred_fallthru
    _
  // Predicated region
  $region6: #{_lambda_.16} parent=0 // pred_check
    _
  $region7: #{_lambda_.16} parent=0 // pred_check_branch
    %15 = sbr.rel (0) target = $region9
  $region8: #{_lambda_.16} parent=0 // pred_region
    _
  $region9: #{_lambda_.16} parent=0 // pred_fallthru
    _
  // Predicated region
  $region10: #{_lambda_.16} parent=0 // pred_check
    _
  $region11: #{_lambda_.16} parent=0 // pred_check_branch
    %17 = sbr.rel (0) target = $region13
  $region12: #{_lambda_.16} parent=0 // pred_region
    _
  $region13: #{_lambda_.16} parent=0 // pred_fallthru
    _
  // Predicated region
  $region14: #{_lambda_.16} parent=0 // pred_check
    _
  $region15: #{_lambda_.16} parent=0 // pred_check_branch
    %19 = sbr.rel (0) target = $region17
  $region16: #{_lambda_.16} parent=0 // pred_region
    _
  $region17: #{_lambda_.16} parent=0 // pred_fallthru
    _
  %v21 = vld [vmem:[%s0] sm:$0xff]
  %v22 = vld [vmem:[%s0 + $0x8] sm:$0xff]
  %v23 = vld [vmem:[%s0 + $0x10] sm:$0xf]
  %v24 = vld [vmem:[%s1] sm:$0xf]
  %v25 = vld [vmem:[%s1 + $0x4] sm:$0xf]
  %v26 = vld [vmem:[%s1 + $0x8] sm:$0xf]
  %v27 = vld [vmem:[%s1 + $0xc] sm:$0xf]
  %v28 = vld [vmem:[%s1 + $0x10] sm:$0xf]
  %v29 = vld [vmem:[%s1 + $0x14] sm:$0xf]
  %v30 = vld [vmem:[%s1 + $0x18] sm:$0xf]
  %v31 = vld [vmem:[%s1 + $0x1c] sm:$0xf]
  %v32 = vld [vmem:[%s1 + $0x20] sm:$0xf]
  %v33 = vld [vmem:[%s1 + $0x24] sm:$0xf]
  %v34 = vld [vmem:[%s1 + $0x28] sm:$0xf]
  %v35 = vld [vmem:[%s1 + $0x2c] sm:$0xf]
  %v36 = vld [vmem:[%s1 + $0x30] sm:$0xf]
  %v37 = vld [vmem:[%s1 + $0x34] sm:$0xf]
  %v38 = vld [vmem:[%s1 + $0x38] sm:$0xf]
  %v39 = vld [vmem:[%s1 + $0x3c] sm:$0xf]
  %v40 = vld [vmem:[%s1 + $0x40] sm:$0xf]
  %v41 = vld [vmem:[%s1 + $0x44] sm:$0xf]
  %v42 = vld [vmem:[%s1 + $0x48] sm:$0xf]
  %v43 = vld [vmem:[%s1 + $0x4c] sm:$0xf]
  %v44 = vld [vmem:[%s1 + $0x50] sm:$0xf]
  %v45 = vld [vmem:[%s1 + $0x54] sm:$0xf]
  %v46 = vld [vmem:[%s1 + $0x58] sm:$0xf]
  %v47 = vld [vmem:[%s1 + $0x5c] sm:$0xf]
  %v48 = vld [vmem:[%s1 + $0x60] sm:$0xf]
  %v49 = vld [vmem:[%s1 + $0x64] sm:$0xf]
  %v50 = vld [vmem:[%s1 + $0x68] sm:$0xf]
  %v51 = vld [vmem:[%s1 + $0x6c] sm:$0xf]
  %v52 = vld [vmem:[%s1 + $0x70] sm:$0xf]
  %v53 = vld [vmem:[%s1 + $0x74] sm:$0xf]
  %v54 = vld [vmem:[%s1 + $0x78] sm:$0xf]
  %v55 = vld [vmem:[%s1 + $0x7c] sm:$0xf]
  %v56 = vld [vmem:[%s1 + $0x80] sm:$0xf]
  %v57 = vld [vmem:[%s1 + $0x84] sm:$0xf]
  %v58 = vld [vmem:[%s1 + $0x88] sm:$0xf]
  %v59 = vld [vmem:[%s1 + $0x8c] sm:$0xf]
  %v60 = vld [vmem:[%s1 + $0x90] sm:$0xf]
  %v61 = vld [vmem:[%s1 + $0x94] sm:$0xf]
  %v62 = vld [vmem:[%s1 + $0x98] sm:$0xf]
  %v63 = vld [vmem:[%s1 + $0x9c] sm:$0xf]
  %v64 = vld [vmem:[%s1 + $0xa0] sm:$0xf]
  %v65 = vld [vmem:[%s1 + $0xa4] sm:$0xf]
  %v66 = vld [vmem:[%s1 + $0xa8] sm:$0xf]
  %v67 = vld [vmem:[%s1 + $0xac] sm:$0xf]
  %v68 = vld [vmem:[%s1 + $0xb0] sm:$0xf]
  %v69 = vld [vmem:[%s1 + $0xb4] sm:$0xf]
  %v70 = vld [vmem:[%s1 + $0xb8] sm:$0xf]
  %v71 = vld [vmem:[%s1 + $0xbc] sm:$0xf]
  %v72 = vld [vmem:[%s1 + $0xc0] sm:$0xf]
  %v73 = vld [vmem:[%s1 + $0xc4] sm:$0xf]
  %v74 = vld [vmem:[%s1 + $0xc8] sm:$0xf]
  %v75 = vld [vmem:[%s1 + $0xcc] sm:$0xf]
  %v76 = vld [vmem:[%s1 + $0xd0] sm:$0xf]
  %v77 = vld [vmem:[%s1 + $0xd4] sm:$0xf]
  %v78 = vld [vmem:[%s1 + $0xd8] sm:$0xf]
  %v79 = vld [vmem:[%s1 + $0xdc] sm:$0xf]
  %v80 = vld [vmem:[%s1 + $0xe0] sm:$0xf]
  %v81 = vld [vmem:[%s1 + $0xe4] sm:$0xf]
  %v82 = vld [vmem:[%s1 + $0xe8] sm:$0xf]
  %v83 = vld [vmem:[%s1 + $0xec] sm:$0xf]
  %v84 = vld [vmem:[%s1 + $0xf0] sm:$0xf]
  %v85 = vld [vmem:[%s1 + $0xf4] sm:$0xf]
  %v86 = vld [vmem:[%s1 + $0xf8] sm:$0xf]
  %v87 = vld [vmem:[%s1 + $0xfc] sm:$0xf]
  %v88 = vld [vmem:[%s1 + $0x100] sm:$0xf]
  %v89 = vld [vmem:[%s1 + $0x104] sm:$0xf]
  %v90 = vld [vmem:[%s1 + $0x108] sm:$0xf]
  %v91 = vld [vmem:[%s1 + $0x10c] sm:$0xf]
  %v92 = vld [vmem:[%s1 + $0x110] sm:$0xf]
  %v93 = vld [vmem:[%s1 + $0x114] sm:$0xf]
  %v94 = vld [vmem:[%s1 + $0x118] sm:$0xf]
  %v95 = vld [vmem:[%s1 + $0x11c] sm:$0xf]
  %v96 = vld [vmem:[%s2] sm:$0xff]
  %v97 = vld [vmem:[%s2 + $0x8] sm:$0xff]
  %v98 = vld [vmem:[%s2 + $0x10] sm:$0xf]
  %v99 = vld [vmem:[%s3] sm:$0xf]
  %v100 = vld [vmem:[%s3 + $0x4] sm:$0xf]
  %v101 = vld [vmem:[%s3 + $0x8] sm:$0xf]
  %v102 = vld [vmem:[%s3 + $0xc] sm:$0xf]
  %v103 = vld [vmem:[%s3 + $0x10] sm:$0xf]
  %v104 = vld [vmem:[%s3 + $0x14] sm:$0xf]
  %v105 = vld [vmem:[%s3 + $0x18] sm:$0xf]
  %v106 = vld [vmem:[%s3 + $0x1c] sm:$0xf]
  %v107 = vld [vmem:[%s3 + $0x20] sm:$0xf]
  %v108 = vld [vmem:[%s3 + $0x24] sm:$0xf]
  %v109 = vld [vmem:[%s3 + $0x28] sm:$0xf]
  %v110 = vld [vmem:[%s3 + $0x2c] sm:$0xf]
  %v111 = vld [vmem:[%s3 + $0x30] sm:$0xf]
  %v112 = vld [vmem:[%s3 + $0x34] sm:$0xf]
  %v113 = vld [vmem:[%s3 + $0x38] sm:$0xf]
  %v114 = vld [vmem:[%s3 + $0x3c] sm:$0xf]
  %v115 = vld [vmem:[%s3 + $0x40] sm:$0xf]
  %v116 = vld [vmem:[%s3 + $0x44] sm:$0xf]
  %v117 = vld [vmem:[%s3 + $0x48] sm:$0xf]
  %v118 = vld [vmem:[%s3 + $0x4c] sm:$0xf]
  %v119 = vld [vmem:[%s3 + $0x50] sm:$0xf]
  %v120 = vld [vmem:[%s3 + $0x54] sm:$0xf]
  %v121 = vld [vmem:[%s3 + $0x58] sm:$0xf]
  %v122 = vld [vmem:[%s3 + $0x5c] sm:$0xf]
  %v123 = vld [vmem:[%s3 + $0x60] sm:$0xf]
  %v124 = vld [vmem:[%s3 + $0x64] sm:$0xf]
  %v125 = vld [vmem:[%s3 + $0x68] sm:$0xf]
  %v126 = vld [vmem:[%s3 + $0x6c] sm:$0xf]
  %v127 = vld [vmem:[%s3 + $0x70] sm:$0xf]
  %v128 = vld [vmem:[%s3 + $0x74] sm:$0xf]
  %v129 = vld [vmem:[%s3 + $0x78] sm:$0xf]
  %v130 = vld [vmem:[%s3 + $0x7c] sm:$0xf]
  %v131 = vld [vmem:[%s3 + $0x80] sm:$0xf]
  %v132 = vld [vmem:[%s3 + $0x84] sm:$0xf]
  %v133 = vld [vmem:[%s3 + $0x88] sm:$0xf]
  %v134 = vld [vmem:[%s3 + $0x8c] sm:$0xf]
  %v135 = vld [vmem:[%s3 + $0x90] sm:$0xf]
  %v136 = vld [vmem:[%s3 + $0x94] sm:$0xf]
  %v137 = vld [vmem:[%s3 + $0x98] sm:$0xf]
  %v138 = vld [vmem:[%s3 + $0x9c] sm:$0xf]
  %v139 = vld [vmem:[%s3 + $0xa0] sm:$0xf]
  %v140 = vld [vmem:[%s3 + $0xa4] sm:$0xf]
  %v141 = vld [vmem:[%s3 + $0xa8] sm:$0xf]
  %v142 = vld [vmem:[%s3 + $0xac] sm:$0xf]
  %v143 = vld [vmem:[%s3 + $0xb0] sm:$0xf]
  %v144 = vld [vmem:[%s3 + $0xb4] sm:$0xf]
  %v145 = vld [vmem:[%s3 + $0xb8] sm:$0xf]
  %v146 = vld [vmem:[%s3 + $0xbc] sm:$0xf]
  %v147 = vld [vmem:[%s3 + $0xc0] sm:$0xf]
  %v148 = vld [vmem:[%s3 + $0xc4] sm:$0xf]
  %v149 = vld [vmem:[%s3 + $0xc8] sm:$0xf]
  %v150 = vld [vmem:[%s3 + $0xcc] sm:$0xf]
  %v151 = vld [vmem:[%s3 + $0xd0] sm:$0xf]
  %v152 = vld [vmem:[%s3 + $0xd4] sm:$0xf]
  %v153 = vld [vmem:[%s3 + $0xd8] sm:$0xf]
  %v154 = vld [vmem:[%s3 + $0xdc] sm:$0xf]
  %v155 = vld [vmem:[%s3 + $0xe0] sm:$0xf]
  %v156 = vld [vmem:[%s3 + $0xe4] sm:$0xf]
  %v157 = vld [vmem:[%s3 + $0xe8] sm:$0xf]
  %v158 = vld [vmem:[%s3 + $0xec] sm:$0xf]
  %v159 = vld [vmem:[%s3 + $0xf0] sm:$0xf]
  %v160 = vld [vmem:[%s3 + $0xf4] sm:$0xf]
  %v161 = vld [vmem:[%s3 + $0xf8] sm:$0xf]
  %v162 = vld [vmem:[%s3 + $0xfc] sm:$0xf]
  %v163 = vld [vmem:[%s3 + $0x100] sm:$0xf]
  %v164 = vld [vmem:[%s3 + $0x104] sm:$0xf]
  %v165 = vld [vmem:[%s3 + $0x108] sm:$0xf]
  %v166 = vld [vmem:[%s3 + $0x10c] sm:$0xf]
  %v167 = vld [vmem:[%s3 + $0x110] sm:$0xf]
  %v168 = vld [vmem:[%s3 + $0x114] sm:$0xf]
  %v169 = vld [vmem:[%s3 + $0x118] sm:$0xf]
  %v170 = vld [vmem:[%s3 + $0x11c] sm:$0xf]
  %v174 = vunpack.c.l.b16 %v96
  %v175 = vunpack.c.h.b16 %v96
  %v176 = vunpack.c.l.b16 %v97
  %v177 = vunpack.c.h.b16 %v97
  %v178 = vunpack.c.l.b16 %v98
  %v179 = vpack.c.b16 %v174, %v174
  %v180 = vpack.c.b16 %v175, %v175
  %v181 = vpack.c.b16 %v176, %v176
  %v182 = vpack.c.b16 %v177, %v177
  %v183 = vpack.c.b16 %v178, %v178
  %v260 = vunpack.c.l.b16 %v99
  %v261 = vunpack.c.l.b16 %v100
  %v262 = vunpack.c.l.b16 %v101
  %v263 = vunpack.c.l.b16 %v102
  %v264 = vunpack.c.l.b16 %v103
  %v265 = vunpack.c.l.b16 %v104
  %v266 = vunpack.c.l.b16 %v105
  %v267 = vunpack.c.l.b16 %v106
  %v268 = vunpack.c.l.b16 %v107
  %v269 = vunpack.c.l.b16 %v108
  %v270 = vunpack.c.l.b16 %v109
  %v271 = vunpack.c.l.b16 %v110
  %v272 = vunpack.c.l.b16 %v111
  %v273 = vunpack.c.l.b16 %v112
  %v274 = vunpack.c.l.b16 %v113
  %v275 = vunpack.c.l.b16 %v114
  %v276 = vunpack.c.l.b16 %v115
  %v277 = vunpack.c.l.b16 %v116
  %v278 = vunpack.c.l.b16 %v117
  %v279 = vunpack.c.l.b16 %v118
  %v280 = vunpack.c.l.b16 %v119
  %v281 = vunpack.c.l.b16 %v120
  %v282 = vunpack.c.l.b16 %v121
  %v283 = vunpack.c.l.b16 %v122
  %v284 = vunpack.c.l.b16 %v123
  %v285 = vunpack.c.l.b16 %v124
  %v286 = vunpack.c.l.b16 %v125
  %v287 = vunpack.c.l.b16 %v126
  %v288 = vunpack.c.l.b16 %v127
  %v289 = vunpack.c.l.b16 %v128
  %v290 = vunpack.c.l.b16 %v129
  %v291 = vunpack.c.l.b16 %v130
  %v292 = vunpack.c.l.b16 %v131
  %v293 = vunpack.c.l.b16 %v132
  %v294 = vunpack.c.l.b16 %v133
  %v295 = vunpack.c.l.b16 %v134
  %v296 = vunpack.c.l.b16 %v135
  %v297 = vunpack.c.l.b16 %v136
  %v298 = vunpack.c.l.b16 %v137
  %v299 = vunpack.c.l.b16 %v138
  %v300 = vunpack.c.l.b16 %v139
  %v301 = vunpack.c.l.b16 %v140
  %v302 = vunpack.c.l.b16 %v141
  %v303 = vunpack.c.l.b16 %v142
  %v304 = vunpack.c.l.b16 %v143
  %v305 = vunpack.c.l.b16 %v144
  %v306 = vunpack.c.l.b16 %v145
  %v307 = vunpack.c.l.b16 %v146
  %v308 = vunpack.c.l.b16 %v147
  %v309 = vunpack.c.l.b16 %v148
  %v310 = vunpack.c.l.b16 %v149
  %v311 = vunpack.c.l.b16 %v150
  %v312 = vunpack.c.l.b16 %v151
  %v313 = vunpack.c.l.b16 %v152
  %v314 = vunpack.c.l.b16 %v153
  %v315 = vunpack.c.l.b16 %v154
  %v316 = vunpack.c.l.b16 %v155
  %v317 = vunpack.c.l.b16 %v156
  %v318 = vunpack.c.l.b16 %v157
  %v319 = vunpack.c.l.b16 %v158
  %v320 = vunpack.c.l.b16 %v159
  %v321 = vunpack.c.l.b16 %v160
  %v322 = vunpack.c.l.b16 %v161
  %v323 = vunpack.c.l.b16 %v162
  %v324 = vunpack.c.l.b16 %v163
  %v325 = vunpack.c.l.b16 %v164
  %v326 = vunpack.c.l.b16 %v165
  %v327 = vunpack.c.l.b16 %v166
  %v328 = vunpack.c.l.b16 %v167
  %v329 = vunpack.c.l.b16 %v168
  %v330 = vunpack.c.l.b16 %v169
  %v331 = vunpack.c.l.b16 %v170
  %v332 = vpack.c.b16 %v261, %v260
  %v333 = vpack.c.b16 %v263, %v262
  %v334 = vpack.c.b16 %v265, %v264
  %v335 = vpack.c.b16 %v267, %v266
  %v336 = vpack.c.b16 %v269, %v268
  %v337 = vpack.c.b16 %v271, %v270
  %v338 = vpack.c.b16 %v273, %v272
  %v339 = vpack.c.b16 %v275, %v274
  %v340 = vpack.c.b16 %v277, %v276
  %v341 = vpack.c.b16 %v279, %v278
  %v342 = vpack.c.b16 %v281, %v280
  %v343 = vpack.c.b16 %v283, %v282
  %v344 = vpack.c.b16 %v285, %v284
  %v345 = vpack.c.b16 %v287, %v286
  %v346 = vpack.c.b16 %v289, %v288
  %v347 = vpack.c.b16 %v291, %v290
  %v348 = vpack.c.b16 %v293, %v292
  %v349 = vpack.c.b16 %v295, %v294
  %v350 = vpack.c.b16 %v297, %v296
  %v351 = vpack.c.b16 %v299, %v298
  %v352 = vpack.c.b16 %v301, %v300
  %v353 = vpack.c.b16 %v303, %v302
  %v354 = vpack.c.b16 %v305, %v304
  %v355 = vpack.c.b16 %v307, %v306
  %v356 = vpack.c.b16 %v309, %v308
  %v357 = vpack.c.b16 %v311, %v310
  %v358 = vpack.c.b16 %v313, %v312
  %v359 = vpack.c.b16 %v315, %v314
  %v360 = vpack.c.b16 %v317, %v316
  %v361 = vpack.c.b16 %v319, %v318
  %v362 = vpack.c.b16 %v321, %v320
  %v363 = vpack.c.b16 %v323, %v322
  %v364 = vpack.c.b16 %v325, %v324
  %v365 = vpack.c.b16 %v327, %v326
  %v366 = vpack.c.b16 %v329, %v328
  %v367 = vpack.c.b16 %v331, %v330
  %vm404 = vcmask 523264
  %v406 = vsel %vm404, %v183, 0
  %408 = vmatprep.subr.bf16.mxu0 0
  %409 = vmatpush1.bf16.msra.mxu0 %v339
  %410 = vmatprep.subr.bf16.mxu0 0
  %411 = vmatpush1.bf16.msra.mxu0 %v338
  %412 = vmatprep.subr.bf16.mxu0 0
  %413 = vmatpush1.bf16.msra.mxu0 %v337
  %414 = vmatprep.subr.bf16.mxu0 0
  %415 = vmatpush1.bf16.msra.mxu0 %v336
  %416 = vmatprep.subr.bf16.mxu0 0
  %417 = vmatpush1.bf16.msra.mxu0 %v335
  %418 = vmatprep.subr.bf16.mxu0 0
  %419 = vmatpush1.bf16.msra.mxu0 %v334
  %420 = vmatprep.subr.bf16.mxu0 0
  %421 = vmatpush1.bf16.msra.mxu0 %v333
  %422 = vmatprep.subr.bf16.mxu0 0
  %423 = vmatpush1.bf16.msra.mxu0 %v332
  %424 = vmatprep.subr.bf16.mxu0 0
  %425 = vmatpush2.bf16.msra.mxu0 %v347
  %426 = vmatprep.subr.bf16.mxu0 0
  %427 = vmatpush2.bf16.msra.mxu0 %v346
  %428 = vmatprep.subr.bf16.mxu0 0
  %429 = vmatpush2.bf16.msra.mxu0 %v345
  %430 = vmatprep.subr.bf16.mxu0 0
  %431 = vmatpush2.bf16.msra.mxu0 %v344
  %432 = vmatprep.subr.bf16.mxu0 0
  %433 = vmatpush2.bf16.msra.mxu0 %v343
  %434 = vmatprep.subr.bf16.mxu0 0
  %435 = vmatpush2.bf16.msra.mxu0 %v342
  %436 = vmatprep.subr.bf16.mxu0 0
  %437 = vmatpush2.bf16.msra.mxu0 %v341
  %438 = vmatprep.subr.bf16.mxu0 0
  %439 = vmatpush2.bf16.msra.mxu0 %v340
  %440 = vmatprep.mubr.bf16.mxu0 %v180
  %441 = vmatmul.mubr.bf16.gmra.mxu0 %v179
  %v442 = vpop.f32.mrf.mxu0
  %v443 = vadd.f32 0.0, %v442
  %v444 = vpop.f32.mrf.mxu0
  %v445 = vpop.f32.mrf.mxu0
  %v446 = vpop.f32.mrf.mxu0
  %447 = vdwg.mxu0
  %448 = vmatprep.subr.bf16.mxu0 0
  %449 = vmatpush1.bf16.msra.mxu0 %v355
  %450 = vmatprep.subr.bf16.mxu0 0
  %451 = vmatpush1.bf16.msra.mxu0 %v354
  %452 = vmatprep.subr.bf16.mxu0 0
  %453 = vmatpush1.bf16.msra.mxu0 %v353
  %454 = vmatprep.subr.bf16.mxu0 0
  %455 = vmatpush1.bf16.msra.mxu0 %v352
  %456 = vmatprep.subr.bf16.mxu0 0
  %457 = vmatpush1.bf16.msra.mxu0 %v351
  %458 = vmatprep.subr.bf16.mxu0 0
  %459 = vmatpush1.bf16.msra.mxu0 %v350
  %460 = vmatprep.subr.bf16.mxu0 0
  %461 = vmatpush1.bf16.msra.mxu0 %v349
  %462 = vmatprep.subr.bf16.mxu0 0
  %463 = vmatpush1.bf16.msra.mxu0 %v348
  %464 = vmatprep.subr.bf16.mxu0 0
  %465 = vmatpush2.bf16.msra.mxu0 %v363
  %466 = vmatprep.subr.bf16.mxu0 0
  %467 = vmatpush2.bf16.msra.mxu0 %v362
  %468 = vmatprep.subr.bf16.mxu0 0
  %469 = vmatpush2.bf16.msra.mxu0 %v361
  %470 = vmatprep.subr.bf16.mxu0 0
  %471 = vmatpush2.bf16.msra.mxu0 %v360
  %472 = vmatprep.subr.bf16.mxu0 0
  %473 = vmatpush2.bf16.msra.mxu0 %v359
  %474 = vmatprep.subr.bf16.mxu0 0
  %475 = vmatpush2.bf16.msra.mxu0 %v358
  %476 = vmatprep.subr.bf16.mxu0 0
  %477 = vmatpush2.bf16.msra.mxu0 %v357
  %478 = vmatprep.subr.bf16.mxu0 0
  %479 = vmatpush2.bf16.msra.mxu0 %v356
  %480 = vmatprep.mubr.bf16.mxu0 %v182
  %481 = vmatmul.mubr.bf16.gmra.mxu0 %v181
  %v482 = vpop.f32.mrf.mxu0
  %v483 = vadd.f32 %v443, %v482
  %v484 = vpop.f32.mrf.mxu0
  %v485 = vpop.f32.mrf.mxu0
  %v486 = vpop.f32.mrf.mxu0
  %487 = vdwg.mxu0
  %488 = vmatprep.subr.bf16.mxu0 0
  %489 = vmatpush1.bf16.msra.mxu0 0
  %490 = vmatprep.subr.bf16.mxu0 0
  %491 = vmatpush1.bf16.msra.mxu0 0
  %492 = vmatprep.subr.bf16.mxu0 0
  %493 = vmatpush1.bf16.msra.mxu0 0
  %494 = vmatprep.subr.bf16.mxu0 0
  %495 = vmatpush1.bf16.msra.mxu0 0
  %496 = vmatprep.subr.bf16.mxu0 0
  %497 = vmatpush1.bf16.msra.mxu0 %v367
  %498 = vmatprep.subr.bf16.mxu0 0
  %499 = vmatpush1.bf16.msra.mxu0 %v366
  %500 = vmatprep.subr.bf16.mxu0 0
  %501 = vmatpush1.bf16.msra.mxu0 %v365
  %502 = vmatprep.subr.bf16.mxu0 0
  %503 = vmatpush1.bf16.msra.mxu0 %v364
  %504 = vmatprep.subr.bf16.mxu0 0
  %505 = vmatpush2.bf16.msra.mxu0 0
  %506 = vmatprep.subr.bf16.mxu0 0
  %507 = vmatpush2.bf16.msra.mxu0 0
  %508 = vmatprep.subr.bf16.mxu0 0
  %509 = vmatpush2.bf16.msra.mxu0 0
  %510 = vmatprep.subr.bf16.mxu0 0
  %511 = vmatpush2.bf16.msra.mxu0 0
  %512 = vmatprep.subr.bf16.mxu0 0
  %513 = vmatpush2.bf16.msra.mxu0 0
  %514 = vmatprep.subr.bf16.mxu0 0
  %515 = vmatpush2.bf16.msra.mxu0 0
  %516 = vmatprep.subr.bf16.mxu0 0
  %517 = vmatpush2.bf16.msra.mxu0 0
  %518 = vmatprep.subr.bf16.mxu0 0
  %519 = vmatpush2.bf16.msra.mxu0 0
  %520 = vmatprep.mubr.bf16.mxu0 0
  %521 = vmatmul.mubr.bf16.gmra.mxu0 %v406
  %v522 = vpop.f32.mrf.mxu0
  %v523 = vadd.f32 %v483, %v522
  %v524 = vpop.f32.mrf.mxu0
  %v525 = vpop.f32.mrf.mxu0
  %v526 = vpop.f32.mrf.mxu0
  %527 = vdwg.mxu0
  %v531 = vunpack.c.l.b16 %v21
  %v532 = vunpack.c.h.b16 %v21
  %v533 = vunpack.c.l.b16 %v22
  %v534 = vunpack.c.h.b16 %v22
  %v535 = vunpack.c.l.b16 %v23
  %v536 = vpack.c.b16 %v531, %v531
  %v537 = vpack.c.b16 %v532, %v532
  %v538 = vpack.c.b16 %v533, %v533
  %v539 = vpack.c.b16 %v534, %v534
  %v540 = vpack.c.b16 %v535, %v535
  %v617 = vunpack.c.l.b16 %v24
  %v618 = vunpack.c.l.b16 %v25
  %v619 = vunpack.c.l.b16 %v26
  %v620 = vunpack.c.l.b16 %v27
  %v621 = vunpack.c.l.b16 %v28
  %v622 = vunpack.c.l.b16 %v29
  %v623 = vunpack.c.l.b16 %v30
  %v624 = vunpack.c.l.b16 %v31
  %v625 = vunpack.c.l.b16 %v32
  %v626 = vunpack.c.l.b16 %v33
  %v627 = vunpack.c.l.b16 %v34
  %v628 = vunpack.c.l.b16 %v35
  %v629 = vunpack.c.l.b16 %v36
  %v630 = vunpack.c.l.b16 %v37
  %v631 = vunpack.c.l.b16 %v38
  %v632 = vunpack.c.l.b16 %v39
  %v633 = vunpack.c.l.b16 %v40
  %v634 = vunpack.c.l.b16 %v41
  %v635 = vunpack.c.l.b16 %v42
  %v636 = vunpack.c.l.b16 %v43
  %v637 = vunpack.c.l.b16 %v44
  %v638 = vunpack.c.l.b16 %v45
  %v639 = vunpack.c.l.b16 %v46
  %v640 = vunpack.c.l.b16 %v47
  %v641 = vunpack.c.l.b16 %v48
  %v642 = vunpack.c.l.b16 %v49
  %v643 = vunpack.c.l.b16 %v50
  %v644 = vunpack.c.l.b16 %v51
  %v645 = vunpack.c.l.b16 %v52
  %v646 = vunpack.c.l.b16 %v53
  %v647 = vunpack.c.l.b16 %v54
  %v648 = vunpack.c.l.b16 %v55
  %v649 = vunpack.c.l.b16 %v56
  %v650 = vunpack.c.l.b16 %v57
  %v651 = vunpack.c.l.b16 %v58
  %v652 = vunpack.c.l.b16 %v59
  %v653 = vunpack.c.l.b16 %v60
  %v654 = vunpack.c.l.b16 %v61
  %v655 = vunpack.c.l.b16 %v62
  %v656 = vunpack.c.l.b16 %v63
  %v657 = vunpack.c.l.b16 %v64
  %v658 = vunpack.c.l.b16 %v65
  %v659 = vunpack.c.l.b16 %v66
  %v660 = vunpack.c.l.b16 %v67
  %v661 = vunpack.c.l.b16 %v68
  %v662 = vunpack.c.l.b16 %v69
  %v663 = vunpack.c.l.b16 %v70
  %v664 = vunpack.c.l.b16 %v71
  %v665 = vunpack.c.l.b16 %v72
  %v666 = vunpack.c.l.b16 %v73
  %v667 = vunpack.c.l.b16 %v74
  %v668 = vunpack.c.l.b16 %v75
  %v669 = vunpack.c.l.b16 %v76
  %v670 = vunpack.c.l.b16 %v77
  %v671 = vunpack.c.l.b16 %v78
  %v672 = vunpack.c.l.b16 %v79
  %v673 = vunpack.c.l.b16 %v80
  %v674 = vunpack.c.l.b16 %v81
  %v675 = vunpack.c.l.b16 %v82
  %v676 = vunpack.c.l.b16 %v83
  %v677 = vunpack.c.l.b16 %v84
  %v678 = vunpack.c.l.b16 %v85
  %v679 = vunpack.c.l.b16 %v86
  %v680 = vunpack.c.l.b16 %v87
  %v681 = vunpack.c.l.b16 %v88
  %v682 = vunpack.c.l.b16 %v89
  %v683 = vunpack.c.l.b16 %v90
  %v684 = vunpack.c.l.b16 %v91
  %v685 = vunpack.c.l.b16 %v92
  %v686 = vunpack.c.l.b16 %v93
  %v687 = vunpack.c.l.b16 %v94
  %v688 = vunpack.c.l.b16 %v95
  %v689 = vpack.c.b16 %v618, %v617
  %v690 = vpack.c.b16 %v620, %v619
  %v691 = vpack.c.b16 %v622, %v621
  %v692 = vpack.c.b16 %v624, %v623
  %v693 = vpack.c.b16 %v626, %v625
  %v694 = vpack.c.b16 %v628, %v627
  %v695 = vpack.c.b16 %v630, %v629
  %v696 = vpack.c.b16 %v632, %v631
  %v697 = vpack.c.b16 %v634, %v633
  %v698 = vpack.c.b16 %v636, %v635
  %v699 = vpack.c.b16 %v638, %v637
  %v700 = vpack.c.b16 %v640, %v639
  %v701 = vpack.c.b16 %v642, %v641
  %v702 = vpack.c.b16 %v644, %v643
  %v703 = vpack.c.b16 %v646, %v645
  %v704 = vpack.c.b16 %v648, %v647
  %v705 = vpack.c.b16 %v650, %v649
  %v706 = vpack.c.b16 %v652, %v651
  %v707 = vpack.c.b16 %v654, %v653
  %v708 = vpack.c.b16 %v656, %v655
  %v709 = vpack.c.b16 %v658, %v657
  %v710 = vpack.c.b16 %v660, %v659
  %v711 = vpack.c.b16 %v662, %v661
  %v712 = vpack.c.b16 %v664, %v663
  %v713 = vpack.c.b16 %v666, %v665
  %v714 = vpack.c.b16 %v668, %v667
  %v715 = vpack.c.b16 %v670, %v669
  %v716 = vpack.c.b16 %v672, %v671
  %v717 = vpack.c.b16 %v674, %v673
  %v718 = vpack.c.b16 %v676, %v675
  %v719 = vpack.c.b16 %v678, %v677
  %v720 = vpack.c.b16 %v680, %v679
  %v721 = vpack.c.b16 %v682, %v681
  %v722 = vpack.c.b16 %v684, %v683
  %v723 = vpack.c.b16 %v686, %v685
  %v724 = vpack.c.b16 %v688, %v687
  %v762 = vsel %vm404, %v540, 0
  %764 = vmatprep.subr.bf16.mxu0 0
  %765 = vmatpush1.bf16.msra.mxu0 %v696
  %766 = vmatprep.subr.bf16.mxu0 0
  %767 = vmatpush1.bf16.msra.mxu0 %v695
  %768 = vmatprep.subr.bf16.mxu0 0
  %769 = vmatpush1.bf16.msra.mxu0 %v694
  %770 = vmatprep.subr.bf16.mxu0 0
  %771 = vmatpush1.bf16.msra.mxu0 %v693
  %772 = vmatprep.subr.bf16.mxu0 0
  %773 = vmatpush1.bf16.msra.mxu0 %v692
  %774 = vmatprep.subr.bf16.mxu0 0
  %775 = vmatpush1.bf16.msra.mxu0 %v691
  %776 = vmatprep.subr.bf16.mxu0 0
  %777 = vmatpush1.bf16.msra.mxu0 %v690
  %778 = vmatprep.subr.bf16.mxu0 0
  %779 = vmatpush1.bf16.msra.mxu0 %v689
  %780 = vmatprep.subr.bf16.mxu0 0
  %781 = vmatpush2.bf16.msra.mxu0 %v704
  %782 = vmatprep.subr.bf16.mxu0 0
  %783 = vmatpush2.bf16.msra.mxu0 %v703
  %784 = vmatprep.subr.bf16.mxu0 0
  %785 = vmatpush2.bf16.msra.mxu0 %v702
  %786 = vmatprep.subr.bf16.mxu0 0
  %787 = vmatpush2.bf16.msra.mxu0 %v701
  %788 = vmatprep.subr.bf16.mxu0 0
  %789 = vmatpush2.bf16.msra.mxu0 %v700
  %790 = vmatprep.subr.bf16.mxu0 0
  %791 = vmatpush2.bf16.msra.mxu0 %v699
  %792 = vmatprep.subr.bf16.mxu0 0
  %793 = vmatpush2.bf16.msra.mxu0 %v698
  %794 = vmatprep.subr.bf16.mxu0 0
  %795 = vmatpush2.bf16.msra.mxu0 %v697
  %796 = vmatprep.mubr.bf16.mxu0 %v537
  %797 = vmatmul.mubr.bf16.gmra.mxu0 %v536
  %v798 = vpop.f32.mrf.mxu0
  %v799 = vadd.f32 %v523, %v798
  %v800 = vpop.f32.mrf.mxu0
  %v801 = vpop.f32.mrf.mxu0
  %v802 = vpop.f32.mrf.mxu0
  %803 = vdwg.mxu0
  %804 = vmatprep.subr.bf16.mxu0 0
  %805 = vmatpush1.bf16.msra.mxu0 %v712
  %806 = vmatprep.subr.bf16.mxu0 0
  %807 = vmatpush1.bf16.msra.mxu0 %v711
  %808 = vmatprep.subr.bf16.mxu0 0
  %809 = vmatpush1.bf16.msra.mxu0 %v710
  %810 = vmatprep.subr.bf16.mxu0 0
  %811 = vmatpush1.bf16.msra.mxu0 %v709
  %812 = vmatprep.subr.bf16.mxu0 0
  %813 = vmatpush1.bf16.msra.mxu0 %v708
  %814 = vmatprep.subr.bf16.mxu0 0
  %815 = vmatpush1.bf16.msra.mxu0 %v707
  %816 = vmatprep.subr.bf16.mxu0 0
  %817 = vmatpush1.bf16.msra.mxu0 %v706
  %818 = vmatprep.subr.bf16.mxu0 0
  %819 = vmatpush1.bf16.msra.mxu0 %v705
  %820 = vmatprep.subr.bf16.mxu0 0
  %821 = vmatpush2.bf16.msra.mxu0 %v720
  %822 = vmatprep.subr.bf16.mxu0 0
  %823 = vmatpush2.bf16.msra.mxu0 %v719
  %824 = vmatprep.subr.bf16.mxu0 0
  %825 = vmatpush2.bf16.msra.mxu0 %v718
  %826 = vmatprep.subr.bf16.mxu0 0
  %827 = vmatpush2.bf16.msra.mxu0 %v717
  %828 = vmatprep.subr.bf16.mxu0 0
  %829 = vmatpush2.bf16.msra.mxu0 %v716
  %830 = vmatprep.subr.bf16.mxu0 0
  %831 = vmatpush2.bf16.msra.mxu0 %v715
  %832 = vmatprep.subr.bf16.mxu0 0
  %833 = vmatpush2.bf16.msra.mxu0 %v714
  %834 = vmatprep.subr.bf16.mxu0 0
  %835 = vmatpush2.bf16.msra.mxu0 %v713
  %836 = vmatprep.mubr.bf16.mxu0 %v539
  %837 = vmatmul.mubr.bf16.gmra.mxu0 %v538
  %v838 = vpop.f32.mrf.mxu0
  %v839 = vadd.f32 %v799, %v838
  %v840 = vpop.f32.mrf.mxu0
  %v841 = vpop.f32.mrf.mxu0
  %v842 = vpop.f32.mrf.mxu0
  %843 = vdwg.mxu0
  %844 = vmatprep.subr.bf16.mxu0 0
  %845 = vmatpush1.bf16.msra.mxu0 0
  %846 = vmatprep.subr.bf16.mxu0 0
  %847 = vmatpush1.bf16.msra.mxu0 0
  %848 = vmatprep.subr.bf16.mxu0 0
  %849 = vmatpush1.bf16.msra.mxu0 0
  %850 = vmatprep.subr.bf16.mxu0 0
  %851 = vmatpush1.bf16.msra.mxu0 0
  %852 = vmatprep.subr.bf16.mxu0 0
  %853 = vmatpush1.bf16.msra.mxu0 %v724
  %854 = vmatprep.subr.bf16.mxu0 0
  %855 = vmatpush1.bf16.msra.mxu0 %v723
  %856 = vmatprep.subr.bf16.mxu0 0
  %857 = vmatpush1.bf16.msra.mxu0 %v722
  %858 = vmatprep.subr.bf16.mxu0 0
  %859 = vmatpush1.bf16.msra.mxu0 %v721
  %860 = vmatprep.subr.bf16.mxu0 0
  %861 = vmatpush2.bf16.msra.mxu0 0
  %862 = vmatprep.subr.bf16.mxu0 0
  %863 = vmatpush2.bf16.msra.mxu0 0
  %864 = vmatprep.subr.bf16.mxu0 0
  %865 = vmatpush2.bf16.msra.mxu0 0
  %866 = vmatprep.subr.bf16.mxu0 0
  %867 = vmatpush2.bf16.msra.mxu0 0
  %868 = vmatprep.subr.bf16.mxu0 0
  %869 = vmatpush2.bf16.msra.mxu0 0
  %870 = vmatprep.subr.bf16.mxu0 0
  %871 = vmatpush2.bf16.msra.mxu0 0
  %872 = vmatprep.subr.bf16.mxu0 0
  %873 = vmatpush2.bf16.msra.mxu0 0
  %874 = vmatprep.subr.bf16.mxu0 0
  %875 = vmatpush2.bf16.msra.mxu0 0
  %876 = vmatprep.mubr.bf16.mxu0 0
  %877 = vmatmul.mubr.bf16.gmra.mxu0 %v762
  %v878 = vpop.f32.mrf.mxu0
  %v879 = vadd.f32 %v839, %v878
  %v880 = vpop.f32.mrf.mxu0
  %v881 = vpop.f32.mrf.mxu0
  %v882 = vpop.f32.mrf.mxu0
  %883 = vdwg.mxu0
  %v884 = vpack.c.bf16 %v879, %v879
  %885 = vst [vmem:[%s4] sm:$0xf] %v884
  %v886 = vunpack.c.l.bf16 %v884
  %v887 = vrot.slane %v886, 4
  %v888 = vadd.f32 %v886, %v887
  %v889 = vrot.slane %v888, 2
  %v890 = vadd.f32 %v888, %v889
  %v891 = vrot.slane %v890, 1
  %v892 = vadd.f32 %v890, %v891
  %v893 = vmul.f32 %v886, %v886
  %v894 = vrot.slane %v893, 4
  %v895 = vadd.f32 %v893, %v894
  %v896 = vrot.slane %v895, 2
  %v897 = vadd.f32 %v895, %v896
  %v898 = vrot.slane %v897, 1
  %v899 = vadd.f32 %v897, %v898
  %900 = vst [vmem:[%s5] sm:$0x1] %v892
  %901 = vst [vmem:[%s6] sm:$0x1] %v899
  // Predicated region
  $region18: #{_lambda_.16} parent=0 // pred_check
    _
  $region19: #{_lambda_.16} parent=0 // pred_check_branch
    %903 = sbr.rel (0) target = $region21
  $region20: #{_lambda_.16} parent=0 // pred_region
    _
  $region21: #{_lambda_.16} parent=0 // pred_fallthru
    _
  // Predicated region
  $region22: #{_lambda_.16} parent=0 // pred_check
    _
  $region23: #{_lambda_.16} parent=0 // pred_check_branch
    %905 = sbr.rel (0) target = $region25
  $region24: #{_lambda_.16} parent=0 // pred_region
    _
  $region25: #{_lambda_.16} parent=0 // pred_fallthru
    _
  // Predicated region
  $region26: #{_lambda_.16} parent=0 // pred_check
    _
  $region27: #{_lambda_.16} parent=0 // pred_check_branch
    %907 = sbr.rel (0) target = $region29
  $region28: #{_lambda_.16} parent=0 // pred_region
    _
  $region29: #{_lambda_.16} parent=0 // pred_fallthru
    _
  // Predicated region
  $region30: #{_lambda_.16} parent=0 // pred_check
    _
  $region31: #{_lambda_.16} parent=0 // pred_check_branch
    %909 = sbr.rel (0) target = $region33
  $region32: #{_lambda_.16} parent=0 // pred_region
    _
  $region33: #{_lambda_.16} parent=0 // pred_fallthru
    _
  // Predicated region
  $region34: #{_lambda_.16} parent=0 // pred_check
    _
  $region35: #{_lambda_.16} parent=0 // pred_check_branch
    %911 = sbr.rel (0) target = $region37
  $region36: #{_lambda_.16} parent=0 // pred_region
    _
  $region37: #{_lambda_.16} parent=0 // pred_fallthru
    _
  // Predicated region
  $region38: #{_lambda_.16} parent=0 // pred_check
    _
  $region39: #{_lambda_.16} parent=0 // pred_check_branch
    %913 = sbr.rel (0) target = $region41
  $region40: #{_lambda_.16} parent=0 // pred_region
    _
  $region41: #{_lambda_.16} parent=0 // pred_fallthru
    _

// kernel: _lambda_.17
$region0: #{_lambda_.17}
  #allocation0 [shape = 'u32[]', space=smem, size = 0x4, offset = 0x4, fixed_abs, tag = 'smem constant byte address 0x4 - core index']
  #allocation1 [shape = 'u32[144,128]{1,0:T(1,128)}', space=vmem, size = 0x12000, scoped, tag = 'internal scratch']
  %s0 = inlined_call_operand.vmem [shape: bf16[32,288], index: 0, kind: input, shape index: {}]
  %s1 = inlined_call_operand.vmem [shape: bf16[288,64], index: 1, kind: input, shape index: {}]
  %s2 = inlined_call_operand.vmem [shape: bf16[32,288], index: 2, kind: input, shape index: {}]
  %s3 = inlined_call_operand.vmem [shape: bf16[288,64], index: 3, kind: input, shape index: {}]
  %s4 = inlined_call_operand.vmem [shape: bf16[32,64], index: 4, kind: output, shape index: {0}]
  %s5 = inlined_call_operand.vmem [shape: f32[1,1,64], index: 5, kind: output, shape index: {1}]
  %s6 = inlined_call_operand.vmem [shape: f32[1,1,64], index: 6, kind: output, shape index: {2}]
  %7 = xla_tuple %s4, %s5, %s6
  %s8 = sld [smem:[#allocation0]]
  $region42: #{_lambda_.17} parent=0
    _
  %s10 = ssub.s32 1, %s8
  %s11 = scalar_select 0, %s10, %s8
  // Predicated region
  $region2: #{_lambda_.17} parent=0 // pred_check
    _
  $region3: #{_lambda_.17} parent=0 // pred_check_branch
    %13 = sbr.rel (0) target = $region5
  $region4: #{_lambda_.17} parent=0 // pred_region
    _
  $region5: #{_lambda_.17} parent=0 // pred_fallthru
    _
  // Predicated region
  $region6: #{_lambda_.17} parent=0 // pred_check
    _
  $region7: #{_lambda_.17} parent=0 // pred_check_branch
    %15 = sbr.rel (0) target = $region9
  $region8: #{_lambda_.17} parent=0 // pred_region
    _
  $region9: #{_lambda_.17} parent=0 // pred_fallthru
    _
  // Predicated region
  $region10: #{_lambda_.17} parent=0 // pred_check
    _
  $region11: #{_lambda_.17} parent=0 // pred_check_branch
    %17 = sbr.rel (0) target = $region13
  $region12: #{_lambda_.17} parent=0 // pred_region
    _
  $region13: #{_lambda_.17} parent=0 // pred_fallthru
    _
  // Predicated region
  $region14: #{_lambda_.17} parent=0 // pred_check
    _
  $region15: #{_lambda_.17} parent=0 // pred_check_branch
    %19 = sbr.rel (0) target = $region17
  $region16: #{_lambda_.17} parent=0 // pred_region
    _
  $region17: #{_lambda_.17} parent=0 // pred_fallthru
    _
  %v21 = vld [vmem:[%s0] sm:$0xff]
  %v22 = vld [vmem:[%s0 + $0x8] sm:$0xf]
  %v23 = vld [vmem:[%s0 + $0xc] sm:$0xff]
  %v24 = vld [vmem:[%s0 + $0x14] sm:$0xf]
  %v25 = vld [vmem:[%s0 + $0x18] sm:$0xff]
  %v26 = vld [vmem:[%s0 + $0x20] sm:$0xf]
  %v27 = vld [vmem:[%s0 + $0x24] sm:$0xff]
  %v28 = vld [vmem:[%s0 + $0x2c] sm:$0xf]
  %v29 = vld [vmem:[%s1] sm:$0xf]
  %v30 = vld [vmem:[%s1 + $0x4] sm:$0xf]
  %v31 = vld [vmem:[%s1 + $0x8] sm:$0xf]
  %v32 = vld [vmem:[%s1 + $0xc] sm:$0xf]
  %v33 = vld [vmem:[%s1 + $0x10] sm:$0xf]
  %v34 = vld [vmem:[%s1 + $0x14] sm:$0xf]
  %v35 = vld [vmem:[%s1 + $0x18] sm:$0xf]
  %v36 = vld [vmem:[%s1 + $0x1c] sm:$0xf]
  %v37 = vld [vmem:[%s1 + $0x20] sm:$0xf]
  %v38 = vld [vmem:[%s1 + $0x24] sm:$0xf]
  %v39 = vld [vmem:[%s1 + $0x28] sm:$0xf]
  %v40 = vld [vmem:[%s1 + $0x2c] sm:$0xf]
  %v41 = vld [vmem:[%s1 + $0x30] sm:$0xf]
  %v42 = vld [vmem:[%s1 + $0x34] sm:$0xf]
  %v43 = vld [vmem:[%s1 + $0x38] sm:$0xf]
  %v44 = vld [vmem:[%s1 + $0x3c] sm:$0xf]
  %v45 = vld [vmem:[%s1 + $0x40] sm:$0xf]
  %v46 = vld [vmem:[%s1 + $0x44] sm:$0xf]
  %v47 = vld [vmem:[%s1 + $0x48] sm:$0xf]
  %v48 = vld [vmem:[%s1 + $0x4c] sm:$0xf]
  %v49 = vld [vmem:[%s1 + $0x50] sm:$0xf]
  %v50 = vld [vmem:[%s1 + $0x54] sm:$0xf]
  %v51 = vld [vmem:[%s1 + $0x58] sm:$0xf]
  %v52 = vld [vmem:[%s1 + $0x5c] sm:$0xf]
  %v53 = vld [vmem:[%s1 + $0x60] sm:$0xf]
  %v54 = vld [vmem:[%s1 + $0x64] sm:$0xf]
  %v55 = vld [vmem:[%s1 + $0x68] sm:$0xf]
  %v56 = vld [vmem:[%s1 + $0x6c] sm:$0xf]
  %v57 = vld [vmem:[%s1 + $0x70] sm:$0xf]
  %v58 = vld [vmem:[%s1 + $0x74] sm:$0xf]
  %v59 = vld [vmem:[%s1 + $0x78] sm:$0xf]
  %v60 = vld [vmem:[%s1 + $0x7c] sm:$0xf]
  %v61 = vld [vmem:[%s1 + $0x80] sm:$0xf]
  %v62 = vld [vmem:[%s1 + $0x84] sm:$0xf]
  %v63 = vld [vmem:[%s1 + $0x88] sm:$0xf]
  %v64 = vld [vmem:[%s1 + $0x8c] sm:$0xf]
  %v65 = vld [vmem:[%s2] sm:$0xff]
  %v66 = vld [vmem:[%s2 + $0x8] sm:$0xf]
  %v67 = vld [vmem:[%s2 + $0xc] sm:$0xff]
  %v68 = vld [vmem:[%s2 + $0x14] sm:$0xf]
  %v69 = vld [vmem:[%s2 + $0x18] sm:$0xff]
  %v70 = vld [vmem:[%s2 + $0x20] sm:$0xf]
  %v71 = vld [vmem:[%s2 + $0x24] sm:$0xff]
  %v72 = vld [vmem:[%s2 + $0x2c] sm:$0xf]
  %v73 = vld [vmem:[%s3] sm:$0xf]
  %v74 = vld [vmem:[%s3 + $0x4] sm:$0xf]
  %v75 = vld [vmem:[%s3 + $0x8] sm:$0xf]
  %v76 = vld [vmem:[%s3 + $0xc] sm:$0xf]
  %v77 = vld [vmem:[%s3 + $0x10] sm:$0xf]
  %v78 = vld [vmem:[%s3 + $0x14] sm:$0xf]
  %v79 = vld [vmem:[%s3 + $0x18] sm:$0xf]
  %v80 = vld [vmem:[%s3 + $0x1c] sm:$0xf]
  %v81 = vld [vmem:[%s3 + $0x20] sm:$0xf]
  %v82 = vld [vmem:[%s3 + $0x24] sm:$0xf]
  %v83 = vld [vmem:[%s3 + $0x28] sm:$0xf]
  %v84 = vld [vmem:[%s3 + $0x2c] sm:$0xf]
  %v85 = vld [vmem:[%s3 + $0x30] sm:$0xf]
  %v86 = vld [vmem:[%s3 + $0x34] sm:$0xf]
  %v87 = vld [vmem:[%s3 + $0x38] sm:$0xf]
  %v88 = vld [vmem:[%s3 + $0x3c] sm:$0xf]
  %v89 = vld [vmem:[%s3 + $0x40] sm:$0xf]
  %v90 = vld [vmem:[%s3 + $0x44] sm:$0xf]
  %v91 = vld [vmem:[%s3 + $0x48] sm:$0xf]
  %v92 = vld [vmem:[%s3 + $0x4c] sm:$0xf]
  %v93 = vld [vmem:[%s3 + $0x50] sm:$0xf]
  %v94 = vld [vmem:[%s3 + $0x54] sm:$0xf]
  %v95 = vld [vmem:[%s3 + $0x58] sm:$0xf]
  %v96 = vld [vmem:[%s3 + $0x5c] sm:$0xf]
  %v97 = vld [vmem:[%s3 + $0x60] sm:$0xf]
  %v98 = vld [vmem:[%s3 + $0x64] sm:$0xf]
  %v99 = vld [vmem:[%s3 + $0x68] sm:$0xf]
  %v100 = vld [vmem:[%s3 + $0x6c] sm:$0xf]
  %v101 = vld [vmem:[%s3 + $0x70] sm:$0xf]
  %v102 = vld [vmem:[%s3 + $0x74] sm:$0xf]
  %v103 = vld [vmem:[%s3 + $0x78] sm:$0xf]
  %v104 = vld [vmem:[%s3 + $0x7c] sm:$0xf]
  %v105 = vld [vmem:[%s3 + $0x80] sm:$0xf]
  %v106 = vld [vmem:[%s3 + $0x84] sm:$0xf]
  %v107 = vld [vmem:[%s3 + $0x88] sm:$0xf]
  %v108 = vld [vmem:[%s3 + $0x8c] sm:$0xf]
  %v117 = vunpack.c.l.b16 %v65
  %v118 = vunpack.c.h.b16 %v65
  %v119 = vunpack.c.l.b16 %v66
  %v120 = vunpack.c.l.b16 %v67
  %v121 = vunpack.c.h.b16 %v67
  %v122 = vunpack.c.l.b16 %v68
  %v123 = vunpack.c.l.b16 %v69
  %v124 = vunpack.c.h.b16 %v69
  %v125 = vunpack.c.l.b16 %v70
  %v126 = vunpack.c.l.b16 %v71
  %v127 = vunpack.c.h.b16 %v71
  %v128 = vunpack.c.l.b16 %v72
  %v129 = vpack.c.b16 %v120, %v117
  %v130 = vpack.c.b16 %v121, %v118
  %v131 = vpack.c.b16 %v122, %v119
  %v132 = vpack.c.b16 %v126, %v123
  %v133 = vpack.c.b16 %v127, %v124
  %v134 = vpack.c.b16 %v128, %v125
  %v175 = vunpack.c.l.b16 %v73
  %v176 = vunpack.c.l.b16 %v74
  %v177 = vunpack.c.l.b16 %v75
  %v178 = vunpack.c.l.b16 %v76
  %v179 = vunpack.c.l.b16 %v77
  %v180 = vunpack.c.l.b16 %v78
  %v181 = vunpack.c.l.b16 %v79
  %v182 = vunpack.c.l.b16 %v80
  %v183 = vunpack.c.l.b16 %v81
  %v184 = vunpack.c.l.b16 %v82
  %v185 = vunpack.c.l.b16 %v83
  %v186 = vunpack.c.l.b16 %v84
  %v187 = vunpack.c.l.b16 %v85
  %v188 = vunpack.c.l.b16 %v86
  %v189 = vunpack.c.l.b16 %v87
  %v190 = vunpack.c.l.b16 %v88
  %v191 = vunpack.c.l.b16 %v89
  %v192 = vunpack.c.l.b16 %v90
  %v193 = vunpack.c.l.b16 %v91
  %v194 = vunpack.c.l.b16 %v92
  %v195 = vunpack.c.l.b16 %v93
  %v196 = vunpack.c.l.b16 %v94
  %v197 = vunpack.c.l.b16 %v95
  %v198 = vunpack.c.l.b16 %v96
  %v199 = vunpack.c.l.b16 %v97
  %v200 = vunpack.c.l.b16 %v98
  %v201 = vunpack.c.l.b16 %v99
  %v202 = vunpack.c.l.b16 %v100
  %v203 = vunpack.c.l.b16 %v101
  %v204 = vunpack.c.l.b16 %v102
  %v205 = vunpack.c.l.b16 %v103
  %v206 = vunpack.c.l.b16 %v104
  %v207 = vunpack.c.l.b16 %v105
  %v208 = vunpack.c.l.b16 %v106
  %v209 = vunpack.c.l.b16 %v107
  %v210 = vunpack.c.l.b16 %v108
  %v211 = vpack.c.b16 %v176, %v175
  %v212 = vpack.c.b16 %v178, %v177
  %v213 = vpack.c.b16 %v180, %v179
  %v214 = vpack.c.b16 %v182, %v181
  %v215 = vpack.c.b16 %v184, %v183
  %v216 = vpack.c.b16 %v186, %v185
  %v217 = vpack.c.b16 %v188, %v187
  %v218 = vpack.c.b16 %v190, %v189
  %v219 = vpack.c.b16 %v192, %v191
  %v220 = vpack.c.b16 %v194, %v193
  %v221 = vpack.c.b16 %v196, %v195
  %v222 = vpack.c.b16 %v198, %v197
  %v223 = vpack.c.b16 %v200, %v199
  %v224 = vpack.c.b16 %v202, %v201
  %v225 = vpack.c.b16 %v204, %v203
  %v226 = vpack.c.b16 %v206, %v205
  %v227 = vpack.c.b16 %v208, %v207
  %v228 = vpack.c.b16 %v210, %v209
  %vm247 = vcmask 261120
  %v249 = vsel %vm247, %v131, 0
  %v252 = vsel %vm247, %v134, 0
  %254 = vmatprep.subr.bf16.mxu0 0
  %255 = vmatpush1.bf16.msra.mxu0 %v218
  %256 = vmatprep.subr.bf16.mxu0 0
  %257 = vmatpush1.bf16.msra.mxu0 %v217
  %258 = vmatprep.subr.bf16.mxu0 0
  %259 = vmatpush1.bf16.msra.mxu0 %v216
  %260 = vmatprep.subr.bf16.mxu0 0
  %261 = vmatpush1.bf16.msra.mxu0 %v215
  %262 = vmatprep.subr.bf16.mxu0 0
  %263 = vmatpush1.bf16.msra.mxu0 %v214
  %264 = vmatprep.subr.bf16.mxu0 0
  %265 = vmatpush1.bf16.msra.mxu0 %v213
  %266 = vmatprep.subr.bf16.mxu0 0
  %267 = vmatpush1.bf16.msra.mxu0 %v212
  %268 = vmatprep.subr.bf16.mxu0 0
  %269 = vmatpush1.bf16.msra.mxu0 %v211
  %270 = vmatprep.subr.bf16.mxu0 0
  %271 = vmatpush2.bf16.msra.mxu0 %v226
  %272 = vmatprep.subr.bf16.mxu0 0
  %273 = vmatpush2.bf16.msra.mxu0 %v225
  %274 = vmatprep.subr.bf16.mxu0 0
  %275 = vmatpush2.bf16.msra.mxu0 %v224
  %276 = vmatprep.subr.bf16.mxu0 0
  %277 = vmatpush2.bf16.msra.mxu0 %v223
  %278 = vmatprep.subr.bf16.mxu0 0
  %279 = vmatpush2.bf16.msra.mxu0 %v222
  %280 = vmatprep.subr.bf16.mxu0 0
  %281 = vmatpush2.bf16.msra.mxu0 %v221
  %282 = vmatprep.subr.bf16.mxu0 0
  %283 = vmatpush2.bf16.msra.mxu0 %v220
  %284 = vmatprep.subr.bf16.mxu0 0
  %285 = vmatpush2.bf16.msra.mxu0 %v219
  %286 = vmatprep.mubr.bf16.mxu0 %v130
  %287 = vmatmul.mubr.bf16.gmra.mxu0 %v129
  %v288 = vpop.f32.mrf.mxu0
  %v289 = vadd.f32 0.0, %v288
  %v290 = vpop.f32.mrf.mxu0
  %v291 = vpop.f32.mrf.mxu0
  %v292 = vadd.f32 0.0, %v291
  %v293 = vpop.f32.mrf.mxu0
  %294 = vmatprep.mubr.bf16.mxu0 %v133
  %295 = vmatmul.mubr.bf16.gmra.mxu0 %v132
  %v296 = vpop.f32.mrf.mxu0
  %v297 = vadd.f32 0.0, %v296
  %v298 = vpop.f32.mrf.mxu0
  %v299 = vpop.f32.mrf.mxu0
  %v300 = vadd.f32 0.0, %v299
  %v301 = vpop.f32.mrf.mxu0
  %302 = vdwg.mxu0
  %303 = vmatprep.subr.bf16.mxu0 0
  %304 = vmatpush1.bf16.msra.mxu0 0
  %305 = vmatprep.subr.bf16.mxu0 0
  %306 = vmatpush1.bf16.msra.mxu0 0
  %307 = vmatprep.subr.bf16.mxu0 0
  %308 = vmatpush1.bf16.msra.mxu0 0
  %309 = vmatprep.subr.bf16.mxu0 0
  %310 = vmatpush1.bf16.msra.mxu0 0
  %311 = vmatprep.subr.bf16.mxu0 0
  %312 = vmatpush1.bf16.msra.mxu0 0
  %313 = vmatprep.subr.bf16.mxu0 0
  %314 = vmatpush1.bf16.msra.mxu0 0
  %315 = vmatprep.subr.bf16.mxu0 0
  %316 = vmatpush1.bf16.msra.mxu0 %v228
  %317 = vmatprep.subr.bf16.mxu0 0
  %318 = vmatpush1.bf16.msra.mxu0 %v227
  %319 = vmatprep.subr.bf16.mxu0 0
  %320 = vmatpush2.bf16.msra.mxu0 0
  %321 = vmatprep.subr.bf16.mxu0 0
  %322 = vmatpush2.bf16.msra.mxu0 0
  %323 = vmatprep.subr.bf16.mxu0 0
  %324 = vmatpush2.bf16.msra.mxu0 0
  %325 = vmatprep.subr.bf16.mxu0 0
  %326 = vmatpush2.bf16.msra.mxu0 0
  %327 = vmatprep.subr.bf16.mxu0 0
  %328 = vmatpush2.bf16.msra.mxu0 0
  %329 = vmatprep.subr.bf16.mxu0 0
  %330 = vmatpush2.bf16.msra.mxu0 0
  %331 = vmatprep.subr.bf16.mxu0 0
  %332 = vmatpush2.bf16.msra.mxu0 0
  %333 = vmatprep.subr.bf16.mxu0 0
  %334 = vmatpush2.bf16.msra.mxu0 0
  %335 = vmatprep.mubr.bf16.mxu0 0
  %336 = vmatmul.mubr.bf16.gmra.mxu0 %v249
  %v337 = vpop.f32.mrf.mxu0
  %v338 = vadd.f32 %v289, %v337
  %v339 = vpop.f32.mrf.mxu0
  %v340 = vpop.f32.mrf.mxu0
  %v341 = vadd.f32 %v292, %v340
  %v342 = vpop.f32.mrf.mxu0
  %343 = vmatprep.mubr.bf16.mxu0 0
  %344 = vmatmul.mubr.bf16.gmra.mxu0 %v252
  %v345 = vpop.f32.mrf.mxu0
  %v346 = vadd.f32 %v297, %v345
  %v347 = vpop.f32.mrf.mxu0
  %v348 = vpop.f32.mrf.mxu0
  %v349 = vadd.f32 %v300, %v348
  %v350 = vpop.f32.mrf.mxu0
  %351 = vdwg.mxu0
  %v360 = vunpack.c.l.b16 %v21
  %v361 = vunpack.c.h.b16 %v21
  %v362 = vunpack.c.l.b16 %v22
  %v363 = vunpack.c.l.b16 %v23
  %v364 = vunpack.c.h.b16 %v23
  %v365 = vunpack.c.l.b16 %v24
  %v366 = vunpack.c.l.b16 %v25
  %v367 = vunpack.c.h.b16 %v25
  %v368 = vunpack.c.l.b16 %v26
  %v369 = vunpack.c.l.b16 %v27
  %v370 = vunpack.c.h.b16 %v27
  %v371 = vunpack.c.l.b16 %v28
  %v372 = vpack.c.b16 %v363, %v360
  %v373 = vpack.c.b16 %v364, %v361
  %v374 = vpack.c.b16 %v365, %v362
  %v375 = vpack.c.b16 %v369, %v366
  %v376 = vpack.c.b16 %v370, %v367
  %v377 = vpack.c.b16 %v371, %v368
  %v418 = vunpack.c.l.b16 %v29
  %v419 = vunpack.c.l.b16 %v30
  %v420 = vunpack.c.l.b16 %v31
  %v421 = vunpack.c.l.b16 %v32
  %v422 = vunpack.c.l.b16 %v33
  %v423 = vunpack.c.l.b16 %v34
  %v424 = vunpack.c.l.b16 %v35
  %v425 = vunpack.c.l.b16 %v36
  %v426 = vunpack.c.l.b16 %v37
  %v427 = vunpack.c.l.b16 %v38
  %v428 = vunpack.c.l.b16 %v39
  %v429 = vunpack.c.l.b16 %v40
  %v430 = vunpack.c.l.b16 %v41
  %v431 = vunpack.c.l.b16 %v42
  %v432 = vunpack.c.l.b16 %v43
  %v433 = vunpack.c.l.b16 %v44
  %v434 = vunpack.c.l.b16 %v45
  %v435 = vunpack.c.l.b16 %v46
  %v436 = vunpack.c.l.b16 %v47
  %v437 = vunpack.c.l.b16 %v48
  %v438 = vunpack.c.l.b16 %v49
  %v439 = vunpack.c.l.b16 %v50
  %v440 = vunpack.c.l.b16 %v51
  %v441 = vunpack.c.l.b16 %v52
  %v442 = vunpack.c.l.b16 %v53
  %v443 = vunpack.c.l.b16 %v54
  %v444 = vunpack.c.l.b16 %v55
  %v445 = vunpack.c.l.b16 %v56
  %v446 = vunpack.c.l.b16 %v57
  %v447 = vunpack.c.l.b16 %v58
  %v448 = vunpack.c.l.b16 %v59
  %v449 = vunpack.c.l.b16 %v60
  %v450 = vunpack.c.l.b16 %v61
  %v451 = vunpack.c.l.b16 %v62
  %v452 = vunpack.c.l.b16 %v63
  %v453 = vunpack.c.l.b16 %v64
  %v454 = vpack.c.b16 %v419, %v418
  %v455 = vpack.c.b16 %v421, %v420
  %v456 = vpack.c.b16 %v423, %v422
  %v457 = vpack.c.b16 %v425, %v424
  %v458 = vpack.c.b16 %v427, %v426
  %v459 = vpack.c.b16 %v429, %v428
  %v460 = vpack.c.b16 %v431, %v430
  %v461 = vpack.c.b16 %v433, %v432
  %v462 = vpack.c.b16 %v435, %v434
  %v463 = vpack.c.b16 %v437, %v436
  %v464 = vpack.c.b16 %v439, %v438
  %v465 = vpack.c.b16 %v441, %v440
  %v466 = vpack.c.b16 %v443, %v442
  %v467 = vpack.c.b16 %v445, %v444
  %v468 = vpack.c.b16 %v447, %v446
  %v469 = vpack.c.b16 %v449, %v448
  %v470 = vpack.c.b16 %v451, %v450
  %v471 = vpack.c.b16 %v453, %v452
  %v491 = vsel %vm247, %v374, 0
  %v494 = vsel %vm247, %v377, 0
  %496 = vmatprep.subr.bf16.mxu0 0
  %497 = vmatpush1.bf16.msra.mxu0 %v461
  %498 = vmatprep.subr.bf16.mxu0 0
  %499 = vmatpush1.bf16.msra.mxu0 %v460
  %500 = vmatprep.subr.bf16.mxu0 0
  %501 = vmatpush1.bf16.msra.mxu0 %v459
  %502 = vmatprep.subr.bf16.mxu0 0
  %503 = vmatpush1.bf16.msra.mxu0 %v458
  %504 = vmatprep.subr.bf16.mxu0 0
  %505 = vmatpush1.bf16.msra.mxu0 %v457
  %506 = vmatprep.subr.bf16.mxu0 0
  %507 = vmatpush1.bf16.msra.mxu0 %v456
  %508 = vmatprep.subr.bf16.mxu0 0
  %509 = vmatpush1.bf16.msra.mxu0 %v455
  %510 = vmatprep.subr.bf16.mxu0 0
  %511 = vmatpush1.bf16.msra.mxu0 %v454
  %512 = vmatprep.subr.bf16.mxu0 0
  %513 = vmatpush2.bf16.msra.mxu0 %v469
  %514 = vmatprep.subr.bf16.mxu0 0
  %515 = vmatpush2.bf16.msra.mxu0 %v468
  %516 = vmatprep.subr.bf16.mxu0 0
  %517 = vmatpush2.bf16.msra.mxu0 %v467
  %518 = vmatprep.subr.bf16.mxu0 0
  %519 = vmatpush2.bf16.msra.mxu0 %v466
  %520 = vmatprep.subr.bf16.mxu0 0
  %521 = vmatpush2.bf16.msra.mxu0 %v465
  %522 = vmatprep.subr.bf16.mxu0 0
  %523 = vmatpush2.bf16.msra.mxu0 %v464
  %524 = vmatprep.subr.bf16.mxu0 0
  %525 = vmatpush2.bf16.msra.mxu0 %v463
  %526 = vmatprep.subr.bf16.mxu0 0
  %527 = vmatpush2.bf16.msra.mxu0 %v462
  %528 = vmatprep.mubr.bf16.mxu0 %v373
  %529 = vmatmul.mubr.bf16.gmra.mxu0 %v372
  %v530 = vpop.f32.mrf.mxu0
  %v531 = vadd.f32 %v338, %v530
  %v532 = vpop.f32.mrf.mxu0
  %v533 = vpop.f32.mrf.mxu0
  %v534 = vadd.f32 %v341, %v533
  %v535 = vpop.f32.mrf.mxu0
  %536 = vmatprep.mubr.bf16.mxu0 %v376
  %537 = vmatmul.mubr.bf16.gmra.mxu0 %v375
  %v538 = vpop.f32.mrf.mxu0
  %v539 = vadd.f32 %v346, %v538
  %v540 = vpop.f32.mrf.mxu0
  %v541 = vpop.f32.mrf.mxu0
  %v542 = vadd.f32 %v349, %v541
  %v543 = vpop.f32.mrf.mxu0
  %544 = vdwg.mxu0
  %545 = vmatprep.subr.bf16.mxu0 0
  %546 = vmatpush1.bf16.msra.mxu0 0
  %547 = vmatprep.subr.bf16.mxu0 0
  %548 = vmatpush1.bf16.msra.mxu0 0
  %549 = vmatprep.subr.bf16.mxu0 0
  %550 = vmatpush1.bf16.msra.mxu0 0
  %551 = vmatprep.subr.bf16.mxu0 0
  %552 = vmatpush1.bf16.msra.mxu0 0
  %553 = vmatprep.subr.bf16.mxu0 0
  %554 = vmatpush1.bf16.msra.mxu0 0
  %555 = vmatprep.subr.bf16.mxu0 0
  %556 = vmatpush1.bf16.msra.mxu0 0
  %557 = vmatprep.subr.bf16.mxu0 0
  %558 = vmatpush1.bf16.msra.mxu0 %v471
  %559 = vmatprep.subr.bf16.mxu0 0
  %560 = vmatpush1.bf16.msra.mxu0 %v470
  %561 = vmatprep.subr.bf16.mxu0 0
  %562 = vmatpush2.bf16.msra.mxu0 0
  %563 = vmatprep.subr.bf16.mxu0 0
  %564 = vmatpush2.bf16.msra.mxu0 0
  %565 = vmatprep.subr.bf16.mxu0 0
  %566 = vmatpush2.bf16.msra.mxu0 0
  %567 = vmatprep.subr.bf16.mxu0 0
  %568 = vmatpush2.bf16.msra.mxu0 0
  %569 = vmatprep.subr.bf16.mxu0 0
  %570 = vmatpush2.bf16.msra.mxu0 0
  %571 = vmatprep.subr.bf16.mxu0 0
  %572 = vmatpush2.bf16.msra.mxu0 0
  %573 = vmatprep.subr.bf16.mxu0 0
  %574 = vmatpush2.bf16.msra.mxu0 0
  %575 = vmatprep.subr.bf16.mxu0 0
  %576 = vmatpush2.bf16.msra.mxu0 0
  %577 = vmatprep.mubr.bf16.mxu0 0
  %578 = vmatmul.mubr.bf16.gmra.mxu0 %v491
  %v579 = vpop.f32.mrf.mxu0
  %v580 = vadd.f32 %v531, %v579
  %v581 = vpop.f32.mrf.mxu0
  %v582 = vpop.f32.mrf.mxu0
  %v583 = vadd.f32 %v534, %v582
  %v584 = vpop.f32.mrf.mxu0
  %585 = vmatprep.mubr.bf16.mxu0 0
  %586 = vmatmul.mubr.bf16.gmra.mxu0 %v494
  %v587 = vpop.f32.mrf.mxu0
  %v588 = vadd.f32 %v539, %v587
  %v589 = vpop.f32.mrf.mxu0
  %v590 = vpop.f32.mrf.mxu0
  %v591 = vadd.f32 %v542, %v590
  %v592 = vpop.f32.mrf.mxu0
  %593 = vdwg.mxu0
  %v594 = vpack.c.bf16 %v583, %v580
  %v595 = vpack.c.bf16 %v591, %v588
  %v598 = vunpack.c.l.b16 %v594
  %v599 = vunpack.c.h.b16 %v594
  %v600 = vunpack.c.l.b16 %v595
  %v601 = vunpack.c.h.b16 %v595
  %v602 = vpack.c.b16 %v598, %v598
  %v603 = vpack.c.b16 %v599, %v599
  %v604 = vpack.c.b16 %v600, %v600
  %v605 = vpack.c.b16 %v601, %v601
  %vm610 = vcmask 519168
  %611 = vst.msk [vmem:[%s4] sm:$0xf] %vm610, %v602
  %612 = vst.msk [vmem:[%s4 + $0x4] sm:$0xf] %vm610, %v603
  %613 = vst.msk [vmem:[%s4 + $0x8] sm:$0xf] %vm610, %v604
  %614 = vst.msk [vmem:[%s4 + $0xc] sm:$0xf] %vm610, %v605
  %v615 = vunpack.c.l.bf16 %v594
  %v616 = vunpack.c.h.bf16 %v594
  %v617 = vunpack.c.l.bf16 %v595
  %v618 = vunpack.c.h.bf16 %v595
  %vm619 = vcmask 523264
  %v620 = vsel %vm619, %v615, 0.0
  %v621 = vsel %vm619, %v616, 0.0
  %v622 = vadd.f32 %v620, %v621
  %v623 = vsel %vm619, %v617, 0.0
  %v624 = vadd.f32 %v622, %v623
  %v625 = vsel %vm619, %v618, 0.0
  %v626 = vadd.f32 %v624, %v625
  %v627 = vrot.slane %v626, 4
  %v628 = vadd.f32 %v626, %v627
  %v629 = vrot.slane %v628, 2
  %v630 = vadd.f32 %v628, %v629
  %v631 = vrot.slane %v630, 1
  %v632 = vadd.f32 %v630, %v631
  %v633 = vmul.f32 %v615, %v615
  %v634 = vmul.f32 %v616, %v616
  %v635 = vmul.f32 %v617, %v617
  %v636 = vmul.f32 %v618, %v618
  %v637 = vsel %vm619, %v633, 0.0
  %v638 = vsel %vm619, %v634, 0.0
  %v639 = vadd.f32 %v637, %v638
  %v640 = vsel %vm619, %v635, 0.0
  %v641 = vadd.f32 %v639, %v640
  %v642 = vsel %vm619, %v636, 0.0
  %v643 = vadd.f32 %v641, %v642
  %v644 = vrot.slane %v643, 4
  %v645 = vadd.f32 %v643, %v644
  %v646 = vrot.slane %v645, 2
  %v647 = vadd.f32 %v645, %v646
  %v648 = vrot.slane %v647, 1
  %v649 = vadd.f32 %v647, %v648
  %vm650 = vcmask 516096
  %651 = vst.msk [vmem:[%s5] sm:$0x1] %vm650, %v632
  %652 = vst.msk [vmem:[%s6] sm:$0x1] %vm650, %v649
  // Predicated region
  $region18: #{_lambda_.17} parent=0 // pred_check
    _
  $region19: #{_lambda_.17} parent=0 // pred_check_branch
    %654 = sbr.rel (0) target = $region21
  $region20: #{_lambda_.17} parent=0 // pred_region
    _
  $region21: #{_lambda_.17} parent=0 // pred_fallthru
    _
  // Predicated region
  $region22: #{_lambda_.17} parent=0 // pred_check
    _
  $region23: #{_lambda_.17} parent=0 // pred_check_branch
    %656 = sbr.rel (0) target = $region25
  $region24: #{_lambda_.17} parent=0 // pred_region
    _
  $region25: #{_lambda_.17} parent=0 // pred_fallthru
    _
  // Predicated region
  $region26: #{_lambda_.17} parent=0 // pred_check
    _
  $region27: #{_lambda_.17} parent=0 // pred_check_branch
    %658 = sbr.rel (0) target = $region29
  $region28: #{_lambda_.17} parent=0 // pred_region
    _
  $region29: #{_lambda_.17} parent=0 // pred_fallthru
    _
  // Predicated region
  $region30: #{_lambda_.17} parent=0 // pred_check
    _
  $region31: #{_lambda_.17} parent=0 // pred_check_branch
    %660 = sbr.rel (0) target = $region33
  $region32: #{_lambda_.17} parent=0 // pred_region
    _
  $region33: #{_lambda_.17} parent=0 // pred_fallthru
    _
  // Predicated region
  $region34: #{_lambda_.17} parent=0 // pred_check
    _
  $region35: #{_lambda_.17} parent=0 // pred_check_branch
    %662 = sbr.rel (0) target = $region37
  $region36: #{_lambda_.17} parent=0 // pred_region
    _
  $region37: #{_lambda_.17} parent=0 // pred_fallthru
    _
  // Predicated region
  $region38: #{_lambda_.17} parent=0 // pred_check
    _
  $region39: #{_lambda_.17} parent=0 // pred_check_branch
    %664 = sbr.rel (0) target = $region41
  $region40: #{_lambda_.17} parent=0 // pred_region
    _
  $region41: #{_lambda_.17} parent=0 // pred_fallthru
    _

// kernel: _lambda_.18
$region0: #{_lambda_.18}
  #allocation0 [shape = 'u32[]', space=smem, size = 0x4, offset = 0x4, fixed_abs, tag = 'smem constant byte address 0x4 - core index']
  #allocation1 [shape = 'u32[144,128]{1,0:T(1,128)}', space=vmem, size = 0x12000, scoped, tag = 'internal scratch']
  %s0 = inlined_call_operand.vmem [shape: bf16[128,144], index: 0, kind: input, shape index: {}]
  %s1 = inlined_call_operand.vmem [shape: bf16[144,32], index: 1, kind: input, shape index: {}]
  %s2 = inlined_call_operand.vmem [shape: bf16[128,144], index: 2, kind: input, shape index: {}]
  %s3 = inlined_call_operand.vmem [shape: bf16[144,32], index: 3, kind: input, shape index: {}]
  %s4 = inlined_call_operand.vmem [shape: bf16[128,32], index: 4, kind: output, shape index: {0}]
  %s5 = inlined_call_operand.vmem [shape: f32[1,1,32], index: 5, kind: output, shape index: {1}]
  %s6 = inlined_call_operand.vmem [shape: f32[1,1,32], index: 6, kind: output, shape index: {2}]
  %7 = xla_tuple %s4, %s5, %s6
  %s8 = sld [smem:[#allocation0]]
  $region42: #{_lambda_.18} parent=0
    _
  %s10 = ssub.s32 1, %s8
  %s11 = scalar_select 0, %s10, %s8
  // Predicated region
  $region2: #{_lambda_.18} parent=0 // pred_check
    _
  $region3: #{_lambda_.18} parent=0 // pred_check_branch
    %13 = sbr.rel (0) target = $region5
  $region4: #{_lambda_.18} parent=0 // pred_region
    _
  $region5: #{_lambda_.18} parent=0 // pred_fallthru
    _
  // Predicated region
  $region6: #{_lambda_.18} parent=0 // pred_check
    _
  $region7: #{_lambda_.18} parent=0 // pred_check_branch
    %15 = sbr.rel (0) target = $region9
  $region8: #{_lambda_.18} parent=0 // pred_region
    _
  $region9: #{_lambda_.18} parent=0 // pred_fallthru
    _
  // Predicated region
  $region10: #{_lambda_.18} parent=0 // pred_check
    _
  $region11: #{_lambda_.18} parent=0 // pred_check_branch
    %17 = sbr.rel (0) target = $region13
  $region12: #{_lambda_.18} parent=0 // pred_region
    _
  $region13: #{_lambda_.18} parent=0 // pred_fallthru
    _
  // Predicated region
  $region14: #{_lambda_.18} parent=0 // pred_check
    _
  $region15: #{_lambda_.18} parent=0 // pred_check_branch
    %19 = sbr.rel (0) target = $region17
  $region16: #{_lambda_.18} parent=0 // pred_region
    _
  $region17: #{_lambda_.18} parent=0 // pred_fallthru
    _
  %v21 = vld [vmem:[%s0] sm:$0xff]
  %v22 = vld [vmem:[%s0 + $0x8] sm:$0xff]
  %v23 = vld [vmem:[%s0 + $0x10] sm:$0xff]
  %v24 = vld [vmem:[%s0 + $0x18] sm:$0xff]
  %v25 = vld [vmem:[%s0 + $0x20] sm:$0xff]
  %v26 = vld [vmem:[%s0 + $0x28] sm:$0xff]
  %v27 = vld [vmem:[%s0 + $0x30] sm:$0xff]
  %v28 = vld [vmem:[%s0 + $0x38] sm:$0xff]
  %v29 = vld [vmem:[%s0 + $0x40] sm:$0xff]
  %v30 = vld [vmem:[%s0 + $0x48] sm:$0xff]
  %v31 = vld [vmem:[%s0 + $0x50] sm:$0xff]
  %v32 = vld [vmem:[%s0 + $0x58] sm:$0xff]
  %v33 = vld [vmem:[%s0 + $0x60] sm:$0xff]
  %v34 = vld [vmem:[%s0 + $0x68] sm:$0xff]
  %v35 = vld [vmem:[%s0 + $0x70] sm:$0xff]
  %v36 = vld [vmem:[%s0 + $0x78] sm:$0xff]
  %v37 = vld [vmem:[%s1] sm:$0xf]
  %v38 = vld [vmem:[%s1 + $0x4] sm:$0xf]
  %v39 = vld [vmem:[%s1 + $0x8] sm:$0xf]
  %v40 = vld [vmem:[%s1 + $0xc] sm:$0xf]
  %v41 = vld [vmem:[%s1 + $0x10] sm:$0xf]
  %v42 = vld [vmem:[%s1 + $0x14] sm:$0xf]
  %v43 = vld [vmem:[%s1 + $0x18] sm:$0xf]
  %v44 = vld [vmem:[%s1 + $0x1c] sm:$0xf]
  %v45 = vld [vmem:[%s1 + $0x20] sm:$0xf]
  %v46 = vld [vmem:[%s1 + $0x24] sm:$0xf]
  %v47 = vld [vmem:[%s1 + $0x28] sm:$0xf]
  %v48 = vld [vmem:[%s1 + $0x2c] sm:$0xf]
  %v49 = vld [vmem:[%s1 + $0x30] sm:$0xf]
  %v50 = vld [vmem:[%s1 + $0x34] sm:$0xf]
  %v51 = vld [vmem:[%s1 + $0x38] sm:$0xf]
  %v52 = vld [vmem:[%s1 + $0x3c] sm:$0xf]
  %v53 = vld [vmem:[%s1 + $0x40] sm:$0xf]
  %v54 = vld [vmem:[%s1 + $0x44] sm:$0xf]
  %v55 = vld [vmem:[%s2] sm:$0xff]
  %v56 = vld [vmem:[%s2 + $0x8] sm:$0xff]
  %v57 = vld [vmem:[%s2 + $0x10] sm:$0xff]
  %v58 = vld [vmem:[%s2 + $0x18] sm:$0xff]
  %v59 = vld [vmem:[%s2 + $0x20] sm:$0xff]
  %v60 = vld [vmem:[%s2 + $0x28] sm:$0xff]
  %v61 = vld [vmem:[%s2 + $0x30] sm:$0xff]
  %v62 = vld [vmem:[%s2 + $0x38] sm:$0xff]
  %v63 = vld [vmem:[%s2 + $0x40] sm:$0xff]
  %v64 = vld [vmem:[%s2 + $0x48] sm:$0xff]
  %v65 = vld [vmem:[%s2 + $0x50] sm:$0xff]
  %v66 = vld [vmem:[%s2 + $0x58] sm:$0xff]
  %v67 = vld [vmem:[%s2 + $0x60] sm:$0xff]
  %v68 = vld [vmem:[%s2 + $0x68] sm:$0xff]
  %v69 = vld [vmem:[%s2 + $0x70] sm:$0xff]
  %v70 = vld [vmem:[%s2 + $0x78] sm:$0xff]
  %v71 = vld [vmem:[%s3] sm:$0xf]
  %v72 = vld [vmem:[%s3 + $0x4] sm:$0xf]
  %v73 = vld [vmem:[%s3 + $0x8] sm:$0xf]
  %v74 = vld [vmem:[%s3 + $0xc] sm:$0xf]
  %v75 = vld [vmem:[%s3 + $0x10] sm:$0xf]
  %v76 = vld [vmem:[%s3 + $0x14] sm:$0xf]
  %v77 = vld [vmem:[%s3 + $0x18] sm:$0xf]
  %v78 = vld [vmem:[%s3 + $0x1c] sm:$0xf]
  %v79 = vld [vmem:[%s3 + $0x20] sm:$0xf]
  %v80 = vld [vmem:[%s3 + $0x24] sm:$0xf]
  %v81 = vld [vmem:[%s3 + $0x28] sm:$0xf]
  %v82 = vld [vmem:[%s3 + $0x2c] sm:$0xf]
  %v83 = vld [vmem:[%s3 + $0x30] sm:$0xf]
  %v84 = vld [vmem:[%s3 + $0x34] sm:$0xf]
  %v85 = vld [vmem:[%s3 + $0x38] sm:$0xf]
  %v86 = vld [vmem:[%s3 + $0x3c] sm:$0xf]
  %v87 = vld [vmem:[%s3 + $0x40] sm:$0xf]
  %v88 = vld [vmem:[%s3 + $0x44] sm:$0xf]
  %v105 = vunpack.c.l.b16 %v55
  %v106 = vunpack.c.h.b16 %v55
  %v107 = vunpack.c.l.b16 %v56
  %v108 = vunpack.c.h.b16 %v56
  %v109 = vunpack.c.l.b16 %v57
  %v110 = vunpack.c.h.b16 %v57
  %v111 = vunpack.c.l.b16 %v58
  %v112 = vunpack.c.h.b16 %v58
  %v113 = vunpack.c.l.b16 %v59
  %v114 = vunpack.c.h.b16 %v59
  %v115 = vunpack.c.l.b16 %v60
  %v116 = vunpack.c.h.b16 %v60
  %v117 = vunpack.c.l.b16 %v61
  %v118 = vunpack.c.h.b16 %v61
  %v119 = vunpack.c.l.b16 %v62
  %v120 = vunpack.c.h.b16 %v62
  %v121 = vunpack.c.l.b16 %v63
  %v122 = vunpack.c.h.b16 %v63
  %v123 = vunpack.c.l.b16 %v64
  %v124 = vunpack.c.h.b16 %v64
  %v125 = vunpack.c.l.b16 %v65
  %v126 = vunpack.c.h.b16 %v65
  %v127 = vunpack.c.l.b16 %v66
  %v128 = vunpack.c.h.b16 %v66
  %v129 = vunpack.c.l.b16 %v67
  %v130 = vunpack.c.h.b16 %v67
  %v131 = vunpack.c.l.b16 %v68
  %v132 = vunpack.c.h.b16 %v68
  %v133 = vunpack.c.l.b16 %v69
  %v134 = vunpack.c.h.b16 %v69
  %v135 = vunpack.c.l.b16 %v70
  %v136 = vunpack.c.h.b16 %v70
  %v137 = vpack.c.b16 %v107, %v105
  %v138 = vpack.c.b16 %v108, %v106
  %v139 = vpack.c.b16 %v111, %v109
  %v140 = vpack.c.b16 %v112, %v110
  %v141 = vpack.c.b16 %v115, %v113
  %v142 = vpack.c.b16 %v116, %v114
  %v143 = vpack.c.b16 %v119, %v117
  %v144 = vpack.c.b16 %v120, %v118
  %v145 = vpack.c.b16 %v123, %v121
  %v146 = vpack.c.b16 %v124, %v122
  %v147 = vpack.c.b16 %v127, %v125
  %v148 = vpack.c.b16 %v128, %v126
  %v149 = vpack.c.b16 %v131, %v129
  %v150 = vpack.c.b16 %v132, %v130
  %v151 = vpack.c.b16 %v135, %v133
  %v152 = vpack.c.b16 %v136, %v134
  %v179 = vunpack.c.l.b16 %v71
  %v180 = vunpack.c.l.b16 %v72
  %v181 = vunpack.c.l.b16 %v73
  %v182 = vunpack.c.l.b16 %v74
  %v183 = vunpack.c.l.b16 %v75
  %v184 = vunpack.c.l.b16 %v76
  %v185 = vunpack.c.l.b16 %v77
  %v186 = vunpack.c.l.b16 %v78
  %v187 = vunpack.c.l.b16 %v79
  %v188 = vunpack.c.l.b16 %v80
  %v189 = vunpack.c.l.b16 %v81
  %v190 = vunpack.c.l.b16 %v82
  %v191 = vunpack.c.l.b16 %v83
  %v192 = vunpack.c.l.b16 %v84
  %v193 = vunpack.c.l.b16 %v85
  %v194 = vunpack.c.l.b16 %v86
  %v195 = vunpack.c.l.b16 %v87
  %v196 = vunpack.c.l.b16 %v88
  %v197 = vpack.c.b16 %v180, %v179
  %v198 = vpack.c.b16 %v182, %v181
  %v199 = vpack.c.b16 %v184, %v183
  %v200 = vpack.c.b16 %v186, %v185
  %v201 = vpack.c.b16 %v188, %v187
  %v202 = vpack.c.b16 %v190, %v189
  %v203 = vpack.c.b16 %v192, %v191
  %v204 = vpack.c.b16 %v194, %v193
  %v205 = vpack.c.b16 %v196, %v195
  %vm215 = vcmask 130048
  %v217 = vsel %vm215, %v138, 0
  %v220 = vsel %vm215, %v140, 0
  %v223 = vsel %vm215, %v142, 0
  %v226 = vsel %vm215, %v144, 0
  %v229 = vsel %vm215, %v146, 0
  %v232 = vsel %vm215, %v148, 0
  %v235 = vsel %vm215, %v150, 0
  %v238 = vsel %vm215, %v152, 0
  %240 = vmatprep.subr.bf16.mxu0 0
  %241 = vmatpush1.bf16.msra.mxu0 %v204
  %242 = vmatprep.subr.bf16.mxu0 0
  %243 = vmatpush1.bf16.msra.mxu0 %v203
  %244 = vmatprep.subr.bf16.mxu0 0
  %245 = vmatpush1.bf16.msra.mxu0 %v202
  %246 = vmatprep.subr.bf16.mxu0 0
  %247 = vmatpush1.bf16.msra.mxu0 %v201
  %248 = vmatprep.subr.bf16.mxu0 0
  %249 = vmatpush1.bf16.msra.mxu0 %v200
  %250 = vmatprep.subr.bf16.mxu0 0
  %251 = vmatpush1.bf16.msra.mxu0 %v199
  %252 = vmatprep.subr.bf16.mxu0 0
  %253 = vmatpush1.bf16.msra.mxu0 %v198
  %254 = vmatprep.subr.bf16.mxu0 0
  %255 = vmatpush1.bf16.msra.mxu0 %v197
  %256 = vmatprep.subr.bf16.mxu0 0
  %257 = vmatpush2.bf16.msra.mxu0 0
  %258 = vmatprep.subr.bf16.mxu0 0
  %259 = vmatpush2.bf16.msra.mxu0 0
  %260 = vmatprep.subr.bf16.mxu0 0
  %261 = vmatpush2.bf16.msra.mxu0 0
  %262 = vmatprep.subr.bf16.mxu0 0
  %263 = vmatpush2.bf16.msra.mxu0 0
  %264 = vmatprep.subr.bf16.mxu0 0
  %265 = vmatpush2.bf16.msra.mxu0 0
  %266 = vmatprep.subr.bf16.mxu0 0
  %267 = vmatpush2.bf16.msra.mxu0 0
  %268 = vmatprep.subr.bf16.mxu0 0
  %269 = vmatpush2.bf16.msra.mxu0 0
  %270 = vmatprep.subr.bf16.mxu0 0
  %271 = vmatpush2.bf16.msra.mxu0 %v205
  %272 = vmatprep.mubr.bf16.mxu0 %v217
  %273 = vmatmul.mubr.bf16.gmra.mxu0 %v137
  %v274 = vpop.f32.mrf.mxu0
  %v275 = vadd.f32 0.0, %v274
  %v276 = vpop.f32.mrf.mxu0
  %v277 = vpop.f32.mrf.mxu0
  %v278 = vadd.f32 0.0, %v277
  %v279 = vpop.f32.mrf.mxu0
  %280 = vmatprep.mubr.bf16.mxu0 %v220
  %281 = vmatmul.mubr.bf16.gmra.mxu0 %v139
  %v282 = vpop.f32.mrf.mxu0
  %v283 = vadd.f32 0.0, %v282
  %v284 = vpop.f32.mrf.mxu0
  %v285 = vpop.f32.mrf.mxu0
  %v286 = vadd.f32 0.0, %v285
  %v287 = vpop.f32.mrf.mxu0
  %288 = vmatprep.mubr.bf16.mxu0 %v223
  %289 = vmatmul.mubr.bf16.gmra.mxu0 %v141
  %v290 = vpop.f32.mrf.mxu0
  %v291 = vadd.f32 0.0, %v290
  %v292 = vpop.f32.mrf.mxu0
  %v293 = vpop.f32.mrf.mxu0
  %v294 = vadd.f32 0.0, %v293
  %v295 = vpop.f32.mrf.mxu0
  %296 = vmatprep.mubr.bf16.mxu0 %v226
  %297 = vmatmul.mubr.bf16.gmra.mxu0 %v143
  %v298 = vpop.f32.mrf.mxu0
  %v299 = vadd.f32 0.0, %v298
  %v300 = vpop.f32.mrf.mxu0
  %v301 = vpop.f32.mrf.mxu0
  %v302 = vadd.f32 0.0, %v301
  %v303 = vpop.f32.mrf.mxu0
  %304 = vmatprep.mubr.bf16.mxu0 %v229
  %305 = vmatmul.mubr.bf16.gmra.mxu0 %v145
  %v306 = vpop.f32.mrf.mxu0
  %v307 = vadd.f32 0.0, %v306
  %v308 = vpop.f32.mrf.mxu0
  %v309 = vpop.f32.mrf.mxu0
  %v310 = vadd.f32 0.0, %v309
  %v311 = vpop.f32.mrf.mxu0
  %312 = vmatprep.mubr.bf16.mxu0 %v232
  %313 = vmatmul.mubr.bf16.gmra.mxu0 %v147
  %v314 = vpop.f32.mrf.mxu0
  %v315 = vadd.f32 0.0, %v314
  %v316 = vpop.f32.mrf.mxu0
  %v317 = vpop.f32.mrf.mxu0
  %v318 = vadd.f32 0.0, %v317
  %v319 = vpop.f32.mrf.mxu0
  %320 = vmatprep.mubr.bf16.mxu0 %v235
  %321 = vmatmul.mubr.bf16.gmra.mxu0 %v149
  %v322 = vpop.f32.mrf.mxu0
  %v323 = vadd.f32 0.0, %v322
  %v324 = vpop.f32.mrf.mxu0
  %v325 = vpop.f32.mrf.mxu0
  %v326 = vadd.f32 0.0, %v325
  %v327 = vpop.f32.mrf.mxu0
  %328 = vmatprep.mubr.bf16.mxu0 %v238
  %329 = vmatmul.mubr.bf16.gmra.mxu0 %v151
  %v330 = vpop.f32.mrf.mxu0
  %v331 = vadd.f32 0.0, %v330
  %v332 = vpop.f32.mrf.mxu0
  %v333 = vpop.f32.mrf.mxu0
  %v334 = vadd.f32 0.0, %v333
  %v335 = vpop.f32.mrf.mxu0
  %336 = vdwg.mxu0
  %v353 = vunpack.c.l.b16 %v21
  %v354 = vunpack.c.h.b16 %v21
  %v355 = vunpack.c.l.b16 %v22
  %v356 = vunpack.c.h.b16 %v22
  %v357 = vunpack.c.l.b16 %v23
  %v358 = vunpack.c.h.b16 %v23
  %v359 = vunpack.c.l.b16 %v24
  %v360 = vunpack.c.h.b16 %v24
  %v361 = vunpack.c.l.b16 %v25
  %v362 = vunpack.c.h.b16 %v25
  %v363 = vunpack.c.l.b16 %v26
  %v364 = vunpack.c.h.b16 %v26
  %v365 = vunpack.c.l.b16 %v27
  %v366 = vunpack.c.h.b16 %v27
  %v367 = vunpack.c.l.b16 %v28
  %v368 = vunpack.c.h.b16 %v28
  %v369 = vunpack.c.l.b16 %v29
  %v370 = vunpack.c.h.b16 %v29
  %v371 = vunpack.c.l.b16 %v30
  %v372 = vunpack.c.h.b16 %v30
  %v373 = vunpack.c.l.b16 %v31
  %v374 = vunpack.c.h.b16 %v31
  %v375 = vunpack.c.l.b16 %v32
  %v376 = vunpack.c.h.b16 %v32
  %v377 = vunpack.c.l.b16 %v33
  %v378 = vunpack.c.h.b16 %v33
  %v379 = vunpack.c.l.b16 %v34
  %v380 = vunpack.c.h.b16 %v34
  %v381 = vunpack.c.l.b16 %v35
  %v382 = vunpack.c.h.b16 %v35
  %v383 = vunpack.c.l.b16 %v36
  %v384 = vunpack.c.h.b16 %v36
  %v385 = vpack.c.b16 %v355, %v353
  %v386 = vpack.c.b16 %v356, %v354
  %v387 = vpack.c.b16 %v359, %v357
  %v388 = vpack.c.b16 %v360, %v358
  %v389 = vpack.c.b16 %v363, %v361
  %v390 = vpack.c.b16 %v364, %v362
  %v391 = vpack.c.b16 %v367, %v365
  %v392 = vpack.c.b16 %v368, %v366
  %v393 = vpack.c.b16 %v371, %v369
  %v394 = vpack.c.b16 %v372, %v370
  %v395 = vpack.c.b16 %v375, %v373
  %v396 = vpack.c.b16 %v376, %v374
  %v397 = vpack.c.b16 %v379, %v377
  %v398 = vpack.c.b16 %v380, %v378
  %v399 = vpack.c.b16 %v383, %v381
  %v400 = vpack.c.b16 %v384, %v382
  %v427 = vunpack.c.l.b16 %v37
  %v428 = vunpack.c.l.b16 %v38
  %v429 = vunpack.c.l.b16 %v39
  %v430 = vunpack.c.l.b16 %v40
  %v431 = vunpack.c.l.b16 %v41
  %v432 = vunpack.c.l.b16 %v42
  %v433 = vunpack.c.l.b16 %v43
  %v434 = vunpack.c.l.b16 %v44
  %v435 = vunpack.c.l.b16 %v45
  %v436 = vunpack.c.l.b16 %v46
  %v437 = vunpack.c.l.b16 %v47
  %v438 = vunpack.c.l.b16 %v48
  %v439 = vunpack.c.l.b16 %v49
  %v440 = vunpack.c.l.b16 %v50
  %v441 = vunpack.c.l.b16 %v51
  %v442 = vunpack.c.l.b16 %v52
  %v443 = vunpack.c.l.b16 %v53
  %v444 = vunpack.c.l.b16 %v54
  %v445 = vpack.c.b16 %v428, %v427
  %v446 = vpack.c.b16 %v430, %v429
  %v447 = vpack.c.b16 %v432, %v431
  %v448 = vpack.c.b16 %v434, %v433
  %v449 = vpack.c.b16 %v436, %v435
  %v450 = vpack.c.b16 %v438, %v437
  %v451 = vpack.c.b16 %v440, %v439
  %v452 = vpack.c.b16 %v442, %v441
  %v453 = vpack.c.b16 %v444, %v443
  %v464 = vsel %vm215, %v386, 0
  %v467 = vsel %vm215, %v388, 0
  %v470 = vsel %vm215, %v390, 0
  %v473 = vsel %vm215, %v392, 0
  %v476 = vsel %vm215, %v394, 0
  %v479 = vsel %vm215, %v396, 0
  %v482 = vsel %vm215, %v398, 0
  %v485 = vsel %vm215, %v400, 0
  %487 = vmatprep.subr.bf16.mxu0 0
  %488 = vmatpush1.bf16.msra.mxu0 %v452
  %489 = vmatprep.subr.bf16.mxu0 0
  %490 = vmatpush1.bf16.msra.mxu0 %v451
  %491 = vmatprep.subr.bf16.mxu0 0
  %492 = vmatpush1.bf16.msra.mxu0 %v450
  %493 = vmatprep.subr.bf16.mxu0 0
  %494 = vmatpush1.bf16.msra.mxu0 %v449
  %495 = vmatprep.subr.bf16.mxu0 0
  %496 = vmatpush1.bf16.msra.mxu0 %v448
  %497 = vmatprep.subr.bf16.mxu0 0
  %498 = vmatpush1.bf16.msra.mxu0 %v447
  %499 = vmatprep.subr.bf16.mxu0 0
  %500 = vmatpush1.bf16.msra.mxu0 %v446
  %501 = vmatprep.subr.bf16.mxu0 0
  %502 = vmatpush1.bf16.msra.mxu0 %v445
  %503 = vmatprep.subr.bf16.mxu0 0
  %504 = vmatpush2.bf16.msra.mxu0 0
  %505 = vmatprep.subr.bf16.mxu0 0
  %506 = vmatpush2.bf16.msra.mxu0 0
  %507 = vmatprep.subr.bf16.mxu0 0
  %508 = vmatpush2.bf16.msra.mxu0 0
  %509 = vmatprep.subr.bf16.mxu0 0
  %510 = vmatpush2.bf16.msra.mxu0 0
  %511 = vmatprep.subr.bf16.mxu0 0
  %512 = vmatpush2.bf16.msra.mxu0 0
  %513 = vmatprep.subr.bf16.mxu0 0
  %514 = vmatpush2.bf16.msra.mxu0 0
  %515 = vmatprep.subr.bf16.mxu0 0
  %516 = vmatpush2.bf16.msra.mxu0 0
  %517 = vmatprep.subr.bf16.mxu0 0
  %518 = vmatpush2.bf16.msra.mxu0 %v453
  %519 = vmatprep.mubr.bf16.mxu0 %v464
  %520 = vmatmul.mubr.bf16.gmra.mxu0 %v385
  %v521 = vpop.f32.mrf.mxu0
  %v522 = vadd.f32 %v275, %v521
  %v523 = vpop.f32.mrf.mxu0
  %v524 = vpop.f32.mrf.mxu0
  %v525 = vadd.f32 %v278, %v524
  %v526 = vpop.f32.mrf.mxu0
  %527 = vmatprep.mubr.bf16.mxu0 %v467
  %528 = vmatmul.mubr.bf16.gmra.mxu0 %v387
  %v529 = vpop.f32.mrf.mxu0
  %v530 = vadd.f32 %v283, %v529
  %v531 = vpop.f32.mrf.mxu0
  %v532 = vpop.f32.mrf.mxu0
  %v533 = vadd.f32 %v286, %v532
  %v534 = vpop.f32.mrf.mxu0
  %535 = vmatprep.mubr.bf16.mxu0 %v470
  %536 = vmatmul.mubr.bf16.gmra.mxu0 %v389
  %v537 = vpop.f32.mrf.mxu0
  %v538 = vadd.f32 %v291, %v537
  %v539 = vpop.f32.mrf.mxu0
  %v540 = vpop.f32.mrf.mxu0
  %v541 = vadd.f32 %v294, %v540
  %v542 = vpop.f32.mrf.mxu0
  %543 = vmatprep.mubr.bf16.mxu0 %v473
  %544 = vmatmul.mubr.bf16.gmra.mxu0 %v391
  %v545 = vpop.f32.mrf.mxu0
  %v546 = vadd.f32 %v299, %v545
  %v547 = vpop.f32.mrf.mxu0
  %v548 = vpop.f32.mrf.mxu0
  %v549 = vadd.f32 %v302, %v548
  %v550 = vpop.f32.mrf.mxu0
  %551 = vmatprep.mubr.bf16.mxu0 %v476
  %552 = vmatmul.mubr.bf16.gmra.mxu0 %v393
  %v553 = vpop.f32.mrf.mxu0
  %v554 = vadd.f32 %v307, %v553
  %v555 = vpop.f32.mrf.mxu0
  %v556 = vpop.f32.mrf.mxu0
  %v557 = vadd.f32 %v310, %v556
  %v558 = vpop.f32.mrf.mxu0
  %559 = vmatprep.mubr.bf16.mxu0 %v479
  %560 = vmatmul.mubr.bf16.gmra.mxu0 %v395
  %v561 = vpop.f32.mrf.mxu0
  %v562 = vadd.f32 %v315, %v561
  %v563 = vpop.f32.mrf.mxu0
  %v564 = vpop.f32.mrf.mxu0
  %v565 = vadd.f32 %v318, %v564
  %v566 = vpop.f32.mrf.mxu0
  %567 = vmatprep.mubr.bf16.mxu0 %v482
  %568 = vmatmul.mubr.bf16.gmra.mxu0 %v397
  %v569 = vpop.f32.mrf.mxu0
  %v570 = vadd.f32 %v323, %v569
  %v571 = vpop.f32.mrf.mxu0
  %v572 = vpop.f32.mrf.mxu0
  %v573 = vadd.f32 %v326, %v572
  %v574 = vpop.f32.mrf.mxu0
  %575 = vmatprep.mubr.bf16.mxu0 %v485
  %576 = vmatmul.mubr.bf16.gmra.mxu0 %v399
  %v577 = vpop.f32.mrf.mxu0
  %v578 = vadd.f32 %v331, %v577
  %v579 = vpop.f32.mrf.mxu0
  %v580 = vpop.f32.mrf.mxu0
  %v581 = vadd.f32 %v334, %v580
  %v582 = vpop.f32.mrf.mxu0
  %583 = vdwg.mxu0
  %v584 = vpack.c.bf16 %v525, %v522
  %v585 = vpack.c.bf16 %v533, %v530
  %v586 = vpack.c.bf16 %v541, %v538
  %v587 = vpack.c.bf16 %v549, %v546
  %v588 = vpack.c.bf16 %v557, %v554
  %v589 = vpack.c.bf16 %v565, %v562
  %v590 = vpack.c.bf16 %v573, %v570
  %v591 = vpack.c.bf16 %v581, %v578
  %v600 = vunpack.c.l.b16 %v584
  %v601 = vunpack.c.h.b16 %v584
  %v602 = vunpack.c.l.b16 %v585
  %v603 = vunpack.c.h.b16 %v585
  %v604 = vunpack.c.l.b16 %v586
  %v605 = vunpack.c.h.b16 %v586
  %v606 = vunpack.c.l.b16 %v587
  %v607 = vunpack.c.h.b16 %v587
  %v608 = vunpack.c.l.b16 %v588
  %v609 = vunpack.c.h.b16 %v588
  %v610 = vunpack.c.l.b16 %v589
  %v611 = vunpack.c.h.b16 %v589
  %v612 = vunpack.c.l.b16 %v590
  %v613 = vunpack.c.h.b16 %v590
  %v614 = vunpack.c.l.b16 %v591
  %v615 = vunpack.c.h.b16 %v591
  %v616 = vpack.c.b16 %v600, %v600
  %v617 = vpack.c.b16 %v601, %v601
  %v618 = vpack.c.b16 %v602, %v602
  %v619 = vpack.c.b16 %v603, %v603
  %v620 = vpack.c.b16 %v604, %v604
  %v621 = vpack.c.b16 %v605, %v605
  %v622 = vpack.c.b16 %v606, %v606
  %v623 = vpack.c.b16 %v607, %v607
  %v624 = vpack.c.b16 %v608, %v608
  %v625 = vpack.c.b16 %v609, %v609
  %v626 = vpack.c.b16 %v610, %v610
  %v627 = vpack.c.b16 %v611, %v611
  %v628 = vpack.c.b16 %v612, %v612
  %v629 = vpack.c.b16 %v613, %v613
  %v630 = vpack.c.b16 %v614, %v614
  %v631 = vpack.c.b16 %v615, %v615
  %vm648 = vcmask 257024
  %649 = vst.msk [vmem:[%s4] sm:$0xf] %vm648, %v616
  %650 = vst.msk [vmem:[%s4 + $0x4] sm:$0xf] %vm648, %v617
  %651 = vst.msk [vmem:[%s4 + $0x8] sm:$0xf] %vm648, %v618
  %652 = vst.msk [vmem:[%s4 + $0xc] sm:$0xf] %vm648, %v619
  %653 = vst.msk [vmem:[%s4 + $0x10] sm:$0xf] %vm648, %v620
  %654 = vst.msk [vmem:[%s4 + $0x14] sm:$0xf] %vm648, %v621
  %655 = vst.msk [vmem:[%s4 + $0x18] sm:$0xf] %vm648, %v622
  %656 = vst.msk [vmem:[%s4 + $0x1c] sm:$0xf] %vm648, %v623
  %657 = vst.msk [vmem:[%s4 + $0x20] sm:$0xf] %vm648, %v624
  %658 = vst.msk [vmem:[%s4 + $0x24] sm:$0xf] %vm648, %v625
  %659 = vst.msk [vmem:[%s4 + $0x28] sm:$0xf] %vm648, %v626
  %660 = vst.msk [vmem:[%s4 + $0x2c] sm:$0xf] %vm648, %v627
  %661 = vst.msk [vmem:[%s4 + $0x30] sm:$0xf] %vm648, %v628
  %662 = vst.msk [vmem:[%s4 + $0x34] sm:$0xf] %vm648, %v629
  %663 = vst.msk [vmem:[%s4 + $0x38] sm:$0xf] %vm648, %v630
  %664 = vst.msk [vmem:[%s4 + $0x3c] sm:$0xf] %vm648, %v631
  %v665 = vunpack.c.l.bf16 %v584
  %v666 = vunpack.c.h.bf16 %v584
  %v667 = vunpack.c.l.bf16 %v585
  %v668 = vunpack.c.h.bf16 %v585
  %v669 = vunpack.c.l.bf16 %v586
  %v670 = vunpack.c.h.bf16 %v586
  %v671 = vunpack.c.l.bf16 %v587
  %v672 = vunpack.c.h.bf16 %v587
  %v673 = vunpack.c.l.bf16 %v588
  %v674 = vunpack.c.h.bf16 %v588
  %v675 = vunpack.c.l.bf16 %v589
  %v676 = vunpack.c.h.bf16 %v589
  %v677 = vunpack.c.l.bf16 %v590
  %v678 = vunpack.c.h.bf16 %v590
  %v679 = vunpack.c.l.bf16 %v591
  %v680 = vunpack.c.h.bf16 %v591
  %vm681 = vcmask 261120
  %v682 = vsel %vm681, %v665, 0.0
  %v683 = vsel %vm681, %v666, 0.0
  %v684 = vadd.f32 %v682, %v683
  %v685 = vsel %vm681, %v667, 0.0
  %v686 = vadd.f32 %v684, %v685
  %v687 = vsel %vm681, %v668, 0.0
  %v688 = vadd.f32 %v686, %v687
  %v689 = vsel %vm681, %v669, 0.0
  %v690 = vadd.f32 %v688, %v689
  %v691 = vsel %vm681, %v670, 0.0
  %v692 = vadd.f32 %v690, %v691
  %v693 = vsel %vm681, %v671, 0.0
  %v694 = vadd.f32 %v692, %v693
  %v695 = vsel %vm681, %v672, 0.0
  %v696 = vadd.f32 %v694, %v695
  %v697 = vsel %vm681, %v673, 0.0
  %v698 = vadd.f32 %v696, %v697
  %v699 = vsel %vm681, %v674, 0.0
  %v700 = vadd.f32 %v698, %v699
  %v701 = vsel %vm681, %v675, 0.0
  %v702 = vadd.f32 %v700, %v701
  %v703 = vsel %vm681, %v676, 0.0
  %v704 = vadd.f32 %v702, %v703
  %v705 = vsel %vm681, %v677, 0.0
  %v706 = vadd.f32 %v704, %v705
  %v707 = vsel %vm681, %v678, 0.0
  %v708 = vadd.f32 %v706, %v707
  %v709 = vsel %vm681, %v679, 0.0
  %v710 = vadd.f32 %v708, %v709
  %v711 = vsel %vm681, %v680, 0.0
  %v712 = vadd.f32 %v710, %v711
  %v713 = vrot.slane %v712, 4
  %v714 = vadd.f32 %v712, %v713
  %v715 = vrot.slane %v714, 2
  %v716 = vadd.f32 %v714, %v715
  %v717 = vrot.slane %v716, 1
  %v718 = vadd.f32 %v716, %v717
  %v719 = vmul.f32 %v665, %v665
  %v720 = vmul.f32 %v666, %v666
  %v721 = vmul.f32 %v667, %v667
  %v722 = vmul.f32 %v668, %v668
  %v723 = vmul.f32 %v669, %v669
  %v724 = vmul.f32 %v670, %v670
  %v725 = vmul.f32 %v671, %v671
  %v726 = vmul.f32 %v672, %v672
  %v727 = vmul.f32 %v673, %v673
  %v728 = vmul.f32 %v674, %v674
  %v729 = vmul.f32 %v675, %v675
  %v730 = vmul.f32 %v676, %v676
  %v731 = vmul.f32 %v677, %v677
  %v732 = vmul.f32 %v678, %v678
  %v733 = vmul.f32 %v679, %v679
  %v734 = vmul.f32 %v680, %v680
  %v735 = vsel %vm681, %v719, 0.0
  %v736 = vsel %vm681, %v720, 0.0
  %v737 = vadd.f32 %v735, %v736
  %v738 = vsel %vm681, %v721, 0.0
  %v739 = vadd.f32 %v737, %v738
  %v740 = vsel %vm681, %v722, 0.0
  %v741 = vadd.f32 %v739, %v740
  %v742 = vsel %vm681, %v723, 0.0
  %v743 = vadd.f32 %v741, %v742
  %v744 = vsel %vm681, %v724, 0.0
  %v745 = vadd.f32 %v743, %v744
  %v746 = vsel %vm681, %v725, 0.0
  %v747 = vadd.f32 %v745, %v746
  %v748 = vsel %vm681, %v726, 0.0
  %v749 = vadd.f32 %v747, %v748
  %v750 = vsel %vm681, %v727, 0.0
  %v751 = vadd.f32 %v749, %v750
  %v752 = vsel %vm681, %v728, 0.0
  %v753 = vadd.f32 %v751, %v752
  %v754 = vsel %vm681, %v729, 0.0
  %v755 = vadd.f32 %v753, %v754
  %v756 = vsel %vm681, %v730, 0.0
  %v757 = vadd.f32 %v755, %v756
  %v758 = vsel %vm681, %v731, 0.0
  %v759 = vadd.f32 %v757, %v758
  %v760 = vsel %vm681, %v732, 0.0
  %v761 = vadd.f32 %v759, %v760
  %v762 = vsel %vm681, %v733, 0.0
  %v763 = vadd.f32 %v761, %v762
  %v764 = vsel %vm681, %v734, 0.0
  %v765 = vadd.f32 %v763, %v764
  %v766 = vrot.slane %v765, 4
  %v767 = vadd.f32 %v765, %v766
  %v768 = vrot.slane %v767, 2
  %v769 = vadd.f32 %v767, %v768
  %v770 = vrot.slane %v769, 1
  %v771 = vadd.f32 %v769, %v770
  %vm772 = vcmask 253952
  %773 = vst.msk [vmem:[%s5] sm:$0x1] %vm772, %v718
  %774 = vst.msk [vmem:[%s6] sm:$0x1] %vm772, %v771
  // Predicated region
  $region18: #{_lambda_.18} parent=0 // pred_check
    _
  $region19: #{_lambda_.18} parent=0 // pred_check_branch
    %776 = sbr.rel (0) target = $region21
  $region20: #{_lambda_.18} parent=0 // pred_region
    _
  $region21: #{_lambda_.18} parent=0 // pred_fallthru
    _
  // Predicated region
  $region22: #{_lambda_.18} parent=0 // pred_check
    _
  $region23: #{_lambda_.18} parent=0 // pred_check_branch
    %778 = sbr.rel (0) target = $region25
  $region24: #{_lambda_.18} parent=0 // pred_region
    _
  $region25: #{_lambda_.18} parent=0 // pred_fallthru
    _
  // Predicated region
  $region26: #{_lambda_.18} parent=0 // pred_check
    _
  $region27: #{_lambda_.18} parent=0 // pred_check_branch
    %780 = sbr.rel (0) target = $region29
  $region28: #{_lambda_.18} parent=0 // pred_region
    _
  $region29: #{_lambda_.18} parent=0 // pred_fallthru
    _
  // Predicated region
  $region30: #{_lambda_.18} parent=0 // pred_check
    _
  $region31: #{_lambda_.18} parent=0 // pred_check_branch
    %782 = sbr.rel (0) target = $region33
  $region32: #{_lambda_.18} parent=0 // pred_region
    _
  $region33: #{_lambda_.18} parent=0 // pred_fallthru
    _
  // Predicated region
  $region34: #{_lambda_.18} parent=0 // pred_check
    _
  $region35: #{_lambda_.18} parent=0 // pred_check_branch
    %784 = sbr.rel (0) target = $region37
  $region36: #{_lambda_.18} parent=0 // pred_region
    _
  $region37: #{_lambda_.18} parent=0 // pred_fallthru
    _
  // Predicated region
  $region38: #{_lambda_.18} parent=0 // pred_check
    _
  $region39: #{_lambda_.18} parent=0 // pred_check_branch
    %786 = sbr.rel (0) target = $region41
  $region40: #{_lambda_.18} parent=0 // pred_region
    _
  $region41: #{_lambda_.18} parent=0 // pred_fallthru
    _

// kernel: tile.6
$region0: #{tile.6}
  #allocation0 [shape = 's32[1]{0}', space=sflag, size = 0x4, scoped, tag = 'scoped memory for tile.6']
  %s0 = inlined_call_operand.vmem [shape: f32[3], index: 0, kind: input, shape index: {}]
  %s1 = inlined_call_operand.vmem [shape: f32[4,3], index: 1, kind: output, shape index: {}]
  // Predicated region
  $region2: #{tile.6} parent=0 // pred_check
    _
  $region3: #{tile.6} parent=0 // pred_check_branch
    %3 = sbr.rel (0) target = $region5
  $region4: #{tile.6} parent=0 // pred_region
    _
  $region5: #{tile.6} parent=0 // pred_fallthru
    _
  %v4 = vld [vmem:[%s0] ss:$0 sm:$0xff]
  %5 = vst [vmem:[%s1] sm:$0xf] %v4

// kernel: tile.7
$region0: #{tile.7}
  %s0 = inlined_call_operand.vmem [shape: f32[4,3], index: 0, kind: input, shape index: {}]
  %s1 = inlined_call_operand.vmem [shape: f32[1,12], index: 1, kind: output, shape index: {}]
  $region1: #{tile.7} parent=0
    #allocation0 [shape = 'u8[4096]{0}', space=vmem, size = 0x1000, scoped, tag = 'scoped mem for output reshape']
    #allocation1 [shape = 'u8[4096]{0}', space=vmem, size = 0x1000, scoped, tag = 'scoped mem for input reshape']
    %s3 = sshll.u32 1, 4
    %s4 = ssub.s32 %s3, 1
    %v5 = vld [vmem:[%s0] sm:%s4]
    %6 = vst [vmem:[#allocation1] sm:%s4] %v5
    %v7 = vld [vmem:[#allocation1] sm:$0x1]
    %vm8 = vcmask 23552
    %9 = vst.msk [vmem:[#allocation0] sm:$0x1] %vm8, %v7
    %s10 = scalar_lea.vmem [#allocation1], 3
    %v11 = vld [vmem:[%s10] sm:$0x1]
    %12 = vrot.lane.b32.xlu0 %v11, 9
    %v13 = vpop.permute.xlu0 %12
    %vm14 = vcmask 97352
    %15 = vst.msk [vmem:[#allocation0] sm:$0x1] %vm14, %v13
    %s16 = scalar_lea.vmem [#allocation1], 2
    %v17 = vld [vmem:[%s16] sm:$0x1]
    %18 = vrot.lane.b32.xlu0 %v17, 6
    %v19 = vpop.permute.xlu0 %18
    %vm20 = vcmask 72752
    %21 = vst.msk [vmem:[#allocation0] sm:$0x1] %vm20, %v19
    %s22 = scalar_lea.vmem [#allocation1], 1
    %v23 = vld [vmem:[%s22] sm:$0x1]
    %24 = vrot.lane.b32.xlu0 %v23, 3
    %v25 = vpop.permute.xlu0 %24
    %vm26 = vcmask 48152
    %27 = vst.msk [vmem:[#allocation0] sm:$0x1] %vm26, %v25
    %s29 = sshll.u32 1, 1
    %s30 = ssub.s32 %s29, 1
    %v32 = vld [vmem:[#allocation0] sm:%s30]
    %s33 = sshll.u32 1, 1
    %s34 = ssub.s32 %s33, 1
    %35 = vst [vmem:[%s1] sm:%s34] %v32

// kernel: _lambda_.19
$region0: #{_lambda_.19}
  #allocation0 [shape = 'u32[]', space=smem, size = 0x4, offset = 0x4, fixed_abs, tag = 'smem constant byte address 0x4 - core index']
  #allocation1 [shape = 'u32[144,128]{1,0:T(1,128)}', space=vmem, size = 0x12000, scoped, tag = 'internal scratch']
  %s0 = inlined_call_operand.vmem [shape: bf16[512,72], index: 0, kind: input, shape index: {}]
  %s1 = inlined_call_operand.vmem [shape: bf16[72,12], index: 1, kind: input, shape index: {}]
  %s2 = inlined_call_operand.vmem [shape: bf16[512,72], index: 2, kind: input, shape index: {}]
  %s3 = inlined_call_operand.vmem [shape: bf16[72,12], index: 3, kind: input, shape index: {}]
  %s4 = inlined_call_operand.vmem [shape: f32[1,12], index: 4, kind: input, shape index: {}]
  %s5 = inlined_call_operand.vmem [shape: f32[512,12], index: 5, kind: output, shape index: {}]
  %s6 = sld [smem:[#allocation0]]
  $region53: #{_lambda_.19} parent=0
    _
  %s8 = ssub.s32 1, %s6
  %s9 = scalar_select 0, %s8, %s6
  loop: start=0, step=1, limit=4
  $region2: #{_lambda_.19} parent=0 // loop_pre_header
    _
  $region3: #{_lambda_.19} parent=0 // loop_header
    %s11 = sphi 0, %s15
    %p12 = scmp.ge.s32.totalorder %s11, 4
    %s21 = sphi 0, %s23
    %s24 = sphi 0, %s21
    %s25 = sphi 0, %s24
    %s41 = sphi 0, %s25
    %s45 = sphi 0, %s45
    %s47 = sphi 0, %s45
    %s48 = sphi 0, %s47
    %s62 = sphi 0, %s48
    %s68 = sphi 0, %s70
    %s71 = sphi 0, %s68
    %s72 = sphi 0, %s71
    %s88 = sphi 0, %s72
    %s92 = sphi 0, %s92
    %s94 = sphi 0, %s92
    %s95 = sphi 0, %s94
    %s109 = sphi 0, %s95
    %s113 = sphi 0, %s113
    %s115 = sphi 0, %s113
    %s116 = sphi 0, %s115
    %s130 = sphi 0, %s116
    %s136 = sphi 0, %s138
    %s139 = sphi 0, %s136
    %s140 = sphi 0, %s139
    %s156 = sphi 0, %s140
  $region4: #{_lambda_.19} parent=0 // loop_header_branch
    %14 = sbr.rel (%p12) target = $region8
  $region5: #{_lambda_.19} parent=0 // loop_body
    %s16 = ssub.s32 %s11, 1
    %s17 = ssub.s32 %s11, 2
    %s18 = sadd.s32 %s11, 1
    %s19 = ssub.s32 %s11, %s18
    %p20 = scmp.eq.s32.totalorder %s19, 0
    %s22 = sadd.s32 %s21, 1
    %s23 = scalar_select %p20, %s21, %s22
    %p26 = pneg %p20
    %p27 = scmp.eq.s32.totalorder %s11, 1
    %p28 = por %p26, %p27
    %p29 = scmp.ne.s32.totalorder %s21, %s24
    %p30 = scmp.eq.s32.totalorder %s11, 0
    %p31 = por %p29, %p30
    %p32 = scmp.ne.s32.totalorder %s21, %s24
    %p33 = scmp.eq.s32.totalorder %s16, 1
    %p34 = por %p32, %p33
    %p35 = scmp.ne.s32.totalorder %s24, %s25
    %p36 = scmp.eq.s32.totalorder %s16, 0
    %p37 = por %p35, %p36
    %p38 = scmp.ne.s32.totalorder %s24, %s25
    %p39 = scmp.eq.s32.totalorder %s17, 1
    %p40 = por %p38, %p39
    %p42 = scmp.ne.s32.totalorder %s25, %s41
    %p43 = scmp.eq.s32.totalorder %s17, 0
    %p44 = por %p42, %p43
    %s46 = sadd.s32 %s45, 1
    %p49 = scmp.eq.s32.totalorder %s11, 1
    %p50 = scmp.ne.s32.totalorder %s45, %s47
    %p51 = scmp.eq.s32.totalorder %s11, 0
    %p52 = por %p50, %p51
    %p53 = scmp.ne.s32.totalorder %s45, %s47
    %p54 = scmp.eq.s32.totalorder %s16, 1
    %p55 = por %p53, %p54
    %p56 = scmp.ne.s32.totalorder %s47, %s48
    %p57 = scmp.eq.s32.totalorder %s16, 0
    %p58 = por %p56, %p57
    %p59 = scmp.ne.s32.totalorder %s47, %s48
    %p60 = scmp.eq.s32.totalorder %s17, 1
    %p61 = por %p59, %p60
    %p63 = scmp.ne.s32.totalorder %s48, %s62
    %p64 = scmp.eq.s32.totalorder %s17, 0
    %p65 = por %p63, %p64
    %s66 = ssub.s32 %s11, %s18
    %p67 = scmp.eq.s32.totalorder %s66, 0
    %s69 = sadd.s32 %s68, 1
    %s70 = scalar_select %p67, %s68, %s69
    %p73 = pneg %p67
    %p74 = scmp.eq.s32.totalorder %s11, 1
    %p75 = por %p73, %p74
    %p76 = scmp.ne.s32.totalorder %s68, %s71
    %p77 = scmp.eq.s32.totalorder %s11, 0
    %p78 = por %p76, %p77
    %p79 = scmp.ne.s32.totalorder %s68, %s71
    %p80 = scmp.eq.s32.totalorder %s16, 1
    %p81 = por %p79, %p80
    %p82 = scmp.ne.s32.totalorder %s71, %s72
    %p83 = scmp.eq.s32.totalorder %s16, 0
    %p84 = por %p82, %p83
    %p85 = scmp.ne.s32.totalorder %s71, %s72
    %p86 = scmp.eq.s32.totalorder %s17, 1
    %p87 = por %p85, %p86
    %p89 = scmp.ne.s32.totalorder %s72, %s88
    %p90 = scmp.eq.s32.totalorder %s17, 0
    %p91 = por %p89, %p90
    %s93 = sadd.s32 %s92, 1
    %p96 = scmp.eq.s32.totalorder %s11, 1
    %p97 = scmp.ne.s32.totalorder %s92, %s94
    %p98 = scmp.eq.s32.totalorder %s11, 0
    %p99 = por %p97, %p98
    %p100 = scmp.ne.s32.totalorder %s92, %s94
    %p101 = scmp.eq.s32.totalorder %s16, 1
    %p102 = por %p100, %p101
    %p103 = scmp.ne.s32.totalorder %s94, %s95
    %p104 = scmp.eq.s32.totalorder %s16, 0
    %p105 = por %p103, %p104
    %p106 = scmp.ne.s32.totalorder %s94, %s95
    %p107 = scmp.eq.s32.totalorder %s17, 1
    %p108 = por %p106, %p107
    %p110 = scmp.ne.s32.totalorder %s95, %s109
    %p111 = scmp.eq.s32.totalorder %s17, 0
    %p112 = por %p110, %p111
    %s114 = sadd.s32 %s113, 1
    %p117 = scmp.eq.s32.totalorder %s11, 1
    %p118 = scmp.ne.s32.totalorder %s113, %s115
    %p119 = scmp.eq.s32.totalorder %s11, 0
    %p120 = por %p118, %p119
    %p121 = scmp.ne.s32.totalorder %s113, %s115
    %p122 = scmp.eq.s32.totalorder %s16, 1
    %p123 = por %p121, %p122
    %p124 = scmp.ne.s32.totalorder %s115, %s116
    %p125 = scmp.eq.s32.totalorder %s16, 0
    %p126 = por %p124, %p125
    %p127 = scmp.ne.s32.totalorder %s115, %s116
    %p128 = scmp.eq.s32.totalorder %s17, 1
    %p129 = por %p127, %p128
    %p131 = scmp.ne.s32.totalorder %s116, %s130
    %p132 = scmp.eq.s32.totalorder %s17, 0
    %p133 = por %p131, %p132
    %s134 = ssub.s32 %s11, %s18
    %p135 = scmp.eq.s32.totalorder %s134, 0
    %s137 = sadd.s32 %s136, 1
    %s138 = scalar_select %p135, %s136, %s137
    %p141 = pneg %p135
    %p142 = scmp.eq.s32.totalorder %s11, 1
    %p143 = por %p141, %p142
    %p144 = scmp.ne.s32.totalorder %s136, %s139
    %p145 = scmp.eq.s32.totalorder %s11, 0
    %p146 = por %p144, %p145
    %p147 = scmp.ne.s32.totalorder %s136, %s139
    %p148 = scmp.eq.s32.totalorder %s16, 1
    %p149 = por %p147, %p148
    %p150 = scmp.ne.s32.totalorder %s139, %s140
    %p151 = scmp.eq.s32.totalorder %s16, 0
    %p152 = por %p150, %p151
    %p153 = scmp.ne.s32.totalorder %s139, %s140
    %p154 = scmp.eq.s32.totalorder %s17, 1
    %p155 = por %p153, %p154
    %p157 = scmp.ne.s32.totalorder %s140, %s156
    %p158 = scmp.eq.s32.totalorder %s17, 0
    %p159 = por %p157, %p158
    %p160 = scmp.le.s32.totalorder 1, %s11
    %p161 = scmp.lt.s32.totalorder %s11, 3
    %p162 = pnand %p160, %p161
    %p163 = pneg %p162
    // Predicated region
    $region9: #{_lambda_.19} parent=5 // pred_check
      _
    $region10: #{_lambda_.19} parent=5 // pred_check_branch
      %165 = sbr.rel (%p162) target = $region12
    $region11: #{_lambda_.19} parent=5 // pred_region
      %s166 = ssub.s32 %s11, 1
      // Predicated region
      $region13: #{_lambda_.19} parent=11 // pred_check
        %p167 = pneg %p58
      $region14: #{_lambda_.19} parent=11 // pred_check_branch
        %169 = sbr.rel (%p167) target = $region16
      $region15: #{_lambda_.19} parent=11 // pred_region
        _
      $region16: #{_lambda_.19} parent=11 // pred_fallthru
        _
      // Predicated region
      $region17: #{_lambda_.19} parent=11 // pred_check
        %p170 = pneg %p105
      $region18: #{_lambda_.19} parent=11 // pred_check_branch
        %172 = sbr.rel (%p170) target = $region20
      $region19: #{_lambda_.19} parent=11 // pred_region
        _
      $region20: #{_lambda_.19} parent=11 // pred_fallthru
        _
      // Predicated region
      $region21: #{_lambda_.19} parent=11 // pred_check
        %p173 = pneg %p126
      $region22: #{_lambda_.19} parent=11 // pred_check_branch
        %175 = sbr.rel (%p173) target = $region24
      $region23: #{_lambda_.19} parent=11 // pred_region
        _
      $region24: #{_lambda_.19} parent=11 // pred_fallthru
        _
    $region12: #{_lambda_.19} parent=5 // pred_fallthru
      _
    %p176 = scmp.lt.s32.totalorder %s11, 2
    // Predicated region
    $region25: #{_lambda_.19} parent=5 // pred_check
      %p177 = pneg %p176
    $region26: #{_lambda_.19} parent=5 // pred_check_branch
      %179 = sbr.rel (%p177) target = $region28
    $region27: #{_lambda_.19} parent=5 // pred_region
      // Predicated region
      $region29: #{_lambda_.19} parent=27 // pred_check
        %p180 = pneg %p31
      $region30: #{_lambda_.19} parent=27 // pred_check_branch
        %182 = sbr.rel (%p180) target = $region32
      $region31: #{_lambda_.19} parent=27 // pred_region
        %s183 = smul.u32 32, %s11
        %p184 = scmp.lt.s32.totalorder %s183, 63
        %s185 = scalar_select %p184, %s183, 63
        %s186 = smul.addr %s185, 4
        %s187 = scalar_lea.vmem %s0, %s186
        %s188 = smul.u32 32, %s11
      $region32: #{_lambda_.19} parent=27 // pred_fallthru
        _
      // Predicated region
      $region33: #{_lambda_.19} parent=27 // pred_check
        %p189 = pneg %p78
      $region34: #{_lambda_.19} parent=27 // pred_check_branch
        %191 = sbr.rel (%p189) target = $region36
      $region35: #{_lambda_.19} parent=27 // pred_region
        %s192 = smul.u32 32, %s11
        %p193 = scmp.lt.s32.totalorder %s192, 63
        %s194 = scalar_select %p193, %s192, 63
        %s195 = smul.addr %s194, 4
        %s196 = scalar_lea.vmem %s2, %s195
        %s197 = smul.u32 32, %s11
      $region36: #{_lambda_.19} parent=27 // pred_fallthru
        _
    $region28: #{_lambda_.19} parent=5 // pred_fallthru
      _
    %p198 = scmp.le.s32.totalorder 1, %s11
    %p199 = scmp.lt.s32.totalorder %s11, 3
    %p200 = pnand %p198, %p199
    %p201 = pneg %p200
    // Predicated region
    $region37: #{_lambda_.19} parent=5 // pred_check
      _
    $region38: #{_lambda_.19} parent=5 // pred_check_branch
      %203 = sbr.rel (%p200) target = $region40
    $region39: #{_lambda_.19} parent=5 // pred_region
      %s204 = ssub.s32 %s11, 1
      %s205 = smul.u32 32, %s16
      %p206 = scmp.lt.s32.totalorder %s205, 63
      %s207 = scalar_select %p206, %s205, 63
      %s208 = smul.addr %s207, 4
      %s209 = scalar_lea.vmem %s0, %s208
      %p210 = pneg %p37
      %p211 = pneg %p34
      %p212 = pneg %p58
      %p213 = pneg %p55
      %s214 = smul.u32 32, %s16
      %p215 = scmp.lt.s32.totalorder %s214, 63
      %s216 = scalar_select %p215, %s214, 63
      %s217 = smul.addr %s216, 4
      %s218 = scalar_lea.vmem %s2, %s217
      %p219 = pneg %p84
      %p220 = pneg %p81
      %p221 = pneg %p105
      %p222 = pneg %p102
      %p223 = pneg %p126
      %p224 = pneg %p123
      %p225 = pneg %p152
      %p226 = pneg %p149
      %s227 = smul.u32 32, %s16
      %p228 = scmp.lt.s32.totalorder %s227, 63
      %s229 = scalar_select %p228, %s227, 63
      %s230 = smul.addr %s229, 8
      %s231 = scalar_lea.vmem %s5, %s230
      %s232 = smul.u32 32, %s16
      %p233 = scmp.lt.s32.totalorder %s232, 63
      %s234 = scalar_select %p233, %s232, 63
      %s235 = smul.addr %s234, 4
      %s236 = scalar_lea.vmem %s0, %s235
      %s237 = smul.u32 32, %s16
      %s238 = smul.u32 32, %s16
      %p239 = scmp.lt.s32.totalorder %s238, 63
      %s240 = scalar_select %p239, %s238, 63
      %s241 = smul.addr %s240, 4
      %s242 = scalar_lea.vmem %s2, %s241
      %s243 = smul.u32 32, %s16
      %s244 = smul.u32 32, %s16
      %p245 = scmp.lt.s32.totalorder %s244, 63
      %s246 = scalar_select %p245, %s244, 63
      %s247 = smul.addr %s246, 8
      %s248 = scalar_lea.vmem %s5, %s247
      %s249 = smul.u32 32, %s16
      %v251 = vld [vmem:[%s236] sm:$0xf]
      %v252 = vld [vmem:[%s236 + $0x4] sm:$0xf]
      %v253 = vld [vmem:[%s236 + $0x8] sm:$0xf]
      %v254 = vld [vmem:[%s236 + $0xc] sm:$0xf]
      %v255 = vld [vmem:[%s236 + $0x10] sm:$0xf]
      %v256 = vld [vmem:[%s236 + $0x14] sm:$0xf]
      %v257 = vld [vmem:[%s236 + $0x18] sm:$0xf]
      %v258 = vld [vmem:[%s236 + $0x1c] sm:$0xf]
      %v259 = vld [vmem:[%s236 + $0x20] sm:$0xf]
      %v260 = vld [vmem:[%s236 + $0x24] sm:$0xf]
      %v261 = vld [vmem:[%s236 + $0x28] sm:$0xf]
      %v262 = vld [vmem:[%s236 + $0x2c] sm:$0xf]
      %v263 = vld [vmem:[%s236 + $0x30] sm:$0xf]
      %v264 = vld [vmem:[%s236 + $0x34] sm:$0xf]
      %v265 = vld [vmem:[%s236 + $0x38] sm:$0xf]
      %v266 = vld [vmem:[%s236 + $0x3c] sm:$0xf]
      %v267 = vld [vmem:[%s236 + $0x40] sm:$0xf]
      %v268 = vld [vmem:[%s236 + $0x44] sm:$0xf]
      %v269 = vld [vmem:[%s236 + $0x48] sm:$0xf]
      %v270 = vld [vmem:[%s236 + $0x4c] sm:$0xf]
      %v271 = vld [vmem:[%s236 + $0x50] sm:$0xf]
      %v272 = vld [vmem:[%s236 + $0x54] sm:$0xf]
      %v273 = vld [vmem:[%s236 + $0x58] sm:$0xf]
      %v274 = vld [vmem:[%s236 + $0x5c] sm:$0xf]
      %v275 = vld [vmem:[%s236 + $0x60] sm:$0xf]
      %v276 = vld [vmem:[%s236 + $0x64] sm:$0xf]
      %v277 = vld [vmem:[%s236 + $0x68] sm:$0xf]
      %v278 = vld [vmem:[%s236 + $0x6c] sm:$0xf]
      %v279 = vld [vmem:[%s236 + $0x70] sm:$0xf]
      %v280 = vld [vmem:[%s236 + $0x74] sm:$0xf]
      %v281 = vld [vmem:[%s236 + $0x78] sm:$0xf]
      %v282 = vld [vmem:[%s236 + $0x7c] sm:$0xf]
      %v283 = vld [vmem:[%s1] sm:$0xf]
      %v284 = vld [vmem:[%s1 + $0x4] sm:$0xf]
      %v285 = vld [vmem:[%s1 + $0x8] sm:$0xf]
      %v286 = vld [vmem:[%s1 + $0xc] sm:$0xf]
      %v287 = vld [vmem:[%s1 + $0x10] sm:$0xf]
      %v288 = vld [vmem:[%s1 + $0x14] sm:$0xf]
      %v289 = vld [vmem:[%s1 + $0x18] sm:$0xf]
      %v290 = vld [vmem:[%s1 + $0x1c] sm:$0xf]
      %v291 = vld [vmem:[%s1 + $0x20] sm:$0xf]
      %v292 = vld [vmem:[%s242] sm:$0xf]
      %v293 = vld [vmem:[%s242 + $0x4] sm:$0xf]
      %v294 = vld [vmem:[%s242 + $0x8] sm:$0xf]
      %v295 = vld [vmem:[%s242 + $0xc] sm:$0xf]
      %v296 = vld [vmem:[%s242 + $0x10] sm:$0xf]
      %v297 = vld [vmem:[%s242 + $0x14] sm:$0xf]
      %v298 = vld [vmem:[%s242 + $0x18] sm:$0xf]
      %v299 = vld [vmem:[%s242 + $0x1c] sm:$0xf]
      %v300 = vld [vmem:[%s242 + $0x20] sm:$0xf]
      %v301 = vld [vmem:[%s242 + $0x24] sm:$0xf]
      %v302 = vld [vmem:[%s242 + $0x28] sm:$0xf]
      %v303 = vld [vmem:[%s242 + $0x2c] sm:$0xf]
      %v304 = vld [vmem:[%s242 + $0x30] sm:$0xf]
      %v305 = vld [vmem:[%s242 + $0x34] sm:$0xf]
      %v306 = vld [vmem:[%s242 + $0x38] sm:$0xf]
      %v307 = vld [vmem:[%s242 + $0x3c] sm:$0xf]
      %v308 = vld [vmem:[%s242 + $0x40] sm:$0xf]
      %v309 = vld [vmem:[%s242 + $0x44] sm:$0xf]
      %v310 = vld [vmem:[%s242 + $0x48] sm:$0xf]
      %v311 = vld [vmem:[%s242 + $0x4c] sm:$0xf]
      %v312 = vld [vmem:[%s242 + $0x50] sm:$0xf]
      %v313 = vld [vmem:[%s242 + $0x54] sm:$0xf]
      %v314 = vld [vmem:[%s242 + $0x58] sm:$0xf]
      %v315 = vld [vmem:[%s242 + $0x5c] sm:$0xf]
      %v316 = vld [vmem:[%s242 + $0x60] sm:$0xf]
      %v317 = vld [vmem:[%s242 + $0x64] sm:$0xf]
      %v318 = vld [vmem:[%s242 + $0x68] sm:$0xf]
      %v319 = vld [vmem:[%s242 + $0x6c] sm:$0xf]
      %v320 = vld [vmem:[%s242 + $0x70] sm:$0xf]
      %v321 = vld [vmem:[%s242 + $0x74] sm:$0xf]
      %v322 = vld [vmem:[%s242 + $0x78] sm:$0xf]
      %v323 = vld [vmem:[%s242 + $0x7c] sm:$0xf]
      %v324 = vld [vmem:[%s3] sm:$0xf]
      %v325 = vld [vmem:[%s3 + $0x4] sm:$0xf]
      %v326 = vld [vmem:[%s3 + $0x8] sm:$0xf]
      %v327 = vld [vmem:[%s3 + $0xc] sm:$0xf]
      %v328 = vld [vmem:[%s3 + $0x10] sm:$0xf]
      %v329 = vld [vmem:[%s3 + $0x14] sm:$0xf]
      %v330 = vld [vmem:[%s3 + $0x18] sm:$0xf]
      %v331 = vld [vmem:[%s3 + $0x1c] sm:$0xf]
      %v332 = vld [vmem:[%s3 + $0x20] sm:$0xf]
      %v365 = vunpack.c.l.b16 %v292
      %v366 = vunpack.c.l.b16 %v293
      %v367 = vunpack.c.l.b16 %v294
      %v368 = vunpack.c.l.b16 %v295
      %v369 = vunpack.c.l.b16 %v296
      %v370 = vunpack.c.l.b16 %v297
      %v371 = vunpack.c.l.b16 %v298
      %v372 = vunpack.c.l.b16 %v299
      %v373 = vunpack.c.l.b16 %v300
      %v374 = vunpack.c.l.b16 %v301
      %v375 = vunpack.c.l.b16 %v302
      %v376 = vunpack.c.l.b16 %v303
      %v377 = vunpack.c.l.b16 %v304
      %v378 = vunpack.c.l.b16 %v305
      %v379 = vunpack.c.l.b16 %v306
      %v380 = vunpack.c.l.b16 %v307
      %v381 = vunpack.c.l.b16 %v308
      %v382 = vunpack.c.l.b16 %v309
      %v383 = vunpack.c.l.b16 %v310
      %v384 = vunpack.c.l.b16 %v311
      %v385 = vunpack.c.l.b16 %v312
      %v386 = vunpack.c.l.b16 %v313
      %v387 = vunpack.c.l.b16 %v314
      %v388 = vunpack.c.l.b16 %v315
      %v389 = vunpack.c.l.b16 %v316
      %v390 = vunpack.c.l.b16 %v317
      %v391 = vunpack.c.l.b16 %v318
      %v392 = vunpack.c.l.b16 %v319
      %v393 = vunpack.c.l.b16 %v320
      %v394 = vunpack.c.l.b16 %v321
      %v395 = vunpack.c.l.b16 %v322
      %v396 = vunpack.c.l.b16 %v323
      %v397 = vpack.c.b16 %v366, %v365
      %v398 = vpack.c.b16 %v368, %v367
      %v399 = vpack.c.b16 %v370, %v369
      %v400 = vpack.c.b16 %v372, %v371
      %v401 = vpack.c.b16 %v374, %v373
      %v402 = vpack.c.b16 %v376, %v375
      %v403 = vpack.c.b16 %v378, %v377
      %v404 = vpack.c.b16 %v380, %v379
      %v405 = vpack.c.b16 %v382, %v381
      %v406 = vpack.c.b16 %v384, %v383
      %v407 = vpack.c.b16 %v386, %v385
      %v408 = vpack.c.b16 %v388, %v387
      %v409 = vpack.c.b16 %v390, %v389
      %v410 = vpack.c.b16 %v392, %v391
      %v411 = vpack.c.b16 %v394, %v393
      %v412 = vpack.c.b16 %v396, %v395
      %v422 = vunpack.c.l.b16 %v324
      %v423 = vunpack.c.l.b16 %v325
      %v424 = vunpack.c.l.b16 %v326
      %v425 = vunpack.c.l.b16 %v327
      %v426 = vunpack.c.l.b16 %v328
      %v427 = vunpack.c.l.b16 %v329
      %v428 = vunpack.c.l.b16 %v330
      %v429 = vunpack.c.l.b16 %v331
      %v430 = vunpack.c.l.b16 %v332
      %v431 = vpack.c.b16 %v423, %v422
      %v432 = vpack.c.b16 %v425, %v424
      %v433 = vpack.c.b16 %v427, %v426
      %v434 = vpack.c.b16 %v429, %v428
      %v435 = vpack.c.b16 %v430, %v430
      %vm440 = vcmask 588800
      %v442 = vsel %vm440, %v397, 0
      %v445 = vsel %vm440, %v398, 0
      %v448 = vsel %vm440, %v399, 0
      %v451 = vsel %vm440, %v400, 0
      %v454 = vsel %vm440, %v401, 0
      %v457 = vsel %vm440, %v402, 0
      %v460 = vsel %vm440, %v403, 0
      %v463 = vsel %vm440, %v404, 0
      %v466 = vsel %vm440, %v405, 0
      %v469 = vsel %vm440, %v406, 0
      %v472 = vsel %vm440, %v407, 0
      %v475 = vsel %vm440, %v408, 0
      %v478 = vsel %vm440, %v409, 0
      %v481 = vsel %vm440, %v410, 0
      %v484 = vsel %vm440, %v411, 0
      %v487 = vsel %vm440, %v412, 0
      %vm489 = vcmask 1043456
      %v491 = vsel %vm489, %v435, 0
      %493 = vmatprep.subr.bf16.mxu0 0
      %494 = vmatpush1.bf16.msra.mxu0 0
      %495 = vmatprep.subr.bf16.mxu0 0
      %496 = vmatpush1.bf16.msra.mxu0 0
      %497 = vmatprep.subr.bf16.mxu0 0
      %498 = vmatpush1.bf16.msra.mxu0 0
      %499 = vmatprep.subr.bf16.mxu0 0
      %500 = vmatpush1.bf16.msra.mxu0 %v491
      %501 = vmatprep.subr.bf16.mxu0 0
      %502 = vmatpush1.bf16.msra.mxu0 %v434
      %503 = vmatprep.subr.bf16.mxu0 0
      %504 = vmatpush1.bf16.msra.mxu0 %v433
      %505 = vmatprep.subr.bf16.mxu0 0
      %506 = vmatpush1.bf16.msra.mxu0 %v432
      %507 = vmatprep.subr.bf16.mxu0 0
      %508 = vmatpush1.bf16.msra.mxu0 %v431
      %509 = vmatprep.subr.bf16.mxu0 0
      %510 = vmatpush2.bf16.msra.mxu0 0
      %511 = vmatprep.subr.bf16.mxu0 0
      %512 = vmatpush2.bf16.msra.mxu0 0
      %513 = vmatprep.subr.bf16.mxu0 0
      %514 = vmatpush2.bf16.msra.mxu0 0
      %515 = vmatprep.subr.bf16.mxu0 0
      %516 = vmatpush2.bf16.msra.mxu0 0
      %517 = vmatprep.subr.bf16.mxu0 0
      %518 = vmatpush2.bf16.msra.mxu0 0
      %519 = vmatprep.subr.bf16.mxu0 0
      %520 = vmatpush2.bf16.msra.mxu0 0
      %521 = vmatprep.subr.bf16.mxu0 0
      %522 = vmatpush2.bf16.msra.mxu0 0
      %523 = vmatprep.subr.bf16.mxu0 0
      %524 = vmatpush2.bf16.msra.mxu0 0
      %525 = vmatprep.mubr.bf16.mxu0 0
      %526 = vmatmul.mubr.bf16.gmra.mxu0 %v442
      %v527 = vpop.f32.mrf.mxu0
      %v528 = vadd.f32 0.0, %v527
      %v529 = vpop.f32.mrf.mxu0
      %v530 = vpop.f32.mrf.mxu0
      %v531 = vadd.f32 0.0, %v530
      %v532 = vpop.f32.mrf.mxu0
      %533 = vmatprep.mubr.bf16.mxu0 0
      %534 = vmatmul.mubr.bf16.gmra.mxu0 %v445
      %v535 = vpop.f32.mrf.mxu0
      %v536 = vadd.f32 0.0, %v535
      %v537 = vpop.f32.mrf.mxu0
      %v538 = vpop.f32.mrf.mxu0
      %v539 = vadd.f32 0.0, %v538
      %v540 = vpop.f32.mrf.mxu0
      %541 = vmatprep.mubr.bf16.mxu0 0
      %542 = vmatmul.mubr.bf16.gmra.mxu0 %v448
      %v543 = vpop.f32.mrf.mxu0
      %v544 = vadd.f32 0.0, %v543
      %v545 = vpop.f32.mrf.mxu0
      %v546 = vpop.f32.mrf.mxu0
      %v547 = vadd.f32 0.0, %v546
      %v548 = vpop.f32.mrf.mxu0
      %549 = vmatprep.mubr.bf16.mxu0 0
      %550 = vmatmul.mubr.bf16.gmra.mxu0 %v451
      %v551 = vpop.f32.mrf.mxu0
      %v552 = vadd.f32 0.0, %v551
      %v553 = vpop.f32.mrf.mxu0
      %v554 = vpop.f32.mrf.mxu0
      %v555 = vadd.f32 0.0, %v554
      %v556 = vpop.f32.mrf.mxu0
      %557 = vmatprep.mubr.bf16.mxu0 0
      %558 = vmatmul.mubr.bf16.gmra.mxu0 %v454
      %v559 = vpop.f32.mrf.mxu0
      %v560 = vadd.f32 0.0, %v559
      %v561 = vpop.f32.mrf.mxu0
      %v562 = vpop.f32.mrf.mxu0
      %v563 = vadd.f32 0.0, %v562
      %v564 = vpop.f32.mrf.mxu0
      %565 = vmatprep.mubr.bf16.mxu0 0
      %566 = vmatmul.mubr.bf16.gmra.mxu0 %v457
      %v567 = vpop.f32.mrf.mxu0
      %v568 = vadd.f32 0.0, %v567
      %v569 = vpop.f32.mrf.mxu0
      %v570 = vpop.f32.mrf.mxu0
      %v571 = vadd.f32 0.0, %v570
      %v572 = vpop.f32.mrf.mxu0
      %573 = vmatprep.mubr.bf16.mxu0 0
      %574 = vmatmul.mubr.bf16.gmra.mxu0 %v460
      %v575 = vpop.f32.mrf.mxu0
      %v576 = vadd.f32 0.0, %v575
      %v577 = vpop.f32.mrf.mxu0
      %v578 = vpop.f32.mrf.mxu0
      %v579 = vadd.f32 0.0, %v578
      %v580 = vpop.f32.mrf.mxu0
      %581 = vmatprep.mubr.bf16.mxu0 0
      %582 = vmatmul.mubr.bf16.gmra.mxu0 %v463
      %v583 = vpop.f32.mrf.mxu0
      %v584 = vadd.f32 0.0, %v583
      %v585 = vpop.f32.mrf.mxu0
      %v586 = vpop.f32.mrf.mxu0
      %v587 = vadd.f32 0.0, %v586
      %v588 = vpop.f32.mrf.mxu0
      %589 = vmatprep.mubr.bf16.mxu0 0
      %590 = vmatmul.mubr.bf16.gmra.mxu0 %v466
      %v591 = vpop.f32.mrf.mxu0
      %v592 = vadd.f32 0.0, %v591
      %v593 = vpop.f32.mrf.mxu0
      %v594 = vpop.f32.mrf.mxu0
      %v595 = vadd.f32 0.0, %v594
      %v596 = vpop.f32.mrf.mxu0
      %597 = vmatprep.mubr.bf16.mxu0 0
      %598 = vmatmul.mubr.bf16.gmra.mxu0 %v469
      %v599 = vpop.f32.mrf.mxu0
      %v600 = vadd.f32 0.0, %v599
      %v601 = vpop.f32.mrf.mxu0
      %v602 = vpop.f32.mrf.mxu0
      %v603 = vadd.f32 0.0, %v602
      %v604 = vpop.f32.mrf.mxu0
      %605 = vmatprep.mubr.bf16.mxu0 0
      %606 = vmatmul.mubr.bf16.gmra.mxu0 %v472
      %v607 = vpop.f32.mrf.mxu0
      %v608 = vadd.f32 0.0, %v607
      %v609 = vpop.f32.mrf.mxu0
      %v610 = vpop.f32.mrf.mxu0
      %v611 = vadd.f32 0.0, %v610
      %v612 = vpop.f32.mrf.mxu0
      %613 = vmatprep.mubr.bf16.mxu0 0
      %614 = vmatmul.mubr.bf16.gmra.mxu0 %v475
      %v615 = vpop.f32.mrf.mxu0
      %v616 = vadd.f32 0.0, %v615
      %v617 = vpop.f32.mrf.mxu0
      %v618 = vpop.f32.mrf.mxu0
      %v619 = vadd.f32 0.0, %v618
      %v620 = vpop.f32.mrf.mxu0
      %621 = vmatprep.mubr.bf16.mxu0 0
      %622 = vmatmul.mubr.bf16.gmra.mxu0 %v478
      %v623 = vpop.f32.mrf.mxu0
      %v624 = vadd.f32 0.0, %v623
      %v625 = vpop.f32.mrf.mxu0
      %v626 = vpop.f32.mrf.mxu0
      %v627 = vadd.f32 0.0, %v626
      %v628 = vpop.f32.mrf.mxu0
      %629 = vmatprep.mubr.bf16.mxu0 0
      %630 = vmatmul.mubr.bf16.gmra.mxu0 %v481
      %v631 = vpop.f32.mrf.mxu0
      %v632 = vadd.f32 0.0, %v631
      %v633 = vpop.f32.mrf.mxu0
      %v634 = vpop.f32.mrf.mxu0
      %v635 = vadd.f32 0.0, %v634
      %v636 = vpop.f32.mrf.mxu0
      %637 = vmatprep.mubr.bf16.mxu0 0
      %638 = vmatmul.mubr.bf16.gmra.mxu0 %v484
      %v639 = vpop.f32.mrf.mxu0
      %v640 = vadd.f32 0.0, %v639
      %v641 = vpop.f32.mrf.mxu0
      %v642 = vpop.f32.mrf.mxu0
      %v643 = vadd.f32 0.0, %v642
      %v644 = vpop.f32.mrf.mxu0
      %645 = vmatprep.mubr.bf16.mxu0 0
      %646 = vmatmul.mubr.bf16.gmra.mxu0 %v487
      %v647 = vpop.f32.mrf.mxu0
      %v648 = vadd.f32 0.0, %v647
      %v649 = vpop.f32.mrf.mxu0
      %v650 = vpop.f32.mrf.mxu0
      %v651 = vadd.f32 0.0, %v650
      %v652 = vpop.f32.mrf.mxu0
      %653 = vdwg.mxu0
      %v686 = vunpack.c.l.b16 %v251
      %v687 = vunpack.c.l.b16 %v252
      %v688 = vunpack.c.l.b16 %v253
      %v689 = vunpack.c.l.b16 %v254
      %v690 = vunpack.c.l.b16 %v255
      %v691 = vunpack.c.l.b16 %v256
      %v692 = vunpack.c.l.b16 %v257
      %v693 = vunpack.c.l.b16 %v258
      %v694 = vunpack.c.l.b16 %v259
      %v695 = vunpack.c.l.b16 %v260
      %v696 = vunpack.c.l.b16 %v261
      %v697 = vunpack.c.l.b16 %v262
      %v698 = vunpack.c.l.b16 %v263
      %v699 = vunpack.c.l.b16 %v264
      %v700 = vunpack.c.l.b16 %v265
      %v701 = vunpack.c.l.b16 %v266
      %v702 = vunpack.c.l.b16 %v267
      %v703 = vunpack.c.l.b16 %v268
      %v704 = vunpack.c.l.b16 %v269
      %v705 = vunpack.c.l.b16 %v270
      %v706 = vunpack.c.l.b16 %v271
      %v707 = vunpack.c.l.b16 %v272
      %v708 = vunpack.c.l.b16 %v273
      %v709 = vunpack.c.l.b16 %v274
      %v710 = vunpack.c.l.b16 %v275
      %v711 = vunpack.c.l.b16 %v276
      %v712 = vunpack.c.l.b16 %v277
      %v713 = vunpack.c.l.b16 %v278
      %v714 = vunpack.c.l.b16 %v279
      %v715 = vunpack.c.l.b16 %v280
      %v716 = vunpack.c.l.b16 %v281
      %v717 = vunpack.c.l.b16 %v282
      %v718 = vpack.c.b16 %v687, %v686
      %v719 = vpack.c.b16 %v689, %v688
      %v720 = vpack.c.b16 %v691, %v690
      %v721 = vpack.c.b16 %v693, %v692
      %v722 = vpack.c.b16 %v695, %v694
      %v723 = vpack.c.b16 %v697, %v696
      %v724 = vpack.c.b16 %v699, %v698
      %v725 = vpack.c.b16 %v701, %v700
      %v726 = vpack.c.b16 %v703, %v702
      %v727 = vpack.c.b16 %v705, %v704
      %v728 = vpack.c.b16 %v707, %v706
      %v729 = vpack.c.b16 %v709, %v708
      %v730 = vpack.c.b16 %v711, %v710
      %v731 = vpack.c.b16 %v713, %v712
      %v732 = vpack.c.b16 %v715, %v714
      %v733 = vpack.c.b16 %v717, %v716
      %v743 = vunpack.c.l.b16 %v283
      %v744 = vunpack.c.l.b16 %v284
      %v745 = vunpack.c.l.b16 %v285
      %v746 = vunpack.c.l.b16 %v286
      %v747 = vunpack.c.l.b16 %v287
      %v748 = vunpack.c.l.b16 %v288
      %v749 = vunpack.c.l.b16 %v289
      %v750 = vunpack.c.l.b16 %v290
      %v751 = vunpack.c.l.b16 %v291
      %v752 = vpack.c.b16 %v744, %v743
      %v753 = vpack.c.b16 %v746, %v745
      %v754 = vpack.c.b16 %v748, %v747
      %v755 = vpack.c.b16 %v750, %v749
      %v756 = vpack.c.b16 %v751, %v751
      %v762 = vsel %vm440, %v718, 0
      %v765 = vsel %vm440, %v719, 0
      %v768 = vsel %vm440, %v720, 0
      %v771 = vsel %vm440, %v721, 0
      %v774 = vsel %vm440, %v722, 0
      %v777 = vsel %vm440, %v723, 0
      %v780 = vsel %vm440, %v724, 0
      %v783 = vsel %vm440, %v725, 0
      %v786 = vsel %vm440, %v726, 0
      %v789 = vsel %vm440, %v727, 0
      %v792 = vsel %vm440, %v728, 0
      %v795 = vsel %vm440, %v729, 0
      %v798 = vsel %vm440, %v730, 0
      %v801 = vsel %vm440, %v731, 0
      %v804 = vsel %vm440, %v732, 0
      %v807 = vsel %vm440, %v733, 0
      %v810 = vsel %vm489, %v756, 0
      %812 = vmatprep.subr.bf16.mxu0 0
      %813 = vmatpush1.bf16.msra.mxu0 0
      %814 = vmatprep.subr.bf16.mxu0 0
      %815 = vmatpush1.bf16.msra.mxu0 0
      %816 = vmatprep.subr.bf16.mxu0 0
      %817 = vmatpush1.bf16.msra.mxu0 0
      %818 = vmatprep.subr.bf16.mxu0 0
      %819 = vmatpush1.bf16.msra.mxu0 %v810
      %820 = vmatprep.subr.bf16.mxu0 0
      %821 = vmatpush1.bf16.msra.mxu0 %v755
      %822 = vmatprep.subr.bf16.mxu0 0
      %823 = vmatpush1.bf16.msra.mxu0 %v754
      %824 = vmatprep.subr.bf16.mxu0 0
      %825 = vmatpush1.bf16.msra.mxu0 %v753
      %826 = vmatprep.subr.bf16.mxu0 0
      %827 = vmatpush1.bf16.msra.mxu0 %v752
      %828 = vmatprep.subr.bf16.mxu0 0
      %829 = vmatpush2.bf16.msra.mxu0 0
      %830 = vmatprep.subr.bf16.mxu0 0
      %831 = vmatpush2.bf16.msra.mxu0 0
      %832 = vmatprep.subr.bf16.mxu0 0
      %833 = vmatpush2.bf16.msra.mxu0 0
      %834 = vmatprep.subr.bf16.mxu0 0
      %835 = vmatpush2.bf16.msra.mxu0 0
      %836 = vmatprep.subr.bf16.mxu0 0
      %837 = vmatpush2.bf16.msra.mxu0 0
      %838 = vmatprep.subr.bf16.mxu0 0
      %839 = vmatpush2.bf16.msra.mxu0 0
      %840 = vmatprep.subr.bf16.mxu0 0
      %841 = vmatpush2.bf16.msra.mxu0 0
      %842 = vmatprep.subr.bf16.mxu0 0
      %843 = vmatpush2.bf16.msra.mxu0 0
      %844 = vmatprep.mubr.bf16.mxu0 0
      %845 = vmatmul.mubr.bf16.gmra.mxu0 %v762
      %v846 = vpop.f32.mrf.mxu0
      %v847 = vadd.f32 %v528, %v846
      %v848 = vpop.f32.mrf.mxu0
      %v849 = vpop.f32.mrf.mxu0
      %v850 = vadd.f32 %v531, %v849
      %v851 = vpop.f32.mrf.mxu0
      %852 = vmatprep.mubr.bf16.mxu0 0
      %853 = vmatmul.mubr.bf16.gmra.mxu0 %v765
      %v854 = vpop.f32.mrf.mxu0
      %v855 = vadd.f32 %v536, %v854
      %v856 = vpop.f32.mrf.mxu0
      %v857 = vpop.f32.mrf.mxu0
      %v858 = vadd.f32 %v539, %v857
      %v859 = vpop.f32.mrf.mxu0
      %860 = vmatprep.mubr.bf16.mxu0 0
      %861 = vmatmul.mubr.bf16.gmra.mxu0 %v768
      %v862 = vpop.f32.mrf.mxu0
      %v863 = vadd.f32 %v544, %v862
      %v864 = vpop.f32.mrf.mxu0
      %v865 = vpop.f32.mrf.mxu0
      %v866 = vadd.f32 %v547, %v865
      %v867 = vpop.f32.mrf.mxu0
      %868 = vmatprep.mubr.bf16.mxu0 0
      %869 = vmatmul.mubr.bf16.gmra.mxu0 %v771
      %v870 = vpop.f32.mrf.mxu0
      %v871 = vadd.f32 %v552, %v870
      %v872 = vpop.f32.mrf.mxu0
      %v873 = vpop.f32.mrf.mxu0
      %v874 = vadd.f32 %v555, %v873
      %v875 = vpop.f32.mrf.mxu0
      %876 = vmatprep.mubr.bf16.mxu0 0
      %877 = vmatmul.mubr.bf16.gmra.mxu0 %v774
      %v878 = vpop.f32.mrf.mxu0
      %v879 = vadd.f32 %v560, %v878
      %v880 = vpop.f32.mrf.mxu0
      %v881 = vpop.f32.mrf.mxu0
      %v882 = vadd.f32 %v563, %v881
      %v883 = vpop.f32.mrf.mxu0
      %884 = vmatprep.mubr.bf16.mxu0 0
      %885 = vmatmul.mubr.bf16.gmra.mxu0 %v777
      %v886 = vpop.f32.mrf.mxu0
      %v887 = vadd.f32 %v568, %v886
      %v888 = vpop.f32.mrf.mxu0
      %v889 = vpop.f32.mrf.mxu0
      %v890 = vadd.f32 %v571, %v889
      %v891 = vpop.f32.mrf.mxu0
      %892 = vmatprep.mubr.bf16.mxu0 0
      %893 = vmatmul.mubr.bf16.gmra.mxu0 %v780
      %v894 = vpop.f32.mrf.mxu0
      %v895 = vadd.f32 %v576, %v894
      %v896 = vpop.f32.mrf.mxu0
      %v897 = vpop.f32.mrf.mxu0
      %v898 = vadd.f32 %v579, %v897
      %v899 = vpop.f32.mrf.mxu0
      %900 = vmatprep.mubr.bf16.mxu0 0
      %901 = vmatmul.mubr.bf16.gmra.mxu0 %v783
      %v902 = vpop.f32.mrf.mxu0
      %v903 = vadd.f32 %v584, %v902
      %v904 = vpop.f32.mrf.mxu0
      %v905 = vpop.f32.mrf.mxu0
      %v906 = vadd.f32 %v587, %v905
      %v907 = vpop.f32.mrf.mxu0
      %908 = vmatprep.mubr.bf16.mxu0 0
      %909 = vmatmul.mubr.bf16.gmra.mxu0 %v786
      %v910 = vpop.f32.mrf.mxu0
      %v911 = vadd.f32 %v592, %v910
      %v912 = vpop.f32.mrf.mxu0
      %v913 = vpop.f32.mrf.mxu0
      %v914 = vadd.f32 %v595, %v913
      %v915 = vpop.f32.mrf.mxu0
      %916 = vmatprep.mubr.bf16.mxu0 0
      %917 = vmatmul.mubr.bf16.gmra.mxu0 %v789
      %v918 = vpop.f32.mrf.mxu0
      %v919 = vadd.f32 %v600, %v918
      %v920 = vpop.f32.mrf.mxu0
      %v921 = vpop.f32.mrf.mxu0
      %v922 = vadd.f32 %v603, %v921
      %v923 = vpop.f32.mrf.mxu0
      %924 = vmatprep.mubr.bf16.mxu0 0
      %925 = vmatmul.mubr.bf16.gmra.mxu0 %v792
      %v926 = vpop.f32.mrf.mxu0
      %v927 = vadd.f32 %v608, %v926
      %v928 = vpop.f32.mrf.mxu0
      %v929 = vpop.f32.mrf.mxu0
      %v930 = vadd.f32 %v611, %v929
      %v931 = vpop.f32.mrf.mxu0
      %932 = vmatprep.mubr.bf16.mxu0 0
      %933 = vmatmul.mubr.bf16.gmra.mxu0 %v795
      %v934 = vpop.f32.mrf.mxu0
      %v935 = vadd.f32 %v616, %v934
      %v936 = vpop.f32.mrf.mxu0
      %v937 = vpop.f32.mrf.mxu0
      %v938 = vadd.f32 %v619, %v937
      %v939 = vpop.f32.mrf.mxu0
      %940 = vmatprep.mubr.bf16.mxu0 0
      %941 = vmatmul.mubr.bf16.gmra.mxu0 %v798
      %v942 = vpop.f32.mrf.mxu0
      %v943 = vadd.f32 %v624, %v942
      %v944 = vpop.f32.mrf.mxu0
      %v945 = vpop.f32.mrf.mxu0
      %v946 = vadd.f32 %v627, %v945
      %v947 = vpop.f32.mrf.mxu0
      %948 = vmatprep.mubr.bf16.mxu0 0
      %949 = vmatmul.mubr.bf16.gmra.mxu0 %v801
      %v950 = vpop.f32.mrf.mxu0
      %v951 = vadd.f32 %v632, %v950
      %v952 = vpop.f32.mrf.mxu0
      %v953 = vpop.f32.mrf.mxu0
      %v954 = vadd.f32 %v635, %v953
      %v955 = vpop.f32.mrf.mxu0
      %956 = vmatprep.mubr.bf16.mxu0 0
      %957 = vmatmul.mubr.bf16.gmra.mxu0 %v804
      %v958 = vpop.f32.mrf.mxu0
      %v959 = vadd.f32 %v640, %v958
      %v960 = vpop.f32.mrf.mxu0
      %v961 = vpop.f32.mrf.mxu0
      %v962 = vadd.f32 %v643, %v961
      %v963 = vpop.f32.mrf.mxu0
      %964 = vmatprep.mubr.bf16.mxu0 0
      %965 = vmatmul.mubr.bf16.gmra.mxu0 %v807
      %v966 = vpop.f32.mrf.mxu0
      %v967 = vadd.f32 %v648, %v966
      %v968 = vpop.f32.mrf.mxu0
      %v969 = vpop.f32.mrf.mxu0
      %v970 = vadd.f32 %v651, %v969
      %v971 = vpop.f32.mrf.mxu0
      %972 = vdwg.mxu0
      %v973 = vld [vmem:[%s4] sm:$0x1]
      %v975 = vlaneseq
      %v976 = vshrl.u32 %v975, 7
      %v977 = vsub.s32 0, %v976
      %v978 = vrot.slane %v973, %v977
      %v980 = vadd.f32 %v847, %v978
      %v981 = vadd.f32 %v850, %v978
      %v982 = vadd.f32 %v855, %v978
      %v983 = vadd.f32 %v858, %v978
      %v984 = vadd.f32 %v863, %v978
      %v985 = vadd.f32 %v866, %v978
      %v986 = vadd.f32 %v871, %v978
      %v987 = vadd.f32 %v874, %v978
      %v988 = vadd.f32 %v879, %v978
      %v989 = vadd.f32 %v882, %v978
      %v990 = vadd.f32 %v887, %v978
      %v991 = vadd.f32 %v890, %v978
      %v992 = vadd.f32 %v895, %v978
      %v993 = vadd.f32 %v898, %v978
      %v994 = vadd.f32 %v903, %v978
      %v995 = vadd.f32 %v906, %v978
      %v996 = vadd.f32 %v911, %v978
      %v997 = vadd.f32 %v914, %v978
      %v998 = vadd.f32 %v919, %v978
      %v999 = vadd.f32 %v922, %v978
      %v1000 = vadd.f32 %v927, %v978
      %v1001 = vadd.f32 %v930, %v978
      %v1002 = vadd.f32 %v935, %v978
      %v1003 = vadd.f32 %v938, %v978
      %v1004 = vadd.f32 %v943, %v978
      %v1005 = vadd.f32 %v946, %v978
      %v1006 = vadd.f32 %v951, %v978
      %v1007 = vadd.f32 %v954, %v978
      %v1008 = vadd.f32 %v959, %v978
      %v1009 = vadd.f32 %v962, %v978
      %v1010 = vadd.f32 %v967, %v978
      %v1011 = vadd.f32 %v970, %v978
      %v1012 = vtanh.pop %v980
      %v1013 = vtanh.pop %v981
      %v1014 = vtanh.pop %v982
      %v1015 = vtanh.pop %v983
      %v1016 = vtanh.pop %v984
      %v1017 = vtanh.pop %v985
      %v1018 = vtanh.pop %v986
      %v1019 = vtanh.pop %v987
      %v1020 = vtanh.pop %v988
      %v1021 = vtanh.pop %v989
      %v1022 = vtanh.pop %v990
      %v1023 = vtanh.pop %v991
      %v1024 = vtanh.pop %v992
      %v1025 = vtanh.pop %v993
      %v1026 = vtanh.pop %v994
      %v1027 = vtanh.pop %v995
      %v1028 = vtanh.pop %v996
      %v1029 = vtanh.pop %v997
      %v1030 = vtanh.pop %v998
      %v1031 = vtanh.pop %v999
      %v1032 = vtanh.pop %v1000
      %v1033 = vtanh.pop %v1001
      %v1034 = vtanh.pop %v1002
      %v1035 = vtanh.pop %v1003
      %v1036 = vtanh.pop %v1004
      %v1037 = vtanh.pop %v1005
      %v1038 = vtanh.pop %v1006
      %v1039 = vtanh.pop %v1007
      %v1040 = vtanh.pop %v1008
      %v1041 = vtanh.pop %v1009
      %v1042 = vtanh.pop %v1010
      %v1043 = vtanh.pop %v1011
      %vm1044 = vcmask 97280
      %1045 = vst.msk [vmem:[%s248] sm:$0xff] %vm1044, %v1012
      %1046 = vst.msk [vmem:[%s248 + $0x8] sm:$0xff] %vm1044, %v1013
      %1047 = vst.msk [vmem:[%s248 + $0x10] sm:$0xff] %vm1044, %v1014
      %1048 = vst.msk [vmem:[%s248 + $0x18] sm:$0xff] %vm1044, %v1015
      %1049 = vst.msk [vmem:[%s248 + $0x20] sm:$0xff] %vm1044, %v1016
      %1050 = vst.msk [vmem:[%s248 + $0x28] sm:$0xff] %vm1044, %v1017
      %1051 = vst.msk [vmem:[%s248 + $0x30] sm:$0xff] %vm1044, %v1018
      %1052 = vst.msk [vmem:[%s248 + $0x38] sm:$0xff] %vm1044, %v1019
      %1053 = vst.msk [vmem:[%s248 + $0x40] sm:$0xff] %vm1044, %v1020
      %1054 = vst.msk [vmem:[%s248 + $0x48] sm:$0xff] %vm1044, %v1021
      %1055 = vst.msk [vmem:[%s248 + $0x50] sm:$0xff] %vm1044, %v1022
      %1056 = vst.msk [vmem:[%s248 + $0x58] sm:$0xff] %vm1044, %v1023
      %1057 = vst.msk [vmem:[%s248 + $0x60] sm:$0xff] %vm1044, %v1024
      %1058 = vst.msk [vmem:[%s248 + $0x68] sm:$0xff] %vm1044, %v1025
      %1059 = vst.msk [vmem:[%s248 + $0x70] sm:$0xff] %vm1044, %v1026
      %1060 = vst.msk [vmem:[%s248 + $0x78] sm:$0xff] %vm1044, %v1027
      %1061 = vst.msk [vmem:[%s248 + $0x80] sm:$0xff] %vm1044, %v1028
      %1062 = vst.msk [vmem:[%s248 + $0x88] sm:$0xff] %vm1044, %v1029
      %1063 = vst.msk [vmem:[%s248 + $0x90] sm:$0xff] %vm1044, %v1030
      %1064 = vst.msk [vmem:[%s248 + $0x98] sm:$0xff] %vm1044, %v1031
      %1065 = vst.msk [vmem:[%s248 + $0xa0] sm:$0xff] %vm1044, %v1032
      %1066 = vst.msk [vmem:[%s248 + $0xa8] sm:$0xff] %vm1044, %v1033
      %1067 = vst.msk [vmem:[%s248 + $0xb0] sm:$0xff] %vm1044, %v1034
      %1068 = vst.msk [vmem:[%s248 + $0xb8] sm:$0xff] %vm1044, %v1035
      %1069 = vst.msk [vmem:[%s248 + $0xc0] sm:$0xff] %vm1044, %v1036
      %1070 = vst.msk [vmem:[%s248 + $0xc8] sm:$0xff] %vm1044, %v1037
      %1071 = vst.msk [vmem:[%s248 + $0xd0] sm:$0xff] %vm1044, %v1038
      %1072 = vst.msk [vmem:[%s248 + $0xd8] sm:$0xff] %vm1044, %v1039
      %1073 = vst.msk [vmem:[%s248 + $0xe0] sm:$0xff] %vm1044, %v1040
      %1074 = vst.msk [vmem:[%s248 + $0xe8] sm:$0xff] %vm1044, %v1041
      %1075 = vst.msk [vmem:[%s248 + $0xf0] sm:$0xff] %vm1044, %v1042
      %1076 = vst.msk [vmem:[%s248 + $0xf8] sm:$0xff] %vm1044, %v1043
      %s1077 = smul.u32 32, %s16
      %p1078 = scmp.lt.s32.totalorder %s1077, 63
      %s1079 = scalar_select %p1078, %s1077, 63
      %s1080 = smul.addr %s1079, 8
      %s1081 = scalar_lea.vmem %s5, %s1080
      // Predicated region
      $region41: #{_lambda_.19} parent=39 // pred_check
        %p1082 = pneg %p149
      $region42: #{_lambda_.19} parent=39 // pred_check_branch
        %1084 = sbr.rel (%p1082) target = $region44
      $region43: #{_lambda_.19} parent=39 // pred_region
        %s1085 = smul.u32 32, %s16
      $region44: #{_lambda_.19} parent=39 // pred_fallthru
        _
    $region40: #{_lambda_.19} parent=5 // pred_fallthru
      _
    %p1086 = scmp.le.s32.totalorder 2, %s11
    // Predicated region
    $region45: #{_lambda_.19} parent=5 // pred_check
      %p1087 = pneg %p1086
    $region46: #{_lambda_.19} parent=5 // pred_check_branch
      %1089 = sbr.rel (%p1087) target = $region48
    $region47: #{_lambda_.19} parent=5 // pred_region
      %s1090 = ssub.s32 %s11, 2
      // Predicated region
      $region49: #{_lambda_.19} parent=47 // pred_check
        %p1091 = pneg %p155
      $region50: #{_lambda_.19} parent=47 // pred_check_branch
        %1093 = sbr.rel (%p1091) target = $region52
      $region51: #{_lambda_.19} parent=47 // pred_region
        %s1094 = smul.u32 32, %s17
        %p1095 = scmp.lt.s32.totalorder %s1094, 63
        %s1096 = scalar_select %p1095, %s1094, 63
        %s1097 = smul.addr %s1096, 8
        %s1098 = scalar_lea.vmem %s5, %s1097
      $region52: #{_lambda_.19} parent=47 // pred_fallthru
        _
    $region48: #{_lambda_.19} parent=5 // pred_fallthru
      _
  $region6: #{_lambda_.19} parent=0 // loop_footer
    %s15 = sadd.s32 1, %s11
  $region7: #{_lambda_.19} parent=0 // loop_footer_branch
    %10 = sbr.rel target = $region3
  $region8: #{_lambda_.19} parent=0 // loop_exit
    _

</llo_original>
